<compile_context>
chip_gen: v6e
topology: v6e:2x2x1
jax: 0.10.0
libtpu: 0.0.40
codegen_flags: <defaults>
</compile_context>

<pallas_src>
import functools

import jax
import jax.numpy as jnp
from jax.experimental import pallas as pl
from jax.experimental.pallas import tpu as pltpu

LEAKY_SLOPE = 0.01  # PyTorch nn.LeakyReLU default


def _round_up(x, m):
    return (x + m - 1) // m * m


def _pick_tk(K, cap=2048):
    """Largest multiple of 128 that divides K and is <= cap."""
    best = None
    t = 128
    while t <= min(K, cap):
        if K % t == 0:
            best = t
        t += 128
    assert best is not None, f"K={K} must be a multiple of 128"
    return best


# ----------------------------------------------------------------------------
# Pallas kernels: fused matmul + bias + optional LeakyReLU
# ----------------------------------------------------------------------------
def _linear_kernel_oneshot(x_ref, w_ref, b_ref, o_ref, *, activate, slope):
    # Single K step: no accumulator, no init/finalize branches.
    y = jnp.dot(x_ref[...], w_ref[...], preferred_element_type=jnp.float32)
    y = y + b_ref[...]
    if activate:
        y = jnp.where(y >= 0, y, slope * y)
    o_ref[...] = y.astype(o_ref.dtype)


def _linear_kernel_acc(x_ref, w_ref, b_ref, o_ref, acc_ref, *, activate, slope):
    k = pl.program_id(2)

    @pl.when(k == 0)
    def _():
        acc_ref[...] = jnp.zeros_like(acc_ref)

    acc_ref[...] += jnp.dot(
        x_ref[...], w_ref[...], preferred_element_type=jnp.float32
    )

    @pl.when(k == pl.num_programs(2) - 1)
    def _():
        y = acc_ref[...] + b_ref[...]  # (tm, tn) + (1, tn) broadcast
        if activate:
            y = jnp.where(y >= 0, y, slope * y)
        o_ref[...] = y.astype(o_ref.dtype)


def fused_linear(xp, wp, bp, *, activate, tm, tn, tk, slope=LEAKY_SLOPE):
    """y = [leaky_relu](xp @ wp + bp).  All operands pre-padded & tile-aligned.

    xp: (Mp, Kp), wp: (Kp, Np), bp: (1, Np); Mp%tm == Np%tn == Kp%tk == 0.
    """
    Mp, Kp = xp.shape
    Kp2, Np = wp.shape
    assert Kp == Kp2 and bp.shape == (1, Np)
    assert Mp % tm == 0 and Np % tn == 0 and Kp % tk == 0

    if Kp == tk:
        # Single K step -> one-shot kernel, 2-D grid, no scratch accumulator.
        grid = (Mp // tm, Np // tn)
        return pl.pallas_call(
            functools.partial(_linear_kernel_oneshot, activate=activate, slope=slope),
            out_shape=jax.ShapeDtypeStruct((Mp, Np), xp.dtype),
            grid_spec=pltpu.PrefetchScalarGridSpec(
                num_scalar_prefetch=0,
                grid=grid,
                in_specs=[
                    pl.BlockSpec((tm, tk), lambda i, j: (i, 0)),
                    pl.BlockSpec((tk, tn), lambda i, j: (0, j)),
                    pl.BlockSpec((1, tn), lambda i, j: (0, j)),
                ],
                out_specs=pl.BlockSpec((tm, tn), lambda i, j: (i, j)),
            ),
            compiler_params=pltpu.CompilerParams(
                dimension_semantics=("parallel", "parallel")
            ),
        )(xp, wp, bp)

    grid = (Mp // tm, Np // tn, Kp // tk)
    return pl.pallas_call(
        functools.partial(_linear_kernel_acc, activate=activate, slope=slope),
        out_shape=jax.ShapeDtypeStruct((Mp, Np), xp.dtype),
        grid_spec=pltpu.PrefetchScalarGridSpec(
            num_scalar_prefetch=0,
            grid=grid,
            in_specs=[
                pl.BlockSpec((tm, tk), lambda i, j, k: (i, k)),
                pl.BlockSpec((tk, tn), lambda i, j, k: (k, j)),
                pl.BlockSpec((1, tn), lambda i, j, k: (0, j)),
            ],
            out_specs=pl.BlockSpec((tm, tn), lambda i, j, k: (i, j)),
            scratch_shapes=[pltpu.VMEM((tm, tn), jnp.float32)],
        ),
        compiler_params=pltpu.CompilerParams(
            dimension_semantics=("parallel", "parallel", "arbitrary")
        ),
    )(xp, wp, bp)


# ----------------------------------------------------------------------------
# Conv2d (valid padding) as im2col + fused Pallas matmul
# ----------------------------------------------------------------------------
def conv2d_leaky(x_nhwc, wmat_p, bias_p, *, KH, KW, stride, cout):
    """x: (B, H, W, Cin) NHWC; wmat_p: (Kp, Np) pre-padded (kh,kw,cin)->cout matrix."""
    B, H, W, C = x_nhwc.shape
    Kp, Np = wmat_p.shape
    OH = (H - KH) // stride + 1
    OW = (W - KW) // stride + 1
    K = KH * KW * C

    # im2col; K padding is folded into the concatenate (no separate pad op).
    cols = []
    for kh in range(KH):
        for kw in range(KW):
            cols.append(
                x_nhwc[:, kh:kh + stride * OH:stride, kw:kw + stride * OW:stride, :]
            )
    if Kp > K:
        cols.append(jnp.zeros((B, OH, OW, Kp - K), x_nhwc.dtype))
    patches = jnp.concatenate(cols, axis=-1).reshape(B * OH * OW, Kp)

    M = B * OH * OW
    tm = min(_round_up(M, 8), 1024)
    Mp = _round_up(M, tm)
    if Mp != M:
        patches = jnp.pad(patches, ((0, Mp - M), (0, 0)))

    y = fused_linear(patches, wmat_p, bias_p, activate=True, tm=tm, tn=Np, tk=Kp)
    return y[:M, :cout].reshape(B, OH, OW, cout)


# ----------------------------------------------------------------------------
# Parameter init (PyTorch layout / PyTorch-default-style U(-1/sqrt(fan_in), .))
# ----------------------------------------------------------------------------
def init_params(key, in_channels, output_size):
    flattened_size = 64 * 14 * 14

    def u(key, shape, fan_in):
        bound = 1.0 / jnp.sqrt(fan_in)
        return jax.random.uniform(key, shape, jnp.float32, -bound, bound)

    ks = jax.random.split(key, 16)
    p = {}
    p["c1w"] = u(ks[0], (32, in_channels, 5, 5), in_channels * 25)
    p["c1b"] = u(ks[1], (32,), in_channels * 25)
    p["c2w"] = u(ks[2], (64, 32, 3, 3), 32 * 9)
    p["c2b"] = u(ks[3], (64,), 32 * 9)
    p["c3w"] = u(ks[4], (64, 64, 3, 3), 64 * 9)
    p["c3b"] = u(ks[5], (64,), 64 * 9)
    # actor
    p["a1w"] = u(ks[6], (512, flattened_size), flattened_size)
    p["a1b"] = u(ks[7], (512,), flattened_size)
    p["a2w"] = u(ks[8], (output_size, 512), 512)
    p["a2b"] = u(ks[9], (output_size,), 512)
    # critic
    p["v1w"] = u(ks[10], (512, flattened_size), flattened_size)
    p["v1b"] = u(ks[11], (512,), flattened_size)
    p["v2w"] = u(ks[12], (1, 512), 512)
    p["v2b"] = u(ks[13], (1,), 512)
    return p


# ----------------------------------------------------------------------------
# One-time parameter preparation (pre-transpose / permute / fuse / pad weights)
# ----------------------------------------------------------------------------
def prepare_params(raw, output_size):
    p = {}

    def conv_mat(w_oihw, b):
        Cout, Cin, KH, KW = w_oihw.shape
        K = KH * KW * Cin
        Kp = _round_up(K, 128)
        Np = _round_up(Cout, 128)
        wmat = jnp.transpose(w_oihw, (2, 3, 1, 0)).reshape(K, Cout)  # (kh,kw,cin)xCout
        wmat = jnp.pad(wmat, ((0, Kp - K), (0, Np - Cout)))
        bp = jnp.pad(b, (0, Np - Cout)).reshape(1, Np)
        return wmat, bp

    p["c1w_mat"], p["c1b_p"] = conv_mat(raw["c1w"], raw["c1b"])
    p["c2w_mat"], p["c2b_p"] = conv_mat(raw["c2w"], raw["c2b"])
    p["c3w_mat"], p["c3b_p"] = conv_mat(raw["c3w"], raw["c3b"])

    # Fused actor1+critic1: (12544, 1024), rows permuted from PyTorch (c,h,w)
    # flatten order to the NHWC (h,w,c) order our conv pipeline produces.
    def head1_w(w, C=64, Hs=14, Ws=14):
        w = w.reshape(w.shape[0], C, Hs, Ws)
        w = jnp.transpose(w, (0, 2, 3, 1)).reshape(w.shape[0], C * Hs * Ws)
        return w.T  # (K, 512)

    a1 = head1_w(raw["a1w"])
    v1 = head1_w(raw["v1w"])
    p["h1w"] = jnp.concatenate([a1, v1], axis=1)                       # (12544, 1024)
    p["h1b"] = jnp.concatenate([raw["a1b"], raw["v1b"]]).reshape(1, -1)

    # Fused actor2+critic2 as a block-diagonal matrix: (1024, output_size+1).
    n_out = output_size + 1
    Nhp = _round_up(n_out, 128)
    w2 = jnp.zeros((1024, Nhp), jnp.float32)
    w2 = w2.at[:512, :output_size].set(raw["a2w"].T)   # actor logits
    w2 = w2.at[512:, output_size].set(raw["v2w"][0])   # critic value
    b2 = jnp.zeros((1, Nhp), jnp.float32)
    b2 = b2.at[0, :output_size].set(raw["a2b"])
    b2 = b2.at[0, output_size].set(raw["v2b"][0])
    p["h2w"], p["h2b"] = w2, b2
    return p


# ----------------------------------------------------------------------------
# Forward pass (5 pallas_calls total)
# ----------------------------------------------------------------------------
def forward(params, state_nchw, *, output_size):
    # NCHW -> NHWC for the conv pipeline
    x = jnp.transpose(state_nchw, (0, 2, 3, 1))

    x = conv2d_leaky(x, params["c1w_mat"], params["c1b_p"], KH=5, KW=5, stride=3, cout=32)
    x = conv2d_leaky(x, params["c2w_mat"], params["c2b_p"], KH=3, KW=3, stride=1, cout=64)
    x = conv2d_leaky(x, params["c3w_mat"], params["c3b_p"], KH=3, KW=3, stride=1, cout=64)

    B = x.shape[0]
    # NHWC flatten; head1 weight rows were pre-permuted to match (no transpose here).
    feats = x.reshape(B, -1)                          # (B, 12544)
    Mp = _round_up(B, 8)
    if Mp != B:
        feats = jnp.pad(feats, ((0, Mp - B), (0, 0)))

    # fused actor1 + critic1: (Mp, 12544) @ (12544, 1024), LeakyReLU fused.
    K1 = feats.shape[1]
    N1 = params["h1w"].shape[1]
    h = fused_linear(feats, params["h1w"], params["h1b"], activate=True,
                     tm=Mp, tn=min(512, N1), tk=_pick_tk(K1, 2048))

    # fused actor2 + critic2 (block diagonal): (Mp, 1024) @ (1024, 128).
    N2 = params["h2w"].shape[1]
    out2 = fused_linear(h, params["h2w"], params["h2b"], activate=False,
                        tm=Mp, tn=N2, tk=_pick_tk(h.shape[1], 2048))

    logits = out2[:B, :output_size]                   # Categorical(logits=...)
    value = out2[:B, output_size:output_size + 1]
    return logits, value


# ----------------------------------------------------------------------------
# Pure-JAX reference (mirrors the PyTorch module) for a correctness check
# ----------------------------------------------------------------------------
def reference_forward(raw, state):
    prec = jax.lax.Precision.HIGHEST

    def conv(x, w, b, stride):
        y = jax.lax.conv_general_dilated(
            x, w, (stride, stride), "VALID",
            dimension_numbers=("NCHW", "OIHW", "NCHW"), precision=prec)
        y = y + b[None, :, None, None]
        return jnp.where(y >= 0, y, LEAKY_SLOPE * y)

    def lin(x, w, b, act):
        y = jnp.dot(x, w.T, precision=prec) + b
        return jnp.where(y >= 0, y, LEAKY_SLOPE * y) if act else y

    x = conv(state, raw["c1w"], raw["c1b"], 3)
    x = conv(x, raw["c2w"], raw["c2b"], 1)
    x = conv(x, raw["c3w"], raw["c3b"], 1)
    f = x.reshape(x.shape[0], -1)                     # channel-major flatten
    h_a = lin(f, raw["a1w"], raw["a1b"], True)
    logits = lin(h_a, raw["a2w"], raw["a2b"], False)
    h_v = lin(f, raw["v1w"], raw["v1b"], True)
    value = lin(h_v, raw["v2w"], raw["v2b"], False)
    return logits, value


if __name__ == "__main__":
    # flattened_size = 64*14*14 implies 56x56 input spatial resolution.
    B, C_IN, H, W = 2, 4, 56, 56
    OUTPUT_SIZE = 6

    key = jax.random.PRNGKey(0)
    k_state, k_params = jax.random.split(key)
    state = jax.random.normal(k_state, (B, C_IN, H, W), jnp.float32)

    raw_params = init_params(k_params, C_IN, OUTPUT_SIZE)
    params = prepare_params(raw_params, OUTPUT_SIZE)   # one-time weight prep

    fwd = jax.jit(functools.partial(forward, output_size=OUTPUT_SIZE))
    logits, value = fwd(params, state)
    jax.block_until_ready((logits, value))

    assert logits.shape == (B, OUTPUT_SIZE), logits.shape
    assert value.shape == (B, 1), value.shape
    assert bool(jnp.all(jnp.isfinite(logits))) and bool(jnp.all(jnp.isfinite(value)))

    ref_logits, ref_value = reference_forward(raw_params, state)
    assert bool(jnp.allclose(logits, ref_logits, rtol=2e-3, atol=2e-3))
    assert bool(jnp.allclose(value, ref_value, rtol=2e-3, atol=2e-3))

    print("KERNEL_OK")
</pallas_src>

<mosaic_0001>
module attributes {stable_mosaic.version = 11 : i64} {
  func.func @_linear_kernel_oneshot(%arg0: i32, %arg1: i32, %arg2: memref<648x128xf32, #tpu.memory_space<vmem>>, %arg3: memref<128x128xf32, #tpu.memory_space<vmem>>, %arg4: memref<1x128xf32, #tpu.memory_space<vmem>>, %arg5: memref<648x128xf32, #tpu.memory_space<vmem>>) attributes {dimension_semantics = [#tpu.dimension_semantics<parallel>, #tpu.dimension_semantics<parallel>], iteration_bounds = array<i64: 1, 1>, scalar_prefetch = 0 : i64, scratch_operands = 0 : i64, tpu.core_type = #tpu.core_type<tc>, window_params = [{transform_indices = @transform_0, window_bounds = array<i64: 648, 128>}, {transform_indices = @transform_1, window_bounds = array<i64: 128, 128>}, {transform_indices = @transform_2, window_bounds = array<i64: 1, 128>}, {transform_indices = @transform_3, window_bounds = array<i64: 648, 128>}]} {
    %c0 = arith.constant 0 : index
    %c0_0 = arith.constant 0 : index
    %0 = vector.load %arg2[%c0, %c0_0] : memref<648x128xf32, #tpu.memory_space<vmem>>, vector<648x128xf32>
    %c0_1 = arith.constant 0 : index
    %c0_2 = arith.constant 0 : index
    %1 = vector.load %arg3[%c0_1, %c0_2] : memref<128x128xf32, #tpu.memory_space<vmem>>, vector<128x128xf32>
    %cst = arith.constant dense<0.000000e+00> : vector<648x128xf32>
    %2 = tpu.matmul %0, %1, %cst {dimension_numbers = #tpu.dot_dimension_numbers<[1], [0], [0], [1], [0, 0, 1, 1], [], []>} : vector<648x128xf32>, vector<128x128xf32>, vector<648x128xf32> -> vector<648x128xf32>
    %c0_3 = arith.constant 0 : index
    %c0_4 = arith.constant 0 : index
    %3 = vector.load %arg4[%c0_3, %c0_4] : memref<1x128xf32, #tpu.memory_space<vmem>>, vector<1x128xf32>
    %4 = vector.broadcast %3 : vector<1x128xf32> to vector<648x128xf32>
    %5 = arith.addf %2, %4 : vector<648x128xf32>
    %cst_5 = arith.constant 0.000000e+00 : f32
    %6 = vector.broadcast %cst_5 : f32 to vector<648x128xf32>
    %7 = arith.cmpf oge, %5, %6 : vector<648x128xf32>
    %cst_6 = arith.constant 0.00999999977 : f32
    %8 = vector.broadcast %cst_6 : f32 to vector<648x128xf32>
    %9 = arith.mulf %8, %5 : vector<648x128xf32>
    %10 = arith.select %7, %5, %9 : vector<648x128xi1>, vector<648x128xf32>
    %c0_7 = arith.constant 0 : index
    %c0_8 = arith.constant 0 : index
    %11 = vector.load %arg5[%c0_7, %c0_8] : memref<648x128xf32, #tpu.memory_space<vmem>>, vector<648x128xf32>
    tpu.vector_store %arg5[%c0_7, %c0_8], %10 {strides = array<i32>} : memref<648x128xf32, #tpu.memory_space<vmem>>, vector<648x128xf32>,
    return
  }
  func.func @transform_0(%arg0: i32, %arg1: i32) -> (i32, i32) {
    %c0_i32 = arith.constant 0 : i32
    %c0_i32_0 = arith.constant 0 : i32
    return %arg0, %c0_i32 : i32, i32
  }
  func.func @transform_1(%arg0: i32, %arg1: i32) -> (i32, i32) {
    %c0_i32 = arith.constant 0 : i32
    %c0_i32_0 = arith.constant 0 : i32
    return %c0_i32, %arg1 : i32, i32
  }
  func.func @transform_2(%arg0: i32, %arg1: i32) -> (i32, i32) {
    %c0_i32 = arith.constant 0 : i32
    %c0_i32_0 = arith.constant 0 : i32
    return %c0_i32, %arg1 : i32, i32
  }
  func.func @transform_3(%arg0: i32, %arg1: i32) -> (i32, i32) {
    %c0_i32 = arith.constant 0 : i32
    return %arg0, %arg1 : i32, i32
  }
}

module attributes {stable_mosaic.version = 11 : i64} {
  func.func @_linear_kernel_oneshot(%arg0: i32, %arg1: i32, %arg2: memref<512x384xf32, #tpu.memory_space<vmem>>, %arg3: memref<384x128xf32, #tpu.memory_space<vmem>>, %arg4: memref<1x128xf32, #tpu.memory_space<vmem>>, %arg5: memref<512x128xf32, #tpu.memory_space<vmem>>) attributes {dimension_semantics = [#tpu.dimension_semantics<parallel>, #tpu.dimension_semantics<parallel>], iteration_bounds = array<i64: 1, 1>, scalar_prefetch = 0 : i64, scratch_operands = 0 : i64, tpu.core_type = #tpu.core_type<tc>, window_params = [{transform_indices = @transform_0, window_bounds = array<i64: 512, 384>}, {transform_indices = @transform_1, window_bounds = array<i64: 384, 128>}, {transform_indices = @transform_2, window_bounds = array<i64: 1, 128>}, {transform_indices = @transform_3, window_bounds = array<i64: 512, 128>}]} {
    %c0 = arith.constant 0 : index
    %c0_0 = arith.constant 0 : index
    %0 = vector.load %arg2[%c0, %c0_0] : memref<512x384xf32, #tpu.memory_space<vmem>>, vector<512x384xf32>
    %c0_1 = arith.constant 0 : index
    %c0_2 = arith.constant 0 : index
    %1 = vector.load %arg3[%c0_1, %c0_2] : memref<384x128xf32, #tpu.memory_space<vmem>>, vector<384x128xf32>
    %cst = arith.constant dense<0.000000e+00> : vector<512x128xf32>
    %2 = tpu.matmul %0, %1, %cst {dimension_numbers = #tpu.dot_dimension_numbers<[1], [0], [0], [1], [0, 0, 1, 1], [], []>} : vector<512x384xf32>, vector<384x128xf32>, vector<512x128xf32> -> vector<512x128xf32>
    %c0_3 = arith.constant 0 : index
    %c0_4 = arith.constant 0 : index
    %3 = vector.load %arg4[%c0_3, %c0_4] : memref<1x128xf32, #tpu.memory_space<vmem>>, vector<1x128xf32>
    %4 = vector.broadcast %3 : vector<1x128xf32> to vector<512x128xf32>
    %5 = arith.addf %2, %4 : vector<512x128xf32>
    %cst_5 = arith.constant 0.000000e+00 : f32
    %6 = vector.broadcast %cst_5 : f32 to vector<512x128xf32>
    %7 = arith.cmpf oge, %5, %6 : vector<512x128xf32>
    %cst_6 = arith.constant 0.00999999977 : f32
    %8 = vector.broadcast %cst_6 : f32 to vector<512x128xf32>
    %9 = arith.mulf %8, %5 : vector<512x128xf32>
    %10 = arith.select %7, %5, %9 : vector<512x128xi1>, vector<512x128xf32>
    %c0_7 = arith.constant 0 : index
    %c0_8 = arith.constant 0 : index
    %11 = vector.load %arg5[%c0_7, %c0_8] : memref<512x128xf32, #tpu.memory_space<vmem>>, vector<512x128xf32>
    tpu.vector_store %arg5[%c0_7, %c0_8], %10 {strides = array<i32>} : memref<512x128xf32, #tpu.memory_space<vmem>>, vector<512x128xf32>,
    return
  }
  func.func @transform_0(%arg0: i32, %arg1: i32) -> (i32, i32) {
    %c0_i32 = arith.constant 0 : i32
    %c0_i32_0 = arith.constant 0 : i32
    return %arg0, %c0_i32 : i32, i32
  }
  func.func @transform_1(%arg0: i32, %arg1: i32) -> (i32, i32) {
    %c0_i32 = arith.constant 0 : i32
    %c0_i32_0 = arith.constant 0 : i32
    return %c0_i32, %arg1 : i32, i32
  }
  func.func @transform_2(%arg0: i32, %arg1: i32) -> (i32, i32) {
    %c0_i32 = arith.constant 0 : i32
    %c0_i32_0 = arith.constant 0 : i32
    return %c0_i32, %arg1 : i32, i32
  }
  func.func @transform_3(%arg0: i32, %arg1: i32) -> (i32, i32) {
    %c0_i32 = arith.constant 0 : i32
    return %arg0, %arg1 : i32, i32
  }
}

module attributes {stable_mosaic.version = 11 : i64} {
  func.func @_linear_kernel_oneshot(%arg0: i32, %arg1: i32, %arg2: memref<392x640xf32, #tpu.memory_space<vmem>>, %arg3: memref<640x128xf32, #tpu.memory_space<vmem>>, %arg4: memref<1x128xf32, #tpu.memory_space<vmem>>, %arg5: memref<392x128xf32, #tpu.memory_space<vmem>>) attributes {dimension_semantics = [#tpu.dimension_semantics<parallel>, #tpu.dimension_semantics<parallel>], iteration_bounds = array<i64: 1, 1>, scalar_prefetch = 0 : i64, scratch_operands = 0 : i64, tpu.core_type = #tpu.core_type<tc>, window_params = [{transform_indices = @transform_0, window_bounds = array<i64: 392, 640>}, {transform_indices = @transform_1, window_bounds = array<i64: 640, 128>}, {transform_indices = @transform_2, window_bounds = array<i64: 1, 128>}, {transform_indices = @transform_3, window_bounds = array<i64: 392, 128>}]} {
    %c0 = arith.constant 0 : index
    %c0_0 = arith.constant 0 : index
    %0 = vector.load %arg2[%c0, %c0_0] : memref<392x640xf32, #tpu.memory_space<vmem>>, vector<392x640xf32>
    %c0_1 = arith.constant 0 : index
    %c0_2 = arith.constant 0 : index
    %1 = vector.load %arg3[%c0_1, %c0_2] : memref<640x128xf32, #tpu.memory_space<vmem>>, vector<640x128xf32>
    %cst = arith.constant dense<0.000000e+00> : vector<392x128xf32>
    %2 = tpu.matmul %0, %1, %cst {dimension_numbers = #tpu.dot_dimension_numbers<[1], [0], [0], [1], [0, 0, 1, 1], [], []>} : vector<392x640xf32>, vector<640x128xf32>, vector<392x128xf32> -> vector<392x128xf32>
    %c0_3 = arith.constant 0 : index
    %c0_4 = arith.constant 0 : index
    %3 = vector.load %arg4[%c0_3, %c0_4] : memref<1x128xf32, #tpu.memory_space<vmem>>, vector<1x128xf32>
    %4 = vector.broadcast %3 : vector<1x128xf32> to vector<392x128xf32>
    %5 = arith.addf %2, %4 : vector<392x128xf32>
    %cst_5 = arith.constant 0.000000e+00 : f32
    %6 = vector.broadcast %cst_5 : f32 to vector<392x128xf32>
    %7 = arith.cmpf oge, %5, %6 : vector<392x128xf32>
    %cst_6 = arith.constant 0.00999999977 : f32
    %8 = vector.broadcast %cst_6 : f32 to vector<392x128xf32>
    %9 = arith.mulf %8, %5 : vector<392x128xf32>
    %10 = arith.select %7, %5, %9 : vector<392x128xi1>, vector<392x128xf32>
    %c0_7 = arith.constant 0 : index
    %c0_8 = arith.constant 0 : index
    %11 = vector.load %arg5[%c0_7, %c0_8] : memref<392x128xf32, #tpu.memory_space<vmem>>, vector<392x128xf32>
    tpu.vector_store %arg5[%c0_7, %c0_8], %10 {strides = array<i32>} : memref<392x128xf32, #tpu.memory_space<vmem>>, vector<392x128xf32>,
    return
  }
  func.func @transform_0(%arg0: i32, %arg1: i32) -> (i32, i32) {
    %c0_i32 = arith.constant 0 : i32
    %c0_i32_0 = arith.constant 0 : i32
    return %arg0, %c0_i32 : i32, i32
  }
  func.func @transform_1(%arg0: i32, %arg1: i32) -> (i32, i32) {
    %c0_i32 = arith.constant 0 : i32
    %c0_i32_0 = arith.constant 0 : i32
    return %c0_i32, %arg1 : i32, i32
  }
  func.func @transform_2(%arg0: i32, %arg1: i32) -> (i32, i32) {
    %c0_i32 = arith.constant 0 : i32
    %c0_i32_0 = arith.constant 0 : i32
    return %c0_i32, %arg1 : i32, i32
  }
  func.func @transform_3(%arg0: i32, %arg1: i32) -> (i32, i32) {
    %c0_i32 = arith.constant 0 : i32
    return %arg0, %arg1 : i32, i32
  }
}

module attributes {stable_mosaic.version = 11 : i64} {
  func.func @_linear_kernel_acc(%arg0: i32, %arg1: i32, %arg2: i32, %arg3: memref<8x1792xf32, #tpu.memory_space<vmem>>, %arg4: memref<1792x512xf32, #tpu.memory_space<vmem>>, %arg5: memref<1x512xf32, #tpu.memory_space<vmem>>, %arg6: memref<8x512xf32, #tpu.memory_space<vmem>>, %arg7: memref<8x512xf32, #tpu.memory_space<vmem>>) attributes {dimension_semantics = [#tpu.dimension_semantics<parallel>, #tpu.dimension_semantics<parallel>, #tpu.dimension_semantics<arbitrary>], iteration_bounds = array<i64: 1, 2, 7>, scalar_prefetch = 0 : i64, scratch_operands = 1 : i64, tpu.core_type = #tpu.core_type<tc>, window_params = [{transform_indices = @transform_0, window_bounds = array<i64: 8, 1792>}, {transform_indices = @transform_1, window_bounds = array<i64: 1792, 512>}, {transform_indices = @transform_2, window_bounds = array<i64: 1, 512>}, {transform_indices = @transform_3, window_bounds = array<i64: 8, 512>}]} {
    %c0_i32 = arith.constant 0 : i32
    %0 = arith.cmpi eq, %arg2, %c0_i32 : i32
    %1 = arith.extui %0 : i1 to i32
    %c0_i32_0 = arith.constant 0 : i32
    %2 = arith.cmpi ne, %1, %c0_i32_0 : i32
    scf.if %2 {
      %cst_9 = arith.constant 0.000000e+00 : f32
      %12 = vector.broadcast %cst_9 : f32 to vector<8x512xf32>
      %c0_10 = arith.constant 0 : index
      %c0_11 = arith.constant 0 : index
      %13 = vector.load %arg7[%c0_10, %c0_11] : memref<8x512xf32, #tpu.memory_space<vmem>>, vector<8x512xf32>
      tpu.vector_store %arg7[%c0_10, %c0_11], %12 {strides = array<i32>} : memref<8x512xf32, #tpu.memory_space<vmem>>, vector<8x512xf32>,
    } else {
    }
    %c0 = arith.constant 0 : index
    %c0_1 = arith.constant 0 : index
    %3 = vector.load %arg7[%c0, %c0_1] : memref<8x512xf32, #tpu.memory_space<vmem>>, vector<8x512xf32>
    %c0_2 = arith.constant 0 : index
    %c0_3 = arith.constant 0 : index
    %4 = vector.load %arg3[%c0_2, %c0_3] : memref<8x1792xf32, #tpu.memory_space<vmem>>, vector<8x1792xf32>
    %c0_4 = arith.constant 0 : index
    %c0_5 = arith.constant 0 : index
    %5 = vector.load %arg4[%c0_4, %c0_5] : memref<1792x512xf32, #tpu.memory_space<vmem>>, vector<1792x512xf32>
    %cst = arith.constant dense<0.000000e+00> : vector<8x512xf32>
    %6 = tpu.matmul %4, %5, %cst {dimension_numbers = #tpu.dot_dimension_numbers<[1], [0], [0], [1], [0, 0, 1, 1], [], []>} : vector<8x1792xf32>, vector<1792x512xf32>, vector<8x512xf32> -> vector<8x512xf32>
    %7 = arith.addf %3, %6 : vector<8x512xf32>
    %c0_6 = arith.constant 0 : index
    %c0_7 = arith.constant 0 : index
    %8 = vector.load %arg7[%c0_6, %c0_7] : memref<8x512xf32, #tpu.memory_space<vmem>>, vector<8x512xf32>
    tpu.vector_store %arg7[%c0_6, %c0_7], %7 {strides = array<i32>} : memref<8x512xf32, #tpu.memory_space<vmem>>, vector<8x512xf32>,
    %c6_i32 = arith.constant 6 : i32
    %9 = arith.cmpi eq, %arg2, %c6_i32 : i32
    %10 = arith.extui %9 : i1 to i32
    %c0_i32_8 = arith.constant 0 : i32
    %11 = arith.cmpi ne, %10, %c0_i32_8 : i32
    scf.if %11 {
      %c0_9 = arith.constant 0 : index
      %c0_10 = arith.constant 0 : index
      %12 = vector.load %arg7[%c0_9, %c0_10] : memref<8x512xf32, #tpu.memory_space<vmem>>, vector<8x512xf32>
      %c0_11 = arith.constant 0 : index
      %c0_12 = arith.constant 0 : index
      %13 = vector.load %arg5[%c0_11, %c0_12] : memref<1x512xf32, #tpu.memory_space<vmem>>, vector<1x512xf32>
      %14 = vector.broadcast %13 : vector<1x512xf32> to vector<8x512xf32>
      %15 = arith.addf %12, %14 : vector<8x512xf32>
      %cst_13 = arith.constant 0.000000e+00 : f32
      %16 = vector.broadcast %cst_13 : f32 to vector<8x512xf32>
      %17 = arith.cmpf oge, %15, %16 : vector<8x512xf32>
      %cst_14 = arith.constant 0.00999999977 : f32
      %18 = vector.broadcast %cst_14 : f32 to vector<8x512xf32>
      %19 = arith.mulf %18, %15 : vector<8x512xf32>
      %20 = arith.select %17, %15, %19 : vector<8x512xi1>, vector<8x512xf32>
      %c0_15 = arith.constant 0 : index
      %c0_16 = arith.constant 0 : index
      %21 = vector.load %arg6[%c0_15, %c0_16] : memref<8x512xf32, #tpu.memory_space<vmem>>, vector<8x512xf32>
      tpu.vector_store %arg6[%c0_15, %c0_16], %20 {strides = array<i32>} : memref<8x512xf32, #tpu.memory_space<vmem>>, vector<8x512xf32>,
    } else {
    }
    return
  }
  func.func @transform_0(%arg0: i32, %arg1: i32, %arg2: i32) -> (i32, i32) {
    %c0_i32 = arith.constant 0 : i32
    return %arg0, %arg2 : i32, i32
  }
  func.func @transform_1(%arg0: i32, %arg1: i32, %arg2: i32) -> (i32, i32) {
    %c0_i32 = arith.constant 0 : i32
    return %arg2, %arg1 : i32, i32
  }
  func.func @transform_2(%arg0: i32, %arg1: i32, %arg2: i32) -> (i32, i32) {
    %c0_i32 = arith.constant 0 : i32
    %c0_i32_0 = arith.constant 0 : i32
    return %c0_i32, %arg1 : i32, i32
  }
  func.func @transform_3(%arg0: i32, %arg1: i32, %arg2: i32) -> (i32, i32) {
    %c0_i32 = arith.constant 0 : i32
    return %arg0, %arg1 : i32, i32
  }
}

module attributes {stable_mosaic.version = 11 : i64} {
  func.func @_linear_kernel_oneshot(%arg0: i32, %arg1: i32, %arg2: memref<8x1024xf32, #tpu.memory_space<vmem>>, %arg3: memref<1024x128xf32, #tpu.memory_space<vmem>>, %arg4: memref<1x128xf32, #tpu.memory_space<vmem>>, %arg5: memref<8x128xf32, #tpu.memory_space<vmem>>) attributes {dimension_semantics = [#tpu.dimension_semantics<parallel>, #tpu.dimension_semantics<parallel>], iteration_bounds = array<i64: 1, 1>, scalar_prefetch = 0 : i64, scratch_operands = 0 : i64, tpu.core_type = #tpu.core_type<tc>, window_params = [{transform_indices = @transform_0, window_bounds = array<i64: 8, 1024>}, {transform_indices = @transform_1, window_bounds = array<i64: 1024, 128>}, {transform_indices = @transform_2, window_bounds = array<i64: 1, 128>}, {transform_indices = @transform_3, window_bounds = array<i64: 8, 128>}]} {
    %c0 = arith.constant 0 : index
    %c0_0 = arith.constant 0 : index
    %0 = vector.load %arg2[%c0, %c0_0] : memref<8x1024xf32, #tpu.memory_space<vmem>>, vector<8x1024xf32>
    %c0_1 = arith.constant 0 : index
    %c0_2 = arith.constant 0 : index
    %1 = vector.load %arg3[%c0_1, %c0_2] : memref<1024x128xf32, #tpu.memory_space<vmem>>, vector<1024x128xf32>
    %cst = arith.constant dense<0.000000e+00> : vector<8x128xf32>
    %2 = tpu.matmul %0, %1, %cst {dimension_numbers = #tpu.dot_dimension_numbers<[1], [0], [0], [1], [0, 0, 1, 1], [], []>} : vector<8x1024xf32>, vector<1024x128xf32>, vector<8x128xf32> -> vector<8x128xf32>
    %c0_3 = arith.constant 0 : index
    %c0_4 = arith.constant 0 : index
    %3 = vector.load %arg4[%c0_3, %c0_4] : memref<1x128xf32, #tpu.memory_space<vmem>>, vector<1x128xf32>
    %4 = vector.broadcast %3 : vector<1x128xf32> to vector<8x128xf32>
    %5 = arith.addf %2, %4 : vector<8x128xf32>
    %c0_5 = arith.constant 0 : index
    %c0_6 = arith.constant 0 : index
    %6 = vector.load %arg5[%c0_5, %c0_6] : memref<8x128xf32, #tpu.memory_space<vmem>>, vector<8x128xf32>
    tpu.vector_store %arg5[%c0_5, %c0_6], %5 {strides = array<i32>} : memref<8x128xf32, #tpu.memory_space<vmem>>, vector<8x128xf32>,
    return
  }
  func.func @transform_0(%arg0: i32, %arg1: i32) -> (i32, i32) {
    %c0_i32 = arith.constant 0 : i32
    %c0_i32_0 = arith.constant 0 : i32
    return %arg0, %c0_i32 : i32, i32
  }
  func.func @transform_1(%arg0: i32, %arg1: i32) -> (i32, i32) {
    %c0_i32 = arith.constant 0 : i32
    %c0_i32_0 = arith.constant 0 : i32
    return %c0_i32, %arg1 : i32, i32
  }
  func.func @transform_2(%arg0: i32, %arg1: i32) -> (i32, i32) {
    %c0_i32 = arith.constant 0 : i32
    %c0_i32_0 = arith.constant 0 : i32
    return %c0_i32, %arg1 : i32, i32
  }
  func.func @transform_3(%arg0: i32, %arg1: i32) -> (i32, i32) {
    %c0_i32 = arith.constant 0 : i32
    return %arg0, %arg1 : i32, i32
  }
}

</mosaic_0001>

<llo_original>
// kernel: forward.5
$region0: #{forward.5}
  #allocation0 [shape = 'u32[]', space=smem, size = 0x4, offset = 0x4, fixed_abs, tag = 'smem constant byte address 0x4 - core index']
  #allocation1 [shape = 'u32[144,128]{1,0:T(1,128)}', space=vmem, size = 0x12000, scoped, tag = 'internal scratch']
  %s0 = inlined_call_operand.vmem [shape: f32[648,128], index: 0, kind: input, shape index: {}]
  %s1 = inlined_call_operand.hbm [shape: f32[128,128], index: 1, kind: input, shape index: {}]
  %s2 = inlined_call_operand.hbm [shape: f32[1,128], index: 2, kind: input, shape index: {}]
  %s3 = inlined_call_operand.vmem [shape: f32[648,128], index: 3, kind: output, shape index: {}]
  %s4 = sld [smem:[#allocation0]]
  $region30: #{forward.5} parent=0
    _
  %s6 = ssub.s32 1, %s4
  %s7 = scalar_select 0, %s6, %s4
  $region1: #{forward.5} parent=0
    #allocation2 [shape = 'u8[65536]{0}', space=vmem, size = 0x10000, scoped, tag = 'input window, operand 1, single buffered']
    #allocation3 [shape = 's32[1]{0}', space=sflag, size = 0x4, scoped, tag = 'scoped memory for forward.5']
    #allocation4 [shape = 'u8[512]{0}', space=vmem, size = 0x400, scoped, tag = 'input window, operand 2, single buffered']
    #allocation5 [shape = 's32[1]{0}', space=sflag, size = 0x4, scoped, tag = 'scoped memory for forward.5']
    %8 = vsyncpa [#allocation3], 0
    %9 = vsyncpa [#allocation5], 0
    // Predicated region
    $region2: #{forward.5} parent=1 // pred_check
      _
    $region3: #{forward.5} parent=1 // pred_check_branch
      %11 = sbr.rel (0) target = $region5
    $region4: #{forward.5} parent=1 // pred_region
      _
    $region5: #{forward.5} parent=1 // pred_fallthru
      _
    // Predicated region
    $region6: #{forward.5} parent=1 // pred_check
      _
    $region7: #{forward.5} parent=1 // pred_check_branch
      %13 = sbr.rel (0) target = $region9
    $region8: #{forward.5} parent=1 // pred_region
      %s15 = ssub.s32 2048, 2048
      %16 = vsyncadd [#allocation3], %s15
      %s17 = sshll.u32 [#allocation2], 4
      %s18 = int_to_ptr.vmem [resolvable:$true] %s17
      %23 = dma.hbm_to_vmem [thread:$0]  %s1, 2048, %s18, [#allocation3], 128, 128, 8
    $region9: #{forward.5} parent=1 // pred_fallthru
      _
    // Predicated region
    $region10: #{forward.5} parent=1 // pred_check
      _
    $region11: #{forward.5} parent=1 // pred_check_branch
      %25 = sbr.rel (0) target = $region13
    $region12: #{forward.5} parent=1 // pred_region
      %s27 = ssub.s32 16, 16
      %28 = vsyncadd [#allocation5], %s27
      %s30 = sshll.u32 [#allocation4], 4
      %s31 = int_to_ptr.vmem [resolvable:$true] %s30
      %33 = dma.hbm_to_vmem [thread:$0]  %s2, 16, %s31, [#allocation5]
    $region13: #{forward.5} parent=1 // pred_fallthru
      _
    // Predicated region
    $region14: #{forward.5} parent=1 // pred_check
      _
    $region15: #{forward.5} parent=1 // pred_check_branch
      %35 = sbr.rel (0) target = $region17
    $region16: #{forward.5} parent=1 // pred_region
      %36 = dma.done [#allocation3], 2048
    $region17: #{forward.5} parent=1 // pred_fallthru
      _
    // Predicated region
    $region18: #{forward.5} parent=1 // pred_check
      _
    $region19: #{forward.5} parent=1 // pred_check_branch
      %38 = sbr.rel (0) target = $region21
    $region20: #{forward.5} parent=1 // pred_region
      %39 = dma.done [#allocation5], 16
    $region21: #{forward.5} parent=1 // pred_fallthru
      _
    %v40 = vld [vmem:[%s0] sm:$0xff]
    %v41 = vld [vmem:[%s0 + $0x8] sm:$0xff]
    %v42 = vld [vmem:[%s0 + $0x10] sm:$0xff]
    %v43 = vld [vmem:[%s0 + $0x18] sm:$0xff]
    %v44 = vld [vmem:[%s0 + $0x20] sm:$0xff]
    %v45 = vld [vmem:[%s0 + $0x28] sm:$0xff]
    %v46 = vld [vmem:[%s0 + $0x30] sm:$0xff]
    %v47 = vld [vmem:[%s0 + $0x38] sm:$0xff]
    %v48 = vld [vmem:[%s0 + $0x40] sm:$0xff]
    %v49 = vld [vmem:[%s0 + $0x48] sm:$0xff]
    %v50 = vld [vmem:[%s0 + $0x50] sm:$0xff]
    %v51 = vld [vmem:[%s0 + $0x58] sm:$0xff]
    %v52 = vld [vmem:[%s0 + $0x60] sm:$0xff]
    %v53 = vld [vmem:[%s0 + $0x68] sm:$0xff]
    %v54 = vld [vmem:[%s0 + $0x70] sm:$0xff]
    %v55 = vld [vmem:[%s0 + $0x78] sm:$0xff]
    %v56 = vld [vmem:[%s0 + $0x80] sm:$0xff]
    %v57 = vld [vmem:[%s0 + $0x88] sm:$0xff]
    %v58 = vld [vmem:[%s0 + $0x90] sm:$0xff]
    %v59 = vld [vmem:[%s0 + $0x98] sm:$0xff]
    %v60 = vld [vmem:[%s0 + $0xa0] sm:$0xff]
    %v61 = vld [vmem:[%s0 + $0xa8] sm:$0xff]
    %v62 = vld [vmem:[%s0 + $0xb0] sm:$0xff]
    %v63 = vld [vmem:[%s0 + $0xb8] sm:$0xff]
    %v64 = vld [vmem:[%s0 + $0xc0] sm:$0xff]
    %v65 = vld [vmem:[%s0 + $0xc8] sm:$0xff]
    %v66 = vld [vmem:[%s0 + $0xd0] sm:$0xff]
    %v67 = vld [vmem:[%s0 + $0xd8] sm:$0xff]
    %v68 = vld [vmem:[%s0 + $0xe0] sm:$0xff]
    %v69 = vld [vmem:[%s0 + $0xe8] sm:$0xff]
    %v70 = vld [vmem:[%s0 + $0xf0] sm:$0xff]
    %v71 = vld [vmem:[%s0 + $0xf8] sm:$0xff]
    %v72 = vld [vmem:[%s0 + $0x100] sm:$0xff]
    %v73 = vld [vmem:[%s0 + $0x108] sm:$0xff]
    %v74 = vld [vmem:[%s0 + $0x110] sm:$0xff]
    %v75 = vld [vmem:[%s0 + $0x118] sm:$0xff]
    %v76 = vld [vmem:[%s0 + $0x120] sm:$0xff]
    %v77 = vld [vmem:[%s0 + $0x128] sm:$0xff]
    %v78 = vld [vmem:[%s0 + $0x130] sm:$0xff]
    %v79 = vld [vmem:[%s0 + $0x138] sm:$0xff]
    %v80 = vld [vmem:[%s0 + $0x140] sm:$0xff]
    %v81 = vld [vmem:[%s0 + $0x148] sm:$0xff]
    %v82 = vld [vmem:[%s0 + $0x150] sm:$0xff]
    %v83 = vld [vmem:[%s0 + $0x158] sm:$0xff]
    %v84 = vld [vmem:[%s0 + $0x160] sm:$0xff]
    %v85 = vld [vmem:[%s0 + $0x168] sm:$0xff]
    %v86 = vld [vmem:[%s0 + $0x170] sm:$0xff]
    %v87 = vld [vmem:[%s0 + $0x178] sm:$0xff]
    %v88 = vld [vmem:[%s0 + $0x180] sm:$0xff]
    %v89 = vld [vmem:[%s0 + $0x188] sm:$0xff]
    %v90 = vld [vmem:[%s0 + $0x190] sm:$0xff]
    %v91 = vld [vmem:[%s0 + $0x198] sm:$0xff]
    %v92 = vld [vmem:[%s0 + $0x1a0] sm:$0xff]
    %v93 = vld [vmem:[%s0 + $0x1a8] sm:$0xff]
    %v94 = vld [vmem:[%s0 + $0x1b0] sm:$0xff]
    %v95 = vld [vmem:[%s0 + $0x1b8] sm:$0xff]
    %v96 = vld [vmem:[%s0 + $0x1c0] sm:$0xff]
    %v97 = vld [vmem:[%s0 + $0x1c8] sm:$0xff]
    %v98 = vld [vmem:[%s0 + $0x1d0] sm:$0xff]
    %v99 = vld [vmem:[%s0 + $0x1d8] sm:$0xff]
    %v100 = vld [vmem:[%s0 + $0x1e0] sm:$0xff]
    %v101 = vld [vmem:[%s0 + $0x1e8] sm:$0xff]
    %v102 = vld [vmem:[%s0 + $0x1f0] sm:$0xff]
    %v103 = vld [vmem:[%s0 + $0x1f8] sm:$0xff]
    %v104 = vld [vmem:[%s0 + $0x200] sm:$0xff]
    %v105 = vld [vmem:[%s0 + $0x208] sm:$0xff]
    %v106 = vld [vmem:[%s0 + $0x210] sm:$0xff]
    %v107 = vld [vmem:[%s0 + $0x218] sm:$0xff]
    %v108 = vld [vmem:[%s0 + $0x220] sm:$0xff]
    %v109 = vld [vmem:[%s0 + $0x228] sm:$0xff]
    %v110 = vld [vmem:[%s0 + $0x230] sm:$0xff]
    %v111 = vld [vmem:[%s0 + $0x238] sm:$0xff]
    %v112 = vld [vmem:[%s0 + $0x240] sm:$0xff]
    %v113 = vld [vmem:[%s0 + $0x248] sm:$0xff]
    %v114 = vld [vmem:[%s0 + $0x250] sm:$0xff]
    %v115 = vld [vmem:[%s0 + $0x258] sm:$0xff]
    %v116 = vld [vmem:[%s0 + $0x260] sm:$0xff]
    %v117 = vld [vmem:[%s0 + $0x268] sm:$0xff]
    %v118 = vld [vmem:[%s0 + $0x270] sm:$0xff]
    %v119 = vld [vmem:[%s0 + $0x278] sm:$0xff]
    %v120 = vld [vmem:[%s0 + $0x280] sm:$0xff]
    %v121 = vld [vmem:[#allocation2] sm:$0xff]
    %v122 = vld [vmem:[#allocation2 + $0x8] sm:$0xff]
    %v123 = vld [vmem:[#allocation2 + $0x10] sm:$0xff]
    %v124 = vld [vmem:[#allocation2 + $0x18] sm:$0xff]
    %v125 = vld [vmem:[#allocation2 + $0x20] sm:$0xff]
    %v126 = vld [vmem:[#allocation2 + $0x28] sm:$0xff]
    %v127 = vld [vmem:[#allocation2 + $0x30] sm:$0xff]
    %v128 = vld [vmem:[#allocation2 + $0x38] sm:$0xff]
    %v129 = vld [vmem:[#allocation2 + $0x40] sm:$0xff]
    %v130 = vld [vmem:[#allocation2 + $0x48] sm:$0xff]
    %v131 = vld [vmem:[#allocation2 + $0x50] sm:$0xff]
    %v132 = vld [vmem:[#allocation2 + $0x58] sm:$0xff]
    %v133 = vld [vmem:[#allocation2 + $0x60] sm:$0xff]
    %v134 = vld [vmem:[#allocation2 + $0x68] sm:$0xff]
    %v135 = vld [vmem:[#allocation2 + $0x70] sm:$0xff]
    %v136 = vld [vmem:[#allocation2 + $0x78] sm:$0xff]
    %v137 = vld [vmem:[#allocation4] sm:$0x1]
    %v139 = vlaneseq
    %v140 = vshrl.u32 %v139, 7
    %v141 = vsub.s32 0, %v140
    %v142 = vrot.slane %v137, %v141
    %144 = vmatprep.subr.mxu0 0.0
    %145 = vmatpush1.msra.mxu0 %v136
    %146 = vmatprep.subr.mxu0 0.0
    %147 = vmatpush1.msra.mxu0 %v135
    %148 = vmatprep.subr.mxu0 0.0
    %149 = vmatpush1.msra.mxu0 %v134
    %150 = vmatprep.subr.mxu0 0.0
    %151 = vmatpush1.msra.mxu0 %v133
    %152 = vmatprep.subr.mxu0 0.0
    %153 = vmatpush1.msra.mxu0 %v132
    %154 = vmatprep.subr.mxu0 0.0
    %155 = vmatpush1.msra.mxu0 %v131
    %156 = vmatprep.subr.mxu0 0.0
    %157 = vmatpush1.msra.mxu0 %v130
    %158 = vmatprep.subr.mxu0 0.0
    %159 = vmatpush1.msra.mxu0 %v129
    %160 = vmatprep.subr.mxu0 0.0
    %161 = vmatpush1.msra.mxu0 %v128
    %162 = vmatprep.subr.mxu0 0.0
    %163 = vmatpush1.msra.mxu0 %v127
    %164 = vmatprep.subr.mxu0 0.0
    %165 = vmatpush1.msra.mxu0 %v126
    %166 = vmatprep.subr.mxu0 0.0
    %167 = vmatpush1.msra.mxu0 %v125
    %168 = vmatprep.subr.mxu0 0.0
    %169 = vmatpush1.msra.mxu0 %v124
    %170 = vmatprep.subr.mxu0 0.0
    %171 = vmatpush1.msra.mxu0 %v123
    %172 = vmatprep.subr.mxu0 0.0
    %173 = vmatpush1.msra.mxu0 %v122
    %174 = vmatprep.subr.mxu0 0.0
    %175 = vmatpush1.msra.mxu0 %v121
    %176 = vmatprep.subr.mxu0 0.0
    %177 = vmatpush2.msra.mxu0 0.0
    %178 = vmatprep.subr.mxu0 0.0
    %179 = vmatpush2.msra.mxu0 0.0
    %180 = vmatprep.subr.mxu0 0.0
    %181 = vmatpush2.msra.mxu0 0.0
    %182 = vmatprep.subr.mxu0 0.0
    %183 = vmatpush2.msra.mxu0 0.0
    %184 = vmatprep.subr.mxu0 0.0
    %185 = vmatpush2.msra.mxu0 0.0
    %186 = vmatprep.subr.mxu0 0.0
    %187 = vmatpush2.msra.mxu0 0.0
    %188 = vmatprep.subr.mxu0 0.0
    %189 = vmatpush2.msra.mxu0 0.0
    %190 = vmatprep.subr.mxu0 0.0
    %191 = vmatpush2.msra.mxu0 0.0
    %192 = vmatprep.subr.mxu0 0.0
    %193 = vmatpush2.msra.mxu0 0.0
    %194 = vmatprep.subr.mxu0 0.0
    %195 = vmatpush2.msra.mxu0 0.0
    %196 = vmatprep.subr.mxu0 0.0
    %197 = vmatpush2.msra.mxu0 0.0
    %198 = vmatprep.subr.mxu0 0.0
    %199 = vmatpush2.msra.mxu0 0.0
    %200 = vmatprep.subr.mxu0 0.0
    %201 = vmatpush2.msra.mxu0 0.0
    %202 = vmatprep.subr.mxu0 0.0
    %203 = vmatpush2.msra.mxu0 0.0
    %204 = vmatprep.subr.mxu0 0.0
    %205 = vmatpush2.msra.mxu0 0.0
    %206 = vmatprep.subr.mxu0 0.0
    %207 = vmatpush2.msra.mxu0 0.0
    %208 = vmatprep.mubr.f32.mxu0 0.0
    %209 = vmatmul.mubr.f32.gmra.mxu0 %v40
    %v210 = vpop.f32.mrf.mxu0
    %v211 = vadd.f32 %v142, %v210
    %v212 = vpop.f32.mrf.mxu0
    %213 = vmatprep.mubr.f32.mxu0 0.0
    %214 = vmatmul.mubr.f32.gmra.mxu0 %v41
    %v215 = vpop.f32.mrf.mxu0
    %v216 = vadd.f32 %v142, %v215
    %v217 = vpop.f32.mrf.mxu0
    %218 = vmatprep.mubr.f32.mxu0 0.0
    %219 = vmatmul.mubr.f32.gmra.mxu0 %v42
    %v220 = vpop.f32.mrf.mxu0
    %v221 = vadd.f32 %v142, %v220
    %v222 = vpop.f32.mrf.mxu0
    %223 = vmatprep.mubr.f32.mxu0 0.0
    %224 = vmatmul.mubr.f32.gmra.mxu0 %v43
    %v225 = vpop.f32.mrf.mxu0
    %v226 = vadd.f32 %v142, %v225
    %v227 = vpop.f32.mrf.mxu0
    %228 = vmatprep.mubr.f32.mxu0 0.0
    %229 = vmatmul.mubr.f32.gmra.mxu0 %v44
    %v230 = vpop.f32.mrf.mxu0
    %v231 = vadd.f32 %v142, %v230
    %v232 = vpop.f32.mrf.mxu0
    %233 = vmatprep.mubr.f32.mxu0 0.0
    %234 = vmatmul.mubr.f32.gmra.mxu0 %v45
    %v235 = vpop.f32.mrf.mxu0
    %v236 = vadd.f32 %v142, %v235
    %v237 = vpop.f32.mrf.mxu0
    %238 = vmatprep.mubr.f32.mxu0 0.0
    %239 = vmatmul.mubr.f32.gmra.mxu0 %v46
    %v240 = vpop.f32.mrf.mxu0
    %v241 = vadd.f32 %v142, %v240
    %v242 = vpop.f32.mrf.mxu0
    %243 = vmatprep.mubr.f32.mxu0 0.0
    %244 = vmatmul.mubr.f32.gmra.mxu0 %v47
    %v245 = vpop.f32.mrf.mxu0
    %v246 = vadd.f32 %v142, %v245
    %v247 = vpop.f32.mrf.mxu0
    %248 = vmatprep.mubr.f32.mxu0 0.0
    %249 = vmatmul.mubr.f32.gmra.mxu0 %v48
    %v250 = vpop.f32.mrf.mxu0
    %v251 = vadd.f32 %v142, %v250
    %v252 = vpop.f32.mrf.mxu0
    %253 = vmatprep.mubr.f32.mxu0 0.0
    %254 = vmatmul.mubr.f32.gmra.mxu0 %v49
    %v255 = vpop.f32.mrf.mxu0
    %v256 = vadd.f32 %v142, %v255
    %v257 = vpop.f32.mrf.mxu0
    %258 = vmatprep.mubr.f32.mxu0 0.0
    %259 = vmatmul.mubr.f32.gmra.mxu0 %v50
    %v260 = vpop.f32.mrf.mxu0
    %v261 = vadd.f32 %v142, %v260
    %v262 = vpop.f32.mrf.mxu0
    %263 = vmatprep.mubr.f32.mxu0 0.0
    %264 = vmatmul.mubr.f32.gmra.mxu0 %v51
    %v265 = vpop.f32.mrf.mxu0
    %v266 = vadd.f32 %v142, %v265
    %v267 = vpop.f32.mrf.mxu0
    %268 = vmatprep.mubr.f32.mxu0 0.0
    %269 = vmatmul.mubr.f32.gmra.mxu0 %v52
    %v270 = vpop.f32.mrf.mxu0
    %v271 = vadd.f32 %v142, %v270
    %v272 = vpop.f32.mrf.mxu0
    %273 = vmatprep.mubr.f32.mxu0 0.0
    %274 = vmatmul.mubr.f32.gmra.mxu0 %v53
    %v275 = vpop.f32.mrf.mxu0
    %v276 = vadd.f32 %v142, %v275
    %v277 = vpop.f32.mrf.mxu0
    %278 = vmatprep.mubr.f32.mxu0 0.0
    %279 = vmatmul.mubr.f32.gmra.mxu0 %v54
    %v280 = vpop.f32.mrf.mxu0
    %v281 = vadd.f32 %v142, %v280
    %v282 = vpop.f32.mrf.mxu0
    %283 = vmatprep.mubr.f32.mxu0 0.0
    %284 = vmatmul.mubr.f32.gmra.mxu0 %v55
    %v285 = vpop.f32.mrf.mxu0
    %v286 = vadd.f32 %v142, %v285
    %v287 = vpop.f32.mrf.mxu0
    %288 = vmatprep.mubr.f32.mxu0 0.0
    %289 = vmatmul.mubr.f32.gmra.mxu0 %v56
    %v290 = vpop.f32.mrf.mxu0
    %v291 = vadd.f32 %v142, %v290
    %v292 = vpop.f32.mrf.mxu0
    %293 = vmatprep.mubr.f32.mxu0 0.0
    %294 = vmatmul.mubr.f32.gmra.mxu0 %v57
    %v295 = vpop.f32.mrf.mxu0
    %v296 = vadd.f32 %v142, %v295
    %v297 = vpop.f32.mrf.mxu0
    %298 = vmatprep.mubr.f32.mxu0 0.0
    %299 = vmatmul.mubr.f32.gmra.mxu0 %v58
    %v300 = vpop.f32.mrf.mxu0
    %v301 = vadd.f32 %v142, %v300
    %v302 = vpop.f32.mrf.mxu0
    %303 = vmatprep.mubr.f32.mxu0 0.0
    %304 = vmatmul.mubr.f32.gmra.mxu0 %v59
    %v305 = vpop.f32.mrf.mxu0
    %v306 = vadd.f32 %v142, %v305
    %v307 = vpop.f32.mrf.mxu0
    %308 = vmatprep.mubr.f32.mxu0 0.0
    %309 = vmatmul.mubr.f32.gmra.mxu0 %v60
    %v310 = vpop.f32.mrf.mxu0
    %v311 = vadd.f32 %v142, %v310
    %v312 = vpop.f32.mrf.mxu0
    %313 = vmatprep.mubr.f32.mxu0 0.0
    %314 = vmatmul.mubr.f32.gmra.mxu0 %v61
    %v315 = vpop.f32.mrf.mxu0
    %v316 = vadd.f32 %v142, %v315
    %v317 = vpop.f32.mrf.mxu0
    %318 = vmatprep.mubr.f32.mxu0 0.0
    %319 = vmatmul.mubr.f32.gmra.mxu0 %v62
    %v320 = vpop.f32.mrf.mxu0
    %v321 = vadd.f32 %v142, %v320
    %v322 = vpop.f32.mrf.mxu0
    %323 = vmatprep.mubr.f32.mxu0 0.0
    %324 = vmatmul.mubr.f32.gmra.mxu0 %v63
    %v325 = vpop.f32.mrf.mxu0
    %v326 = vadd.f32 %v142, %v325
    %v327 = vpop.f32.mrf.mxu0
    %328 = vmatprep.mubr.f32.mxu0 0.0
    %329 = vmatmul.mubr.f32.gmra.mxu0 %v64
    %v330 = vpop.f32.mrf.mxu0
    %v331 = vadd.f32 %v142, %v330
    %v332 = vpop.f32.mrf.mxu0
    %333 = vmatprep.mubr.f32.mxu0 0.0
    %334 = vmatmul.mubr.f32.gmra.mxu0 %v65
    %v335 = vpop.f32.mrf.mxu0
    %v336 = vadd.f32 %v142, %v335
    %v337 = vpop.f32.mrf.mxu0
    %338 = vmatprep.mubr.f32.mxu0 0.0
    %339 = vmatmul.mubr.f32.gmra.mxu0 %v66
    %v340 = vpop.f32.mrf.mxu0
    %v341 = vadd.f32 %v142, %v340
    %v342 = vpop.f32.mrf.mxu0
    %343 = vmatprep.mubr.f32.mxu0 0.0
    %344 = vmatmul.mubr.f32.gmra.mxu0 %v67
    %v345 = vpop.f32.mrf.mxu0
    %v346 = vadd.f32 %v142, %v345
    %v347 = vpop.f32.mrf.mxu0
    %348 = vmatprep.mubr.f32.mxu0 0.0
    %349 = vmatmul.mubr.f32.gmra.mxu0 %v68
    %v350 = vpop.f32.mrf.mxu0
    %v351 = vadd.f32 %v142, %v350
    %v352 = vpop.f32.mrf.mxu0
    %353 = vmatprep.mubr.f32.mxu0 0.0
    %354 = vmatmul.mubr.f32.gmra.mxu0 %v69
    %v355 = vpop.f32.mrf.mxu0
    %v356 = vadd.f32 %v142, %v355
    %v357 = vpop.f32.mrf.mxu0
    %358 = vmatprep.mubr.f32.mxu0 0.0
    %359 = vmatmul.mubr.f32.gmra.mxu0 %v70
    %v360 = vpop.f32.mrf.mxu0
    %v361 = vadd.f32 %v142, %v360
    %v362 = vpop.f32.mrf.mxu0
    %363 = vmatprep.mubr.f32.mxu0 0.0
    %364 = vmatmul.mubr.f32.gmra.mxu0 %v71
    %v365 = vpop.f32.mrf.mxu0
    %v366 = vadd.f32 %v142, %v365
    %v367 = vpop.f32.mrf.mxu0
    %368 = vmatprep.mubr.f32.mxu0 0.0
    %369 = vmatmul.mubr.f32.gmra.mxu0 %v72
    %v370 = vpop.f32.mrf.mxu0
    %v371 = vadd.f32 %v142, %v370
    %v372 = vpop.f32.mrf.mxu0
    %373 = vmatprep.mubr.f32.mxu0 0.0
    %374 = vmatmul.mubr.f32.gmra.mxu0 %v73
    %v375 = vpop.f32.mrf.mxu0
    %v376 = vadd.f32 %v142, %v375
    %v377 = vpop.f32.mrf.mxu0
    %378 = vmatprep.mubr.f32.mxu0 0.0
    %379 = vmatmul.mubr.f32.gmra.mxu0 %v74
    %v380 = vpop.f32.mrf.mxu0
    %v381 = vadd.f32 %v142, %v380
    %v382 = vpop.f32.mrf.mxu0
    %383 = vmatprep.mubr.f32.mxu0 0.0
    %384 = vmatmul.mubr.f32.gmra.mxu0 %v75
    %v385 = vpop.f32.mrf.mxu0
    %v386 = vadd.f32 %v142, %v385
    %v387 = vpop.f32.mrf.mxu0
    %388 = vmatprep.mubr.f32.mxu0 0.0
    %389 = vmatmul.mubr.f32.gmra.mxu0 %v76
    %v390 = vpop.f32.mrf.mxu0
    %v391 = vadd.f32 %v142, %v390
    %v392 = vpop.f32.mrf.mxu0
    %393 = vmatprep.mubr.f32.mxu0 0.0
    %394 = vmatmul.mubr.f32.gmra.mxu0 %v77
    %v395 = vpop.f32.mrf.mxu0
    %v396 = vadd.f32 %v142, %v395
    %v397 = vpop.f32.mrf.mxu0
    %398 = vmatprep.mubr.f32.mxu0 0.0
    %399 = vmatmul.mubr.f32.gmra.mxu0 %v78
    %v400 = vpop.f32.mrf.mxu0
    %v401 = vadd.f32 %v142, %v400
    %v402 = vpop.f32.mrf.mxu0
    %403 = vmatprep.mubr.f32.mxu0 0.0
    %404 = vmatmul.mubr.f32.gmra.mxu0 %v79
    %v405 = vpop.f32.mrf.mxu0
    %v406 = vadd.f32 %v142, %v405
    %v407 = vpop.f32.mrf.mxu0
    %408 = vmatprep.mubr.f32.mxu0 0.0
    %409 = vmatmul.mubr.f32.gmra.mxu0 %v80
    %v410 = vpop.f32.mrf.mxu0
    %v411 = vadd.f32 %v142, %v410
    %v412 = vpop.f32.mrf.mxu0
    %413 = vmatprep.mubr.f32.mxu0 0.0
    %414 = vmatmul.mubr.f32.gmra.mxu0 %v81
    %v415 = vpop.f32.mrf.mxu0
    %v416 = vadd.f32 %v142, %v415
    %v417 = vpop.f32.mrf.mxu0
    %418 = vmatprep.mubr.f32.mxu0 0.0
    %419 = vmatmul.mubr.f32.gmra.mxu0 %v82
    %v420 = vpop.f32.mrf.mxu0
    %v421 = vadd.f32 %v142, %v420
    %v422 = vpop.f32.mrf.mxu0
    %423 = vmatprep.mubr.f32.mxu0 0.0
    %424 = vmatmul.mubr.f32.gmra.mxu0 %v83
    %v425 = vpop.f32.mrf.mxu0
    %v426 = vadd.f32 %v142, %v425
    %v427 = vpop.f32.mrf.mxu0
    %428 = vmatprep.mubr.f32.mxu0 0.0
    %429 = vmatmul.mubr.f32.gmra.mxu0 %v84
    %v430 = vpop.f32.mrf.mxu0
    %v431 = vadd.f32 %v142, %v430
    %v432 = vpop.f32.mrf.mxu0
    %433 = vmatprep.mubr.f32.mxu0 0.0
    %434 = vmatmul.mubr.f32.gmra.mxu0 %v85
    %v435 = vpop.f32.mrf.mxu0
    %v436 = vadd.f32 %v142, %v435
    %v437 = vpop.f32.mrf.mxu0
    %438 = vmatprep.mubr.f32.mxu0 0.0
    %439 = vmatmul.mubr.f32.gmra.mxu0 %v86
    %v440 = vpop.f32.mrf.mxu0
    %v441 = vadd.f32 %v142, %v440
    %v442 = vpop.f32.mrf.mxu0
    %443 = vmatprep.mubr.f32.mxu0 0.0
    %444 = vmatmul.mubr.f32.gmra.mxu0 %v87
    %v445 = vpop.f32.mrf.mxu0
    %v446 = vadd.f32 %v142, %v445
    %v447 = vpop.f32.mrf.mxu0
    %448 = vmatprep.mubr.f32.mxu0 0.0
    %449 = vmatmul.mubr.f32.gmra.mxu0 %v88
    %v450 = vpop.f32.mrf.mxu0
    %v451 = vadd.f32 %v142, %v450
    %v452 = vpop.f32.mrf.mxu0
    %453 = vmatprep.mubr.f32.mxu0 0.0
    %454 = vmatmul.mubr.f32.gmra.mxu0 %v89
    %v455 = vpop.f32.mrf.mxu0
    %v456 = vadd.f32 %v142, %v455
    %v457 = vpop.f32.mrf.mxu0
    %458 = vmatprep.mubr.f32.mxu0 0.0
    %459 = vmatmul.mubr.f32.gmra.mxu0 %v90
    %v460 = vpop.f32.mrf.mxu0
    %v461 = vadd.f32 %v142, %v460
    %v462 = vpop.f32.mrf.mxu0
    %463 = vmatprep.mubr.f32.mxu0 0.0
    %464 = vmatmul.mubr.f32.gmra.mxu0 %v91
    %v465 = vpop.f32.mrf.mxu0
    %v466 = vadd.f32 %v142, %v465
    %v467 = vpop.f32.mrf.mxu0
    %468 = vmatprep.mubr.f32.mxu0 0.0
    %469 = vmatmul.mubr.f32.gmra.mxu0 %v92
    %v470 = vpop.f32.mrf.mxu0
    %v471 = vadd.f32 %v142, %v470
    %v472 = vpop.f32.mrf.mxu0
    %473 = vmatprep.mubr.f32.mxu0 0.0
    %474 = vmatmul.mubr.f32.gmra.mxu0 %v93
    %v475 = vpop.f32.mrf.mxu0
    %v476 = vadd.f32 %v142, %v475
    %v477 = vpop.f32.mrf.mxu0
    %478 = vmatprep.mubr.f32.mxu0 0.0
    %479 = vmatmul.mubr.f32.gmra.mxu0 %v94
    %v480 = vpop.f32.mrf.mxu0
    %v481 = vadd.f32 %v142, %v480
    %v482 = vpop.f32.mrf.mxu0
    %483 = vmatprep.mubr.f32.mxu0 0.0
    %484 = vmatmul.mubr.f32.gmra.mxu0 %v95
    %v485 = vpop.f32.mrf.mxu0
    %v486 = vadd.f32 %v142, %v485
    %v487 = vpop.f32.mrf.mxu0
    %488 = vmatprep.mubr.f32.mxu0 0.0
    %489 = vmatmul.mubr.f32.gmra.mxu0 %v96
    %v490 = vpop.f32.mrf.mxu0
    %v491 = vadd.f32 %v142, %v490
    %v492 = vpop.f32.mrf.mxu0
    %493 = vmatprep.mubr.f32.mxu0 0.0
    %494 = vmatmul.mubr.f32.gmra.mxu0 %v97
    %v495 = vpop.f32.mrf.mxu0
    %v496 = vadd.f32 %v142, %v495
    %v497 = vpop.f32.mrf.mxu0
    %498 = vmatprep.mubr.f32.mxu0 0.0
    %499 = vmatmul.mubr.f32.gmra.mxu0 %v98
    %v500 = vpop.f32.mrf.mxu0
    %v501 = vadd.f32 %v142, %v500
    %v502 = vpop.f32.mrf.mxu0
    %503 = vmatprep.mubr.f32.mxu0 0.0
    %504 = vmatmul.mubr.f32.gmra.mxu0 %v99
    %v505 = vpop.f32.mrf.mxu0
    %v506 = vadd.f32 %v142, %v505
    %v507 = vpop.f32.mrf.mxu0
    %508 = vmatprep.mubr.f32.mxu0 0.0
    %509 = vmatmul.mubr.f32.gmra.mxu0 %v100
    %v510 = vpop.f32.mrf.mxu0
    %v511 = vadd.f32 %v142, %v510
    %v512 = vpop.f32.mrf.mxu0
    %513 = vmatprep.mubr.f32.mxu0 0.0
    %514 = vmatmul.mubr.f32.gmra.mxu0 %v101
    %v515 = vpop.f32.mrf.mxu0
    %v516 = vadd.f32 %v142, %v515
    %v517 = vpop.f32.mrf.mxu0
    %518 = vmatprep.mubr.f32.mxu0 0.0
    %519 = vmatmul.mubr.f32.gmra.mxu0 %v102
    %v520 = vpop.f32.mrf.mxu0
    %v521 = vadd.f32 %v142, %v520
    %v522 = vpop.f32.mrf.mxu0
    %523 = vmatprep.mubr.f32.mxu0 0.0
    %524 = vmatmul.mubr.f32.gmra.mxu0 %v103
    %v525 = vpop.f32.mrf.mxu0
    %v526 = vadd.f32 %v142, %v525
    %v527 = vpop.f32.mrf.mxu0
    %528 = vmatprep.mubr.f32.mxu0 0.0
    %529 = vmatmul.mubr.f32.gmra.mxu0 %v104
    %v530 = vpop.f32.mrf.mxu0
    %v531 = vadd.f32 %v142, %v530
    %v532 = vpop.f32.mrf.mxu0
    %533 = vmatprep.mubr.f32.mxu0 0.0
    %534 = vmatmul.mubr.f32.gmra.mxu0 %v105
    %v535 = vpop.f32.mrf.mxu0
    %v536 = vadd.f32 %v142, %v535
    %v537 = vpop.f32.mrf.mxu0
    %538 = vmatprep.mubr.f32.mxu0 0.0
    %539 = vmatmul.mubr.f32.gmra.mxu0 %v106
    %v540 = vpop.f32.mrf.mxu0
    %v541 = vadd.f32 %v142, %v540
    %v542 = vpop.f32.mrf.mxu0
    %543 = vmatprep.mubr.f32.mxu0 0.0
    %544 = vmatmul.mubr.f32.gmra.mxu0 %v107
    %v545 = vpop.f32.mrf.mxu0
    %v546 = vadd.f32 %v142, %v545
    %v547 = vpop.f32.mrf.mxu0
    %548 = vmatprep.mubr.f32.mxu0 0.0
    %549 = vmatmul.mubr.f32.gmra.mxu0 %v108
    %v550 = vpop.f32.mrf.mxu0
    %v551 = vadd.f32 %v142, %v550
    %v552 = vpop.f32.mrf.mxu0
    %553 = vmatprep.mubr.f32.mxu0 0.0
    %554 = vmatmul.mubr.f32.gmra.mxu0 %v109
    %v555 = vpop.f32.mrf.mxu0
    %v556 = vadd.f32 %v142, %v555
    %v557 = vpop.f32.mrf.mxu0
    %558 = vmatprep.mubr.f32.mxu0 0.0
    %559 = vmatmul.mubr.f32.gmra.mxu0 %v110
    %v560 = vpop.f32.mrf.mxu0
    %v561 = vadd.f32 %v142, %v560
    %v562 = vpop.f32.mrf.mxu0
    %563 = vmatprep.mubr.f32.mxu0 0.0
    %564 = vmatmul.mubr.f32.gmra.mxu0 %v111
    %v565 = vpop.f32.mrf.mxu0
    %v566 = vadd.f32 %v142, %v565
    %v567 = vpop.f32.mrf.mxu0
    %568 = vmatprep.mubr.f32.mxu0 0.0
    %569 = vmatmul.mubr.f32.gmra.mxu0 %v112
    %v570 = vpop.f32.mrf.mxu0
    %v571 = vadd.f32 %v142, %v570
    %v572 = vpop.f32.mrf.mxu0
    %573 = vmatprep.mubr.f32.mxu0 0.0
    %574 = vmatmul.mubr.f32.gmra.mxu0 %v113
    %v575 = vpop.f32.mrf.mxu0
    %v576 = vadd.f32 %v142, %v575
    %v577 = vpop.f32.mrf.mxu0
    %578 = vmatprep.mubr.f32.mxu0 0.0
    %579 = vmatmul.mubr.f32.gmra.mxu0 %v114
    %v580 = vpop.f32.mrf.mxu0
    %v581 = vadd.f32 %v142, %v580
    %v582 = vpop.f32.mrf.mxu0
    %583 = vmatprep.mubr.f32.mxu0 0.0
    %584 = vmatmul.mubr.f32.gmra.mxu0 %v115
    %v585 = vpop.f32.mrf.mxu0
    %v586 = vadd.f32 %v142, %v585
    %v587 = vpop.f32.mrf.mxu0
    %588 = vmatprep.mubr.f32.mxu0 0.0
    %589 = vmatmul.mubr.f32.gmra.mxu0 %v116
    %v590 = vpop.f32.mrf.mxu0
    %v591 = vadd.f32 %v142, %v590
    %v592 = vpop.f32.mrf.mxu0
    %593 = vmatprep.mubr.f32.mxu0 0.0
    %594 = vmatmul.mubr.f32.gmra.mxu0 %v117
    %v595 = vpop.f32.mrf.mxu0
    %v596 = vadd.f32 %v142, %v595
    %v597 = vpop.f32.mrf.mxu0
    %598 = vmatprep.mubr.f32.mxu0 0.0
    %599 = vmatmul.mubr.f32.gmra.mxu0 %v118
    %v600 = vpop.f32.mrf.mxu0
    %v601 = vadd.f32 %v142, %v600
    %v602 = vpop.f32.mrf.mxu0
    %603 = vmatprep.mubr.f32.mxu0 0.0
    %604 = vmatmul.mubr.f32.gmra.mxu0 %v119
    %v605 = vpop.f32.mrf.mxu0
    %v606 = vadd.f32 %v142, %v605
    %v607 = vpop.f32.mrf.mxu0
    %608 = vmatprep.mubr.f32.mxu0 0.0
    %609 = vmatmul.mubr.f32.gmra.mxu0 %v120
    %v610 = vpop.f32.mrf.mxu0
    %v611 = vadd.f32 %v142, %v610
    %v612 = vpop.f32.mrf.mxu0
    %613 = vdwg.mxu0
    %vm614 = vcmp.ge.f32.partialorder %v211, 0.0
    %vm615 = vcmp.ge.f32.partialorder %v216, 0.0
    %vm616 = vcmp.ge.f32.partialorder %v221, 0.0
    %vm617 = vcmp.ge.f32.partialorder %v226, 0.0
    %vm618 = vcmp.ge.f32.partialorder %v231, 0.0
    %vm619 = vcmp.ge.f32.partialorder %v236, 0.0
    %vm620 = vcmp.ge.f32.partialorder %v241, 0.0
    %vm621 = vcmp.ge.f32.partialorder %v246, 0.0
    %vm622 = vcmp.ge.f32.partialorder %v251, 0.0
    %vm623 = vcmp.ge.f32.partialorder %v256, 0.0
    %vm624 = vcmp.ge.f32.partialorder %v261, 0.0
    %vm625 = vcmp.ge.f32.partialorder %v266, 0.0
    %vm626 = vcmp.ge.f32.partialorder %v271, 0.0
    %vm627 = vcmp.ge.f32.partialorder %v276, 0.0
    %vm628 = vcmp.ge.f32.partialorder %v281, 0.0
    %vm629 = vcmp.ge.f32.partialorder %v286, 0.0
    %vm630 = vcmp.ge.f32.partialorder %v291, 0.0
    %vm631 = vcmp.ge.f32.partialorder %v296, 0.0
    %vm632 = vcmp.ge.f32.partialorder %v301, 0.0
    %vm633 = vcmp.ge.f32.partialorder %v306, 0.0
    %vm634 = vcmp.ge.f32.partialorder %v311, 0.0
    %vm635 = vcmp.ge.f32.partialorder %v316, 0.0
    %vm636 = vcmp.ge.f32.partialorder %v321, 0.0
    %vm637 = vcmp.ge.f32.partialorder %v326, 0.0
    %vm638 = vcmp.ge.f32.partialorder %v331, 0.0
    %vm639 = vcmp.ge.f32.partialorder %v336, 0.0
    %vm640 = vcmp.ge.f32.partialorder %v341, 0.0
    %vm641 = vcmp.ge.f32.partialorder %v346, 0.0
    %vm642 = vcmp.ge.f32.partialorder %v351, 0.0
    %vm643 = vcmp.ge.f32.partialorder %v356, 0.0
    %vm644 = vcmp.ge.f32.partialorder %v361, 0.0
    %vm645 = vcmp.ge.f32.partialorder %v366, 0.0
    %vm646 = vcmp.ge.f32.partialorder %v371, 0.0
    %vm647 = vcmp.ge.f32.partialorder %v376, 0.0
    %vm648 = vcmp.ge.f32.partialorder %v381, 0.0
    %vm649 = vcmp.ge.f32.partialorder %v386, 0.0
    %vm650 = vcmp.ge.f32.partialorder %v391, 0.0
    %vm651 = vcmp.ge.f32.partialorder %v396, 0.0
    %vm652 = vcmp.ge.f32.partialorder %v401, 0.0
    %vm653 = vcmp.ge.f32.partialorder %v406, 0.0
    %vm654 = vcmp.ge.f32.partialorder %v411, 0.0
    %vm655 = vcmp.ge.f32.partialorder %v416, 0.0
    %vm656 = vcmp.ge.f32.partialorder %v421, 0.0
    %vm657 = vcmp.ge.f32.partialorder %v426, 0.0
    %vm658 = vcmp.ge.f32.partialorder %v431, 0.0
    %vm659 = vcmp.ge.f32.partialorder %v436, 0.0
    %vm660 = vcmp.ge.f32.partialorder %v441, 0.0
    %vm661 = vcmp.ge.f32.partialorder %v446, 0.0
    %vm662 = vcmp.ge.f32.partialorder %v451, 0.0
    %vm663 = vcmp.ge.f32.partialorder %v456, 0.0
    %vm664 = vcmp.ge.f32.partialorder %v461, 0.0
    %vm665 = vcmp.ge.f32.partialorder %v466, 0.0
    %vm666 = vcmp.ge.f32.partialorder %v471, 0.0
    %vm667 = vcmp.ge.f32.partialorder %v476, 0.0
    %vm668 = vcmp.ge.f32.partialorder %v481, 0.0
    %vm669 = vcmp.ge.f32.partialorder %v486, 0.0
    %vm670 = vcmp.ge.f32.partialorder %v491, 0.0
    %vm671 = vcmp.ge.f32.partialorder %v496, 0.0
    %vm672 = vcmp.ge.f32.partialorder %v501, 0.0
    %vm673 = vcmp.ge.f32.partialorder %v506, 0.0
    %vm674 = vcmp.ge.f32.partialorder %v511, 0.0
    %vm675 = vcmp.ge.f32.partialorder %v516, 0.0
    %vm676 = vcmp.ge.f32.partialorder %v521, 0.0
    %vm677 = vcmp.ge.f32.partialorder %v526, 0.0
    %vm678 = vcmp.ge.f32.partialorder %v531, 0.0
    %vm679 = vcmp.ge.f32.partialorder %v536, 0.0
    %vm680 = vcmp.ge.f32.partialorder %v541, 0.0
    %vm681 = vcmp.ge.f32.partialorder %v546, 0.0
    %vm682 = vcmp.ge.f32.partialorder %v551, 0.0
    %vm683 = vcmp.ge.f32.partialorder %v556, 0.0
    %vm684 = vcmp.ge.f32.partialorder %v561, 0.0
    %vm685 = vcmp.ge.f32.partialorder %v566, 0.0
    %vm686 = vcmp.ge.f32.partialorder %v571, 0.0
    %vm687 = vcmp.ge.f32.partialorder %v576, 0.0
    %vm688 = vcmp.ge.f32.partialorder %v581, 0.0
    %vm689 = vcmp.ge.f32.partialorder %v586, 0.0
    %vm690 = vcmp.ge.f32.partialorder %v591, 0.0
    %vm691 = vcmp.ge.f32.partialorder %v596, 0.0
    %vm692 = vcmp.ge.f32.partialorder %v601, 0.0
    %vm693 = vcmp.ge.f32.partialorder %v606, 0.0
    %vm694 = vcmp.ge.f32.partialorder %v611, 0.0
    %v695 = vmul.f32 %v211, 0.01
    %v696 = vmul.f32 %v216, 0.01
    %v697 = vmul.f32 %v221, 0.01
    %v698 = vmul.f32 %v226, 0.01
    %v699 = vmul.f32 %v231, 0.01
    %v700 = vmul.f32 %v236, 0.01
    %v701 = vmul.f32 %v241, 0.01
    %v702 = vmul.f32 %v246, 0.01
    %v703 = vmul.f32 %v251, 0.01
    %v704 = vmul.f32 %v256, 0.01
    %v705 = vmul.f32 %v261, 0.01
    %v706 = vmul.f32 %v266, 0.01
    %v707 = vmul.f32 %v271, 0.01
    %v708 = vmul.f32 %v276, 0.01
    %v709 = vmul.f32 %v281, 0.01
    %v710 = vmul.f32 %v286, 0.01
    %v711 = vmul.f32 %v291, 0.01
    %v712 = vmul.f32 %v296, 0.01
    %v713 = vmul.f32 %v301, 0.01
    %v714 = vmul.f32 %v306, 0.01
    %v715 = vmul.f32 %v311, 0.01
    %v716 = vmul.f32 %v316, 0.01
    %v717 = vmul.f32 %v321, 0.01
    %v718 = vmul.f32 %v326, 0.01
    %v719 = vmul.f32 %v331, 0.01
    %v720 = vmul.f32 %v336, 0.01
    %v721 = vmul.f32 %v341, 0.01
    %v722 = vmul.f32 %v346, 0.01
    %v723 = vmul.f32 %v351, 0.01
    %v724 = vmul.f32 %v356, 0.01
    %v725 = vmul.f32 %v361, 0.01
    %v726 = vmul.f32 %v366, 0.01
    %v727 = vmul.f32 %v371, 0.01
    %v728 = vmul.f32 %v376, 0.01
    %v729 = vmul.f32 %v381, 0.01
    %v730 = vmul.f32 %v386, 0.01
    %v731 = vmul.f32 %v391, 0.01
    %v732 = vmul.f32 %v396, 0.01
    %v733 = vmul.f32 %v401, 0.01
    %v734 = vmul.f32 %v406, 0.01
    %v735 = vmul.f32 %v411, 0.01
    %v736 = vmul.f32 %v416, 0.01
    %v737 = vmul.f32 %v421, 0.01
    %v738 = vmul.f32 %v426, 0.01
    %v739 = vmul.f32 %v431, 0.01
    %v740 = vmul.f32 %v436, 0.01
    %v741 = vmul.f32 %v441, 0.01
    %v742 = vmul.f32 %v446, 0.01
    %v743 = vmul.f32 %v451, 0.01
    %v744 = vmul.f32 %v456, 0.01
    %v745 = vmul.f32 %v461, 0.01
    %v746 = vmul.f32 %v466, 0.01
    %v747 = vmul.f32 %v471, 0.01
    %v748 = vmul.f32 %v476, 0.01
    %v749 = vmul.f32 %v481, 0.01
    %v750 = vmul.f32 %v486, 0.01
    %v751 = vmul.f32 %v491, 0.01
    %v752 = vmul.f32 %v496, 0.01
    %v753 = vmul.f32 %v501, 0.01
    %v754 = vmul.f32 %v506, 0.01
    %v755 = vmul.f32 %v511, 0.01
    %v756 = vmul.f32 %v516, 0.01
    %v757 = vmul.f32 %v521, 0.01
    %v758 = vmul.f32 %v526, 0.01
    %v759 = vmul.f32 %v531, 0.01
    %v760 = vmul.f32 %v536, 0.01
    %v761 = vmul.f32 %v541, 0.01
    %v762 = vmul.f32 %v546, 0.01
    %v763 = vmul.f32 %v551, 0.01
    %v764 = vmul.f32 %v556, 0.01
    %v765 = vmul.f32 %v561, 0.01
    %v766 = vmul.f32 %v566, 0.01
    %v767 = vmul.f32 %v571, 0.01
    %v768 = vmul.f32 %v576, 0.01
    %v769 = vmul.f32 %v581, 0.01
    %v770 = vmul.f32 %v586, 0.01
    %v771 = vmul.f32 %v591, 0.01
    %v772 = vmul.f32 %v596, 0.01
    %v773 = vmul.f32 %v601, 0.01
    %v774 = vmul.f32 %v606, 0.01
    %v775 = vmul.f32 %v611, 0.01
    %v776 = vsel %vm614, %v211, %v695
    %v777 = vsel %vm615, %v216, %v696
    %v778 = vsel %vm616, %v221, %v697
    %v779 = vsel %vm617, %v226, %v698
    %v780 = vsel %vm618, %v231, %v699
    %v781 = vsel %vm619, %v236, %v700
    %v782 = vsel %vm620, %v241, %v701
    %v783 = vsel %vm621, %v246, %v702
    %v784 = vsel %vm622, %v251, %v703
    %v785 = vsel %vm623, %v256, %v704
    %v786 = vsel %vm624, %v261, %v705
    %v787 = vsel %vm625, %v266, %v706
    %v788 = vsel %vm626, %v271, %v707
    %v789 = vsel %vm627, %v276, %v708
    %v790 = vsel %vm628, %v281, %v709
    %v791 = vsel %vm629, %v286, %v710
    %v792 = vsel %vm630, %v291, %v711
    %v793 = vsel %vm631, %v296, %v712
    %v794 = vsel %vm632, %v301, %v713
    %v795 = vsel %vm633, %v306, %v714
    %v796 = vsel %vm634, %v311, %v715
    %v797 = vsel %vm635, %v316, %v716
    %v798 = vsel %vm636, %v321, %v717
    %v799 = vsel %vm637, %v326, %v718
    %v800 = vsel %vm638, %v331, %v719
    %v801 = vsel %vm639, %v336, %v720
    %v802 = vsel %vm640, %v341, %v721
    %v803 = vsel %vm641, %v346, %v722
    %v804 = vsel %vm642, %v351, %v723
    %v805 = vsel %vm643, %v356, %v724
    %v806 = vsel %vm644, %v361, %v725
    %v807 = vsel %vm645, %v366, %v726
    %v808 = vsel %vm646, %v371, %v727
    %v809 = vsel %vm647, %v376, %v728
    %v810 = vsel %vm648, %v381, %v729
    %v811 = vsel %vm649, %v386, %v730
    %v812 = vsel %vm650, %v391, %v731
    %v813 = vsel %vm651, %v396, %v732
    %v814 = vsel %vm652, %v401, %v733
    %v815 = vsel %vm653, %v406, %v734
    %v816 = vsel %vm654, %v411, %v735
    %v817 = vsel %vm655, %v416, %v736
    %v818 = vsel %vm656, %v421, %v737
    %v819 = vsel %vm657, %v426, %v738
    %v820 = vsel %vm658, %v431, %v739
    %v821 = vsel %vm659, %v436, %v740
    %v822 = vsel %vm660, %v441, %v741
    %v823 = vsel %vm661, %v446, %v742
    %v824 = vsel %vm662, %v451, %v743
    %v825 = vsel %vm663, %v456, %v744
    %v826 = vsel %vm664, %v461, %v745
    %v827 = vsel %vm665, %v466, %v746
    %v828 = vsel %vm666, %v471, %v747
    %v829 = vsel %vm667, %v476, %v748
    %v830 = vsel %vm668, %v481, %v749
    %v831 = vsel %vm669, %v486, %v750
    %v832 = vsel %vm670, %v491, %v751
    %v833 = vsel %vm671, %v496, %v752
    %v834 = vsel %vm672, %v501, %v753
    %v835 = vsel %vm673, %v506, %v754
    %v836 = vsel %vm674, %v511, %v755
    %v837 = vsel %vm675, %v516, %v756
    %v838 = vsel %vm676, %v521, %v757
    %v839 = vsel %vm677, %v526, %v758
    %v840 = vsel %vm678, %v531, %v759
    %v841 = vsel %vm679, %v536, %v760
    %v842 = vsel %vm680, %v541, %v761
    %v843 = vsel %vm681, %v546, %v762
    %v844 = vsel %vm682, %v551, %v763
    %v845 = vsel %vm683, %v556, %v764
    %v846 = vsel %vm684, %v561, %v765
    %v847 = vsel %vm685, %v566, %v766
    %v848 = vsel %vm686, %v571, %v767
    %v849 = vsel %vm687, %v576, %v768
    %v850 = vsel %vm688, %v581, %v769
    %v851 = vsel %vm689, %v586, %v770
    %v852 = vsel %vm690, %v591, %v771
    %v853 = vsel %vm691, %v596, %v772
    %v854 = vsel %vm692, %v601, %v773
    %v855 = vsel %vm693, %v606, %v774
    %v856 = vsel %vm694, %v611, %v775
    %857 = vst [vmem:[%s3] sm:$0xff] %v776
    %858 = vst [vmem:[%s3 + $0x8] sm:$0xff] %v777
    %859 = vst [vmem:[%s3 + $0x10] sm:$0xff] %v778
    %860 = vst [vmem:[%s3 + $0x18] sm:$0xff] %v779
    %861 = vst [vmem:[%s3 + $0x20] sm:$0xff] %v780
    %862 = vst [vmem:[%s3 + $0x28] sm:$0xff] %v781
    %863 = vst [vmem:[%s3 + $0x30] sm:$0xff] %v782
    %864 = vst [vmem:[%s3 + $0x38] sm:$0xff] %v783
    %865 = vst [vmem:[%s3 + $0x40] sm:$0xff] %v784
    %866 = vst [vmem:[%s3 + $0x48] sm:$0xff] %v785
    %867 = vst [vmem:[%s3 + $0x50] sm:$0xff] %v786
    %868 = vst [vmem:[%s3 + $0x58] sm:$0xff] %v787
    %869 = vst [vmem:[%s3 + $0x60] sm:$0xff] %v788
    %870 = vst [vmem:[%s3 + $0x68] sm:$0xff] %v789
    %871 = vst [vmem:[%s3 + $0x70] sm:$0xff] %v790
    %872 = vst [vmem:[%s3 + $0x78] sm:$0xff] %v791
    %873 = vst [vmem:[%s3 + $0x80] sm:$0xff] %v792
    %874 = vst [vmem:[%s3 + $0x88] sm:$0xff] %v793
    %875 = vst [vmem:[%s3 + $0x90] sm:$0xff] %v794
    %876 = vst [vmem:[%s3 + $0x98] sm:$0xff] %v795
    %877 = vst [vmem:[%s3 + $0xa0] sm:$0xff] %v796
    %878 = vst [vmem:[%s3 + $0xa8] sm:$0xff] %v797
    %879 = vst [vmem:[%s3 + $0xb0] sm:$0xff] %v798
    %880 = vst [vmem:[%s3 + $0xb8] sm:$0xff] %v799
    %881 = vst [vmem:[%s3 + $0xc0] sm:$0xff] %v800
    %882 = vst [vmem:[%s3 + $0xc8] sm:$0xff] %v801
    %883 = vst [vmem:[%s3 + $0xd0] sm:$0xff] %v802
    %884 = vst [vmem:[%s3 + $0xd8] sm:$0xff] %v803
    %885 = vst [vmem:[%s3 + $0xe0] sm:$0xff] %v804
    %886 = vst [vmem:[%s3 + $0xe8] sm:$0xff] %v805
    %887 = vst [vmem:[%s3 + $0xf0] sm:$0xff] %v806
    %888 = vst [vmem:[%s3 + $0xf8] sm:$0xff] %v807
    %889 = vst [vmem:[%s3 + $0x100] sm:$0xff] %v808
    %890 = vst [vmem:[%s3 + $0x108] sm:$0xff] %v809
    %891 = vst [vmem:[%s3 + $0x110] sm:$0xff] %v810
    %892 = vst [vmem:[%s3 + $0x118] sm:$0xff] %v811
    %893 = vst [vmem:[%s3 + $0x120] sm:$0xff] %v812
    %894 = vst [vmem:[%s3 + $0x128] sm:$0xff] %v813
    %895 = vst [vmem:[%s3 + $0x130] sm:$0xff] %v814
    %896 = vst [vmem:[%s3 + $0x138] sm:$0xff] %v815
    %897 = vst [vmem:[%s3 + $0x140] sm:$0xff] %v816
    %898 = vst [vmem:[%s3 + $0x148] sm:$0xff] %v817
    %899 = vst [vmem:[%s3 + $0x150] sm:$0xff] %v818
    %900 = vst [vmem:[%s3 + $0x158] sm:$0xff] %v819
    %901 = vst [vmem:[%s3 + $0x160] sm:$0xff] %v820
    %902 = vst [vmem:[%s3 + $0x168] sm:$0xff] %v821
    %903 = vst [vmem:[%s3 + $0x170] sm:$0xff] %v822
    %904 = vst [vmem:[%s3 + $0x178] sm:$0xff] %v823
    %905 = vst [vmem:[%s3 + $0x180] sm:$0xff] %v824
    %906 = vst [vmem:[%s3 + $0x188] sm:$0xff] %v825
    %907 = vst [vmem:[%s3 + $0x190] sm:$0xff] %v826
    %908 = vst [vmem:[%s3 + $0x198] sm:$0xff] %v827
    %909 = vst [vmem:[%s3 + $0x1a0] sm:$0xff] %v828
    %910 = vst [vmem:[%s3 + $0x1a8] sm:$0xff] %v829
    %911 = vst [vmem:[%s3 + $0x1b0] sm:$0xff] %v830
    %912 = vst [vmem:[%s3 + $0x1b8] sm:$0xff] %v831
    %913 = vst [vmem:[%s3 + $0x1c0] sm:$0xff] %v832
    %914 = vst [vmem:[%s3 + $0x1c8] sm:$0xff] %v833
    %915 = vst [vmem:[%s3 + $0x1d0] sm:$0xff] %v834
    %916 = vst [vmem:[%s3 + $0x1d8] sm:$0xff] %v835
    %917 = vst [vmem:[%s3 + $0x1e0] sm:$0xff] %v836
    %918 = vst [vmem:[%s3 + $0x1e8] sm:$0xff] %v837
    %919 = vst [vmem:[%s3 + $0x1f0] sm:$0xff] %v838
    %920 = vst [vmem:[%s3 + $0x1f8] sm:$0xff] %v839
    %921 = vst [vmem:[%s3 + $0x200] sm:$0xff] %v840
    %922 = vst [vmem:[%s3 + $0x208] sm:$0xff] %v841
    %923 = vst [vmem:[%s3 + $0x210] sm:$0xff] %v842
    %924 = vst [vmem:[%s3 + $0x218] sm:$0xff] %v843
    %925 = vst [vmem:[%s3 + $0x220] sm:$0xff] %v844
    %926 = vst [vmem:[%s3 + $0x228] sm:$0xff] %v845
    %927 = vst [vmem:[%s3 + $0x230] sm:$0xff] %v846
    %928 = vst [vmem:[%s3 + $0x238] sm:$0xff] %v847
    %929 = vst [vmem:[%s3 + $0x240] sm:$0xff] %v848
    %930 = vst [vmem:[%s3 + $0x248] sm:$0xff] %v849
    %931 = vst [vmem:[%s3 + $0x250] sm:$0xff] %v850
    %932 = vst [vmem:[%s3 + $0x258] sm:$0xff] %v851
    %933 = vst [vmem:[%s3 + $0x260] sm:$0xff] %v852
    %934 = vst [vmem:[%s3 + $0x268] sm:$0xff] %v853
    %935 = vst [vmem:[%s3 + $0x270] sm:$0xff] %v854
    %936 = vst [vmem:[%s3 + $0x278] sm:$0xff] %v855
    %937 = vst [vmem:[%s3 + $0x280] sm:$0xff] %v856
    // Predicated region
    $region22: #{forward.5} parent=1 // pred_check
      _
    $region23: #{forward.5} parent=1 // pred_check_branch
      %939 = sbr.rel (0) target = $region25
    $region24: #{forward.5} parent=1 // pred_region
      _
    $region25: #{forward.5} parent=1 // pred_fallthru
      _
    // Predicated region
    $region26: #{forward.5} parent=1 // pred_check
      _
    $region27: #{forward.5} parent=1 // pred_check_branch
      %941 = sbr.rel (0) target = $region29
    $region28: #{forward.5} parent=1 // pred_region
      _
    $region29: #{forward.5} parent=1 // pred_fallthru
      _
    %942 = vsyncpa [#allocation3], 1
    %943 = vsyncpa [#allocation5], 1

// kernel: forward.6
$region0: #{forward.6}
  #allocation0 [shape = 'u32[]', space=smem, size = 0x4, offset = 0x4, fixed_abs, tag = 'smem constant byte address 0x4 - core index']
  #allocation1 [shape = 'u32[144,128]{1,0:T(1,128)}', space=vmem, size = 0x12000, scoped, tag = 'internal scratch']
  %s0 = inlined_call_operand.vmem [shape: f32[512,384], index: 0, kind: input, shape index: {}]
  %s1 = inlined_call_operand.hbm [shape: f32[384,128], index: 1, kind: input, shape index: {}]
  %s2 = inlined_call_operand.hbm [shape: f32[1,128], index: 2, kind: input, shape index: {}]
  %s3 = inlined_call_operand.vmem [shape: f32[512,128], index: 3, kind: output, shape index: {}]
  %s4 = sld [smem:[#allocation0]]
  $region30: #{forward.6} parent=0
    _
  %s6 = ssub.s32 1, %s4
  %s7 = scalar_select 0, %s6, %s4
  $region1: #{forward.6} parent=0
    #allocation2 [shape = 'u8[196608]{0}', space=vmem, size = 0x30000, scoped, tag = 'input window, operand 1, single buffered']
    #allocation3 [shape = 's32[1]{0}', space=sflag, size = 0x4, scoped, tag = 'scoped memory for forward.6']
    #allocation4 [shape = 'u8[512]{0}', space=vmem, size = 0x400, scoped, tag = 'input window, operand 2, single buffered']
    #allocation5 [shape = 's32[1]{0}', space=sflag, size = 0x4, scoped, tag = 'scoped memory for forward.6']
    %8 = vsyncpa [#allocation3], 0
    %9 = vsyncpa [#allocation5], 0
    // Predicated region
    $region2: #{forward.6} parent=1 // pred_check
      _
    $region3: #{forward.6} parent=1 // pred_check_branch
      %11 = sbr.rel (0) target = $region5
    $region4: #{forward.6} parent=1 // pred_region
      _
    $region5: #{forward.6} parent=1 // pred_fallthru
      _
    // Predicated region
    $region6: #{forward.6} parent=1 // pred_check
      _
    $region7: #{forward.6} parent=1 // pred_check_branch
      %13 = sbr.rel (0) target = $region9
    $region8: #{forward.6} parent=1 // pred_region
      %s15 = ssub.s32 6144, 6144
      %16 = vsyncadd [#allocation3], %s15
      %s17 = sshll.u32 [#allocation2], 4
      %s18 = int_to_ptr.vmem [resolvable:$true] %s17
      %23 = dma.hbm_to_vmem [thread:$0]  %s1, 6144, %s18, [#allocation3], 128, 128, 8
    $region9: #{forward.6} parent=1 // pred_fallthru
      _
    // Predicated region
    $region10: #{forward.6} parent=1 // pred_check
      _
    $region11: #{forward.6} parent=1 // pred_check_branch
      %25 = sbr.rel (0) target = $region13
    $region12: #{forward.6} parent=1 // pred_region
      %s27 = ssub.s32 16, 16
      %28 = vsyncadd [#allocation5], %s27
      %s30 = sshll.u32 [#allocation4], 4
      %s31 = int_to_ptr.vmem [resolvable:$true] %s30
      %33 = dma.hbm_to_vmem [thread:$0]  %s2, 16, %s31, [#allocation5]
    $region13: #{forward.6} parent=1 // pred_fallthru
      _
    // Predicated region
    $region14: #{forward.6} parent=1 // pred_check
      _
    $region15: #{forward.6} parent=1 // pred_check_branch
      %35 = sbr.rel (0) target = $region17
    $region16: #{forward.6} parent=1 // pred_region
      %36 = dma.done [#allocation3], 6144
    $region17: #{forward.6} parent=1 // pred_fallthru
      _
    // Predicated region
    $region18: #{forward.6} parent=1 // pred_check
      _
    $region19: #{forward.6} parent=1 // pred_check_branch
      %38 = sbr.rel (0) target = $region21
    $region20: #{forward.6} parent=1 // pred_region
      %39 = dma.done [#allocation5], 16
    $region21: #{forward.6} parent=1 // pred_fallthru
      _
    %v40 = vld [vmem:[%s0] sm:$0xff]
    %v41 = vld [vmem:[%s0 + $0x8] sm:$0xff]
    %v42 = vld [vmem:[%s0 + $0x10] sm:$0xff]
    %v43 = vld [vmem:[%s0 + $0x18] sm:$0xff]
    %v44 = vld [vmem:[%s0 + $0x20] sm:$0xff]
    %v45 = vld [vmem:[%s0 + $0x28] sm:$0xff]
    %v46 = vld [vmem:[%s0 + $0x30] sm:$0xff]
    %v47 = vld [vmem:[%s0 + $0x38] sm:$0xff]
    %v48 = vld [vmem:[%s0 + $0x40] sm:$0xff]
    %v49 = vld [vmem:[%s0 + $0x48] sm:$0xff]
    %v50 = vld [vmem:[%s0 + $0x50] sm:$0xff]
    %v51 = vld [vmem:[%s0 + $0x58] sm:$0xff]
    %v52 = vld [vmem:[%s0 + $0x60] sm:$0xff]
    %v53 = vld [vmem:[%s0 + $0x68] sm:$0xff]
    %v54 = vld [vmem:[%s0 + $0x70] sm:$0xff]
    %v55 = vld [vmem:[%s0 + $0x78] sm:$0xff]
    %v56 = vld [vmem:[%s0 + $0x80] sm:$0xff]
    %v57 = vld [vmem:[%s0 + $0x88] sm:$0xff]
    %v58 = vld [vmem:[%s0 + $0x90] sm:$0xff]
    %v59 = vld [vmem:[%s0 + $0x98] sm:$0xff]
    %v60 = vld [vmem:[%s0 + $0xa0] sm:$0xff]
    %v61 = vld [vmem:[%s0 + $0xa8] sm:$0xff]
    %v62 = vld [vmem:[%s0 + $0xb0] sm:$0xff]
    %v63 = vld [vmem:[%s0 + $0xb8] sm:$0xff]
    %v64 = vld [vmem:[%s0 + $0xc0] sm:$0xff]
    %v65 = vld [vmem:[%s0 + $0xc8] sm:$0xff]
    %v66 = vld [vmem:[%s0 + $0xd0] sm:$0xff]
    %v67 = vld [vmem:[%s0 + $0xd8] sm:$0xff]
    %v68 = vld [vmem:[%s0 + $0xe0] sm:$0xff]
    %v69 = vld [vmem:[%s0 + $0xe8] sm:$0xff]
    %v70 = vld [vmem:[%s0 + $0xf0] sm:$0xff]
    %v71 = vld [vmem:[%s0 + $0xf8] sm:$0xff]
    %v72 = vld [vmem:[%s0 + $0x100] sm:$0xff]
    %v73 = vld [vmem:[%s0 + $0x108] sm:$0xff]
    %v74 = vld [vmem:[%s0 + $0x110] sm:$0xff]
    %v75 = vld [vmem:[%s0 + $0x118] sm:$0xff]
    %v76 = vld [vmem:[%s0 + $0x120] sm:$0xff]
    %v77 = vld [vmem:[%s0 + $0x128] sm:$0xff]
    %v78 = vld [vmem:[%s0 + $0x130] sm:$0xff]
    %v79 = vld [vmem:[%s0 + $0x138] sm:$0xff]
    %v80 = vld [vmem:[%s0 + $0x140] sm:$0xff]
    %v81 = vld [vmem:[%s0 + $0x148] sm:$0xff]
    %v82 = vld [vmem:[%s0 + $0x150] sm:$0xff]
    %v83 = vld [vmem:[%s0 + $0x158] sm:$0xff]
    %v84 = vld [vmem:[%s0 + $0x160] sm:$0xff]
    %v85 = vld [vmem:[%s0 + $0x168] sm:$0xff]
    %v86 = vld [vmem:[%s0 + $0x170] sm:$0xff]
    %v87 = vld [vmem:[%s0 + $0x178] sm:$0xff]
    %v88 = vld [vmem:[%s0 + $0x180] sm:$0xff]
    %v89 = vld [vmem:[%s0 + $0x188] sm:$0xff]
    %v90 = vld [vmem:[%s0 + $0x190] sm:$0xff]
    %v91 = vld [vmem:[%s0 + $0x198] sm:$0xff]
    %v92 = vld [vmem:[%s0 + $0x1a0] sm:$0xff]
    %v93 = vld [vmem:[%s0 + $0x1a8] sm:$0xff]
    %v94 = vld [vmem:[%s0 + $0x1b0] sm:$0xff]
    %v95 = vld [vmem:[%s0 + $0x1b8] sm:$0xff]
    %v96 = vld [vmem:[%s0 + $0x1c0] sm:$0xff]
    %v97 = vld [vmem:[%s0 + $0x1c8] sm:$0xff]
    %v98 = vld [vmem:[%s0 + $0x1d0] sm:$0xff]
    %v99 = vld [vmem:[%s0 + $0x1d8] sm:$0xff]
    %v100 = vld [vmem:[%s0 + $0x1e0] sm:$0xff]
    %v101 = vld [vmem:[%s0 + $0x1e8] sm:$0xff]
    %v102 = vld [vmem:[%s0 + $0x1f0] sm:$0xff]
    %v103 = vld [vmem:[%s0 + $0x1f8] sm:$0xff]
    %v104 = vld [vmem:[%s0 + $0x200] sm:$0xff]
    %v105 = vld [vmem:[%s0 + $0x208] sm:$0xff]
    %v106 = vld [vmem:[%s0 + $0x210] sm:$0xff]
    %v107 = vld [vmem:[%s0 + $0x218] sm:$0xff]
    %v108 = vld [vmem:[%s0 + $0x220] sm:$0xff]
    %v109 = vld [vmem:[%s0 + $0x228] sm:$0xff]
    %v110 = vld [vmem:[%s0 + $0x230] sm:$0xff]
    %v111 = vld [vmem:[%s0 + $0x238] sm:$0xff]
    %v112 = vld [vmem:[%s0 + $0x240] sm:$0xff]
    %v113 = vld [vmem:[%s0 + $0x248] sm:$0xff]
    %v114 = vld [vmem:[%s0 + $0x250] sm:$0xff]
    %v115 = vld [vmem:[%s0 + $0x258] sm:$0xff]
    %v116 = vld [vmem:[%s0 + $0x260] sm:$0xff]
    %v117 = vld [vmem:[%s0 + $0x268] sm:$0xff]
    %v118 = vld [vmem:[%s0 + $0x270] sm:$0xff]
    %v119 = vld [vmem:[%s0 + $0x278] sm:$0xff]
    %v120 = vld [vmem:[%s0 + $0x280] sm:$0xff]
    %v121 = vld [vmem:[%s0 + $0x288] sm:$0xff]
    %v122 = vld [vmem:[%s0 + $0x290] sm:$0xff]
    %v123 = vld [vmem:[%s0 + $0x298] sm:$0xff]
    %v124 = vld [vmem:[%s0 + $0x2a0] sm:$0xff]
    %v125 = vld [vmem:[%s0 + $0x2a8] sm:$0xff]
    %v126 = vld [vmem:[%s0 + $0x2b0] sm:$0xff]
    %v127 = vld [vmem:[%s0 + $0x2b8] sm:$0xff]
    %v128 = vld [vmem:[%s0 + $0x2c0] sm:$0xff]
    %v129 = vld [vmem:[%s0 + $0x2c8] sm:$0xff]
    %v130 = vld [vmem:[%s0 + $0x2d0] sm:$0xff]
    %v131 = vld [vmem:[%s0 + $0x2d8] sm:$0xff]
    %v132 = vld [vmem:[%s0 + $0x2e0] sm:$0xff]
    %v133 = vld [vmem:[%s0 + $0x2e8] sm:$0xff]
    %v134 = vld [vmem:[%s0 + $0x2f0] sm:$0xff]
    %v135 = vld [vmem:[%s0 + $0x2f8] sm:$0xff]
    %v136 = vld [vmem:[%s0 + $0x300] sm:$0xff]
    %v137 = vld [vmem:[%s0 + $0x308] sm:$0xff]
    %v138 = vld [vmem:[%s0 + $0x310] sm:$0xff]
    %v139 = vld [vmem:[%s0 + $0x318] sm:$0xff]
    %v140 = vld [vmem:[%s0 + $0x320] sm:$0xff]
    %v141 = vld [vmem:[%s0 + $0x328] sm:$0xff]
    %v142 = vld [vmem:[%s0 + $0x330] sm:$0xff]
    %v143 = vld [vmem:[%s0 + $0x338] sm:$0xff]
    %v144 = vld [vmem:[%s0 + $0x340] sm:$0xff]
    %v145 = vld [vmem:[%s0 + $0x348] sm:$0xff]
    %v146 = vld [vmem:[%s0 + $0x350] sm:$0xff]
    %v147 = vld [vmem:[%s0 + $0x358] sm:$0xff]
    %v148 = vld [vmem:[%s0 + $0x360] sm:$0xff]
    %v149 = vld [vmem:[%s0 + $0x368] sm:$0xff]
    %v150 = vld [vmem:[%s0 + $0x370] sm:$0xff]
    %v151 = vld [vmem:[%s0 + $0x378] sm:$0xff]
    %v152 = vld [vmem:[%s0 + $0x380] sm:$0xff]
    %v153 = vld [vmem:[%s0 + $0x388] sm:$0xff]
    %v154 = vld [vmem:[%s0 + $0x390] sm:$0xff]
    %v155 = vld [vmem:[%s0 + $0x398] sm:$0xff]
    %v156 = vld [vmem:[%s0 + $0x3a0] sm:$0xff]
    %v157 = vld [vmem:[%s0 + $0x3a8] sm:$0xff]
    %v158 = vld [vmem:[%s0 + $0x3b0] sm:$0xff]
    %v159 = vld [vmem:[%s0 + $0x3b8] sm:$0xff]
    %v160 = vld [vmem:[%s0 + $0x3c0] sm:$0xff]
    %v161 = vld [vmem:[%s0 + $0x3c8] sm:$0xff]
    %v162 = vld [vmem:[%s0 + $0x3d0] sm:$0xff]
    %v163 = vld [vmem:[%s0 + $0x3d8] sm:$0xff]
    %v164 = vld [vmem:[%s0 + $0x3e0] sm:$0xff]
    %v165 = vld [vmem:[%s0 + $0x3e8] sm:$0xff]
    %v166 = vld [vmem:[%s0 + $0x3f0] sm:$0xff]
    %v167 = vld [vmem:[%s0 + $0x3f8] sm:$0xff]
    %v168 = vld [vmem:[%s0 + $0x400] sm:$0xff]
    %v169 = vld [vmem:[%s0 + $0x408] sm:$0xff]
    %v170 = vld [vmem:[%s0 + $0x410] sm:$0xff]
    %v171 = vld [vmem:[%s0 + $0x418] sm:$0xff]
    %v172 = vld [vmem:[%s0 + $0x420] sm:$0xff]
    %v173 = vld [vmem:[%s0 + $0x428] sm:$0xff]
    %v174 = vld [vmem:[%s0 + $0x430] sm:$0xff]
    %v175 = vld [vmem:[%s0 + $0x438] sm:$0xff]
    %v176 = vld [vmem:[%s0 + $0x440] sm:$0xff]
    %v177 = vld [vmem:[%s0 + $0x448] sm:$0xff]
    %v178 = vld [vmem:[%s0 + $0x450] sm:$0xff]
    %v179 = vld [vmem:[%s0 + $0x458] sm:$0xff]
    %v180 = vld [vmem:[%s0 + $0x460] sm:$0xff]
    %v181 = vld [vmem:[%s0 + $0x468] sm:$0xff]
    %v182 = vld [vmem:[%s0 + $0x470] sm:$0xff]
    %v183 = vld [vmem:[%s0 + $0x478] sm:$0xff]
    %v184 = vld [vmem:[%s0 + $0x480] sm:$0xff]
    %v185 = vld [vmem:[%s0 + $0x488] sm:$0xff]
    %v186 = vld [vmem:[%s0 + $0x490] sm:$0xff]
    %v187 = vld [vmem:[%s0 + $0x498] sm:$0xff]
    %v188 = vld [vmem:[%s0 + $0x4a0] sm:$0xff]
    %v189 = vld [vmem:[%s0 + $0x4a8] sm:$0xff]
    %v190 = vld [vmem:[%s0 + $0x4b0] sm:$0xff]
    %v191 = vld [vmem:[%s0 + $0x4b8] sm:$0xff]
    %v192 = vld [vmem:[%s0 + $0x4c0] sm:$0xff]
    %v193 = vld [vmem:[%s0 + $0x4c8] sm:$0xff]
    %v194 = vld [vmem:[%s0 + $0x4d0] sm:$0xff]
    %v195 = vld [vmem:[%s0 + $0x4d8] sm:$0xff]
    %v196 = vld [vmem:[%s0 + $0x4e0] sm:$0xff]
    %v197 = vld [vmem:[%s0 + $0x4e8] sm:$0xff]
    %v198 = vld [vmem:[%s0 + $0x4f0] sm:$0xff]
    %v199 = vld [vmem:[%s0 + $0x4f8] sm:$0xff]
    %v200 = vld [vmem:[%s0 + $0x500] sm:$0xff]
    %v201 = vld [vmem:[%s0 + $0x508] sm:$0xff]
    %v202 = vld [vmem:[%s0 + $0x510] sm:$0xff]
    %v203 = vld [vmem:[%s0 + $0x518] sm:$0xff]
    %v204 = vld [vmem:[%s0 + $0x520] sm:$0xff]
    %v205 = vld [vmem:[%s0 + $0x528] sm:$0xff]
    %v206 = vld [vmem:[%s0 + $0x530] sm:$0xff]
    %v207 = vld [vmem:[%s0 + $0x538] sm:$0xff]
    %v208 = vld [vmem:[%s0 + $0x540] sm:$0xff]
    %v209 = vld [vmem:[%s0 + $0x548] sm:$0xff]
    %v210 = vld [vmem:[%s0 + $0x550] sm:$0xff]
    %v211 = vld [vmem:[%s0 + $0x558] sm:$0xff]
    %v212 = vld [vmem:[%s0 + $0x560] sm:$0xff]
    %v213 = vld [vmem:[%s0 + $0x568] sm:$0xff]
    %v214 = vld [vmem:[%s0 + $0x570] sm:$0xff]
    %v215 = vld [vmem:[%s0 + $0x578] sm:$0xff]
    %v216 = vld [vmem:[%s0 + $0x580] sm:$0xff]
    %v217 = vld [vmem:[%s0 + $0x588] sm:$0xff]
    %v218 = vld [vmem:[%s0 + $0x590] sm:$0xff]
    %v219 = vld [vmem:[%s0 + $0x598] sm:$0xff]
    %v220 = vld [vmem:[%s0 + $0x5a0] sm:$0xff]
    %v221 = vld [vmem:[%s0 + $0x5a8] sm:$0xff]
    %v222 = vld [vmem:[%s0 + $0x5b0] sm:$0xff]
    %v223 = vld [vmem:[%s0 + $0x5b8] sm:$0xff]
    %v224 = vld [vmem:[%s0 + $0x5c0] sm:$0xff]
    %v225 = vld [vmem:[%s0 + $0x5c8] sm:$0xff]
    %v226 = vld [vmem:[%s0 + $0x5d0] sm:$0xff]
    %v227 = vld [vmem:[%s0 + $0x5d8] sm:$0xff]
    %v228 = vld [vmem:[%s0 + $0x5e0] sm:$0xff]
    %v229 = vld [vmem:[%s0 + $0x5e8] sm:$0xff]
    %v230 = vld [vmem:[%s0 + $0x5f0] sm:$0xff]
    %v231 = vld [vmem:[%s0 + $0x5f8] sm:$0xff]
    %v232 = vld [vmem:[#allocation2] sm:$0xff]
    %v233 = vld [vmem:[#allocation2 + $0x8] sm:$0xff]
    %v234 = vld [vmem:[#allocation2 + $0x10] sm:$0xff]
    %v235 = vld [vmem:[#allocation2 + $0x18] sm:$0xff]
    %v236 = vld [vmem:[#allocation2 + $0x20] sm:$0xff]
    %v237 = vld [vmem:[#allocation2 + $0x28] sm:$0xff]
    %v238 = vld [vmem:[#allocation2 + $0x30] sm:$0xff]
    %v239 = vld [vmem:[#allocation2 + $0x38] sm:$0xff]
    %v240 = vld [vmem:[#allocation2 + $0x40] sm:$0xff]
    %v241 = vld [vmem:[#allocation2 + $0x48] sm:$0xff]
    %v242 = vld [vmem:[#allocation2 + $0x50] sm:$0xff]
    %v243 = vld [vmem:[#allocation2 + $0x58] sm:$0xff]
    %v244 = vld [vmem:[#allocation2 + $0x60] sm:$0xff]
    %v245 = vld [vmem:[#allocation2 + $0x68] sm:$0xff]
    %v246 = vld [vmem:[#allocation2 + $0x70] sm:$0xff]
    %v247 = vld [vmem:[#allocation2 + $0x78] sm:$0xff]
    %v248 = vld [vmem:[#allocation2 + $0x80] sm:$0xff]
    %v249 = vld [vmem:[#allocation2 + $0x88] sm:$0xff]
    %v250 = vld [vmem:[#allocation2 + $0x90] sm:$0xff]
    %v251 = vld [vmem:[#allocation2 + $0x98] sm:$0xff]
    %v252 = vld [vmem:[#allocation2 + $0xa0] sm:$0xff]
    %v253 = vld [vmem:[#allocation2 + $0xa8] sm:$0xff]
    %v254 = vld [vmem:[#allocation2 + $0xb0] sm:$0xff]
    %v255 = vld [vmem:[#allocation2 + $0xb8] sm:$0xff]
    %v256 = vld [vmem:[#allocation2 + $0xc0] sm:$0xff]
    %v257 = vld [vmem:[#allocation2 + $0xc8] sm:$0xff]
    %v258 = vld [vmem:[#allocation2 + $0xd0] sm:$0xff]
    %v259 = vld [vmem:[#allocation2 + $0xd8] sm:$0xff]
    %v260 = vld [vmem:[#allocation2 + $0xe0] sm:$0xff]
    %v261 = vld [vmem:[#allocation2 + $0xe8] sm:$0xff]
    %v262 = vld [vmem:[#allocation2 + $0xf0] sm:$0xff]
    %v263 = vld [vmem:[#allocation2 + $0xf8] sm:$0xff]
    %v264 = vld [vmem:[#allocation2 + $0x100] sm:$0xff]
    %v265 = vld [vmem:[#allocation2 + $0x108] sm:$0xff]
    %v266 = vld [vmem:[#allocation2 + $0x110] sm:$0xff]
    %v267 = vld [vmem:[#allocation2 + $0x118] sm:$0xff]
    %v268 = vld [vmem:[#allocation2 + $0x120] sm:$0xff]
    %v269 = vld [vmem:[#allocation2 + $0x128] sm:$0xff]
    %v270 = vld [vmem:[#allocation2 + $0x130] sm:$0xff]
    %v271 = vld [vmem:[#allocation2 + $0x138] sm:$0xff]
    %v272 = vld [vmem:[#allocation2 + $0x140] sm:$0xff]
    %v273 = vld [vmem:[#allocation2 + $0x148] sm:$0xff]
    %v274 = vld [vmem:[#allocation2 + $0x150] sm:$0xff]
    %v275 = vld [vmem:[#allocation2 + $0x158] sm:$0xff]
    %v276 = vld [vmem:[#allocation2 + $0x160] sm:$0xff]
    %v277 = vld [vmem:[#allocation2 + $0x168] sm:$0xff]
    %v278 = vld [vmem:[#allocation2 + $0x170] sm:$0xff]
    %v279 = vld [vmem:[#allocation2 + $0x178] sm:$0xff]
    %v280 = vld [vmem:[#allocation4] sm:$0x1]
    %v282 = vlaneseq
    %v283 = vshrl.u32 %v282, 7
    %v284 = vsub.s32 0, %v283
    %v285 = vrot.slane %v280, %v284
    %287 = vmatprep.subr.mxu0 0.0
    %288 = vmatpush1.msra.mxu0 %v247
    %289 = vmatprep.subr.mxu0 0.0
    %290 = vmatpush1.msra.mxu0 %v246
    %291 = vmatprep.subr.mxu0 0.0
    %292 = vmatpush1.msra.mxu0 %v245
    %293 = vmatprep.subr.mxu0 0.0
    %294 = vmatpush1.msra.mxu0 %v244
    %295 = vmatprep.subr.mxu0 0.0
    %296 = vmatpush1.msra.mxu0 %v243
    %297 = vmatprep.subr.mxu0 0.0
    %298 = vmatpush1.msra.mxu0 %v242
    %299 = vmatprep.subr.mxu0 0.0
    %300 = vmatpush1.msra.mxu0 %v241
    %301 = vmatprep.subr.mxu0 0.0
    %302 = vmatpush1.msra.mxu0 %v240
    %303 = vmatprep.subr.mxu0 0.0
    %304 = vmatpush1.msra.mxu0 %v239
    %305 = vmatprep.subr.mxu0 0.0
    %306 = vmatpush1.msra.mxu0 %v238
    %307 = vmatprep.subr.mxu0 0.0
    %308 = vmatpush1.msra.mxu0 %v237
    %309 = vmatprep.subr.mxu0 0.0
    %310 = vmatpush1.msra.mxu0 %v236
    %311 = vmatprep.subr.mxu0 0.0
    %312 = vmatpush1.msra.mxu0 %v235
    %313 = vmatprep.subr.mxu0 0.0
    %314 = vmatpush1.msra.mxu0 %v234
    %315 = vmatprep.subr.mxu0 0.0
    %316 = vmatpush1.msra.mxu0 %v233
    %317 = vmatprep.subr.mxu0 0.0
    %318 = vmatpush1.msra.mxu0 %v232
    %319 = vmatprep.subr.mxu0 0.0
    %320 = vmatpush2.msra.mxu0 %v263
    %321 = vmatprep.subr.mxu0 0.0
    %322 = vmatpush2.msra.mxu0 %v262
    %323 = vmatprep.subr.mxu0 0.0
    %324 = vmatpush2.msra.mxu0 %v261
    %325 = vmatprep.subr.mxu0 0.0
    %326 = vmatpush2.msra.mxu0 %v260
    %327 = vmatprep.subr.mxu0 0.0
    %328 = vmatpush2.msra.mxu0 %v259
    %329 = vmatprep.subr.mxu0 0.0
    %330 = vmatpush2.msra.mxu0 %v258
    %331 = vmatprep.subr.mxu0 0.0
    %332 = vmatpush2.msra.mxu0 %v257
    %333 = vmatprep.subr.mxu0 0.0
    %334 = vmatpush2.msra.mxu0 %v256
    %335 = vmatprep.subr.mxu0 0.0
    %336 = vmatpush2.msra.mxu0 %v255
    %337 = vmatprep.subr.mxu0 0.0
    %338 = vmatpush2.msra.mxu0 %v254
    %339 = vmatprep.subr.mxu0 0.0
    %340 = vmatpush2.msra.mxu0 %v253
    %341 = vmatprep.subr.mxu0 0.0
    %342 = vmatpush2.msra.mxu0 %v252
    %343 = vmatprep.subr.mxu0 0.0
    %344 = vmatpush2.msra.mxu0 %v251
    %345 = vmatprep.subr.mxu0 0.0
    %346 = vmatpush2.msra.mxu0 %v250
    %347 = vmatprep.subr.mxu0 0.0
    %348 = vmatpush2.msra.mxu0 %v249
    %349 = vmatprep.subr.mxu0 0.0
    %350 = vmatpush2.msra.mxu0 %v248
    %351 = vmatprep.mubr.f32.mxu0 %v41
    %352 = vmatmul.mubr.f32.gmra.mxu0 %v40
    %v353 = vpop.f32.mrf.mxu0
    %v354 = vadd.f32 %v285, %v353
    %v355 = vpop.f32.mrf.mxu0
    %356 = vmatprep.mubr.f32.mxu0 %v44
    %357 = vmatmul.mubr.f32.gmra.mxu0 %v43
    %v358 = vpop.f32.mrf.mxu0
    %v359 = vadd.f32 %v285, %v358
    %v360 = vpop.f32.mrf.mxu0
    %361 = vmatprep.mubr.f32.mxu0 %v47
    %362 = vmatmul.mubr.f32.gmra.mxu0 %v46
    %v363 = vpop.f32.mrf.mxu0
    %v364 = vadd.f32 %v285, %v363
    %v365 = vpop.f32.mrf.mxu0
    %366 = vmatprep.mubr.f32.mxu0 %v50
    %367 = vmatmul.mubr.f32.gmra.mxu0 %v49
    %v368 = vpop.f32.mrf.mxu0
    %v369 = vadd.f32 %v285, %v368
    %v370 = vpop.f32.mrf.mxu0
    %371 = vmatprep.mubr.f32.mxu0 %v53
    %372 = vmatmul.mubr.f32.gmra.mxu0 %v52
    %v373 = vpop.f32.mrf.mxu0
    %v374 = vadd.f32 %v285, %v373
    %v375 = vpop.f32.mrf.mxu0
    %376 = vmatprep.mubr.f32.mxu0 %v56
    %377 = vmatmul.mubr.f32.gmra.mxu0 %v55
    %v378 = vpop.f32.mrf.mxu0
    %v379 = vadd.f32 %v285, %v378
    %v380 = vpop.f32.mrf.mxu0
    %381 = vmatprep.mubr.f32.mxu0 %v59
    %382 = vmatmul.mubr.f32.gmra.mxu0 %v58
    %v383 = vpop.f32.mrf.mxu0
    %v384 = vadd.f32 %v285, %v383
    %v385 = vpop.f32.mrf.mxu0
    %386 = vmatprep.mubr.f32.mxu0 %v62
    %387 = vmatmul.mubr.f32.gmra.mxu0 %v61
    %v388 = vpop.f32.mrf.mxu0
    %v389 = vadd.f32 %v285, %v388
    %v390 = vpop.f32.mrf.mxu0
    %391 = vmatprep.mubr.f32.mxu0 %v65
    %392 = vmatmul.mubr.f32.gmra.mxu0 %v64
    %v393 = vpop.f32.mrf.mxu0
    %v394 = vadd.f32 %v285, %v393
    %v395 = vpop.f32.mrf.mxu0
    %396 = vmatprep.mubr.f32.mxu0 %v68
    %397 = vmatmul.mubr.f32.gmra.mxu0 %v67
    %v398 = vpop.f32.mrf.mxu0
    %v399 = vadd.f32 %v285, %v398
    %v400 = vpop.f32.mrf.mxu0
    %401 = vmatprep.mubr.f32.mxu0 %v71
    %402 = vmatmul.mubr.f32.gmra.mxu0 %v70
    %v403 = vpop.f32.mrf.mxu0
    %v404 = vadd.f32 %v285, %v403
    %v405 = vpop.f32.mrf.mxu0
    %406 = vmatprep.mubr.f32.mxu0 %v74
    %407 = vmatmul.mubr.f32.gmra.mxu0 %v73
    %v408 = vpop.f32.mrf.mxu0
    %v409 = vadd.f32 %v285, %v408
    %v410 = vpop.f32.mrf.mxu0
    %411 = vmatprep.mubr.f32.mxu0 %v77
    %412 = vmatmul.mubr.f32.gmra.mxu0 %v76
    %v413 = vpop.f32.mrf.mxu0
    %v414 = vadd.f32 %v285, %v413
    %v415 = vpop.f32.mrf.mxu0
    %416 = vmatprep.mubr.f32.mxu0 %v80
    %417 = vmatmul.mubr.f32.gmra.mxu0 %v79
    %v418 = vpop.f32.mrf.mxu0
    %v419 = vadd.f32 %v285, %v418
    %v420 = vpop.f32.mrf.mxu0
    %421 = vmatprep.mubr.f32.mxu0 %v83
    %422 = vmatmul.mubr.f32.gmra.mxu0 %v82
    %v423 = vpop.f32.mrf.mxu0
    %v424 = vadd.f32 %v285, %v423
    %v425 = vpop.f32.mrf.mxu0
    %426 = vmatprep.mubr.f32.mxu0 %v86
    %427 = vmatmul.mubr.f32.gmra.mxu0 %v85
    %v428 = vpop.f32.mrf.mxu0
    %v429 = vadd.f32 %v285, %v428
    %v430 = vpop.f32.mrf.mxu0
    %431 = vmatprep.mubr.f32.mxu0 %v89
    %432 = vmatmul.mubr.f32.gmra.mxu0 %v88
    %v433 = vpop.f32.mrf.mxu0
    %v434 = vadd.f32 %v285, %v433
    %v435 = vpop.f32.mrf.mxu0
    %436 = vmatprep.mubr.f32.mxu0 %v92
    %437 = vmatmul.mubr.f32.gmra.mxu0 %v91
    %v438 = vpop.f32.mrf.mxu0
    %v439 = vadd.f32 %v285, %v438
    %v440 = vpop.f32.mrf.mxu0
    %441 = vmatprep.mubr.f32.mxu0 %v95
    %442 = vmatmul.mubr.f32.gmra.mxu0 %v94
    %v443 = vpop.f32.mrf.mxu0
    %v444 = vadd.f32 %v285, %v443
    %v445 = vpop.f32.mrf.mxu0
    %446 = vmatprep.mubr.f32.mxu0 %v98
    %447 = vmatmul.mubr.f32.gmra.mxu0 %v97
    %v448 = vpop.f32.mrf.mxu0
    %v449 = vadd.f32 %v285, %v448
    %v450 = vpop.f32.mrf.mxu0
    %451 = vmatprep.mubr.f32.mxu0 %v101
    %452 = vmatmul.mubr.f32.gmra.mxu0 %v100
    %v453 = vpop.f32.mrf.mxu0
    %v454 = vadd.f32 %v285, %v453
    %v455 = vpop.f32.mrf.mxu0
    %456 = vmatprep.mubr.f32.mxu0 %v104
    %457 = vmatmul.mubr.f32.gmra.mxu0 %v103
    %v458 = vpop.f32.mrf.mxu0
    %v459 = vadd.f32 %v285, %v458
    %v460 = vpop.f32.mrf.mxu0
    %461 = vmatprep.mubr.f32.mxu0 %v107
    %462 = vmatmul.mubr.f32.gmra.mxu0 %v106
    %v463 = vpop.f32.mrf.mxu0
    %v464 = vadd.f32 %v285, %v463
    %v465 = vpop.f32.mrf.mxu0
    %466 = vmatprep.mubr.f32.mxu0 %v110
    %467 = vmatmul.mubr.f32.gmra.mxu0 %v109
    %v468 = vpop.f32.mrf.mxu0
    %v469 = vadd.f32 %v285, %v468
    %v470 = vpop.f32.mrf.mxu0
    %471 = vmatprep.mubr.f32.mxu0 %v113
    %472 = vmatmul.mubr.f32.gmra.mxu0 %v112
    %v473 = vpop.f32.mrf.mxu0
    %v474 = vadd.f32 %v285, %v473
    %v475 = vpop.f32.mrf.mxu0
    %476 = vmatprep.mubr.f32.mxu0 %v116
    %477 = vmatmul.mubr.f32.gmra.mxu0 %v115
    %v478 = vpop.f32.mrf.mxu0
    %v479 = vadd.f32 %v285, %v478
    %v480 = vpop.f32.mrf.mxu0
    %481 = vmatprep.mubr.f32.mxu0 %v119
    %482 = vmatmul.mubr.f32.gmra.mxu0 %v118
    %v483 = vpop.f32.mrf.mxu0
    %v484 = vadd.f32 %v285, %v483
    %v485 = vpop.f32.mrf.mxu0
    %486 = vmatprep.mubr.f32.mxu0 %v122
    %487 = vmatmul.mubr.f32.gmra.mxu0 %v121
    %v488 = vpop.f32.mrf.mxu0
    %v489 = vadd.f32 %v285, %v488
    %v490 = vpop.f32.mrf.mxu0
    %491 = vmatprep.mubr.f32.mxu0 %v125
    %492 = vmatmul.mubr.f32.gmra.mxu0 %v124
    %v493 = vpop.f32.mrf.mxu0
    %v494 = vadd.f32 %v285, %v493
    %v495 = vpop.f32.mrf.mxu0
    %496 = vmatprep.mubr.f32.mxu0 %v128
    %497 = vmatmul.mubr.f32.gmra.mxu0 %v127
    %v498 = vpop.f32.mrf.mxu0
    %v499 = vadd.f32 %v285, %v498
    %v500 = vpop.f32.mrf.mxu0
    %501 = vmatprep.mubr.f32.mxu0 %v131
    %502 = vmatmul.mubr.f32.gmra.mxu0 %v130
    %v503 = vpop.f32.mrf.mxu0
    %v504 = vadd.f32 %v285, %v503
    %v505 = vpop.f32.mrf.mxu0
    %506 = vmatprep.mubr.f32.mxu0 %v134
    %507 = vmatmul.mubr.f32.gmra.mxu0 %v133
    %v508 = vpop.f32.mrf.mxu0
    %v509 = vadd.f32 %v285, %v508
    %v510 = vpop.f32.mrf.mxu0
    %511 = vmatprep.mubr.f32.mxu0 %v137
    %512 = vmatmul.mubr.f32.gmra.mxu0 %v136
    %v513 = vpop.f32.mrf.mxu0
    %v514 = vadd.f32 %v285, %v513
    %v515 = vpop.f32.mrf.mxu0
    %516 = vmatprep.mubr.f32.mxu0 %v140
    %517 = vmatmul.mubr.f32.gmra.mxu0 %v139
    %v518 = vpop.f32.mrf.mxu0
    %v519 = vadd.f32 %v285, %v518
    %v520 = vpop.f32.mrf.mxu0
    %521 = vmatprep.mubr.f32.mxu0 %v143
    %522 = vmatmul.mubr.f32.gmra.mxu0 %v142
    %v523 = vpop.f32.mrf.mxu0
    %v524 = vadd.f32 %v285, %v523
    %v525 = vpop.f32.mrf.mxu0
    %526 = vmatprep.mubr.f32.mxu0 %v146
    %527 = vmatmul.mubr.f32.gmra.mxu0 %v145
    %v528 = vpop.f32.mrf.mxu0
    %v529 = vadd.f32 %v285, %v528
    %v530 = vpop.f32.mrf.mxu0
    %531 = vmatprep.mubr.f32.mxu0 %v149
    %532 = vmatmul.mubr.f32.gmra.mxu0 %v148
    %v533 = vpop.f32.mrf.mxu0
    %v534 = vadd.f32 %v285, %v533
    %v535 = vpop.f32.mrf.mxu0
    %536 = vmatprep.mubr.f32.mxu0 %v152
    %537 = vmatmul.mubr.f32.gmra.mxu0 %v151
    %v538 = vpop.f32.mrf.mxu0
    %v539 = vadd.f32 %v285, %v538
    %v540 = vpop.f32.mrf.mxu0
    %541 = vmatprep.mubr.f32.mxu0 %v155
    %542 = vmatmul.mubr.f32.gmra.mxu0 %v154
    %v543 = vpop.f32.mrf.mxu0
    %v544 = vadd.f32 %v285, %v543
    %v545 = vpop.f32.mrf.mxu0
    %546 = vmatprep.mubr.f32.mxu0 %v158
    %547 = vmatmul.mubr.f32.gmra.mxu0 %v157
    %v548 = vpop.f32.mrf.mxu0
    %v549 = vadd.f32 %v285, %v548
    %v550 = vpop.f32.mrf.mxu0
    %551 = vmatprep.mubr.f32.mxu0 %v161
    %552 = vmatmul.mubr.f32.gmra.mxu0 %v160
    %v553 = vpop.f32.mrf.mxu0
    %v554 = vadd.f32 %v285, %v553
    %v555 = vpop.f32.mrf.mxu0
    %556 = vmatprep.mubr.f32.mxu0 %v164
    %557 = vmatmul.mubr.f32.gmra.mxu0 %v163
    %v558 = vpop.f32.mrf.mxu0
    %v559 = vadd.f32 %v285, %v558
    %v560 = vpop.f32.mrf.mxu0
    %561 = vmatprep.mubr.f32.mxu0 %v167
    %562 = vmatmul.mubr.f32.gmra.mxu0 %v166
    %v563 = vpop.f32.mrf.mxu0
    %v564 = vadd.f32 %v285, %v563
    %v565 = vpop.f32.mrf.mxu0
    %566 = vmatprep.mubr.f32.mxu0 %v170
    %567 = vmatmul.mubr.f32.gmra.mxu0 %v169
    %v568 = vpop.f32.mrf.mxu0
    %v569 = vadd.f32 %v285, %v568
    %v570 = vpop.f32.mrf.mxu0
    %571 = vmatprep.mubr.f32.mxu0 %v173
    %572 = vmatmul.mubr.f32.gmra.mxu0 %v172
    %v573 = vpop.f32.mrf.mxu0
    %v574 = vadd.f32 %v285, %v573
    %v575 = vpop.f32.mrf.mxu0
    %576 = vmatprep.mubr.f32.mxu0 %v176
    %577 = vmatmul.mubr.f32.gmra.mxu0 %v175
    %v578 = vpop.f32.mrf.mxu0
    %v579 = vadd.f32 %v285, %v578
    %v580 = vpop.f32.mrf.mxu0
    %581 = vmatprep.mubr.f32.mxu0 %v179
    %582 = vmatmul.mubr.f32.gmra.mxu0 %v178
    %v583 = vpop.f32.mrf.mxu0
    %v584 = vadd.f32 %v285, %v583
    %v585 = vpop.f32.mrf.mxu0
    %586 = vmatprep.mubr.f32.mxu0 %v182
    %587 = vmatmul.mubr.f32.gmra.mxu0 %v181
    %v588 = vpop.f32.mrf.mxu0
    %v589 = vadd.f32 %v285, %v588
    %v590 = vpop.f32.mrf.mxu0
    %591 = vmatprep.mubr.f32.mxu0 %v185
    %592 = vmatmul.mubr.f32.gmra.mxu0 %v184
    %v593 = vpop.f32.mrf.mxu0
    %v594 = vadd.f32 %v285, %v593
    %v595 = vpop.f32.mrf.mxu0
    %596 = vmatprep.mubr.f32.mxu0 %v188
    %597 = vmatmul.mubr.f32.gmra.mxu0 %v187
    %v598 = vpop.f32.mrf.mxu0
    %v599 = vadd.f32 %v285, %v598
    %v600 = vpop.f32.mrf.mxu0
    %601 = vmatprep.mubr.f32.mxu0 %v191
    %602 = vmatmul.mubr.f32.gmra.mxu0 %v190
    %v603 = vpop.f32.mrf.mxu0
    %v604 = vadd.f32 %v285, %v603
    %v605 = vpop.f32.mrf.mxu0
    %606 = vmatprep.mubr.f32.mxu0 %v194
    %607 = vmatmul.mubr.f32.gmra.mxu0 %v193
    %v608 = vpop.f32.mrf.mxu0
    %v609 = vadd.f32 %v285, %v608
    %v610 = vpop.f32.mrf.mxu0
    %611 = vmatprep.mubr.f32.mxu0 %v197
    %612 = vmatmul.mubr.f32.gmra.mxu0 %v196
    %v613 = vpop.f32.mrf.mxu0
    %v614 = vadd.f32 %v285, %v613
    %v615 = vpop.f32.mrf.mxu0
    %616 = vmatprep.mubr.f32.mxu0 %v200
    %617 = vmatmul.mubr.f32.gmra.mxu0 %v199
    %v618 = vpop.f32.mrf.mxu0
    %v619 = vadd.f32 %v285, %v618
    %v620 = vpop.f32.mrf.mxu0
    %621 = vmatprep.mubr.f32.mxu0 %v203
    %622 = vmatmul.mubr.f32.gmra.mxu0 %v202
    %v623 = vpop.f32.mrf.mxu0
    %v624 = vadd.f32 %v285, %v623
    %v625 = vpop.f32.mrf.mxu0
    %626 = vmatprep.mubr.f32.mxu0 %v206
    %627 = vmatmul.mubr.f32.gmra.mxu0 %v205
    %v628 = vpop.f32.mrf.mxu0
    %v629 = vadd.f32 %v285, %v628
    %v630 = vpop.f32.mrf.mxu0
    %631 = vmatprep.mubr.f32.mxu0 %v209
    %632 = vmatmul.mubr.f32.gmra.mxu0 %v208
    %v633 = vpop.f32.mrf.mxu0
    %v634 = vadd.f32 %v285, %v633
    %v635 = vpop.f32.mrf.mxu0
    %636 = vmatprep.mubr.f32.mxu0 %v212
    %637 = vmatmul.mubr.f32.gmra.mxu0 %v211
    %v638 = vpop.f32.mrf.mxu0
    %v639 = vadd.f32 %v285, %v638
    %v640 = vpop.f32.mrf.mxu0
    %641 = vmatprep.mubr.f32.mxu0 %v215
    %642 = vmatmul.mubr.f32.gmra.mxu0 %v214
    %v643 = vpop.f32.mrf.mxu0
    %v644 = vadd.f32 %v285, %v643
    %v645 = vpop.f32.mrf.mxu0
    %646 = vmatprep.mubr.f32.mxu0 %v218
    %647 = vmatmul.mubr.f32.gmra.mxu0 %v217
    %v648 = vpop.f32.mrf.mxu0
    %v649 = vadd.f32 %v285, %v648
    %v650 = vpop.f32.mrf.mxu0
    %651 = vmatprep.mubr.f32.mxu0 %v221
    %652 = vmatmul.mubr.f32.gmra.mxu0 %v220
    %v653 = vpop.f32.mrf.mxu0
    %v654 = vadd.f32 %v285, %v653
    %v655 = vpop.f32.mrf.mxu0
    %656 = vmatprep.mubr.f32.mxu0 %v224
    %657 = vmatmul.mubr.f32.gmra.mxu0 %v223
    %v658 = vpop.f32.mrf.mxu0
    %v659 = vadd.f32 %v285, %v658
    %v660 = vpop.f32.mrf.mxu0
    %661 = vmatprep.mubr.f32.mxu0 %v227
    %662 = vmatmul.mubr.f32.gmra.mxu0 %v226
    %v663 = vpop.f32.mrf.mxu0
    %v664 = vadd.f32 %v285, %v663
    %v665 = vpop.f32.mrf.mxu0
    %666 = vmatprep.mubr.f32.mxu0 %v230
    %667 = vmatmul.mubr.f32.gmra.mxu0 %v229
    %v668 = vpop.f32.mrf.mxu0
    %v669 = vadd.f32 %v285, %v668
    %v670 = vpop.f32.mrf.mxu0
    %671 = vdwg.mxu0
    %672 = vmatprep.subr.mxu0 0.0
    %673 = vmatpush1.msra.mxu0 %v279
    %674 = vmatprep.subr.mxu0 0.0
    %675 = vmatpush1.msra.mxu0 %v278
    %676 = vmatprep.subr.mxu0 0.0
    %677 = vmatpush1.msra.mxu0 %v277
    %678 = vmatprep.subr.mxu0 0.0
    %679 = vmatpush1.msra.mxu0 %v276
    %680 = vmatprep.subr.mxu0 0.0
    %681 = vmatpush1.msra.mxu0 %v275
    %682 = vmatprep.subr.mxu0 0.0
    %683 = vmatpush1.msra.mxu0 %v274
    %684 = vmatprep.subr.mxu0 0.0
    %685 = vmatpush1.msra.mxu0 %v273
    %686 = vmatprep.subr.mxu0 0.0
    %687 = vmatpush1.msra.mxu0 %v272
    %688 = vmatprep.subr.mxu0 0.0
    %689 = vmatpush1.msra.mxu0 %v271
    %690 = vmatprep.subr.mxu0 0.0
    %691 = vmatpush1.msra.mxu0 %v270
    %692 = vmatprep.subr.mxu0 0.0
    %693 = vmatpush1.msra.mxu0 %v269
    %694 = vmatprep.subr.mxu0 0.0
    %695 = vmatpush1.msra.mxu0 %v268
    %696 = vmatprep.subr.mxu0 0.0
    %697 = vmatpush1.msra.mxu0 %v267
    %698 = vmatprep.subr.mxu0 0.0
    %699 = vmatpush1.msra.mxu0 %v266
    %700 = vmatprep.subr.mxu0 0.0
    %701 = vmatpush1.msra.mxu0 %v265
    %702 = vmatprep.subr.mxu0 0.0
    %703 = vmatpush1.msra.mxu0 %v264
    %704 = vmatprep.subr.mxu0 0.0
    %705 = vmatpush2.msra.mxu0 0.0
    %706 = vmatprep.subr.mxu0 0.0
    %707 = vmatpush2.msra.mxu0 0.0
    %708 = vmatprep.subr.mxu0 0.0
    %709 = vmatpush2.msra.mxu0 0.0
    %710 = vmatprep.subr.mxu0 0.0
    %711 = vmatpush2.msra.mxu0 0.0
    %712 = vmatprep.subr.mxu0 0.0
    %713 = vmatpush2.msra.mxu0 0.0
    %714 = vmatprep.subr.mxu0 0.0
    %715 = vmatpush2.msra.mxu0 0.0
    %716 = vmatprep.subr.mxu0 0.0
    %717 = vmatpush2.msra.mxu0 0.0
    %718 = vmatprep.subr.mxu0 0.0
    %719 = vmatpush2.msra.mxu0 0.0
    %720 = vmatprep.subr.mxu0 0.0
    %721 = vmatpush2.msra.mxu0 0.0
    %722 = vmatprep.subr.mxu0 0.0
    %723 = vmatpush2.msra.mxu0 0.0
    %724 = vmatprep.subr.mxu0 0.0
    %725 = vmatpush2.msra.mxu0 0.0
    %726 = vmatprep.subr.mxu0 0.0
    %727 = vmatpush2.msra.mxu0 0.0
    %728 = vmatprep.subr.mxu0 0.0
    %729 = vmatpush2.msra.mxu0 0.0
    %730 = vmatprep.subr.mxu0 0.0
    %731 = vmatpush2.msra.mxu0 0.0
    %732 = vmatprep.subr.mxu0 0.0
    %733 = vmatpush2.msra.mxu0 0.0
    %734 = vmatprep.subr.mxu0 0.0
    %735 = vmatpush2.msra.mxu0 0.0
    %736 = vmatprep.mubr.f32.mxu0 0.0
    %737 = vmatmul.mubr.f32.gmra.mxu0 %v42
    %v738 = vpop.f32.mrf.mxu0
    %v739 = vadd.f32 %v354, %v738
    %v740 = vpop.f32.mrf.mxu0
    %741 = vmatprep.mubr.f32.mxu0 0.0
    %742 = vmatmul.mubr.f32.gmra.mxu0 %v45
    %v743 = vpop.f32.mrf.mxu0
    %v744 = vadd.f32 %v359, %v743
    %v745 = vpop.f32.mrf.mxu0
    %746 = vmatprep.mubr.f32.mxu0 0.0
    %747 = vmatmul.mubr.f32.gmra.mxu0 %v48
    %v748 = vpop.f32.mrf.mxu0
    %v749 = vadd.f32 %v364, %v748
    %v750 = vpop.f32.mrf.mxu0
    %751 = vmatprep.mubr.f32.mxu0 0.0
    %752 = vmatmul.mubr.f32.gmra.mxu0 %v51
    %v753 = vpop.f32.mrf.mxu0
    %v754 = vadd.f32 %v369, %v753
    %v755 = vpop.f32.mrf.mxu0
    %756 = vmatprep.mubr.f32.mxu0 0.0
    %757 = vmatmul.mubr.f32.gmra.mxu0 %v54
    %v758 = vpop.f32.mrf.mxu0
    %v759 = vadd.f32 %v374, %v758
    %v760 = vpop.f32.mrf.mxu0
    %761 = vmatprep.mubr.f32.mxu0 0.0
    %762 = vmatmul.mubr.f32.gmra.mxu0 %v57
    %v763 = vpop.f32.mrf.mxu0
    %v764 = vadd.f32 %v379, %v763
    %v765 = vpop.f32.mrf.mxu0
    %766 = vmatprep.mubr.f32.mxu0 0.0
    %767 = vmatmul.mubr.f32.gmra.mxu0 %v60
    %v768 = vpop.f32.mrf.mxu0
    %v769 = vadd.f32 %v384, %v768
    %v770 = vpop.f32.mrf.mxu0
    %771 = vmatprep.mubr.f32.mxu0 0.0
    %772 = vmatmul.mubr.f32.gmra.mxu0 %v63
    %v773 = vpop.f32.mrf.mxu0
    %v774 = vadd.f32 %v389, %v773
    %v775 = vpop.f32.mrf.mxu0
    %776 = vmatprep.mubr.f32.mxu0 0.0
    %777 = vmatmul.mubr.f32.gmra.mxu0 %v66
    %v778 = vpop.f32.mrf.mxu0
    %v779 = vadd.f32 %v394, %v778
    %v780 = vpop.f32.mrf.mxu0
    %781 = vmatprep.mubr.f32.mxu0 0.0
    %782 = vmatmul.mubr.f32.gmra.mxu0 %v69
    %v783 = vpop.f32.mrf.mxu0
    %v784 = vadd.f32 %v399, %v783
    %v785 = vpop.f32.mrf.mxu0
    %786 = vmatprep.mubr.f32.mxu0 0.0
    %787 = vmatmul.mubr.f32.gmra.mxu0 %v72
    %v788 = vpop.f32.mrf.mxu0
    %v789 = vadd.f32 %v404, %v788
    %v790 = vpop.f32.mrf.mxu0
    %791 = vmatprep.mubr.f32.mxu0 0.0
    %792 = vmatmul.mubr.f32.gmra.mxu0 %v75
    %v793 = vpop.f32.mrf.mxu0
    %v794 = vadd.f32 %v409, %v793
    %v795 = vpop.f32.mrf.mxu0
    %796 = vmatprep.mubr.f32.mxu0 0.0
    %797 = vmatmul.mubr.f32.gmra.mxu0 %v78
    %v798 = vpop.f32.mrf.mxu0
    %v799 = vadd.f32 %v414, %v798
    %v800 = vpop.f32.mrf.mxu0
    %801 = vmatprep.mubr.f32.mxu0 0.0
    %802 = vmatmul.mubr.f32.gmra.mxu0 %v81
    %v803 = vpop.f32.mrf.mxu0
    %v804 = vadd.f32 %v419, %v803
    %v805 = vpop.f32.mrf.mxu0
    %806 = vmatprep.mubr.f32.mxu0 0.0
    %807 = vmatmul.mubr.f32.gmra.mxu0 %v84
    %v808 = vpop.f32.mrf.mxu0
    %v809 = vadd.f32 %v424, %v808
    %v810 = vpop.f32.mrf.mxu0
    %811 = vmatprep.mubr.f32.mxu0 0.0
    %812 = vmatmul.mubr.f32.gmra.mxu0 %v87
    %v813 = vpop.f32.mrf.mxu0
    %v814 = vadd.f32 %v429, %v813
    %v815 = vpop.f32.mrf.mxu0
    %816 = vmatprep.mubr.f32.mxu0 0.0
    %817 = vmatmul.mubr.f32.gmra.mxu0 %v90
    %v818 = vpop.f32.mrf.mxu0
    %v819 = vadd.f32 %v434, %v818
    %v820 = vpop.f32.mrf.mxu0
    %821 = vmatprep.mubr.f32.mxu0 0.0
    %822 = vmatmul.mubr.f32.gmra.mxu0 %v93
    %v823 = vpop.f32.mrf.mxu0
    %v824 = vadd.f32 %v439, %v823
    %v825 = vpop.f32.mrf.mxu0
    %826 = vmatprep.mubr.f32.mxu0 0.0
    %827 = vmatmul.mubr.f32.gmra.mxu0 %v96
    %v828 = vpop.f32.mrf.mxu0
    %v829 = vadd.f32 %v444, %v828
    %v830 = vpop.f32.mrf.mxu0
    %831 = vmatprep.mubr.f32.mxu0 0.0
    %832 = vmatmul.mubr.f32.gmra.mxu0 %v99
    %v833 = vpop.f32.mrf.mxu0
    %v834 = vadd.f32 %v449, %v833
    %v835 = vpop.f32.mrf.mxu0
    %836 = vmatprep.mubr.f32.mxu0 0.0
    %837 = vmatmul.mubr.f32.gmra.mxu0 %v102
    %v838 = vpop.f32.mrf.mxu0
    %v839 = vadd.f32 %v454, %v838
    %v840 = vpop.f32.mrf.mxu0
    %841 = vmatprep.mubr.f32.mxu0 0.0
    %842 = vmatmul.mubr.f32.gmra.mxu0 %v105
    %v843 = vpop.f32.mrf.mxu0
    %v844 = vadd.f32 %v459, %v843
    %v845 = vpop.f32.mrf.mxu0
    %846 = vmatprep.mubr.f32.mxu0 0.0
    %847 = vmatmul.mubr.f32.gmra.mxu0 %v108
    %v848 = vpop.f32.mrf.mxu0
    %v849 = vadd.f32 %v464, %v848
    %v850 = vpop.f32.mrf.mxu0
    %851 = vmatprep.mubr.f32.mxu0 0.0
    %852 = vmatmul.mubr.f32.gmra.mxu0 %v111
    %v853 = vpop.f32.mrf.mxu0
    %v854 = vadd.f32 %v469, %v853
    %v855 = vpop.f32.mrf.mxu0
    %856 = vmatprep.mubr.f32.mxu0 0.0
    %857 = vmatmul.mubr.f32.gmra.mxu0 %v114
    %v858 = vpop.f32.mrf.mxu0
    %v859 = vadd.f32 %v474, %v858
    %v860 = vpop.f32.mrf.mxu0
    %861 = vmatprep.mubr.f32.mxu0 0.0
    %862 = vmatmul.mubr.f32.gmra.mxu0 %v117
    %v863 = vpop.f32.mrf.mxu0
    %v864 = vadd.f32 %v479, %v863
    %v865 = vpop.f32.mrf.mxu0
    %866 = vmatprep.mubr.f32.mxu0 0.0
    %867 = vmatmul.mubr.f32.gmra.mxu0 %v120
    %v868 = vpop.f32.mrf.mxu0
    %v869 = vadd.f32 %v484, %v868
    %v870 = vpop.f32.mrf.mxu0
    %871 = vmatprep.mubr.f32.mxu0 0.0
    %872 = vmatmul.mubr.f32.gmra.mxu0 %v123
    %v873 = vpop.f32.mrf.mxu0
    %v874 = vadd.f32 %v489, %v873
    %v875 = vpop.f32.mrf.mxu0
    %876 = vmatprep.mubr.f32.mxu0 0.0
    %877 = vmatmul.mubr.f32.gmra.mxu0 %v126
    %v878 = vpop.f32.mrf.mxu0
    %v879 = vadd.f32 %v494, %v878
    %v880 = vpop.f32.mrf.mxu0
    %881 = vmatprep.mubr.f32.mxu0 0.0
    %882 = vmatmul.mubr.f32.gmra.mxu0 %v129
    %v883 = vpop.f32.mrf.mxu0
    %v884 = vadd.f32 %v499, %v883
    %v885 = vpop.f32.mrf.mxu0
    %886 = vmatprep.mubr.f32.mxu0 0.0
    %887 = vmatmul.mubr.f32.gmra.mxu0 %v132
    %v888 = vpop.f32.mrf.mxu0
    %v889 = vadd.f32 %v504, %v888
    %v890 = vpop.f32.mrf.mxu0
    %891 = vmatprep.mubr.f32.mxu0 0.0
    %892 = vmatmul.mubr.f32.gmra.mxu0 %v135
    %v893 = vpop.f32.mrf.mxu0
    %v894 = vadd.f32 %v509, %v893
    %v895 = vpop.f32.mrf.mxu0
    %896 = vmatprep.mubr.f32.mxu0 0.0
    %897 = vmatmul.mubr.f32.gmra.mxu0 %v138
    %v898 = vpop.f32.mrf.mxu0
    %v899 = vadd.f32 %v514, %v898
    %v900 = vpop.f32.mrf.mxu0
    %901 = vmatprep.mubr.f32.mxu0 0.0
    %902 = vmatmul.mubr.f32.gmra.mxu0 %v141
    %v903 = vpop.f32.mrf.mxu0
    %v904 = vadd.f32 %v519, %v903
    %v905 = vpop.f32.mrf.mxu0
    %906 = vmatprep.mubr.f32.mxu0 0.0
    %907 = vmatmul.mubr.f32.gmra.mxu0 %v144
    %v908 = vpop.f32.mrf.mxu0
    %v909 = vadd.f32 %v524, %v908
    %v910 = vpop.f32.mrf.mxu0
    %911 = vmatprep.mubr.f32.mxu0 0.0
    %912 = vmatmul.mubr.f32.gmra.mxu0 %v147
    %v913 = vpop.f32.mrf.mxu0
    %v914 = vadd.f32 %v529, %v913
    %v915 = vpop.f32.mrf.mxu0
    %916 = vmatprep.mubr.f32.mxu0 0.0
    %917 = vmatmul.mubr.f32.gmra.mxu0 %v150
    %v918 = vpop.f32.mrf.mxu0
    %v919 = vadd.f32 %v534, %v918
    %v920 = vpop.f32.mrf.mxu0
    %921 = vmatprep.mubr.f32.mxu0 0.0
    %922 = vmatmul.mubr.f32.gmra.mxu0 %v153
    %v923 = vpop.f32.mrf.mxu0
    %v924 = vadd.f32 %v539, %v923
    %v925 = vpop.f32.mrf.mxu0
    %926 = vmatprep.mubr.f32.mxu0 0.0
    %927 = vmatmul.mubr.f32.gmra.mxu0 %v156
    %v928 = vpop.f32.mrf.mxu0
    %v929 = vadd.f32 %v544, %v928
    %v930 = vpop.f32.mrf.mxu0
    %931 = vmatprep.mubr.f32.mxu0 0.0
    %932 = vmatmul.mubr.f32.gmra.mxu0 %v159
    %v933 = vpop.f32.mrf.mxu0
    %v934 = vadd.f32 %v549, %v933
    %v935 = vpop.f32.mrf.mxu0
    %936 = vmatprep.mubr.f32.mxu0 0.0
    %937 = vmatmul.mubr.f32.gmra.mxu0 %v162
    %v938 = vpop.f32.mrf.mxu0
    %v939 = vadd.f32 %v554, %v938
    %v940 = vpop.f32.mrf.mxu0
    %941 = vmatprep.mubr.f32.mxu0 0.0
    %942 = vmatmul.mubr.f32.gmra.mxu0 %v165
    %v943 = vpop.f32.mrf.mxu0
    %v944 = vadd.f32 %v559, %v943
    %v945 = vpop.f32.mrf.mxu0
    %946 = vmatprep.mubr.f32.mxu0 0.0
    %947 = vmatmul.mubr.f32.gmra.mxu0 %v168
    %v948 = vpop.f32.mrf.mxu0
    %v949 = vadd.f32 %v564, %v948
    %v950 = vpop.f32.mrf.mxu0
    %951 = vmatprep.mubr.f32.mxu0 0.0
    %952 = vmatmul.mubr.f32.gmra.mxu0 %v171
    %v953 = vpop.f32.mrf.mxu0
    %v954 = vadd.f32 %v569, %v953
    %v955 = vpop.f32.mrf.mxu0
    %956 = vmatprep.mubr.f32.mxu0 0.0
    %957 = vmatmul.mubr.f32.gmra.mxu0 %v174
    %v958 = vpop.f32.mrf.mxu0
    %v959 = vadd.f32 %v574, %v958
    %v960 = vpop.f32.mrf.mxu0
    %961 = vmatprep.mubr.f32.mxu0 0.0
    %962 = vmatmul.mubr.f32.gmra.mxu0 %v177
    %v963 = vpop.f32.mrf.mxu0
    %v964 = vadd.f32 %v579, %v963
    %v965 = vpop.f32.mrf.mxu0
    %966 = vmatprep.mubr.f32.mxu0 0.0
    %967 = vmatmul.mubr.f32.gmra.mxu0 %v180
    %v968 = vpop.f32.mrf.mxu0
    %v969 = vadd.f32 %v584, %v968
    %v970 = vpop.f32.mrf.mxu0
    %971 = vmatprep.mubr.f32.mxu0 0.0
    %972 = vmatmul.mubr.f32.gmra.mxu0 %v183
    %v973 = vpop.f32.mrf.mxu0
    %v974 = vadd.f32 %v589, %v973
    %v975 = vpop.f32.mrf.mxu0
    %976 = vmatprep.mubr.f32.mxu0 0.0
    %977 = vmatmul.mubr.f32.gmra.mxu0 %v186
    %v978 = vpop.f32.mrf.mxu0
    %v979 = vadd.f32 %v594, %v978
    %v980 = vpop.f32.mrf.mxu0
    %981 = vmatprep.mubr.f32.mxu0 0.0
    %982 = vmatmul.mubr.f32.gmra.mxu0 %v189
    %v983 = vpop.f32.mrf.mxu0
    %v984 = vadd.f32 %v599, %v983
    %v985 = vpop.f32.mrf.mxu0
    %986 = vmatprep.mubr.f32.mxu0 0.0
    %987 = vmatmul.mubr.f32.gmra.mxu0 %v192
    %v988 = vpop.f32.mrf.mxu0
    %v989 = vadd.f32 %v604, %v988
    %v990 = vpop.f32.mrf.mxu0
    %991 = vmatprep.mubr.f32.mxu0 0.0
    %992 = vmatmul.mubr.f32.gmra.mxu0 %v195
    %v993 = vpop.f32.mrf.mxu0
    %v994 = vadd.f32 %v609, %v993
    %v995 = vpop.f32.mrf.mxu0
    %996 = vmatprep.mubr.f32.mxu0 0.0
    %997 = vmatmul.mubr.f32.gmra.mxu0 %v198
    %v998 = vpop.f32.mrf.mxu0
    %v999 = vadd.f32 %v614, %v998
    %v1000 = vpop.f32.mrf.mxu0
    %1001 = vmatprep.mubr.f32.mxu0 0.0
    %1002 = vmatmul.mubr.f32.gmra.mxu0 %v201
    %v1003 = vpop.f32.mrf.mxu0
    %v1004 = vadd.f32 %v619, %v1003
    %v1005 = vpop.f32.mrf.mxu0
    %1006 = vmatprep.mubr.f32.mxu0 0.0
    %1007 = vmatmul.mubr.f32.gmra.mxu0 %v204
    %v1008 = vpop.f32.mrf.mxu0
    %v1009 = vadd.f32 %v624, %v1008
    %v1010 = vpop.f32.mrf.mxu0
    %1011 = vmatprep.mubr.f32.mxu0 0.0
    %1012 = vmatmul.mubr.f32.gmra.mxu0 %v207
    %v1013 = vpop.f32.mrf.mxu0
    %v1014 = vadd.f32 %v629, %v1013
    %v1015 = vpop.f32.mrf.mxu0
    %1016 = vmatprep.mubr.f32.mxu0 0.0
    %1017 = vmatmul.mubr.f32.gmra.mxu0 %v210
    %v1018 = vpop.f32.mrf.mxu0
    %v1019 = vadd.f32 %v634, %v1018
    %v1020 = vpop.f32.mrf.mxu0
    %1021 = vmatprep.mubr.f32.mxu0 0.0
    %1022 = vmatmul.mubr.f32.gmra.mxu0 %v213
    %v1023 = vpop.f32.mrf.mxu0
    %v1024 = vadd.f32 %v639, %v1023
    %v1025 = vpop.f32.mrf.mxu0
    %1026 = vmatprep.mubr.f32.mxu0 0.0
    %1027 = vmatmul.mubr.f32.gmra.mxu0 %v216
    %v1028 = vpop.f32.mrf.mxu0
    %v1029 = vadd.f32 %v644, %v1028
    %v1030 = vpop.f32.mrf.mxu0
    %1031 = vmatprep.mubr.f32.mxu0 0.0
    %1032 = vmatmul.mubr.f32.gmra.mxu0 %v219
    %v1033 = vpop.f32.mrf.mxu0
    %v1034 = vadd.f32 %v649, %v1033
    %v1035 = vpop.f32.mrf.mxu0
    %1036 = vmatprep.mubr.f32.mxu0 0.0
    %1037 = vmatmul.mubr.f32.gmra.mxu0 %v222
    %v1038 = vpop.f32.mrf.mxu0
    %v1039 = vadd.f32 %v654, %v1038
    %v1040 = vpop.f32.mrf.mxu0
    %1041 = vmatprep.mubr.f32.mxu0 0.0
    %1042 = vmatmul.mubr.f32.gmra.mxu0 %v225
    %v1043 = vpop.f32.mrf.mxu0
    %v1044 = vadd.f32 %v659, %v1043
    %v1045 = vpop.f32.mrf.mxu0
    %1046 = vmatprep.mubr.f32.mxu0 0.0
    %1047 = vmatmul.mubr.f32.gmra.mxu0 %v228
    %v1048 = vpop.f32.mrf.mxu0
    %v1049 = vadd.f32 %v664, %v1048
    %v1050 = vpop.f32.mrf.mxu0
    %1051 = vmatprep.mubr.f32.mxu0 0.0
    %1052 = vmatmul.mubr.f32.gmra.mxu0 %v231
    %v1053 = vpop.f32.mrf.mxu0
    %v1054 = vadd.f32 %v669, %v1053
    %v1055 = vpop.f32.mrf.mxu0
    %1056 = vdwg.mxu0
    %vm1057 = vcmp.ge.f32.partialorder %v739, 0.0
    %vm1058 = vcmp.ge.f32.partialorder %v744, 0.0
    %vm1059 = vcmp.ge.f32.partialorder %v749, 0.0
    %vm1060 = vcmp.ge.f32.partialorder %v754, 0.0
    %vm1061 = vcmp.ge.f32.partialorder %v759, 0.0
    %vm1062 = vcmp.ge.f32.partialorder %v764, 0.0
    %vm1063 = vcmp.ge.f32.partialorder %v769, 0.0
    %vm1064 = vcmp.ge.f32.partialorder %v774, 0.0
    %vm1065 = vcmp.ge.f32.partialorder %v779, 0.0
    %vm1066 = vcmp.ge.f32.partialorder %v784, 0.0
    %vm1067 = vcmp.ge.f32.partialorder %v789, 0.0
    %vm1068 = vcmp.ge.f32.partialorder %v794, 0.0
    %vm1069 = vcmp.ge.f32.partialorder %v799, 0.0
    %vm1070 = vcmp.ge.f32.partialorder %v804, 0.0
    %vm1071 = vcmp.ge.f32.partialorder %v809, 0.0
    %vm1072 = vcmp.ge.f32.partialorder %v814, 0.0
    %vm1073 = vcmp.ge.f32.partialorder %v819, 0.0
    %vm1074 = vcmp.ge.f32.partialorder %v824, 0.0
    %vm1075 = vcmp.ge.f32.partialorder %v829, 0.0
    %vm1076 = vcmp.ge.f32.partialorder %v834, 0.0
    %vm1077 = vcmp.ge.f32.partialorder %v839, 0.0
    %vm1078 = vcmp.ge.f32.partialorder %v844, 0.0
    %vm1079 = vcmp.ge.f32.partialorder %v849, 0.0
    %vm1080 = vcmp.ge.f32.partialorder %v854, 0.0
    %vm1081 = vcmp.ge.f32.partialorder %v859, 0.0
    %vm1082 = vcmp.ge.f32.partialorder %v864, 0.0
    %vm1083 = vcmp.ge.f32.partialorder %v869, 0.0
    %vm1084 = vcmp.ge.f32.partialorder %v874, 0.0
    %vm1085 = vcmp.ge.f32.partialorder %v879, 0.0
    %vm1086 = vcmp.ge.f32.partialorder %v884, 0.0
    %vm1087 = vcmp.ge.f32.partialorder %v889, 0.0
    %vm1088 = vcmp.ge.f32.partialorder %v894, 0.0
    %vm1089 = vcmp.ge.f32.partialorder %v899, 0.0
    %vm1090 = vcmp.ge.f32.partialorder %v904, 0.0
    %vm1091 = vcmp.ge.f32.partialorder %v909, 0.0
    %vm1092 = vcmp.ge.f32.partialorder %v914, 0.0
    %vm1093 = vcmp.ge.f32.partialorder %v919, 0.0
    %vm1094 = vcmp.ge.f32.partialorder %v924, 0.0
    %vm1095 = vcmp.ge.f32.partialorder %v929, 0.0
    %vm1096 = vcmp.ge.f32.partialorder %v934, 0.0
    %vm1097 = vcmp.ge.f32.partialorder %v939, 0.0
    %vm1098 = vcmp.ge.f32.partialorder %v944, 0.0
    %vm1099 = vcmp.ge.f32.partialorder %v949, 0.0
    %vm1100 = vcmp.ge.f32.partialorder %v954, 0.0
    %vm1101 = vcmp.ge.f32.partialorder %v959, 0.0
    %vm1102 = vcmp.ge.f32.partialorder %v964, 0.0
    %vm1103 = vcmp.ge.f32.partialorder %v969, 0.0
    %vm1104 = vcmp.ge.f32.partialorder %v974, 0.0
    %vm1105 = vcmp.ge.f32.partialorder %v979, 0.0
    %vm1106 = vcmp.ge.f32.partialorder %v984, 0.0
    %vm1107 = vcmp.ge.f32.partialorder %v989, 0.0
    %vm1108 = vcmp.ge.f32.partialorder %v994, 0.0
    %vm1109 = vcmp.ge.f32.partialorder %v999, 0.0
    %vm1110 = vcmp.ge.f32.partialorder %v1004, 0.0
    %vm1111 = vcmp.ge.f32.partialorder %v1009, 0.0
    %vm1112 = vcmp.ge.f32.partialorder %v1014, 0.0
    %vm1113 = vcmp.ge.f32.partialorder %v1019, 0.0
    %vm1114 = vcmp.ge.f32.partialorder %v1024, 0.0
    %vm1115 = vcmp.ge.f32.partialorder %v1029, 0.0
    %vm1116 = vcmp.ge.f32.partialorder %v1034, 0.0
    %vm1117 = vcmp.ge.f32.partialorder %v1039, 0.0
    %vm1118 = vcmp.ge.f32.partialorder %v1044, 0.0
    %vm1119 = vcmp.ge.f32.partialorder %v1049, 0.0
    %vm1120 = vcmp.ge.f32.partialorder %v1054, 0.0
    %v1121 = vmul.f32 %v739, 0.01
    %v1122 = vmul.f32 %v744, 0.01
    %v1123 = vmul.f32 %v749, 0.01
    %v1124 = vmul.f32 %v754, 0.01
    %v1125 = vmul.f32 %v759, 0.01
    %v1126 = vmul.f32 %v764, 0.01
    %v1127 = vmul.f32 %v769, 0.01
    %v1128 = vmul.f32 %v774, 0.01
    %v1129 = vmul.f32 %v779, 0.01
    %v1130 = vmul.f32 %v784, 0.01
    %v1131 = vmul.f32 %v789, 0.01
    %v1132 = vmul.f32 %v794, 0.01
    %v1133 = vmul.f32 %v799, 0.01
    %v1134 = vmul.f32 %v804, 0.01
    %v1135 = vmul.f32 %v809, 0.01
    %v1136 = vmul.f32 %v814, 0.01
    %v1137 = vmul.f32 %v819, 0.01
    %v1138 = vmul.f32 %v824, 0.01
    %v1139 = vmul.f32 %v829, 0.01
    %v1140 = vmul.f32 %v834, 0.01
    %v1141 = vmul.f32 %v839, 0.01
    %v1142 = vmul.f32 %v844, 0.01
    %v1143 = vmul.f32 %v849, 0.01
    %v1144 = vmul.f32 %v854, 0.01
    %v1145 = vmul.f32 %v859, 0.01
    %v1146 = vmul.f32 %v864, 0.01
    %v1147 = vmul.f32 %v869, 0.01
    %v1148 = vmul.f32 %v874, 0.01
    %v1149 = vmul.f32 %v879, 0.01
    %v1150 = vmul.f32 %v884, 0.01
    %v1151 = vmul.f32 %v889, 0.01
    %v1152 = vmul.f32 %v894, 0.01
    %v1153 = vmul.f32 %v899, 0.01
    %v1154 = vmul.f32 %v904, 0.01
    %v1155 = vmul.f32 %v909, 0.01
    %v1156 = vmul.f32 %v914, 0.01
    %v1157 = vmul.f32 %v919, 0.01
    %v1158 = vmul.f32 %v924, 0.01
    %v1159 = vmul.f32 %v929, 0.01
    %v1160 = vmul.f32 %v934, 0.01
    %v1161 = vmul.f32 %v939, 0.01
    %v1162 = vmul.f32 %v944, 0.01
    %v1163 = vmul.f32 %v949, 0.01
    %v1164 = vmul.f32 %v954, 0.01
    %v1165 = vmul.f32 %v959, 0.01
    %v1166 = vmul.f32 %v964, 0.01
    %v1167 = vmul.f32 %v969, 0.01
    %v1168 = vmul.f32 %v974, 0.01
    %v1169 = vmul.f32 %v979, 0.01
    %v1170 = vmul.f32 %v984, 0.01
    %v1171 = vmul.f32 %v989, 0.01
    %v1172 = vmul.f32 %v994, 0.01
    %v1173 = vmul.f32 %v999, 0.01
    %v1174 = vmul.f32 %v1004, 0.01
    %v1175 = vmul.f32 %v1009, 0.01
    %v1176 = vmul.f32 %v1014, 0.01
    %v1177 = vmul.f32 %v1019, 0.01
    %v1178 = vmul.f32 %v1024, 0.01
    %v1179 = vmul.f32 %v1029, 0.01
    %v1180 = vmul.f32 %v1034, 0.01
    %v1181 = vmul.f32 %v1039, 0.01
    %v1182 = vmul.f32 %v1044, 0.01
    %v1183 = vmul.f32 %v1049, 0.01
    %v1184 = vmul.f32 %v1054, 0.01
    %v1185 = vsel %vm1057, %v739, %v1121
    %v1186 = vsel %vm1058, %v744, %v1122
    %v1187 = vsel %vm1059, %v749, %v1123
    %v1188 = vsel %vm1060, %v754, %v1124
    %v1189 = vsel %vm1061, %v759, %v1125
    %v1190 = vsel %vm1062, %v764, %v1126
    %v1191 = vsel %vm1063, %v769, %v1127
    %v1192 = vsel %vm1064, %v774, %v1128
    %v1193 = vsel %vm1065, %v779, %v1129
    %v1194 = vsel %vm1066, %v784, %v1130
    %v1195 = vsel %vm1067, %v789, %v1131
    %v1196 = vsel %vm1068, %v794, %v1132
    %v1197 = vsel %vm1069, %v799, %v1133
    %v1198 = vsel %vm1070, %v804, %v1134
    %v1199 = vsel %vm1071, %v809, %v1135
    %v1200 = vsel %vm1072, %v814, %v1136
    %v1201 = vsel %vm1073, %v819, %v1137
    %v1202 = vsel %vm1074, %v824, %v1138
    %v1203 = vsel %vm1075, %v829, %v1139
    %v1204 = vsel %vm1076, %v834, %v1140
    %v1205 = vsel %vm1077, %v839, %v1141
    %v1206 = vsel %vm1078, %v844, %v1142
    %v1207 = vsel %vm1079, %v849, %v1143
    %v1208 = vsel %vm1080, %v854, %v1144
    %v1209 = vsel %vm1081, %v859, %v1145
    %v1210 = vsel %vm1082, %v864, %v1146
    %v1211 = vsel %vm1083, %v869, %v1147
    %v1212 = vsel %vm1084, %v874, %v1148
    %v1213 = vsel %vm1085, %v879, %v1149
    %v1214 = vsel %vm1086, %v884, %v1150
    %v1215 = vsel %vm1087, %v889, %v1151
    %v1216 = vsel %vm1088, %v894, %v1152
    %v1217 = vsel %vm1089, %v899, %v1153
    %v1218 = vsel %vm1090, %v904, %v1154
    %v1219 = vsel %vm1091, %v909, %v1155
    %v1220 = vsel %vm1092, %v914, %v1156
    %v1221 = vsel %vm1093, %v919, %v1157
    %v1222 = vsel %vm1094, %v924, %v1158
    %v1223 = vsel %vm1095, %v929, %v1159
    %v1224 = vsel %vm1096, %v934, %v1160
    %v1225 = vsel %vm1097, %v939, %v1161
    %v1226 = vsel %vm1098, %v944, %v1162
    %v1227 = vsel %vm1099, %v949, %v1163
    %v1228 = vsel %vm1100, %v954, %v1164
    %v1229 = vsel %vm1101, %v959, %v1165
    %v1230 = vsel %vm1102, %v964, %v1166
    %v1231 = vsel %vm1103, %v969, %v1167
    %v1232 = vsel %vm1104, %v974, %v1168
    %v1233 = vsel %vm1105, %v979, %v1169
    %v1234 = vsel %vm1106, %v984, %v1170
    %v1235 = vsel %vm1107, %v989, %v1171
    %v1236 = vsel %vm1108, %v994, %v1172
    %v1237 = vsel %vm1109, %v999, %v1173
    %v1238 = vsel %vm1110, %v1004, %v1174
    %v1239 = vsel %vm1111, %v1009, %v1175
    %v1240 = vsel %vm1112, %v1014, %v1176
    %v1241 = vsel %vm1113, %v1019, %v1177
    %v1242 = vsel %vm1114, %v1024, %v1178
    %v1243 = vsel %vm1115, %v1029, %v1179
    %v1244 = vsel %vm1116, %v1034, %v1180
    %v1245 = vsel %vm1117, %v1039, %v1181
    %v1246 = vsel %vm1118, %v1044, %v1182
    %v1247 = vsel %vm1119, %v1049, %v1183
    %v1248 = vsel %vm1120, %v1054, %v1184
    %1249 = vst [vmem:[%s3] sm:$0xff] %v1185
    %1250 = vst [vmem:[%s3 + $0x8] sm:$0xff] %v1186
    %1251 = vst [vmem:[%s3 + $0x10] sm:$0xff] %v1187
    %1252 = vst [vmem:[%s3 + $0x18] sm:$0xff] %v1188
    %1253 = vst [vmem:[%s3 + $0x20] sm:$0xff] %v1189
    %1254 = vst [vmem:[%s3 + $0x28] sm:$0xff] %v1190
    %1255 = vst [vmem:[%s3 + $0x30] sm:$0xff] %v1191
    %1256 = vst [vmem:[%s3 + $0x38] sm:$0xff] %v1192
    %1257 = vst [vmem:[%s3 + $0x40] sm:$0xff] %v1193
    %1258 = vst [vmem:[%s3 + $0x48] sm:$0xff] %v1194
    %1259 = vst [vmem:[%s3 + $0x50] sm:$0xff] %v1195
    %1260 = vst [vmem:[%s3 + $0x58] sm:$0xff] %v1196
    %1261 = vst [vmem:[%s3 + $0x60] sm:$0xff] %v1197
    %1262 = vst [vmem:[%s3 + $0x68] sm:$0xff] %v1198
    %1263 = vst [vmem:[%s3 + $0x70] sm:$0xff] %v1199
    %1264 = vst [vmem:[%s3 + $0x78] sm:$0xff] %v1200
    %1265 = vst [vmem:[%s3 + $0x80] sm:$0xff] %v1201
    %1266 = vst [vmem:[%s3 + $0x88] sm:$0xff] %v1202
    %1267 = vst [vmem:[%s3 + $0x90] sm:$0xff] %v1203
    %1268 = vst [vmem:[%s3 + $0x98] sm:$0xff] %v1204
    %1269 = vst [vmem:[%s3 + $0xa0] sm:$0xff] %v1205
    %1270 = vst [vmem:[%s3 + $0xa8] sm:$0xff] %v1206
    %1271 = vst [vmem:[%s3 + $0xb0] sm:$0xff] %v1207
    %1272 = vst [vmem:[%s3 + $0xb8] sm:$0xff] %v1208
    %1273 = vst [vmem:[%s3 + $0xc0] sm:$0xff] %v1209
    %1274 = vst [vmem:[%s3 + $0xc8] sm:$0xff] %v1210
    %1275 = vst [vmem:[%s3 + $0xd0] sm:$0xff] %v1211
    %1276 = vst [vmem:[%s3 + $0xd8] sm:$0xff] %v1212
    %1277 = vst [vmem:[%s3 + $0xe0] sm:$0xff] %v1213
    %1278 = vst [vmem:[%s3 + $0xe8] sm:$0xff] %v1214
    %1279 = vst [vmem:[%s3 + $0xf0] sm:$0xff] %v1215
    %1280 = vst [vmem:[%s3 + $0xf8] sm:$0xff] %v1216
    %1281 = vst [vmem:[%s3 + $0x100] sm:$0xff] %v1217
    %1282 = vst [vmem:[%s3 + $0x108] sm:$0xff] %v1218
    %1283 = vst [vmem:[%s3 + $0x110] sm:$0xff] %v1219
    %1284 = vst [vmem:[%s3 + $0x118] sm:$0xff] %v1220
    %1285 = vst [vmem:[%s3 + $0x120] sm:$0xff] %v1221
    %1286 = vst [vmem:[%s3 + $0x128] sm:$0xff] %v1222
    %1287 = vst [vmem:[%s3 + $0x130] sm:$0xff] %v1223
    %1288 = vst [vmem:[%s3 + $0x138] sm:$0xff] %v1224
    %1289 = vst [vmem:[%s3 + $0x140] sm:$0xff] %v1225
    %1290 = vst [vmem:[%s3 + $0x148] sm:$0xff] %v1226
    %1291 = vst [vmem:[%s3 + $0x150] sm:$0xff] %v1227
    %1292 = vst [vmem:[%s3 + $0x158] sm:$0xff] %v1228
    %1293 = vst [vmem:[%s3 + $0x160] sm:$0xff] %v1229
    %1294 = vst [vmem:[%s3 + $0x168] sm:$0xff] %v1230
    %1295 = vst [vmem:[%s3 + $0x170] sm:$0xff] %v1231
    %1296 = vst [vmem:[%s3 + $0x178] sm:$0xff] %v1232
    %1297 = vst [vmem:[%s3 + $0x180] sm:$0xff] %v1233
    %1298 = vst [vmem:[%s3 + $0x188] sm:$0xff] %v1234
    %1299 = vst [vmem:[%s3 + $0x190] sm:$0xff] %v1235
    %1300 = vst [vmem:[%s3 + $0x198] sm:$0xff] %v1236
    %1301 = vst [vmem:[%s3 + $0x1a0] sm:$0xff] %v1237
    %1302 = vst [vmem:[%s3 + $0x1a8] sm:$0xff] %v1238
    %1303 = vst [vmem:[%s3 + $0x1b0] sm:$0xff] %v1239
    %1304 = vst [vmem:[%s3 + $0x1b8] sm:$0xff] %v1240
    %1305 = vst [vmem:[%s3 + $0x1c0] sm:$0xff] %v1241
    %1306 = vst [vmem:[%s3 + $0x1c8] sm:$0xff] %v1242
    %1307 = vst [vmem:[%s3 + $0x1d0] sm:$0xff] %v1243
    %1308 = vst [vmem:[%s3 + $0x1d8] sm:$0xff] %v1244
    %1309 = vst [vmem:[%s3 + $0x1e0] sm:$0xff] %v1245
    %1310 = vst [vmem:[%s3 + $0x1e8] sm:$0xff] %v1246
    %1311 = vst [vmem:[%s3 + $0x1f0] sm:$0xff] %v1247
    %1312 = vst [vmem:[%s3 + $0x1f8] sm:$0xff] %v1248
    // Predicated region
    $region22: #{forward.6} parent=1 // pred_check
      _
    $region23: #{forward.6} parent=1 // pred_check_branch
      %1314 = sbr.rel (0) target = $region25
    $region24: #{forward.6} parent=1 // pred_region
      _
    $region25: #{forward.6} parent=1 // pred_fallthru
      _
    // Predicated region
    $region26: #{forward.6} parent=1 // pred_check
      _
    $region27: #{forward.6} parent=1 // pred_check_branch
      %1316 = sbr.rel (0) target = $region29
    $region28: #{forward.6} parent=1 // pred_region
      _
    $region29: #{forward.6} parent=1 // pred_fallthru
      _
    %1317 = vsyncpa [#allocation3], 1
    %1318 = vsyncpa [#allocation5], 1

// kernel: forward.7
$region0: #{forward.7}
  #allocation0 [shape = 'u32[]', space=smem, size = 0x4, offset = 0x4, fixed_abs, tag = 'smem constant byte address 0x4 - core index']
  #allocation1 [shape = 'u32[144,128]{1,0:T(1,128)}', space=vmem, size = 0x12000, scoped, tag = 'internal scratch']
  %s0 = inlined_call_operand.vmem [shape: f32[392,640], index: 0, kind: input, shape index: {}]
  %s1 = inlined_call_operand.vmem [shape: f32[640,128], index: 1, kind: input, shape index: {}]
  %s2 = inlined_call_operand.vmem [shape: f32[1,128], index: 2, kind: input, shape index: {}]
  %s3 = inlined_call_operand.vmem [shape: f32[392,128], index: 3, kind: output, shape index: {}]
  %s4 = sld [smem:[#allocation0]]
  $region22: #{forward.7} parent=0
    _
  %s6 = ssub.s32 1, %s4
  %s7 = scalar_select 0, %s6, %s4
  // Predicated region
  $region2: #{forward.7} parent=0 // pred_check
    _
  $region3: #{forward.7} parent=0 // pred_check_branch
    %9 = sbr.rel (0) target = $region5
  $region4: #{forward.7} parent=0 // pred_region
    _
  $region5: #{forward.7} parent=0 // pred_fallthru
    _
  // Predicated region
  $region6: #{forward.7} parent=0 // pred_check
    _
  $region7: #{forward.7} parent=0 // pred_check_branch
    %11 = sbr.rel (0) target = $region9
  $region8: #{forward.7} parent=0 // pred_region
    _
  $region9: #{forward.7} parent=0 // pred_fallthru
    _
  // Predicated region
  $region10: #{forward.7} parent=0 // pred_check
    _
  $region11: #{forward.7} parent=0 // pred_check_branch
    %13 = sbr.rel (0) target = $region13
  $region12: #{forward.7} parent=0 // pred_region
    _
  $region13: #{forward.7} parent=0 // pred_fallthru
    _
  %v14 = vld [vmem:[%s0] sm:$0xff]
  %v15 = vld [vmem:[%s0 + $0x8] sm:$0xff]
  %v16 = vld [vmem:[%s0 + $0x10] sm:$0xff]
  %v17 = vld [vmem:[%s0 + $0x18] sm:$0xff]
  %v18 = vld [vmem:[%s0 + $0x20] sm:$0xff]
  %v19 = vld [vmem:[%s0 + $0x28] sm:$0xff]
  %v20 = vld [vmem:[%s0 + $0x30] sm:$0xff]
  %v21 = vld [vmem:[%s0 + $0x38] sm:$0xff]
  %v22 = vld [vmem:[%s0 + $0x40] sm:$0xff]
  %v23 = vld [vmem:[%s0 + $0x48] sm:$0xff]
  %v24 = vld [vmem:[%s0 + $0x50] sm:$0xff]
  %v25 = vld [vmem:[%s0 + $0x58] sm:$0xff]
  %v26 = vld [vmem:[%s0 + $0x60] sm:$0xff]
  %v27 = vld [vmem:[%s0 + $0x68] sm:$0xff]
  %v28 = vld [vmem:[%s0 + $0x70] sm:$0xff]
  %v29 = vld [vmem:[%s0 + $0x78] sm:$0xff]
  %v30 = vld [vmem:[%s0 + $0x80] sm:$0xff]
  %v31 = vld [vmem:[%s0 + $0x88] sm:$0xff]
  %v32 = vld [vmem:[%s0 + $0x90] sm:$0xff]
  %v33 = vld [vmem:[%s0 + $0x98] sm:$0xff]
  %v34 = vld [vmem:[%s0 + $0xa0] sm:$0xff]
  %v35 = vld [vmem:[%s0 + $0xa8] sm:$0xff]
  %v36 = vld [vmem:[%s0 + $0xb0] sm:$0xff]
  %v37 = vld [vmem:[%s0 + $0xb8] sm:$0xff]
  %v38 = vld [vmem:[%s0 + $0xc0] sm:$0xff]
  %v39 = vld [vmem:[%s0 + $0xc8] sm:$0xff]
  %v40 = vld [vmem:[%s0 + $0xd0] sm:$0xff]
  %v41 = vld [vmem:[%s0 + $0xd8] sm:$0xff]
  %v42 = vld [vmem:[%s0 + $0xe0] sm:$0xff]
  %v43 = vld [vmem:[%s0 + $0xe8] sm:$0xff]
  %v44 = vld [vmem:[%s0 + $0xf0] sm:$0xff]
  %v45 = vld [vmem:[%s0 + $0xf8] sm:$0xff]
  %v46 = vld [vmem:[%s0 + $0x100] sm:$0xff]
  %v47 = vld [vmem:[%s0 + $0x108] sm:$0xff]
  %v48 = vld [vmem:[%s0 + $0x110] sm:$0xff]
  %v49 = vld [vmem:[%s0 + $0x118] sm:$0xff]
  %v50 = vld [vmem:[%s0 + $0x120] sm:$0xff]
  %v51 = vld [vmem:[%s0 + $0x128] sm:$0xff]
  %v52 = vld [vmem:[%s0 + $0x130] sm:$0xff]
  %v53 = vld [vmem:[%s0 + $0x138] sm:$0xff]
  %v54 = vld [vmem:[%s0 + $0x140] sm:$0xff]
  %v55 = vld [vmem:[%s0 + $0x148] sm:$0xff]
  %v56 = vld [vmem:[%s0 + $0x150] sm:$0xff]
  %v57 = vld [vmem:[%s0 + $0x158] sm:$0xff]
  %v58 = vld [vmem:[%s0 + $0x160] sm:$0xff]
  %v59 = vld [vmem:[%s0 + $0x168] sm:$0xff]
  %v60 = vld [vmem:[%s0 + $0x170] sm:$0xff]
  %v61 = vld [vmem:[%s0 + $0x178] sm:$0xff]
  %v62 = vld [vmem:[%s0 + $0x180] sm:$0xff]
  %v63 = vld [vmem:[%s0 + $0x188] sm:$0xff]
  %v64 = vld [vmem:[%s0 + $0x190] sm:$0xff]
  %v65 = vld [vmem:[%s0 + $0x198] sm:$0xff]
  %v66 = vld [vmem:[%s0 + $0x1a0] sm:$0xff]
  %v67 = vld [vmem:[%s0 + $0x1a8] sm:$0xff]
  %v68 = vld [vmem:[%s0 + $0x1b0] sm:$0xff]
  %v69 = vld [vmem:[%s0 + $0x1b8] sm:$0xff]
  %v70 = vld [vmem:[%s0 + $0x1c0] sm:$0xff]
  %v71 = vld [vmem:[%s0 + $0x1c8] sm:$0xff]
  %v72 = vld [vmem:[%s0 + $0x1d0] sm:$0xff]
  %v73 = vld [vmem:[%s0 + $0x1d8] sm:$0xff]
  %v74 = vld [vmem:[%s0 + $0x1e0] sm:$0xff]
  %v75 = vld [vmem:[%s0 + $0x1e8] sm:$0xff]
  %v76 = vld [vmem:[%s0 + $0x1f0] sm:$0xff]
  %v77 = vld [vmem:[%s0 + $0x1f8] sm:$0xff]
  %v78 = vld [vmem:[%s0 + $0x200] sm:$0xff]
  %v79 = vld [vmem:[%s0 + $0x208] sm:$0xff]
  %v80 = vld [vmem:[%s0 + $0x210] sm:$0xff]
  %v81 = vld [vmem:[%s0 + $0x218] sm:$0xff]
  %v82 = vld [vmem:[%s0 + $0x220] sm:$0xff]
  %v83 = vld [vmem:[%s0 + $0x228] sm:$0xff]
  %v84 = vld [vmem:[%s0 + $0x230] sm:$0xff]
  %v85 = vld [vmem:[%s0 + $0x238] sm:$0xff]
  %v86 = vld [vmem:[%s0 + $0x240] sm:$0xff]
  %v87 = vld [vmem:[%s0 + $0x248] sm:$0xff]
  %v88 = vld [vmem:[%s0 + $0x250] sm:$0xff]
  %v89 = vld [vmem:[%s0 + $0x258] sm:$0xff]
  %v90 = vld [vmem:[%s0 + $0x260] sm:$0xff]
  %v91 = vld [vmem:[%s0 + $0x268] sm:$0xff]
  %v92 = vld [vmem:[%s0 + $0x270] sm:$0xff]
  %v93 = vld [vmem:[%s0 + $0x278] sm:$0xff]
  %v94 = vld [vmem:[%s0 + $0x280] sm:$0xff]
  %v95 = vld [vmem:[%s0 + $0x288] sm:$0xff]
  %v96 = vld [vmem:[%s0 + $0x290] sm:$0xff]
  %v97 = vld [vmem:[%s0 + $0x298] sm:$0xff]
  %v98 = vld [vmem:[%s0 + $0x2a0] sm:$0xff]
  %v99 = vld [vmem:[%s0 + $0x2a8] sm:$0xff]
  %v100 = vld [vmem:[%s0 + $0x2b0] sm:$0xff]
  %v101 = vld [vmem:[%s0 + $0x2b8] sm:$0xff]
  %v102 = vld [vmem:[%s0 + $0x2c0] sm:$0xff]
  %v103 = vld [vmem:[%s0 + $0x2c8] sm:$0xff]
  %v104 = vld [vmem:[%s0 + $0x2d0] sm:$0xff]
  %v105 = vld [vmem:[%s0 + $0x2d8] sm:$0xff]
  %v106 = vld [vmem:[%s0 + $0x2e0] sm:$0xff]
  %v107 = vld [vmem:[%s0 + $0x2e8] sm:$0xff]
  %v108 = vld [vmem:[%s0 + $0x2f0] sm:$0xff]
  %v109 = vld [vmem:[%s0 + $0x2f8] sm:$0xff]
  %v110 = vld [vmem:[%s0 + $0x300] sm:$0xff]
  %v111 = vld [vmem:[%s0 + $0x308] sm:$0xff]
  %v112 = vld [vmem:[%s0 + $0x310] sm:$0xff]
  %v113 = vld [vmem:[%s0 + $0x318] sm:$0xff]
  %v114 = vld [vmem:[%s0 + $0x320] sm:$0xff]
  %v115 = vld [vmem:[%s0 + $0x328] sm:$0xff]
  %v116 = vld [vmem:[%s0 + $0x330] sm:$0xff]
  %v117 = vld [vmem:[%s0 + $0x338] sm:$0xff]
  %v118 = vld [vmem:[%s0 + $0x340] sm:$0xff]
  %v119 = vld [vmem:[%s0 + $0x348] sm:$0xff]
  %v120 = vld [vmem:[%s0 + $0x350] sm:$0xff]
  %v121 = vld [vmem:[%s0 + $0x358] sm:$0xff]
  %v122 = vld [vmem:[%s0 + $0x360] sm:$0xff]
  %v123 = vld [vmem:[%s0 + $0x368] sm:$0xff]
  %v124 = vld [vmem:[%s0 + $0x370] sm:$0xff]
  %v125 = vld [vmem:[%s0 + $0x378] sm:$0xff]
  %v126 = vld [vmem:[%s0 + $0x380] sm:$0xff]
  %v127 = vld [vmem:[%s0 + $0x388] sm:$0xff]
  %v128 = vld [vmem:[%s0 + $0x390] sm:$0xff]
  %v129 = vld [vmem:[%s0 + $0x398] sm:$0xff]
  %v130 = vld [vmem:[%s0 + $0x3a0] sm:$0xff]
  %v131 = vld [vmem:[%s0 + $0x3a8] sm:$0xff]
  %v132 = vld [vmem:[%s0 + $0x3b0] sm:$0xff]
  %v133 = vld [vmem:[%s0 + $0x3b8] sm:$0xff]
  %v134 = vld [vmem:[%s0 + $0x3c0] sm:$0xff]
  %v135 = vld [vmem:[%s0 + $0x3c8] sm:$0xff]
  %v136 = vld [vmem:[%s0 + $0x3d0] sm:$0xff]
  %v137 = vld [vmem:[%s0 + $0x3d8] sm:$0xff]
  %v138 = vld [vmem:[%s0 + $0x3e0] sm:$0xff]
  %v139 = vld [vmem:[%s0 + $0x3e8] sm:$0xff]
  %v140 = vld [vmem:[%s0 + $0x3f0] sm:$0xff]
  %v141 = vld [vmem:[%s0 + $0x3f8] sm:$0xff]
  %v142 = vld [vmem:[%s0 + $0x400] sm:$0xff]
  %v143 = vld [vmem:[%s0 + $0x408] sm:$0xff]
  %v144 = vld [vmem:[%s0 + $0x410] sm:$0xff]
  %v145 = vld [vmem:[%s0 + $0x418] sm:$0xff]
  %v146 = vld [vmem:[%s0 + $0x420] sm:$0xff]
  %v147 = vld [vmem:[%s0 + $0x428] sm:$0xff]
  %v148 = vld [vmem:[%s0 + $0x430] sm:$0xff]
  %v149 = vld [vmem:[%s0 + $0x438] sm:$0xff]
  %v150 = vld [vmem:[%s0 + $0x440] sm:$0xff]
  %v151 = vld [vmem:[%s0 + $0x448] sm:$0xff]
  %v152 = vld [vmem:[%s0 + $0x450] sm:$0xff]
  %v153 = vld [vmem:[%s0 + $0x458] sm:$0xff]
  %v154 = vld [vmem:[%s0 + $0x460] sm:$0xff]
  %v155 = vld [vmem:[%s0 + $0x468] sm:$0xff]
  %v156 = vld [vmem:[%s0 + $0x470] sm:$0xff]
  %v157 = vld [vmem:[%s0 + $0x478] sm:$0xff]
  %v158 = vld [vmem:[%s0 + $0x480] sm:$0xff]
  %v159 = vld [vmem:[%s0 + $0x488] sm:$0xff]
  %v160 = vld [vmem:[%s0 + $0x490] sm:$0xff]
  %v161 = vld [vmem:[%s0 + $0x498] sm:$0xff]
  %v162 = vld [vmem:[%s0 + $0x4a0] sm:$0xff]
  %v163 = vld [vmem:[%s0 + $0x4a8] sm:$0xff]
  %v164 = vld [vmem:[%s0 + $0x4b0] sm:$0xff]
  %v165 = vld [vmem:[%s0 + $0x4b8] sm:$0xff]
  %v166 = vld [vmem:[%s0 + $0x4c0] sm:$0xff]
  %v167 = vld [vmem:[%s0 + $0x4c8] sm:$0xff]
  %v168 = vld [vmem:[%s0 + $0x4d0] sm:$0xff]
  %v169 = vld [vmem:[%s0 + $0x4d8] sm:$0xff]
  %v170 = vld [vmem:[%s0 + $0x4e0] sm:$0xff]
  %v171 = vld [vmem:[%s0 + $0x4e8] sm:$0xff]
  %v172 = vld [vmem:[%s0 + $0x4f0] sm:$0xff]
  %v173 = vld [vmem:[%s0 + $0x4f8] sm:$0xff]
  %v174 = vld [vmem:[%s0 + $0x500] sm:$0xff]
  %v175 = vld [vmem:[%s0 + $0x508] sm:$0xff]
  %v176 = vld [vmem:[%s0 + $0x510] sm:$0xff]
  %v177 = vld [vmem:[%s0 + $0x518] sm:$0xff]
  %v178 = vld [vmem:[%s0 + $0x520] sm:$0xff]
  %v179 = vld [vmem:[%s0 + $0x528] sm:$0xff]
  %v180 = vld [vmem:[%s0 + $0x530] sm:$0xff]
  %v181 = vld [vmem:[%s0 + $0x538] sm:$0xff]
  %v182 = vld [vmem:[%s0 + $0x540] sm:$0xff]
  %v183 = vld [vmem:[%s0 + $0x548] sm:$0xff]
  %v184 = vld [vmem:[%s0 + $0x550] sm:$0xff]
  %v185 = vld [vmem:[%s0 + $0x558] sm:$0xff]
  %v186 = vld [vmem:[%s0 + $0x560] sm:$0xff]
  %v187 = vld [vmem:[%s0 + $0x568] sm:$0xff]
  %v188 = vld [vmem:[%s0 + $0x570] sm:$0xff]
  %v189 = vld [vmem:[%s0 + $0x578] sm:$0xff]
  %v190 = vld [vmem:[%s0 + $0x580] sm:$0xff]
  %v191 = vld [vmem:[%s0 + $0x588] sm:$0xff]
  %v192 = vld [vmem:[%s0 + $0x590] sm:$0xff]
  %v193 = vld [vmem:[%s0 + $0x598] sm:$0xff]
  %v194 = vld [vmem:[%s0 + $0x5a0] sm:$0xff]
  %v195 = vld [vmem:[%s0 + $0x5a8] sm:$0xff]
  %v196 = vld [vmem:[%s0 + $0x5b0] sm:$0xff]
  %v197 = vld [vmem:[%s0 + $0x5b8] sm:$0xff]
  %v198 = vld [vmem:[%s0 + $0x5c0] sm:$0xff]
  %v199 = vld [vmem:[%s0 + $0x5c8] sm:$0xff]
  %v200 = vld [vmem:[%s0 + $0x5d0] sm:$0xff]
  %v201 = vld [vmem:[%s0 + $0x5d8] sm:$0xff]
  %v202 = vld [vmem:[%s0 + $0x5e0] sm:$0xff]
  %v203 = vld [vmem:[%s0 + $0x5e8] sm:$0xff]
  %v204 = vld [vmem:[%s0 + $0x5f0] sm:$0xff]
  %v205 = vld [vmem:[%s0 + $0x5f8] sm:$0xff]
  %v206 = vld [vmem:[%s0 + $0x600] sm:$0xff]
  %v207 = vld [vmem:[%s0 + $0x608] sm:$0xff]
  %v208 = vld [vmem:[%s0 + $0x610] sm:$0xff]
  %v209 = vld [vmem:[%s0 + $0x618] sm:$0xff]
  %v210 = vld [vmem:[%s0 + $0x620] sm:$0xff]
  %v211 = vld [vmem:[%s0 + $0x628] sm:$0xff]
  %v212 = vld [vmem:[%s0 + $0x630] sm:$0xff]
  %v213 = vld [vmem:[%s0 + $0x638] sm:$0xff]
  %v214 = vld [vmem:[%s0 + $0x640] sm:$0xff]
  %v215 = vld [vmem:[%s0 + $0x648] sm:$0xff]
  %v216 = vld [vmem:[%s0 + $0x650] sm:$0xff]
  %v217 = vld [vmem:[%s0 + $0x658] sm:$0xff]
  %v218 = vld [vmem:[%s0 + $0x660] sm:$0xff]
  %v219 = vld [vmem:[%s0 + $0x668] sm:$0xff]
  %v220 = vld [vmem:[%s0 + $0x670] sm:$0xff]
  %v221 = vld [vmem:[%s0 + $0x678] sm:$0xff]
  %v222 = vld [vmem:[%s0 + $0x680] sm:$0xff]
  %v223 = vld [vmem:[%s0 + $0x688] sm:$0xff]
  %v224 = vld [vmem:[%s0 + $0x690] sm:$0xff]
  %v225 = vld [vmem:[%s0 + $0x698] sm:$0xff]
  %v226 = vld [vmem:[%s0 + $0x6a0] sm:$0xff]
  %v227 = vld [vmem:[%s0 + $0x6a8] sm:$0xff]
  %v228 = vld [vmem:[%s0 + $0x6b0] sm:$0xff]
  %v229 = vld [vmem:[%s0 + $0x6b8] sm:$0xff]
  %v230 = vld [vmem:[%s0 + $0x6c0] sm:$0xff]
  %v231 = vld [vmem:[%s0 + $0x6c8] sm:$0xff]
  %v232 = vld [vmem:[%s0 + $0x6d0] sm:$0xff]
  %v233 = vld [vmem:[%s0 + $0x6d8] sm:$0xff]
  %v234 = vld [vmem:[%s0 + $0x6e0] sm:$0xff]
  %v235 = vld [vmem:[%s0 + $0x6e8] sm:$0xff]
  %v236 = vld [vmem:[%s0 + $0x6f0] sm:$0xff]
  %v237 = vld [vmem:[%s0 + $0x6f8] sm:$0xff]
  %v238 = vld [vmem:[%s0 + $0x700] sm:$0xff]
  %v239 = vld [vmem:[%s0 + $0x708] sm:$0xff]
  %v240 = vld [vmem:[%s0 + $0x710] sm:$0xff]
  %v241 = vld [vmem:[%s0 + $0x718] sm:$0xff]
  %v242 = vld [vmem:[%s0 + $0x720] sm:$0xff]
  %v243 = vld [vmem:[%s0 + $0x728] sm:$0xff]
  %v244 = vld [vmem:[%s0 + $0x730] sm:$0xff]
  %v245 = vld [vmem:[%s0 + $0x738] sm:$0xff]
  %v246 = vld [vmem:[%s0 + $0x740] sm:$0xff]
  %v247 = vld [vmem:[%s0 + $0x748] sm:$0xff]
  %v248 = vld [vmem:[%s0 + $0x750] sm:$0xff]
  %v249 = vld [vmem:[%s0 + $0x758] sm:$0xff]
  %v250 = vld [vmem:[%s0 + $0x760] sm:$0xff]
  %v251 = vld [vmem:[%s0 + $0x768] sm:$0xff]
  %v252 = vld [vmem:[%s0 + $0x770] sm:$0xff]
  %v253 = vld [vmem:[%s0 + $0x778] sm:$0xff]
  %v254 = vld [vmem:[%s0 + $0x780] sm:$0xff]
  %v255 = vld [vmem:[%s0 + $0x788] sm:$0xff]
  %v256 = vld [vmem:[%s0 + $0x790] sm:$0xff]
  %v257 = vld [vmem:[%s0 + $0x798] sm:$0xff]
  %v258 = vld [vmem:[%s0 + $0x7a0] sm:$0xff]
  %v259 = vld [vmem:[%s1] sm:$0xff]
  %v260 = vld [vmem:[%s1 + $0x8] sm:$0xff]
  %v261 = vld [vmem:[%s1 + $0x10] sm:$0xff]
  %v262 = vld [vmem:[%s1 + $0x18] sm:$0xff]
  %v263 = vld [vmem:[%s1 + $0x20] sm:$0xff]
  %v264 = vld [vmem:[%s1 + $0x28] sm:$0xff]
  %v265 = vld [vmem:[%s1 + $0x30] sm:$0xff]
  %v266 = vld [vmem:[%s1 + $0x38] sm:$0xff]
  %v267 = vld [vmem:[%s1 + $0x40] sm:$0xff]
  %v268 = vld [vmem:[%s1 + $0x48] sm:$0xff]
  %v269 = vld [vmem:[%s1 + $0x50] sm:$0xff]
  %v270 = vld [vmem:[%s1 + $0x58] sm:$0xff]
  %v271 = vld [vmem:[%s1 + $0x60] sm:$0xff]
  %v272 = vld [vmem:[%s1 + $0x68] sm:$0xff]
  %v273 = vld [vmem:[%s1 + $0x70] sm:$0xff]
  %v274 = vld [vmem:[%s1 + $0x78] sm:$0xff]
  %v275 = vld [vmem:[%s1 + $0x80] sm:$0xff]
  %v276 = vld [vmem:[%s1 + $0x88] sm:$0xff]
  %v277 = vld [vmem:[%s1 + $0x90] sm:$0xff]
  %v278 = vld [vmem:[%s1 + $0x98] sm:$0xff]
  %v279 = vld [vmem:[%s1 + $0xa0] sm:$0xff]
  %v280 = vld [vmem:[%s1 + $0xa8] sm:$0xff]
  %v281 = vld [vmem:[%s1 + $0xb0] sm:$0xff]
  %v282 = vld [vmem:[%s1 + $0xb8] sm:$0xff]
  %v283 = vld [vmem:[%s1 + $0xc0] sm:$0xff]
  %v284 = vld [vmem:[%s1 + $0xc8] sm:$0xff]
  %v285 = vld [vmem:[%s1 + $0xd0] sm:$0xff]
  %v286 = vld [vmem:[%s1 + $0xd8] sm:$0xff]
  %v287 = vld [vmem:[%s1 + $0xe0] sm:$0xff]
  %v288 = vld [vmem:[%s1 + $0xe8] sm:$0xff]
  %v289 = vld [vmem:[%s1 + $0xf0] sm:$0xff]
  %v290 = vld [vmem:[%s1 + $0xf8] sm:$0xff]
  %v291 = vld [vmem:[%s1 + $0x100] sm:$0xff]
  %v292 = vld [vmem:[%s1 + $0x108] sm:$0xff]
  %v293 = vld [vmem:[%s1 + $0x110] sm:$0xff]
  %v294 = vld [vmem:[%s1 + $0x118] sm:$0xff]
  %v295 = vld [vmem:[%s1 + $0x120] sm:$0xff]
  %v296 = vld [vmem:[%s1 + $0x128] sm:$0xff]
  %v297 = vld [vmem:[%s1 + $0x130] sm:$0xff]
  %v298 = vld [vmem:[%s1 + $0x138] sm:$0xff]
  %v299 = vld [vmem:[%s1 + $0x140] sm:$0xff]
  %v300 = vld [vmem:[%s1 + $0x148] sm:$0xff]
  %v301 = vld [vmem:[%s1 + $0x150] sm:$0xff]
  %v302 = vld [vmem:[%s1 + $0x158] sm:$0xff]
  %v303 = vld [vmem:[%s1 + $0x160] sm:$0xff]
  %v304 = vld [vmem:[%s1 + $0x168] sm:$0xff]
  %v305 = vld [vmem:[%s1 + $0x170] sm:$0xff]
  %v306 = vld [vmem:[%s1 + $0x178] sm:$0xff]
  %v307 = vld [vmem:[%s1 + $0x180] sm:$0xff]
  %v308 = vld [vmem:[%s1 + $0x188] sm:$0xff]
  %v309 = vld [vmem:[%s1 + $0x190] sm:$0xff]
  %v310 = vld [vmem:[%s1 + $0x198] sm:$0xff]
  %v311 = vld [vmem:[%s1 + $0x1a0] sm:$0xff]
  %v312 = vld [vmem:[%s1 + $0x1a8] sm:$0xff]
  %v313 = vld [vmem:[%s1 + $0x1b0] sm:$0xff]
  %v314 = vld [vmem:[%s1 + $0x1b8] sm:$0xff]
  %v315 = vld [vmem:[%s1 + $0x1c0] sm:$0xff]
  %v316 = vld [vmem:[%s1 + $0x1c8] sm:$0xff]
  %v317 = vld [vmem:[%s1 + $0x1d0] sm:$0xff]
  %v318 = vld [vmem:[%s1 + $0x1d8] sm:$0xff]
  %v319 = vld [vmem:[%s1 + $0x1e0] sm:$0xff]
  %v320 = vld [vmem:[%s1 + $0x1e8] sm:$0xff]
  %v321 = vld [vmem:[%s1 + $0x1f0] sm:$0xff]
  %v322 = vld [vmem:[%s1 + $0x1f8] sm:$0xff]
  %v323 = vld [vmem:[%s1 + $0x200] sm:$0xff]
  %v324 = vld [vmem:[%s1 + $0x208] sm:$0xff]
  %v325 = vld [vmem:[%s1 + $0x210] sm:$0xff]
  %v326 = vld [vmem:[%s1 + $0x218] sm:$0xff]
  %v327 = vld [vmem:[%s1 + $0x220] sm:$0xff]
  %v328 = vld [vmem:[%s1 + $0x228] sm:$0xff]
  %v329 = vld [vmem:[%s1 + $0x230] sm:$0xff]
  %v330 = vld [vmem:[%s1 + $0x238] sm:$0xff]
  %v331 = vld [vmem:[%s1 + $0x240] sm:$0xff]
  %v332 = vld [vmem:[%s1 + $0x248] sm:$0xff]
  %v333 = vld [vmem:[%s1 + $0x250] sm:$0xff]
  %v334 = vld [vmem:[%s1 + $0x258] sm:$0xff]
  %v335 = vld [vmem:[%s1 + $0x260] sm:$0xff]
  %v336 = vld [vmem:[%s1 + $0x268] sm:$0xff]
  %v337 = vld [vmem:[%s1 + $0x270] sm:$0xff]
  %v338 = vld [vmem:[%s1 + $0x278] sm:$0xff]
  %v339 = vld [vmem:[%s2] sm:$0x1]
  %v341 = vlaneseq
  %v342 = vshrl.u32 %v341, 7
  %v343 = vsub.s32 0, %v342
  %v344 = vrot.slane %v339, %v343
  %346 = vmatprep.subr.mxu0 0.0
  %347 = vmatpush1.msra.mxu0 %v274
  %348 = vmatprep.subr.mxu0 0.0
  %349 = vmatpush1.msra.mxu0 %v273
  %350 = vmatprep.subr.mxu0 0.0
  %351 = vmatpush1.msra.mxu0 %v272
  %352 = vmatprep.subr.mxu0 0.0
  %353 = vmatpush1.msra.mxu0 %v271
  %354 = vmatprep.subr.mxu0 0.0
  %355 = vmatpush1.msra.mxu0 %v270
  %356 = vmatprep.subr.mxu0 0.0
  %357 = vmatpush1.msra.mxu0 %v269
  %358 = vmatprep.subr.mxu0 0.0
  %359 = vmatpush1.msra.mxu0 %v268
  %360 = vmatprep.subr.mxu0 0.0
  %361 = vmatpush1.msra.mxu0 %v267
  %362 = vmatprep.subr.mxu0 0.0
  %363 = vmatpush1.msra.mxu0 %v266
  %364 = vmatprep.subr.mxu0 0.0
  %365 = vmatpush1.msra.mxu0 %v265
  %366 = vmatprep.subr.mxu0 0.0
  %367 = vmatpush1.msra.mxu0 %v264
  %368 = vmatprep.subr.mxu0 0.0
  %369 = vmatpush1.msra.mxu0 %v263
  %370 = vmatprep.subr.mxu0 0.0
  %371 = vmatpush1.msra.mxu0 %v262
  %372 = vmatprep.subr.mxu0 0.0
  %373 = vmatpush1.msra.mxu0 %v261
  %374 = vmatprep.subr.mxu0 0.0
  %375 = vmatpush1.msra.mxu0 %v260
  %376 = vmatprep.subr.mxu0 0.0
  %377 = vmatpush1.msra.mxu0 %v259
  %378 = vmatprep.subr.mxu0 0.0
  %379 = vmatpush2.msra.mxu0 %v290
  %380 = vmatprep.subr.mxu0 0.0
  %381 = vmatpush2.msra.mxu0 %v289
  %382 = vmatprep.subr.mxu0 0.0
  %383 = vmatpush2.msra.mxu0 %v288
  %384 = vmatprep.subr.mxu0 0.0
  %385 = vmatpush2.msra.mxu0 %v287
  %386 = vmatprep.subr.mxu0 0.0
  %387 = vmatpush2.msra.mxu0 %v286
  %388 = vmatprep.subr.mxu0 0.0
  %389 = vmatpush2.msra.mxu0 %v285
  %390 = vmatprep.subr.mxu0 0.0
  %391 = vmatpush2.msra.mxu0 %v284
  %392 = vmatprep.subr.mxu0 0.0
  %393 = vmatpush2.msra.mxu0 %v283
  %394 = vmatprep.subr.mxu0 0.0
  %395 = vmatpush2.msra.mxu0 %v282
  %396 = vmatprep.subr.mxu0 0.0
  %397 = vmatpush2.msra.mxu0 %v281
  %398 = vmatprep.subr.mxu0 0.0
  %399 = vmatpush2.msra.mxu0 %v280
  %400 = vmatprep.subr.mxu0 0.0
  %401 = vmatpush2.msra.mxu0 %v279
  %402 = vmatprep.subr.mxu0 0.0
  %403 = vmatpush2.msra.mxu0 %v278
  %404 = vmatprep.subr.mxu0 0.0
  %405 = vmatpush2.msra.mxu0 %v277
  %406 = vmatprep.subr.mxu0 0.0
  %407 = vmatpush2.msra.mxu0 %v276
  %408 = vmatprep.subr.mxu0 0.0
  %409 = vmatpush2.msra.mxu0 %v275
  %410 = vmatprep.mubr.f32.mxu0 %v15
  %411 = vmatmul.mubr.f32.gmra.mxu0 %v14
  %v412 = vpop.f32.mrf.mxu0
  %v413 = vadd.f32 %v344, %v412
  %v414 = vpop.f32.mrf.mxu0
  %415 = vmatprep.mubr.f32.mxu0 %v20
  %416 = vmatmul.mubr.f32.gmra.mxu0 %v19
  %v417 = vpop.f32.mrf.mxu0
  %v418 = vadd.f32 %v344, %v417
  %v419 = vpop.f32.mrf.mxu0
  %420 = vmatprep.mubr.f32.mxu0 %v25
  %421 = vmatmul.mubr.f32.gmra.mxu0 %v24
  %v422 = vpop.f32.mrf.mxu0
  %v423 = vadd.f32 %v344, %v422
  %v424 = vpop.f32.mrf.mxu0
  %425 = vmatprep.mubr.f32.mxu0 %v30
  %426 = vmatmul.mubr.f32.gmra.mxu0 %v29
  %v427 = vpop.f32.mrf.mxu0
  %v428 = vadd.f32 %v344, %v427
  %v429 = vpop.f32.mrf.mxu0
  %430 = vmatprep.mubr.f32.mxu0 %v35
  %431 = vmatmul.mubr.f32.gmra.mxu0 %v34
  %v432 = vpop.f32.mrf.mxu0
  %v433 = vadd.f32 %v344, %v432
  %v434 = vpop.f32.mrf.mxu0
  %435 = vmatprep.mubr.f32.mxu0 %v40
  %436 = vmatmul.mubr.f32.gmra.mxu0 %v39
  %v437 = vpop.f32.mrf.mxu0
  %v438 = vadd.f32 %v344, %v437
  %v439 = vpop.f32.mrf.mxu0
  %440 = vmatprep.mubr.f32.mxu0 %v45
  %441 = vmatmul.mubr.f32.gmra.mxu0 %v44
  %v442 = vpop.f32.mrf.mxu0
  %v443 = vadd.f32 %v344, %v442
  %v444 = vpop.f32.mrf.mxu0
  %445 = vmatprep.mubr.f32.mxu0 %v50
  %446 = vmatmul.mubr.f32.gmra.mxu0 %v49
  %v447 = vpop.f32.mrf.mxu0
  %v448 = vadd.f32 %v344, %v447
  %v449 = vpop.f32.mrf.mxu0
  %450 = vmatprep.mubr.f32.mxu0 %v55
  %451 = vmatmul.mubr.f32.gmra.mxu0 %v54
  %v452 = vpop.f32.mrf.mxu0
  %v453 = vadd.f32 %v344, %v452
  %v454 = vpop.f32.mrf.mxu0
  %455 = vmatprep.mubr.f32.mxu0 %v60
  %456 = vmatmul.mubr.f32.gmra.mxu0 %v59
  %v457 = vpop.f32.mrf.mxu0
  %v458 = vadd.f32 %v344, %v457
  %v459 = vpop.f32.mrf.mxu0
  %460 = vmatprep.mubr.f32.mxu0 %v65
  %461 = vmatmul.mubr.f32.gmra.mxu0 %v64
  %v462 = vpop.f32.mrf.mxu0
  %v463 = vadd.f32 %v344, %v462
  %v464 = vpop.f32.mrf.mxu0
  %465 = vmatprep.mubr.f32.mxu0 %v70
  %466 = vmatmul.mubr.f32.gmra.mxu0 %v69
  %v467 = vpop.f32.mrf.mxu0
  %v468 = vadd.f32 %v344, %v467
  %v469 = vpop.f32.mrf.mxu0
  %470 = vmatprep.mubr.f32.mxu0 %v75
  %471 = vmatmul.mubr.f32.gmra.mxu0 %v74
  %v472 = vpop.f32.mrf.mxu0
  %v473 = vadd.f32 %v344, %v472
  %v474 = vpop.f32.mrf.mxu0
  %475 = vmatprep.mubr.f32.mxu0 %v80
  %476 = vmatmul.mubr.f32.gmra.mxu0 %v79
  %v477 = vpop.f32.mrf.mxu0
  %v478 = vadd.f32 %v344, %v477
  %v479 = vpop.f32.mrf.mxu0
  %480 = vmatprep.mubr.f32.mxu0 %v85
  %481 = vmatmul.mubr.f32.gmra.mxu0 %v84
  %v482 = vpop.f32.mrf.mxu0
  %v483 = vadd.f32 %v344, %v482
  %v484 = vpop.f32.mrf.mxu0
  %485 = vmatprep.mubr.f32.mxu0 %v90
  %486 = vmatmul.mubr.f32.gmra.mxu0 %v89
  %v487 = vpop.f32.mrf.mxu0
  %v488 = vadd.f32 %v344, %v487
  %v489 = vpop.f32.mrf.mxu0
  %490 = vmatprep.mubr.f32.mxu0 %v95
  %491 = vmatmul.mubr.f32.gmra.mxu0 %v94
  %v492 = vpop.f32.mrf.mxu0
  %v493 = vadd.f32 %v344, %v492
  %v494 = vpop.f32.mrf.mxu0
  %495 = vmatprep.mubr.f32.mxu0 %v100
  %496 = vmatmul.mubr.f32.gmra.mxu0 %v99
  %v497 = vpop.f32.mrf.mxu0
  %v498 = vadd.f32 %v344, %v497
  %v499 = vpop.f32.mrf.mxu0
  %500 = vmatprep.mubr.f32.mxu0 %v105
  %501 = vmatmul.mubr.f32.gmra.mxu0 %v104
  %v502 = vpop.f32.mrf.mxu0
  %v503 = vadd.f32 %v344, %v502
  %v504 = vpop.f32.mrf.mxu0
  %505 = vmatprep.mubr.f32.mxu0 %v110
  %506 = vmatmul.mubr.f32.gmra.mxu0 %v109
  %v507 = vpop.f32.mrf.mxu0
  %v508 = vadd.f32 %v344, %v507
  %v509 = vpop.f32.mrf.mxu0
  %510 = vmatprep.mubr.f32.mxu0 %v115
  %511 = vmatmul.mubr.f32.gmra.mxu0 %v114
  %v512 = vpop.f32.mrf.mxu0
  %v513 = vadd.f32 %v344, %v512
  %v514 = vpop.f32.mrf.mxu0
  %515 = vmatprep.mubr.f32.mxu0 %v120
  %516 = vmatmul.mubr.f32.gmra.mxu0 %v119
  %v517 = vpop.f32.mrf.mxu0
  %v518 = vadd.f32 %v344, %v517
  %v519 = vpop.f32.mrf.mxu0
  %520 = vmatprep.mubr.f32.mxu0 %v125
  %521 = vmatmul.mubr.f32.gmra.mxu0 %v124
  %v522 = vpop.f32.mrf.mxu0
  %v523 = vadd.f32 %v344, %v522
  %v524 = vpop.f32.mrf.mxu0
  %525 = vmatprep.mubr.f32.mxu0 %v130
  %526 = vmatmul.mubr.f32.gmra.mxu0 %v129
  %v527 = vpop.f32.mrf.mxu0
  %v528 = vadd.f32 %v344, %v527
  %v529 = vpop.f32.mrf.mxu0
  %530 = vmatprep.mubr.f32.mxu0 %v135
  %531 = vmatmul.mubr.f32.gmra.mxu0 %v134
  %v532 = vpop.f32.mrf.mxu0
  %v533 = vadd.f32 %v344, %v532
  %v534 = vpop.f32.mrf.mxu0
  %535 = vmatprep.mubr.f32.mxu0 %v140
  %536 = vmatmul.mubr.f32.gmra.mxu0 %v139
  %v537 = vpop.f32.mrf.mxu0
  %v538 = vadd.f32 %v344, %v537
  %v539 = vpop.f32.mrf.mxu0
  %540 = vmatprep.mubr.f32.mxu0 %v145
  %541 = vmatmul.mubr.f32.gmra.mxu0 %v144
  %v542 = vpop.f32.mrf.mxu0
  %v543 = vadd.f32 %v344, %v542
  %v544 = vpop.f32.mrf.mxu0
  %545 = vmatprep.mubr.f32.mxu0 %v150
  %546 = vmatmul.mubr.f32.gmra.mxu0 %v149
  %v547 = vpop.f32.mrf.mxu0
  %v548 = vadd.f32 %v344, %v547
  %v549 = vpop.f32.mrf.mxu0
  %550 = vmatprep.mubr.f32.mxu0 %v155
  %551 = vmatmul.mubr.f32.gmra.mxu0 %v154
  %v552 = vpop.f32.mrf.mxu0
  %v553 = vadd.f32 %v344, %v552
  %v554 = vpop.f32.mrf.mxu0
  %555 = vmatprep.mubr.f32.mxu0 %v160
  %556 = vmatmul.mubr.f32.gmra.mxu0 %v159
  %v557 = vpop.f32.mrf.mxu0
  %v558 = vadd.f32 %v344, %v557
  %v559 = vpop.f32.mrf.mxu0
  %560 = vmatprep.mubr.f32.mxu0 %v165
  %561 = vmatmul.mubr.f32.gmra.mxu0 %v164
  %v562 = vpop.f32.mrf.mxu0
  %v563 = vadd.f32 %v344, %v562
  %v564 = vpop.f32.mrf.mxu0
  %565 = vmatprep.mubr.f32.mxu0 %v170
  %566 = vmatmul.mubr.f32.gmra.mxu0 %v169
  %v567 = vpop.f32.mrf.mxu0
  %v568 = vadd.f32 %v344, %v567
  %v569 = vpop.f32.mrf.mxu0
  %570 = vmatprep.mubr.f32.mxu0 %v175
  %571 = vmatmul.mubr.f32.gmra.mxu0 %v174
  %v572 = vpop.f32.mrf.mxu0
  %v573 = vadd.f32 %v344, %v572
  %v574 = vpop.f32.mrf.mxu0
  %575 = vmatprep.mubr.f32.mxu0 %v180
  %576 = vmatmul.mubr.f32.gmra.mxu0 %v179
  %v577 = vpop.f32.mrf.mxu0
  %v578 = vadd.f32 %v344, %v577
  %v579 = vpop.f32.mrf.mxu0
  %580 = vmatprep.mubr.f32.mxu0 %v185
  %581 = vmatmul.mubr.f32.gmra.mxu0 %v184
  %v582 = vpop.f32.mrf.mxu0
  %v583 = vadd.f32 %v344, %v582
  %v584 = vpop.f32.mrf.mxu0
  %585 = vmatprep.mubr.f32.mxu0 %v190
  %586 = vmatmul.mubr.f32.gmra.mxu0 %v189
  %v587 = vpop.f32.mrf.mxu0
  %v588 = vadd.f32 %v344, %v587
  %v589 = vpop.f32.mrf.mxu0
  %590 = vmatprep.mubr.f32.mxu0 %v195
  %591 = vmatmul.mubr.f32.gmra.mxu0 %v194
  %v592 = vpop.f32.mrf.mxu0
  %v593 = vadd.f32 %v344, %v592
  %v594 = vpop.f32.mrf.mxu0
  %595 = vmatprep.mubr.f32.mxu0 %v200
  %596 = vmatmul.mubr.f32.gmra.mxu0 %v199
  %v597 = vpop.f32.mrf.mxu0
  %v598 = vadd.f32 %v344, %v597
  %v599 = vpop.f32.mrf.mxu0
  %600 = vmatprep.mubr.f32.mxu0 %v205
  %601 = vmatmul.mubr.f32.gmra.mxu0 %v204
  %v602 = vpop.f32.mrf.mxu0
  %v603 = vadd.f32 %v344, %v602
  %v604 = vpop.f32.mrf.mxu0
  %605 = vmatprep.mubr.f32.mxu0 %v210
  %606 = vmatmul.mubr.f32.gmra.mxu0 %v209
  %v607 = vpop.f32.mrf.mxu0
  %v608 = vadd.f32 %v344, %v607
  %v609 = vpop.f32.mrf.mxu0
  %610 = vmatprep.mubr.f32.mxu0 %v215
  %611 = vmatmul.mubr.f32.gmra.mxu0 %v214
  %v612 = vpop.f32.mrf.mxu0
  %v613 = vadd.f32 %v344, %v612
  %v614 = vpop.f32.mrf.mxu0
  %615 = vmatprep.mubr.f32.mxu0 %v220
  %616 = vmatmul.mubr.f32.gmra.mxu0 %v219
  %v617 = vpop.f32.mrf.mxu0
  %v618 = vadd.f32 %v344, %v617
  %v619 = vpop.f32.mrf.mxu0
  %620 = vmatprep.mubr.f32.mxu0 %v225
  %621 = vmatmul.mubr.f32.gmra.mxu0 %v224
  %v622 = vpop.f32.mrf.mxu0
  %v623 = vadd.f32 %v344, %v622
  %v624 = vpop.f32.mrf.mxu0
  %625 = vmatprep.mubr.f32.mxu0 %v230
  %626 = vmatmul.mubr.f32.gmra.mxu0 %v229
  %v627 = vpop.f32.mrf.mxu0
  %v628 = vadd.f32 %v344, %v627
  %v629 = vpop.f32.mrf.mxu0
  %630 = vmatprep.mubr.f32.mxu0 %v235
  %631 = vmatmul.mubr.f32.gmra.mxu0 %v234
  %v632 = vpop.f32.mrf.mxu0
  %v633 = vadd.f32 %v344, %v632
  %v634 = vpop.f32.mrf.mxu0
  %635 = vmatprep.mubr.f32.mxu0 %v240
  %636 = vmatmul.mubr.f32.gmra.mxu0 %v239
  %v637 = vpop.f32.mrf.mxu0
  %v638 = vadd.f32 %v344, %v637
  %v639 = vpop.f32.mrf.mxu0
  %640 = vmatprep.mubr.f32.mxu0 %v245
  %641 = vmatmul.mubr.f32.gmra.mxu0 %v244
  %v642 = vpop.f32.mrf.mxu0
  %v643 = vadd.f32 %v344, %v642
  %v644 = vpop.f32.mrf.mxu0
  %645 = vmatprep.mubr.f32.mxu0 %v250
  %646 = vmatmul.mubr.f32.gmra.mxu0 %v249
  %v647 = vpop.f32.mrf.mxu0
  %v648 = vadd.f32 %v344, %v647
  %v649 = vpop.f32.mrf.mxu0
  %650 = vmatprep.mubr.f32.mxu0 %v255
  %651 = vmatmul.mubr.f32.gmra.mxu0 %v254
  %v652 = vpop.f32.mrf.mxu0
  %v653 = vadd.f32 %v344, %v652
  %v654 = vpop.f32.mrf.mxu0
  %655 = vdwg.mxu0
  %656 = vmatprep.subr.mxu0 0.0
  %657 = vmatpush1.msra.mxu0 %v306
  %658 = vmatprep.subr.mxu0 0.0
  %659 = vmatpush1.msra.mxu0 %v305
  %660 = vmatprep.subr.mxu0 0.0
  %661 = vmatpush1.msra.mxu0 %v304
  %662 = vmatprep.subr.mxu0 0.0
  %663 = vmatpush1.msra.mxu0 %v303
  %664 = vmatprep.subr.mxu0 0.0
  %665 = vmatpush1.msra.mxu0 %v302
  %666 = vmatprep.subr.mxu0 0.0
  %667 = vmatpush1.msra.mxu0 %v301
  %668 = vmatprep.subr.mxu0 0.0
  %669 = vmatpush1.msra.mxu0 %v300
  %670 = vmatprep.subr.mxu0 0.0
  %671 = vmatpush1.msra.mxu0 %v299
  %672 = vmatprep.subr.mxu0 0.0
  %673 = vmatpush1.msra.mxu0 %v298
  %674 = vmatprep.subr.mxu0 0.0
  %675 = vmatpush1.msra.mxu0 %v297
  %676 = vmatprep.subr.mxu0 0.0
  %677 = vmatpush1.msra.mxu0 %v296
  %678 = vmatprep.subr.mxu0 0.0
  %679 = vmatpush1.msra.mxu0 %v295
  %680 = vmatprep.subr.mxu0 0.0
  %681 = vmatpush1.msra.mxu0 %v294
  %682 = vmatprep.subr.mxu0 0.0
  %683 = vmatpush1.msra.mxu0 %v293
  %684 = vmatprep.subr.mxu0 0.0
  %685 = vmatpush1.msra.mxu0 %v292
  %686 = vmatprep.subr.mxu0 0.0
  %687 = vmatpush1.msra.mxu0 %v291
  %688 = vmatprep.subr.mxu0 0.0
  %689 = vmatpush2.msra.mxu0 %v322
  %690 = vmatprep.subr.mxu0 0.0
  %691 = vmatpush2.msra.mxu0 %v321
  %692 = vmatprep.subr.mxu0 0.0
  %693 = vmatpush2.msra.mxu0 %v320
  %694 = vmatprep.subr.mxu0 0.0
  %695 = vmatpush2.msra.mxu0 %v319
  %696 = vmatprep.subr.mxu0 0.0
  %697 = vmatpush2.msra.mxu0 %v318
  %698 = vmatprep.subr.mxu0 0.0
  %699 = vmatpush2.msra.mxu0 %v317
  %700 = vmatprep.subr.mxu0 0.0
  %701 = vmatpush2.msra.mxu0 %v316
  %702 = vmatprep.subr.mxu0 0.0
  %703 = vmatpush2.msra.mxu0 %v315
  %704 = vmatprep.subr.mxu0 0.0
  %705 = vmatpush2.msra.mxu0 %v314
  %706 = vmatprep.subr.mxu0 0.0
  %707 = vmatpush2.msra.mxu0 %v313
  %708 = vmatprep.subr.mxu0 0.0
  %709 = vmatpush2.msra.mxu0 %v312
  %710 = vmatprep.subr.mxu0 0.0
  %711 = vmatpush2.msra.mxu0 %v311
  %712 = vmatprep.subr.mxu0 0.0
  %713 = vmatpush2.msra.mxu0 %v310
  %714 = vmatprep.subr.mxu0 0.0
  %715 = vmatpush2.msra.mxu0 %v309
  %716 = vmatprep.subr.mxu0 0.0
  %717 = vmatpush2.msra.mxu0 %v308
  %718 = vmatprep.subr.mxu0 0.0
  %719 = vmatpush2.msra.mxu0 %v307
  %720 = vmatprep.mubr.f32.mxu0 %v17
  %721 = vmatmul.mubr.f32.gmra.mxu0 %v16
  %v722 = vpop.f32.mrf.mxu0
  %v723 = vadd.f32 %v413, %v722
  %v724 = vpop.f32.mrf.mxu0
  %725 = vmatprep.mubr.f32.mxu0 %v22
  %726 = vmatmul.mubr.f32.gmra.mxu0 %v21
  %v727 = vpop.f32.mrf.mxu0
  %v728 = vadd.f32 %v418, %v727
  %v729 = vpop.f32.mrf.mxu0
  %730 = vmatprep.mubr.f32.mxu0 %v27
  %731 = vmatmul.mubr.f32.gmra.mxu0 %v26
  %v732 = vpop.f32.mrf.mxu0
  %v733 = vadd.f32 %v423, %v732
  %v734 = vpop.f32.mrf.mxu0
  %735 = vmatprep.mubr.f32.mxu0 %v32
  %736 = vmatmul.mubr.f32.gmra.mxu0 %v31
  %v737 = vpop.f32.mrf.mxu0
  %v738 = vadd.f32 %v428, %v737
  %v739 = vpop.f32.mrf.mxu0
  %740 = vmatprep.mubr.f32.mxu0 %v37
  %741 = vmatmul.mubr.f32.gmra.mxu0 %v36
  %v742 = vpop.f32.mrf.mxu0
  %v743 = vadd.f32 %v433, %v742
  %v744 = vpop.f32.mrf.mxu0
  %745 = vmatprep.mubr.f32.mxu0 %v42
  %746 = vmatmul.mubr.f32.gmra.mxu0 %v41
  %v747 = vpop.f32.mrf.mxu0
  %v748 = vadd.f32 %v438, %v747
  %v749 = vpop.f32.mrf.mxu0
  %750 = vmatprep.mubr.f32.mxu0 %v47
  %751 = vmatmul.mubr.f32.gmra.mxu0 %v46
  %v752 = vpop.f32.mrf.mxu0
  %v753 = vadd.f32 %v443, %v752
  %v754 = vpop.f32.mrf.mxu0
  %755 = vmatprep.mubr.f32.mxu0 %v52
  %756 = vmatmul.mubr.f32.gmra.mxu0 %v51
  %v757 = vpop.f32.mrf.mxu0
  %v758 = vadd.f32 %v448, %v757
  %v759 = vpop.f32.mrf.mxu0
  %760 = vmatprep.mubr.f32.mxu0 %v57
  %761 = vmatmul.mubr.f32.gmra.mxu0 %v56
  %v762 = vpop.f32.mrf.mxu0
  %v763 = vadd.f32 %v453, %v762
  %v764 = vpop.f32.mrf.mxu0
  %765 = vmatprep.mubr.f32.mxu0 %v62
  %766 = vmatmul.mubr.f32.gmra.mxu0 %v61
  %v767 = vpop.f32.mrf.mxu0
  %v768 = vadd.f32 %v458, %v767
  %v769 = vpop.f32.mrf.mxu0
  %770 = vmatprep.mubr.f32.mxu0 %v67
  %771 = vmatmul.mubr.f32.gmra.mxu0 %v66
  %v772 = vpop.f32.mrf.mxu0
  %v773 = vadd.f32 %v463, %v772
  %v774 = vpop.f32.mrf.mxu0
  %775 = vmatprep.mubr.f32.mxu0 %v72
  %776 = vmatmul.mubr.f32.gmra.mxu0 %v71
  %v777 = vpop.f32.mrf.mxu0
  %v778 = vadd.f32 %v468, %v777
  %v779 = vpop.f32.mrf.mxu0
  %780 = vmatprep.mubr.f32.mxu0 %v77
  %781 = vmatmul.mubr.f32.gmra.mxu0 %v76
  %v782 = vpop.f32.mrf.mxu0
  %v783 = vadd.f32 %v473, %v782
  %v784 = vpop.f32.mrf.mxu0
  %785 = vmatprep.mubr.f32.mxu0 %v82
  %786 = vmatmul.mubr.f32.gmra.mxu0 %v81
  %v787 = vpop.f32.mrf.mxu0
  %v788 = vadd.f32 %v478, %v787
  %v789 = vpop.f32.mrf.mxu0
  %790 = vmatprep.mubr.f32.mxu0 %v87
  %791 = vmatmul.mubr.f32.gmra.mxu0 %v86
  %v792 = vpop.f32.mrf.mxu0
  %v793 = vadd.f32 %v483, %v792
  %v794 = vpop.f32.mrf.mxu0
  %795 = vmatprep.mubr.f32.mxu0 %v92
  %796 = vmatmul.mubr.f32.gmra.mxu0 %v91
  %v797 = vpop.f32.mrf.mxu0
  %v798 = vadd.f32 %v488, %v797
  %v799 = vpop.f32.mrf.mxu0
  %800 = vmatprep.mubr.f32.mxu0 %v97
  %801 = vmatmul.mubr.f32.gmra.mxu0 %v96
  %v802 = vpop.f32.mrf.mxu0
  %v803 = vadd.f32 %v493, %v802
  %v804 = vpop.f32.mrf.mxu0
  %805 = vmatprep.mubr.f32.mxu0 %v102
  %806 = vmatmul.mubr.f32.gmra.mxu0 %v101
  %v807 = vpop.f32.mrf.mxu0
  %v808 = vadd.f32 %v498, %v807
  %v809 = vpop.f32.mrf.mxu0
  %810 = vmatprep.mubr.f32.mxu0 %v107
  %811 = vmatmul.mubr.f32.gmra.mxu0 %v106
  %v812 = vpop.f32.mrf.mxu0
  %v813 = vadd.f32 %v503, %v812
  %v814 = vpop.f32.mrf.mxu0
  %815 = vmatprep.mubr.f32.mxu0 %v112
  %816 = vmatmul.mubr.f32.gmra.mxu0 %v111
  %v817 = vpop.f32.mrf.mxu0
  %v818 = vadd.f32 %v508, %v817
  %v819 = vpop.f32.mrf.mxu0
  %820 = vmatprep.mubr.f32.mxu0 %v117
  %821 = vmatmul.mubr.f32.gmra.mxu0 %v116
  %v822 = vpop.f32.mrf.mxu0
  %v823 = vadd.f32 %v513, %v822
  %v824 = vpop.f32.mrf.mxu0
  %825 = vmatprep.mubr.f32.mxu0 %v122
  %826 = vmatmul.mubr.f32.gmra.mxu0 %v121
  %v827 = vpop.f32.mrf.mxu0
  %v828 = vadd.f32 %v518, %v827
  %v829 = vpop.f32.mrf.mxu0
  %830 = vmatprep.mubr.f32.mxu0 %v127
  %831 = vmatmul.mubr.f32.gmra.mxu0 %v126
  %v832 = vpop.f32.mrf.mxu0
  %v833 = vadd.f32 %v523, %v832
  %v834 = vpop.f32.mrf.mxu0
  %835 = vmatprep.mubr.f32.mxu0 %v132
  %836 = vmatmul.mubr.f32.gmra.mxu0 %v131
  %v837 = vpop.f32.mrf.mxu0
  %v838 = vadd.f32 %v528, %v837
  %v839 = vpop.f32.mrf.mxu0
  %840 = vmatprep.mubr.f32.mxu0 %v137
  %841 = vmatmul.mubr.f32.gmra.mxu0 %v136
  %v842 = vpop.f32.mrf.mxu0
  %v843 = vadd.f32 %v533, %v842
  %v844 = vpop.f32.mrf.mxu0
  %845 = vmatprep.mubr.f32.mxu0 %v142
  %846 = vmatmul.mubr.f32.gmra.mxu0 %v141
  %v847 = vpop.f32.mrf.mxu0
  %v848 = vadd.f32 %v538, %v847
  %v849 = vpop.f32.mrf.mxu0
  %850 = vmatprep.mubr.f32.mxu0 %v147
  %851 = vmatmul.mubr.f32.gmra.mxu0 %v146
  %v852 = vpop.f32.mrf.mxu0
  %v853 = vadd.f32 %v543, %v852
  %v854 = vpop.f32.mrf.mxu0
  %855 = vmatprep.mubr.f32.mxu0 %v152
  %856 = vmatmul.mubr.f32.gmra.mxu0 %v151
  %v857 = vpop.f32.mrf.mxu0
  %v858 = vadd.f32 %v548, %v857
  %v859 = vpop.f32.mrf.mxu0
  %860 = vmatprep.mubr.f32.mxu0 %v157
  %861 = vmatmul.mubr.f32.gmra.mxu0 %v156
  %v862 = vpop.f32.mrf.mxu0
  %v863 = vadd.f32 %v553, %v862
  %v864 = vpop.f32.mrf.mxu0
  %865 = vmatprep.mubr.f32.mxu0 %v162
  %866 = vmatmul.mubr.f32.gmra.mxu0 %v161
  %v867 = vpop.f32.mrf.mxu0
  %v868 = vadd.f32 %v558, %v867
  %v869 = vpop.f32.mrf.mxu0
  %870 = vmatprep.mubr.f32.mxu0 %v167
  %871 = vmatmul.mubr.f32.gmra.mxu0 %v166
  %v872 = vpop.f32.mrf.mxu0
  %v873 = vadd.f32 %v563, %v872
  %v874 = vpop.f32.mrf.mxu0
  %875 = vmatprep.mubr.f32.mxu0 %v172
  %876 = vmatmul.mubr.f32.gmra.mxu0 %v171
  %v877 = vpop.f32.mrf.mxu0
  %v878 = vadd.f32 %v568, %v877
  %v879 = vpop.f32.mrf.mxu0
  %880 = vmatprep.mubr.f32.mxu0 %v177
  %881 = vmatmul.mubr.f32.gmra.mxu0 %v176
  %v882 = vpop.f32.mrf.mxu0
  %v883 = vadd.f32 %v573, %v882
  %v884 = vpop.f32.mrf.mxu0
  %885 = vmatprep.mubr.f32.mxu0 %v182
  %886 = vmatmul.mubr.f32.gmra.mxu0 %v181
  %v887 = vpop.f32.mrf.mxu0
  %v888 = vadd.f32 %v578, %v887
  %v889 = vpop.f32.mrf.mxu0
  %890 = vmatprep.mubr.f32.mxu0 %v187
  %891 = vmatmul.mubr.f32.gmra.mxu0 %v186
  %v892 = vpop.f32.mrf.mxu0
  %v893 = vadd.f32 %v583, %v892
  %v894 = vpop.f32.mrf.mxu0
  %895 = vmatprep.mubr.f32.mxu0 %v192
  %896 = vmatmul.mubr.f32.gmra.mxu0 %v191
  %v897 = vpop.f32.mrf.mxu0
  %v898 = vadd.f32 %v588, %v897
  %v899 = vpop.f32.mrf.mxu0
  %900 = vmatprep.mubr.f32.mxu0 %v197
  %901 = vmatmul.mubr.f32.gmra.mxu0 %v196
  %v902 = vpop.f32.mrf.mxu0
  %v903 = vadd.f32 %v593, %v902
  %v904 = vpop.f32.mrf.mxu0
  %905 = vmatprep.mubr.f32.mxu0 %v202
  %906 = vmatmul.mubr.f32.gmra.mxu0 %v201
  %v907 = vpop.f32.mrf.mxu0
  %v908 = vadd.f32 %v598, %v907
  %v909 = vpop.f32.mrf.mxu0
  %910 = vmatprep.mubr.f32.mxu0 %v207
  %911 = vmatmul.mubr.f32.gmra.mxu0 %v206
  %v912 = vpop.f32.mrf.mxu0
  %v913 = vadd.f32 %v603, %v912
  %v914 = vpop.f32.mrf.mxu0
  %915 = vmatprep.mubr.f32.mxu0 %v212
  %916 = vmatmul.mubr.f32.gmra.mxu0 %v211
  %v917 = vpop.f32.mrf.mxu0
  %v918 = vadd.f32 %v608, %v917
  %v919 = vpop.f32.mrf.mxu0
  %920 = vmatprep.mubr.f32.mxu0 %v217
  %921 = vmatmul.mubr.f32.gmra.mxu0 %v216
  %v922 = vpop.f32.mrf.mxu0
  %v923 = vadd.f32 %v613, %v922
  %v924 = vpop.f32.mrf.mxu0
  %925 = vmatprep.mubr.f32.mxu0 %v222
  %926 = vmatmul.mubr.f32.gmra.mxu0 %v221
  %v927 = vpop.f32.mrf.mxu0
  %v928 = vadd.f32 %v618, %v927
  %v929 = vpop.f32.mrf.mxu0
  %930 = vmatprep.mubr.f32.mxu0 %v227
  %931 = vmatmul.mubr.f32.gmra.mxu0 %v226
  %v932 = vpop.f32.mrf.mxu0
  %v933 = vadd.f32 %v623, %v932
  %v934 = vpop.f32.mrf.mxu0
  %935 = vmatprep.mubr.f32.mxu0 %v232
  %936 = vmatmul.mubr.f32.gmra.mxu0 %v231
  %v937 = vpop.f32.mrf.mxu0
  %v938 = vadd.f32 %v628, %v937
  %v939 = vpop.f32.mrf.mxu0
  %940 = vmatprep.mubr.f32.mxu0 %v237
  %941 = vmatmul.mubr.f32.gmra.mxu0 %v236
  %v942 = vpop.f32.mrf.mxu0
  %v943 = vadd.f32 %v633, %v942
  %v944 = vpop.f32.mrf.mxu0
  %945 = vmatprep.mubr.f32.mxu0 %v242
  %946 = vmatmul.mubr.f32.gmra.mxu0 %v241
  %v947 = vpop.f32.mrf.mxu0
  %v948 = vadd.f32 %v638, %v947
  %v949 = vpop.f32.mrf.mxu0
  %950 = vmatprep.mubr.f32.mxu0 %v247
  %951 = vmatmul.mubr.f32.gmra.mxu0 %v246
  %v952 = vpop.f32.mrf.mxu0
  %v953 = vadd.f32 %v643, %v952
  %v954 = vpop.f32.mrf.mxu0
  %955 = vmatprep.mubr.f32.mxu0 %v252
  %956 = vmatmul.mubr.f32.gmra.mxu0 %v251
  %v957 = vpop.f32.mrf.mxu0
  %v958 = vadd.f32 %v648, %v957
  %v959 = vpop.f32.mrf.mxu0
  %960 = vmatprep.mubr.f32.mxu0 %v257
  %961 = vmatmul.mubr.f32.gmra.mxu0 %v256
  %v962 = vpop.f32.mrf.mxu0
  %v963 = vadd.f32 %v653, %v962
  %v964 = vpop.f32.mrf.mxu0
  %965 = vdwg.mxu0
  %966 = vmatprep.subr.mxu0 0.0
  %967 = vmatpush1.msra.mxu0 %v338
  %968 = vmatprep.subr.mxu0 0.0
  %969 = vmatpush1.msra.mxu0 %v337
  %970 = vmatprep.subr.mxu0 0.0
  %971 = vmatpush1.msra.mxu0 %v336
  %972 = vmatprep.subr.mxu0 0.0
  %973 = vmatpush1.msra.mxu0 %v335
  %974 = vmatprep.subr.mxu0 0.0
  %975 = vmatpush1.msra.mxu0 %v334
  %976 = vmatprep.subr.mxu0 0.0
  %977 = vmatpush1.msra.mxu0 %v333
  %978 = vmatprep.subr.mxu0 0.0
  %979 = vmatpush1.msra.mxu0 %v332
  %980 = vmatprep.subr.mxu0 0.0
  %981 = vmatpush1.msra.mxu0 %v331
  %982 = vmatprep.subr.mxu0 0.0
  %983 = vmatpush1.msra.mxu0 %v330
  %984 = vmatprep.subr.mxu0 0.0
  %985 = vmatpush1.msra.mxu0 %v329
  %986 = vmatprep.subr.mxu0 0.0
  %987 = vmatpush1.msra.mxu0 %v328
  %988 = vmatprep.subr.mxu0 0.0
  %989 = vmatpush1.msra.mxu0 %v327
  %990 = vmatprep.subr.mxu0 0.0
  %991 = vmatpush1.msra.mxu0 %v326
  %992 = vmatprep.subr.mxu0 0.0
  %993 = vmatpush1.msra.mxu0 %v325
  %994 = vmatprep.subr.mxu0 0.0
  %995 = vmatpush1.msra.mxu0 %v324
  %996 = vmatprep.subr.mxu0 0.0
  %997 = vmatpush1.msra.mxu0 %v323
  %998 = vmatprep.subr.mxu0 0.0
  %999 = vmatpush2.msra.mxu0 0.0
  %1000 = vmatprep.subr.mxu0 0.0
  %1001 = vmatpush2.msra.mxu0 0.0
  %1002 = vmatprep.subr.mxu0 0.0
  %1003 = vmatpush2.msra.mxu0 0.0
  %1004 = vmatprep.subr.mxu0 0.0
  %1005 = vmatpush2.msra.mxu0 0.0
  %1006 = vmatprep.subr.mxu0 0.0
  %1007 = vmatpush2.msra.mxu0 0.0
  %1008 = vmatprep.subr.mxu0 0.0
  %1009 = vmatpush2.msra.mxu0 0.0
  %1010 = vmatprep.subr.mxu0 0.0
  %1011 = vmatpush2.msra.mxu0 0.0
  %1012 = vmatprep.subr.mxu0 0.0
  %1013 = vmatpush2.msra.mxu0 0.0
  %1014 = vmatprep.subr.mxu0 0.0
  %1015 = vmatpush2.msra.mxu0 0.0
  %1016 = vmatprep.subr.mxu0 0.0
  %1017 = vmatpush2.msra.mxu0 0.0
  %1018 = vmatprep.subr.mxu0 0.0
  %1019 = vmatpush2.msra.mxu0 0.0
  %1020 = vmatprep.subr.mxu0 0.0
  %1021 = vmatpush2.msra.mxu0 0.0
  %1022 = vmatprep.subr.mxu0 0.0
  %1023 = vmatpush2.msra.mxu0 0.0
  %1024 = vmatprep.subr.mxu0 0.0
  %1025 = vmatpush2.msra.mxu0 0.0
  %1026 = vmatprep.subr.mxu0 0.0
  %1027 = vmatpush2.msra.mxu0 0.0
  %1028 = vmatprep.subr.mxu0 0.0
  %1029 = vmatpush2.msra.mxu0 0.0
  %1030 = vmatprep.mubr.f32.mxu0 0.0
  %1031 = vmatmul.mubr.f32.gmra.mxu0 %v18
  %v1032 = vpop.f32.mrf.mxu0
  %v1033 = vadd.f32 %v723, %v1032
  %v1034 = vpop.f32.mrf.mxu0
  %1035 = vmatprep.mubr.f32.mxu0 0.0
  %1036 = vmatmul.mubr.f32.gmra.mxu0 %v23
  %v1037 = vpop.f32.mrf.mxu0
  %v1038 = vadd.f32 %v728, %v1037
  %v1039 = vpop.f32.mrf.mxu0
  %1040 = vmatprep.mubr.f32.mxu0 0.0
  %1041 = vmatmul.mubr.f32.gmra.mxu0 %v28
  %v1042 = vpop.f32.mrf.mxu0
  %v1043 = vadd.f32 %v733, %v1042
  %v1044 = vpop.f32.mrf.mxu0
  %1045 = vmatprep.mubr.f32.mxu0 0.0
  %1046 = vmatmul.mubr.f32.gmra.mxu0 %v33
  %v1047 = vpop.f32.mrf.mxu0
  %v1048 = vadd.f32 %v738, %v1047
  %v1049 = vpop.f32.mrf.mxu0
  %1050 = vmatprep.mubr.f32.mxu0 0.0
  %1051 = vmatmul.mubr.f32.gmra.mxu0 %v38
  %v1052 = vpop.f32.mrf.mxu0
  %v1053 = vadd.f32 %v743, %v1052
  %v1054 = vpop.f32.mrf.mxu0
  %1055 = vmatprep.mubr.f32.mxu0 0.0
  %1056 = vmatmul.mubr.f32.gmra.mxu0 %v43
  %v1057 = vpop.f32.mrf.mxu0
  %v1058 = vadd.f32 %v748, %v1057
  %v1059 = vpop.f32.mrf.mxu0
  %1060 = vmatprep.mubr.f32.mxu0 0.0
  %1061 = vmatmul.mubr.f32.gmra.mxu0 %v48
  %v1062 = vpop.f32.mrf.mxu0
  %v1063 = vadd.f32 %v753, %v1062
  %v1064 = vpop.f32.mrf.mxu0
  %1065 = vmatprep.mubr.f32.mxu0 0.0
  %1066 = vmatmul.mubr.f32.gmra.mxu0 %v53
  %v1067 = vpop.f32.mrf.mxu0
  %v1068 = vadd.f32 %v758, %v1067
  %v1069 = vpop.f32.mrf.mxu0
  %1070 = vmatprep.mubr.f32.mxu0 0.0
  %1071 = vmatmul.mubr.f32.gmra.mxu0 %v58
  %v1072 = vpop.f32.mrf.mxu0
  %v1073 = vadd.f32 %v763, %v1072
  %v1074 = vpop.f32.mrf.mxu0
  %1075 = vmatprep.mubr.f32.mxu0 0.0
  %1076 = vmatmul.mubr.f32.gmra.mxu0 %v63
  %v1077 = vpop.f32.mrf.mxu0
  %v1078 = vadd.f32 %v768, %v1077
  %v1079 = vpop.f32.mrf.mxu0
  %1080 = vmatprep.mubr.f32.mxu0 0.0
  %1081 = vmatmul.mubr.f32.gmra.mxu0 %v68
  %v1082 = vpop.f32.mrf.mxu0
  %v1083 = vadd.f32 %v773, %v1082
  %v1084 = vpop.f32.mrf.mxu0
  %1085 = vmatprep.mubr.f32.mxu0 0.0
  %1086 = vmatmul.mubr.f32.gmra.mxu0 %v73
  %v1087 = vpop.f32.mrf.mxu0
  %v1088 = vadd.f32 %v778, %v1087
  %v1089 = vpop.f32.mrf.mxu0
  %1090 = vmatprep.mubr.f32.mxu0 0.0
  %1091 = vmatmul.mubr.f32.gmra.mxu0 %v78
  %v1092 = vpop.f32.mrf.mxu0
  %v1093 = vadd.f32 %v783, %v1092
  %v1094 = vpop.f32.mrf.mxu0
  %1095 = vmatprep.mubr.f32.mxu0 0.0
  %1096 = vmatmul.mubr.f32.gmra.mxu0 %v83
  %v1097 = vpop.f32.mrf.mxu0
  %v1098 = vadd.f32 %v788, %v1097
  %v1099 = vpop.f32.mrf.mxu0
  %1100 = vmatprep.mubr.f32.mxu0 0.0
  %1101 = vmatmul.mubr.f32.gmra.mxu0 %v88
  %v1102 = vpop.f32.mrf.mxu0
  %v1103 = vadd.f32 %v793, %v1102
  %v1104 = vpop.f32.mrf.mxu0
  %1105 = vmatprep.mubr.f32.mxu0 0.0
  %1106 = vmatmul.mubr.f32.gmra.mxu0 %v93
  %v1107 = vpop.f32.mrf.mxu0
  %v1108 = vadd.f32 %v798, %v1107
  %v1109 = vpop.f32.mrf.mxu0
  %1110 = vmatprep.mubr.f32.mxu0 0.0
  %1111 = vmatmul.mubr.f32.gmra.mxu0 %v98
  %v1112 = vpop.f32.mrf.mxu0
  %v1113 = vadd.f32 %v803, %v1112
  %v1114 = vpop.f32.mrf.mxu0
  %1115 = vmatprep.mubr.f32.mxu0 0.0
  %1116 = vmatmul.mubr.f32.gmra.mxu0 %v103
  %v1117 = vpop.f32.mrf.mxu0
  %v1118 = vadd.f32 %v808, %v1117
  %v1119 = vpop.f32.mrf.mxu0
  %1120 = vmatprep.mubr.f32.mxu0 0.0
  %1121 = vmatmul.mubr.f32.gmra.mxu0 %v108
  %v1122 = vpop.f32.mrf.mxu0
  %v1123 = vadd.f32 %v813, %v1122
  %v1124 = vpop.f32.mrf.mxu0
  %1125 = vmatprep.mubr.f32.mxu0 0.0
  %1126 = vmatmul.mubr.f32.gmra.mxu0 %v113
  %v1127 = vpop.f32.mrf.mxu0
  %v1128 = vadd.f32 %v818, %v1127
  %v1129 = vpop.f32.mrf.mxu0
  %1130 = vmatprep.mubr.f32.mxu0 0.0
  %1131 = vmatmul.mubr.f32.gmra.mxu0 %v118
  %v1132 = vpop.f32.mrf.mxu0
  %v1133 = vadd.f32 %v823, %v1132
  %v1134 = vpop.f32.mrf.mxu0
  %1135 = vmatprep.mubr.f32.mxu0 0.0
  %1136 = vmatmul.mubr.f32.gmra.mxu0 %v123
  %v1137 = vpop.f32.mrf.mxu0
  %v1138 = vadd.f32 %v828, %v1137
  %v1139 = vpop.f32.mrf.mxu0
  %1140 = vmatprep.mubr.f32.mxu0 0.0
  %1141 = vmatmul.mubr.f32.gmra.mxu0 %v128
  %v1142 = vpop.f32.mrf.mxu0
  %v1143 = vadd.f32 %v833, %v1142
  %v1144 = vpop.f32.mrf.mxu0
  %1145 = vmatprep.mubr.f32.mxu0 0.0
  %1146 = vmatmul.mubr.f32.gmra.mxu0 %v133
  %v1147 = vpop.f32.mrf.mxu0
  %v1148 = vadd.f32 %v838, %v1147
  %v1149 = vpop.f32.mrf.mxu0
  %1150 = vmatprep.mubr.f32.mxu0 0.0
  %1151 = vmatmul.mubr.f32.gmra.mxu0 %v138
  %v1152 = vpop.f32.mrf.mxu0
  %v1153 = vadd.f32 %v843, %v1152
  %v1154 = vpop.f32.mrf.mxu0
  %1155 = vmatprep.mubr.f32.mxu0 0.0
  %1156 = vmatmul.mubr.f32.gmra.mxu0 %v143
  %v1157 = vpop.f32.mrf.mxu0
  %v1158 = vadd.f32 %v848, %v1157
  %v1159 = vpop.f32.mrf.mxu0
  %1160 = vmatprep.mubr.f32.mxu0 0.0
  %1161 = vmatmul.mubr.f32.gmra.mxu0 %v148
  %v1162 = vpop.f32.mrf.mxu0
  %v1163 = vadd.f32 %v853, %v1162
  %v1164 = vpop.f32.mrf.mxu0
  %1165 = vmatprep.mubr.f32.mxu0 0.0
  %1166 = vmatmul.mubr.f32.gmra.mxu0 %v153
  %v1167 = vpop.f32.mrf.mxu0
  %v1168 = vadd.f32 %v858, %v1167
  %v1169 = vpop.f32.mrf.mxu0
  %1170 = vmatprep.mubr.f32.mxu0 0.0
  %1171 = vmatmul.mubr.f32.gmra.mxu0 %v158
  %v1172 = vpop.f32.mrf.mxu0
  %v1173 = vadd.f32 %v863, %v1172
  %v1174 = vpop.f32.mrf.mxu0
  %1175 = vmatprep.mubr.f32.mxu0 0.0
  %1176 = vmatmul.mubr.f32.gmra.mxu0 %v163
  %v1177 = vpop.f32.mrf.mxu0
  %v1178 = vadd.f32 %v868, %v1177
  %v1179 = vpop.f32.mrf.mxu0
  %1180 = vmatprep.mubr.f32.mxu0 0.0
  %1181 = vmatmul.mubr.f32.gmra.mxu0 %v168
  %v1182 = vpop.f32.mrf.mxu0
  %v1183 = vadd.f32 %v873, %v1182
  %v1184 = vpop.f32.mrf.mxu0
  %1185 = vmatprep.mubr.f32.mxu0 0.0
  %1186 = vmatmul.mubr.f32.gmra.mxu0 %v173
  %v1187 = vpop.f32.mrf.mxu0
  %v1188 = vadd.f32 %v878, %v1187
  %v1189 = vpop.f32.mrf.mxu0
  %1190 = vmatprep.mubr.f32.mxu0 0.0
  %1191 = vmatmul.mubr.f32.gmra.mxu0 %v178
  %v1192 = vpop.f32.mrf.mxu0
  %v1193 = vadd.f32 %v883, %v1192
  %v1194 = vpop.f32.mrf.mxu0
  %1195 = vmatprep.mubr.f32.mxu0 0.0
  %1196 = vmatmul.mubr.f32.gmra.mxu0 %v183
  %v1197 = vpop.f32.mrf.mxu0
  %v1198 = vadd.f32 %v888, %v1197
  %v1199 = vpop.f32.mrf.mxu0
  %1200 = vmatprep.mubr.f32.mxu0 0.0
  %1201 = vmatmul.mubr.f32.gmra.mxu0 %v188
  %v1202 = vpop.f32.mrf.mxu0
  %v1203 = vadd.f32 %v893, %v1202
  %v1204 = vpop.f32.mrf.mxu0
  %1205 = vmatprep.mubr.f32.mxu0 0.0
  %1206 = vmatmul.mubr.f32.gmra.mxu0 %v193
  %v1207 = vpop.f32.mrf.mxu0
  %v1208 = vadd.f32 %v898, %v1207
  %v1209 = vpop.f32.mrf.mxu0
  %1210 = vmatprep.mubr.f32.mxu0 0.0
  %1211 = vmatmul.mubr.f32.gmra.mxu0 %v198
  %v1212 = vpop.f32.mrf.mxu0
  %v1213 = vadd.f32 %v903, %v1212
  %v1214 = vpop.f32.mrf.mxu0
  %1215 = vmatprep.mubr.f32.mxu0 0.0
  %1216 = vmatmul.mubr.f32.gmra.mxu0 %v203
  %v1217 = vpop.f32.mrf.mxu0
  %v1218 = vadd.f32 %v908, %v1217
  %v1219 = vpop.f32.mrf.mxu0
  %1220 = vmatprep.mubr.f32.mxu0 0.0
  %1221 = vmatmul.mubr.f32.gmra.mxu0 %v208
  %v1222 = vpop.f32.mrf.mxu0
  %v1223 = vadd.f32 %v913, %v1222
  %v1224 = vpop.f32.mrf.mxu0
  %1225 = vmatprep.mubr.f32.mxu0 0.0
  %1226 = vmatmul.mubr.f32.gmra.mxu0 %v213
  %v1227 = vpop.f32.mrf.mxu0
  %v1228 = vadd.f32 %v918, %v1227
  %v1229 = vpop.f32.mrf.mxu0
  %1230 = vmatprep.mubr.f32.mxu0 0.0
  %1231 = vmatmul.mubr.f32.gmra.mxu0 %v218
  %v1232 = vpop.f32.mrf.mxu0
  %v1233 = vadd.f32 %v923, %v1232
  %v1234 = vpop.f32.mrf.mxu0
  %1235 = vmatprep.mubr.f32.mxu0 0.0
  %1236 = vmatmul.mubr.f32.gmra.mxu0 %v223
  %v1237 = vpop.f32.mrf.mxu0
  %v1238 = vadd.f32 %v928, %v1237
  %v1239 = vpop.f32.mrf.mxu0
  %1240 = vmatprep.mubr.f32.mxu0 0.0
  %1241 = vmatmul.mubr.f32.gmra.mxu0 %v228
  %v1242 = vpop.f32.mrf.mxu0
  %v1243 = vadd.f32 %v933, %v1242
  %v1244 = vpop.f32.mrf.mxu0
  %1245 = vmatprep.mubr.f32.mxu0 0.0
  %1246 = vmatmul.mubr.f32.gmra.mxu0 %v233
  %v1247 = vpop.f32.mrf.mxu0
  %v1248 = vadd.f32 %v938, %v1247
  %v1249 = vpop.f32.mrf.mxu0
  %1250 = vmatprep.mubr.f32.mxu0 0.0
  %1251 = vmatmul.mubr.f32.gmra.mxu0 %v238
  %v1252 = vpop.f32.mrf.mxu0
  %v1253 = vadd.f32 %v943, %v1252
  %v1254 = vpop.f32.mrf.mxu0
  %1255 = vmatprep.mubr.f32.mxu0 0.0
  %1256 = vmatmul.mubr.f32.gmra.mxu0 %v243
  %v1257 = vpop.f32.mrf.mxu0
  %v1258 = vadd.f32 %v948, %v1257
  %v1259 = vpop.f32.mrf.mxu0
  %1260 = vmatprep.mubr.f32.mxu0 0.0
  %1261 = vmatmul.mubr.f32.gmra.mxu0 %v248
  %v1262 = vpop.f32.mrf.mxu0
  %v1263 = vadd.f32 %v953, %v1262
  %v1264 = vpop.f32.mrf.mxu0
  %1265 = vmatprep.mubr.f32.mxu0 0.0
  %1266 = vmatmul.mubr.f32.gmra.mxu0 %v253
  %v1267 = vpop.f32.mrf.mxu0
  %v1268 = vadd.f32 %v958, %v1267
  %v1269 = vpop.f32.mrf.mxu0
  %1270 = vmatprep.mubr.f32.mxu0 0.0
  %1271 = vmatmul.mubr.f32.gmra.mxu0 %v258
  %v1272 = vpop.f32.mrf.mxu0
  %v1273 = vadd.f32 %v963, %v1272
  %v1274 = vpop.f32.mrf.mxu0
  %1275 = vdwg.mxu0
  %vm1276 = vcmp.ge.f32.partialorder %v1033, 0.0
  %vm1277 = vcmp.ge.f32.partialorder %v1038, 0.0
  %vm1278 = vcmp.ge.f32.partialorder %v1043, 0.0
  %vm1279 = vcmp.ge.f32.partialorder %v1048, 0.0
  %vm1280 = vcmp.ge.f32.partialorder %v1053, 0.0
  %vm1281 = vcmp.ge.f32.partialorder %v1058, 0.0
  %vm1282 = vcmp.ge.f32.partialorder %v1063, 0.0
  %vm1283 = vcmp.ge.f32.partialorder %v1068, 0.0
  %vm1284 = vcmp.ge.f32.partialorder %v1073, 0.0
  %vm1285 = vcmp.ge.f32.partialorder %v1078, 0.0
  %vm1286 = vcmp.ge.f32.partialorder %v1083, 0.0
  %vm1287 = vcmp.ge.f32.partialorder %v1088, 0.0
  %vm1288 = vcmp.ge.f32.partialorder %v1093, 0.0
  %vm1289 = vcmp.ge.f32.partialorder %v1098, 0.0
  %vm1290 = vcmp.ge.f32.partialorder %v1103, 0.0
  %vm1291 = vcmp.ge.f32.partialorder %v1108, 0.0
  %vm1292 = vcmp.ge.f32.partialorder %v1113, 0.0
  %vm1293 = vcmp.ge.f32.partialorder %v1118, 0.0
  %vm1294 = vcmp.ge.f32.partialorder %v1123, 0.0
  %vm1295 = vcmp.ge.f32.partialorder %v1128, 0.0
  %vm1296 = vcmp.ge.f32.partialorder %v1133, 0.0
  %vm1297 = vcmp.ge.f32.partialorder %v1138, 0.0
  %vm1298 = vcmp.ge.f32.partialorder %v1143, 0.0
  %vm1299 = vcmp.ge.f32.partialorder %v1148, 0.0
  %vm1300 = vcmp.ge.f32.partialorder %v1153, 0.0
  %vm1301 = vcmp.ge.f32.partialorder %v1158, 0.0
  %vm1302 = vcmp.ge.f32.partialorder %v1163, 0.0
  %vm1303 = vcmp.ge.f32.partialorder %v1168, 0.0
  %vm1304 = vcmp.ge.f32.partialorder %v1173, 0.0
  %vm1305 = vcmp.ge.f32.partialorder %v1178, 0.0
  %vm1306 = vcmp.ge.f32.partialorder %v1183, 0.0
  %vm1307 = vcmp.ge.f32.partialorder %v1188, 0.0
  %vm1308 = vcmp.ge.f32.partialorder %v1193, 0.0
  %vm1309 = vcmp.ge.f32.partialorder %v1198, 0.0
  %vm1310 = vcmp.ge.f32.partialorder %v1203, 0.0
  %vm1311 = vcmp.ge.f32.partialorder %v1208, 0.0
  %vm1312 = vcmp.ge.f32.partialorder %v1213, 0.0
  %vm1313 = vcmp.ge.f32.partialorder %v1218, 0.0
  %vm1314 = vcmp.ge.f32.partialorder %v1223, 0.0
  %vm1315 = vcmp.ge.f32.partialorder %v1228, 0.0
  %vm1316 = vcmp.ge.f32.partialorder %v1233, 0.0
  %vm1317 = vcmp.ge.f32.partialorder %v1238, 0.0
  %vm1318 = vcmp.ge.f32.partialorder %v1243, 0.0
  %vm1319 = vcmp.ge.f32.partialorder %v1248, 0.0
  %vm1320 = vcmp.ge.f32.partialorder %v1253, 0.0
  %vm1321 = vcmp.ge.f32.partialorder %v1258, 0.0
  %vm1322 = vcmp.ge.f32.partialorder %v1263, 0.0
  %vm1323 = vcmp.ge.f32.partialorder %v1268, 0.0
  %vm1324 = vcmp.ge.f32.partialorder %v1273, 0.0
  %v1325 = vmul.f32 %v1033, 0.01
  %v1326 = vmul.f32 %v1038, 0.01
  %v1327 = vmul.f32 %v1043, 0.01
  %v1328 = vmul.f32 %v1048, 0.01
  %v1329 = vmul.f32 %v1053, 0.01
  %v1330 = vmul.f32 %v1058, 0.01
  %v1331 = vmul.f32 %v1063, 0.01
  %v1332 = vmul.f32 %v1068, 0.01
  %v1333 = vmul.f32 %v1073, 0.01
  %v1334 = vmul.f32 %v1078, 0.01
  %v1335 = vmul.f32 %v1083, 0.01
  %v1336 = vmul.f32 %v1088, 0.01
  %v1337 = vmul.f32 %v1093, 0.01
  %v1338 = vmul.f32 %v1098, 0.01
  %v1339 = vmul.f32 %v1103, 0.01
  %v1340 = vmul.f32 %v1108, 0.01
  %v1341 = vmul.f32 %v1113, 0.01
  %v1342 = vmul.f32 %v1118, 0.01
  %v1343 = vmul.f32 %v1123, 0.01
  %v1344 = vmul.f32 %v1128, 0.01
  %v1345 = vmul.f32 %v1133, 0.01
  %v1346 = vmul.f32 %v1138, 0.01
  %v1347 = vmul.f32 %v1143, 0.01
  %v1348 = vmul.f32 %v1148, 0.01
  %v1349 = vmul.f32 %v1153, 0.01
  %v1350 = vmul.f32 %v1158, 0.01
  %v1351 = vmul.f32 %v1163, 0.01
  %v1352 = vmul.f32 %v1168, 0.01
  %v1353 = vmul.f32 %v1173, 0.01
  %v1354 = vmul.f32 %v1178, 0.01
  %v1355 = vmul.f32 %v1183, 0.01
  %v1356 = vmul.f32 %v1188, 0.01
  %v1357 = vmul.f32 %v1193, 0.01
  %v1358 = vmul.f32 %v1198, 0.01
  %v1359 = vmul.f32 %v1203, 0.01
  %v1360 = vmul.f32 %v1208, 0.01
  %v1361 = vmul.f32 %v1213, 0.01
  %v1362 = vmul.f32 %v1218, 0.01
  %v1363 = vmul.f32 %v1223, 0.01
  %v1364 = vmul.f32 %v1228, 0.01
  %v1365 = vmul.f32 %v1233, 0.01
  %v1366 = vmul.f32 %v1238, 0.01
  %v1367 = vmul.f32 %v1243, 0.01
  %v1368 = vmul.f32 %v1248, 0.01
  %v1369 = vmul.f32 %v1253, 0.01
  %v1370 = vmul.f32 %v1258, 0.01
  %v1371 = vmul.f32 %v1263, 0.01
  %v1372 = vmul.f32 %v1268, 0.01
  %v1373 = vmul.f32 %v1273, 0.01
  %v1374 = vsel %vm1276, %v1033, %v1325
  %v1375 = vsel %vm1277, %v1038, %v1326
  %v1376 = vsel %vm1278, %v1043, %v1327
  %v1377 = vsel %vm1279, %v1048, %v1328
  %v1378 = vsel %vm1280, %v1053, %v1329
  %v1379 = vsel %vm1281, %v1058, %v1330
  %v1380 = vsel %vm1282, %v1063, %v1331
  %v1381 = vsel %vm1283, %v1068, %v1332
  %v1382 = vsel %vm1284, %v1073, %v1333
  %v1383 = vsel %vm1285, %v1078, %v1334
  %v1384 = vsel %vm1286, %v1083, %v1335
  %v1385 = vsel %vm1287, %v1088, %v1336
  %v1386 = vsel %vm1288, %v1093, %v1337
  %v1387 = vsel %vm1289, %v1098, %v1338
  %v1388 = vsel %vm1290, %v1103, %v1339
  %v1389 = vsel %vm1291, %v1108, %v1340
  %v1390 = vsel %vm1292, %v1113, %v1341
  %v1391 = vsel %vm1293, %v1118, %v1342
  %v1392 = vsel %vm1294, %v1123, %v1343
  %v1393 = vsel %vm1295, %v1128, %v1344
  %v1394 = vsel %vm1296, %v1133, %v1345
  %v1395 = vsel %vm1297, %v1138, %v1346
  %v1396 = vsel %vm1298, %v1143, %v1347
  %v1397 = vsel %vm1299, %v1148, %v1348
  %v1398 = vsel %vm1300, %v1153, %v1349
  %v1399 = vsel %vm1301, %v1158, %v1350
  %v1400 = vsel %vm1302, %v1163, %v1351
  %v1401 = vsel %vm1303, %v1168, %v1352
  %v1402 = vsel %vm1304, %v1173, %v1353
  %v1403 = vsel %vm1305, %v1178, %v1354
  %v1404 = vsel %vm1306, %v1183, %v1355
  %v1405 = vsel %vm1307, %v1188, %v1356
  %v1406 = vsel %vm1308, %v1193, %v1357
  %v1407 = vsel %vm1309, %v1198, %v1358
  %v1408 = vsel %vm1310, %v1203, %v1359
  %v1409 = vsel %vm1311, %v1208, %v1360
  %v1410 = vsel %vm1312, %v1213, %v1361
  %v1411 = vsel %vm1313, %v1218, %v1362
  %v1412 = vsel %vm1314, %v1223, %v1363
  %v1413 = vsel %vm1315, %v1228, %v1364
  %v1414 = vsel %vm1316, %v1233, %v1365
  %v1415 = vsel %vm1317, %v1238, %v1366
  %v1416 = vsel %vm1318, %v1243, %v1367
  %v1417 = vsel %vm1319, %v1248, %v1368
  %v1418 = vsel %vm1320, %v1253, %v1369
  %v1419 = vsel %vm1321, %v1258, %v1370
  %v1420 = vsel %vm1322, %v1263, %v1371
  %v1421 = vsel %vm1323, %v1268, %v1372
  %v1422 = vsel %vm1324, %v1273, %v1373
  %1423 = vst [vmem:[%s3] sm:$0xff] %v1374
  %1424 = vst [vmem:[%s3 + $0x8] sm:$0xff] %v1375
  %1425 = vst [vmem:[%s3 + $0x10] sm:$0xff] %v1376
  %1426 = vst [vmem:[%s3 + $0x18] sm:$0xff] %v1377
  %1427 = vst [vmem:[%s3 + $0x20] sm:$0xff] %v1378
  %1428 = vst [vmem:[%s3 + $0x28] sm:$0xff] %v1379
  %1429 = vst [vmem:[%s3 + $0x30] sm:$0xff] %v1380
  %1430 = vst [vmem:[%s3 + $0x38] sm:$0xff] %v1381
  %1431 = vst [vmem:[%s3 + $0x40] sm:$0xff] %v1382
  %1432 = vst [vmem:[%s3 + $0x48] sm:$0xff] %v1383
  %1433 = vst [vmem:[%s3 + $0x50] sm:$0xff] %v1384
  %1434 = vst [vmem:[%s3 + $0x58] sm:$0xff] %v1385
  %1435 = vst [vmem:[%s3 + $0x60] sm:$0xff] %v1386
  %1436 = vst [vmem:[%s3 + $0x68] sm:$0xff] %v1387
  %1437 = vst [vmem:[%s3 + $0x70] sm:$0xff] %v1388
  %1438 = vst [vmem:[%s3 + $0x78] sm:$0xff] %v1389
  %1439 = vst [vmem:[%s3 + $0x80] sm:$0xff] %v1390
  %1440 = vst [vmem:[%s3 + $0x88] sm:$0xff] %v1391
  %1441 = vst [vmem:[%s3 + $0x90] sm:$0xff] %v1392
  %1442 = vst [vmem:[%s3 + $0x98] sm:$0xff] %v1393
  %1443 = vst [vmem:[%s3 + $0xa0] sm:$0xff] %v1394
  %1444 = vst [vmem:[%s3 + $0xa8] sm:$0xff] %v1395
  %1445 = vst [vmem:[%s3 + $0xb0] sm:$0xff] %v1396
  %1446 = vst [vmem:[%s3 + $0xb8] sm:$0xff] %v1397
  %1447 = vst [vmem:[%s3 + $0xc0] sm:$0xff] %v1398
  %1448 = vst [vmem:[%s3 + $0xc8] sm:$0xff] %v1399
  %1449 = vst [vmem:[%s3 + $0xd0] sm:$0xff] %v1400
  %1450 = vst [vmem:[%s3 + $0xd8] sm:$0xff] %v1401
  %1451 = vst [vmem:[%s3 + $0xe0] sm:$0xff] %v1402
  %1452 = vst [vmem:[%s3 + $0xe8] sm:$0xff] %v1403
  %1453 = vst [vmem:[%s3 + $0xf0] sm:$0xff] %v1404
  %1454 = vst [vmem:[%s3 + $0xf8] sm:$0xff] %v1405
  %1455 = vst [vmem:[%s3 + $0x100] sm:$0xff] %v1406
  %1456 = vst [vmem:[%s3 + $0x108] sm:$0xff] %v1407
  %1457 = vst [vmem:[%s3 + $0x110] sm:$0xff] %v1408
  %1458 = vst [vmem:[%s3 + $0x118] sm:$0xff] %v1409
  %1459 = vst [vmem:[%s3 + $0x120] sm:$0xff] %v1410
  %1460 = vst [vmem:[%s3 + $0x128] sm:$0xff] %v1411
  %1461 = vst [vmem:[%s3 + $0x130] sm:$0xff] %v1412
  %1462 = vst [vmem:[%s3 + $0x138] sm:$0xff] %v1413
  %1463 = vst [vmem:[%s3 + $0x140] sm:$0xff] %v1414
  %1464 = vst [vmem:[%s3 + $0x148] sm:$0xff] %v1415
  %1465 = vst [vmem:[%s3 + $0x150] sm:$0xff] %v1416
  %1466 = vst [vmem:[%s3 + $0x158] sm:$0xff] %v1417
  %1467 = vst [vmem:[%s3 + $0x160] sm:$0xff] %v1418
  %1468 = vst [vmem:[%s3 + $0x168] sm:$0xff] %v1419
  %1469 = vst [vmem:[%s3 + $0x170] sm:$0xff] %v1420
  %1470 = vst [vmem:[%s3 + $0x178] sm:$0xff] %v1421
  %1471 = vst [vmem:[%s3 + $0x180] sm:$0xff] %v1422
  // Predicated region
  $region14: #{forward.7} parent=0 // pred_check
    _
  $region15: #{forward.7} parent=0 // pred_check_branch
    %1473 = sbr.rel (0) target = $region17
  $region16: #{forward.7} parent=0 // pred_region
    _
  $region17: #{forward.7} parent=0 // pred_fallthru
    _
  // Predicated region
  $region18: #{forward.7} parent=0 // pred_check
    _
  $region19: #{forward.7} parent=0 // pred_check_branch
    %1475 = sbr.rel (0) target = $region21
  $region20: #{forward.7} parent=0 // pred_region
    _
  $region21: #{forward.7} parent=0 // pred_fallthru
    _

// kernel: forward.9
$region0: #{forward.9}
  #allocation0 [shape = 'u32[]', space=smem, size = 0x4, offset = 0x4, fixed_abs, tag = 'smem constant byte address 0x4 - core index']
  #allocation1 [shape = 'u32[144,128]{1,0:T(1,128)}', space=vmem, size = 0x12000, scoped, tag = 'internal scratch']
  %s0 = inlined_call_operand.vmem [shape: f32[8,1024], index: 0, kind: input, shape index: {}]
  %s1 = inlined_call_operand.vmem [shape: f32[1024,128], index: 1, kind: input, shape index: {}]
  %s2 = inlined_call_operand.vmem [shape: f32[1,128], index: 2, kind: input, shape index: {}]
  %s3 = inlined_call_operand.vmem [shape: f32[8,128], index: 3, kind: output, shape index: {}]
  %s4 = sld [smem:[#allocation0]]
  $region22: #{forward.9} parent=0
    _
  %s6 = ssub.s32 1, %s4
  %s7 = scalar_select 0, %s6, %s4
  // Predicated region
  $region2: #{forward.9} parent=0 // pred_check
    _
  $region3: #{forward.9} parent=0 // pred_check_branch
    %9 = sbr.rel (0) target = $region5
  $region4: #{forward.9} parent=0 // pred_region
    _
  $region5: #{forward.9} parent=0 // pred_fallthru
    _
  // Predicated region
  $region6: #{forward.9} parent=0 // pred_check
    _
  $region7: #{forward.9} parent=0 // pred_check_branch
    %11 = sbr.rel (0) target = $region9
  $region8: #{forward.9} parent=0 // pred_region
    _
  $region9: #{forward.9} parent=0 // pred_fallthru
    _
  // Predicated region
  $region10: #{forward.9} parent=0 // pred_check
    _
  $region11: #{forward.9} parent=0 // pred_check_branch
    %13 = sbr.rel (0) target = $region13
  $region12: #{forward.9} parent=0 // pred_region
    _
  $region13: #{forward.9} parent=0 // pred_fallthru
    _
  %v14 = vld [vmem:[%s0] sm:$0xff]
  %v15 = vld [vmem:[%s0 + $0x8] sm:$0xff]
  %v16 = vld [vmem:[%s0 + $0x10] sm:$0xff]
  %v17 = vld [vmem:[%s0 + $0x18] sm:$0xff]
  %v18 = vld [vmem:[%s0 + $0x20] sm:$0xff]
  %v19 = vld [vmem:[%s0 + $0x28] sm:$0xff]
  %v20 = vld [vmem:[%s0 + $0x30] sm:$0xff]
  %v21 = vld [vmem:[%s0 + $0x38] sm:$0xff]
  %v22 = vld [vmem:[%s1] sm:$0xff]
  %v23 = vld [vmem:[%s1 + $0x8] sm:$0xff]
  %v24 = vld [vmem:[%s1 + $0x10] sm:$0xff]
  %v25 = vld [vmem:[%s1 + $0x18] sm:$0xff]
  %v26 = vld [vmem:[%s1 + $0x20] sm:$0xff]
  %v27 = vld [vmem:[%s1 + $0x28] sm:$0xff]
  %v28 = vld [vmem:[%s1 + $0x30] sm:$0xff]
  %v29 = vld [vmem:[%s1 + $0x38] sm:$0xff]
  %v30 = vld [vmem:[%s1 + $0x40] sm:$0xff]
  %v31 = vld [vmem:[%s1 + $0x48] sm:$0xff]
  %v32 = vld [vmem:[%s1 + $0x50] sm:$0xff]
  %v33 = vld [vmem:[%s1 + $0x58] sm:$0xff]
  %v34 = vld [vmem:[%s1 + $0x60] sm:$0xff]
  %v35 = vld [vmem:[%s1 + $0x68] sm:$0xff]
  %v36 = vld [vmem:[%s1 + $0x70] sm:$0xff]
  %v37 = vld [vmem:[%s1 + $0x78] sm:$0xff]
  %v38 = vld [vmem:[%s1 + $0x80] sm:$0xff]
  %v39 = vld [vmem:[%s1 + $0x88] sm:$0xff]
  %v40 = vld [vmem:[%s1 + $0x90] sm:$0xff]
  %v41 = vld [vmem:[%s1 + $0x98] sm:$0xff]
  %v42 = vld [vmem:[%s1 + $0xa0] sm:$0xff]
  %v43 = vld [vmem:[%s1 + $0xa8] sm:$0xff]
  %v44 = vld [vmem:[%s1 + $0xb0] sm:$0xff]
  %v45 = vld [vmem:[%s1 + $0xb8] sm:$0xff]
  %v46 = vld [vmem:[%s1 + $0xc0] sm:$0xff]
  %v47 = vld [vmem:[%s1 + $0xc8] sm:$0xff]
  %v48 = vld [vmem:[%s1 + $0xd0] sm:$0xff]
  %v49 = vld [vmem:[%s1 + $0xd8] sm:$0xff]
  %v50 = vld [vmem:[%s1 + $0xe0] sm:$0xff]
  %v51 = vld [vmem:[%s1 + $0xe8] sm:$0xff]
  %v52 = vld [vmem:[%s1 + $0xf0] sm:$0xff]
  %v53 = vld [vmem:[%s1 + $0xf8] sm:$0xff]
  %v54 = vld [vmem:[%s1 + $0x100] sm:$0xff]
  %v55 = vld [vmem:[%s1 + $0x108] sm:$0xff]
  %v56 = vld [vmem:[%s1 + $0x110] sm:$0xff]
  %v57 = vld [vmem:[%s1 + $0x118] sm:$0xff]
  %v58 = vld [vmem:[%s1 + $0x120] sm:$0xff]
  %v59 = vld [vmem:[%s1 + $0x128] sm:$0xff]
  %v60 = vld [vmem:[%s1 + $0x130] sm:$0xff]
  %v61 = vld [vmem:[%s1 + $0x138] sm:$0xff]
  %v62 = vld [vmem:[%s1 + $0x140] sm:$0xff]
  %v63 = vld [vmem:[%s1 + $0x148] sm:$0xff]
  %v64 = vld [vmem:[%s1 + $0x150] sm:$0xff]
  %v65 = vld [vmem:[%s1 + $0x158] sm:$0xff]
  %v66 = vld [vmem:[%s1 + $0x160] sm:$0xff]
  %v67 = vld [vmem:[%s1 + $0x168] sm:$0xff]
  %v68 = vld [vmem:[%s1 + $0x170] sm:$0xff]
  %v69 = vld [vmem:[%s1 + $0x178] sm:$0xff]
  %v70 = vld [vmem:[%s1 + $0x180] sm:$0xff]
  %v71 = vld [vmem:[%s1 + $0x188] sm:$0xff]
  %v72 = vld [vmem:[%s1 + $0x190] sm:$0xff]
  %v73 = vld [vmem:[%s1 + $0x198] sm:$0xff]
  %v74 = vld [vmem:[%s1 + $0x1a0] sm:$0xff]
  %v75 = vld [vmem:[%s1 + $0x1a8] sm:$0xff]
  %v76 = vld [vmem:[%s1 + $0x1b0] sm:$0xff]
  %v77 = vld [vmem:[%s1 + $0x1b8] sm:$0xff]
  %v78 = vld [vmem:[%s1 + $0x1c0] sm:$0xff]
  %v79 = vld [vmem:[%s1 + $0x1c8] sm:$0xff]
  %v80 = vld [vmem:[%s1 + $0x1d0] sm:$0xff]
  %v81 = vld [vmem:[%s1 + $0x1d8] sm:$0xff]
  %v82 = vld [vmem:[%s1 + $0x1e0] sm:$0xff]
  %v83 = vld [vmem:[%s1 + $0x1e8] sm:$0xff]
  %v84 = vld [vmem:[%s1 + $0x1f0] sm:$0xff]
  %v85 = vld [vmem:[%s1 + $0x1f8] sm:$0xff]
  %v86 = vld [vmem:[%s1 + $0x200] sm:$0xff]
  %v87 = vld [vmem:[%s1 + $0x208] sm:$0xff]
  %v88 = vld [vmem:[%s1 + $0x210] sm:$0xff]
  %v89 = vld [vmem:[%s1 + $0x218] sm:$0xff]
  %v90 = vld [vmem:[%s1 + $0x220] sm:$0xff]
  %v91 = vld [vmem:[%s1 + $0x228] sm:$0xff]
  %v92 = vld [vmem:[%s1 + $0x230] sm:$0xff]
  %v93 = vld [vmem:[%s1 + $0x238] sm:$0xff]
  %v94 = vld [vmem:[%s1 + $0x240] sm:$0xff]
  %v95 = vld [vmem:[%s1 + $0x248] sm:$0xff]
  %v96 = vld [vmem:[%s1 + $0x250] sm:$0xff]
  %v97 = vld [vmem:[%s1 + $0x258] sm:$0xff]
  %v98 = vld [vmem:[%s1 + $0x260] sm:$0xff]
  %v99 = vld [vmem:[%s1 + $0x268] sm:$0xff]
  %v100 = vld [vmem:[%s1 + $0x270] sm:$0xff]
  %v101 = vld [vmem:[%s1 + $0x278] sm:$0xff]
  %v102 = vld [vmem:[%s1 + $0x280] sm:$0xff]
  %v103 = vld [vmem:[%s1 + $0x288] sm:$0xff]
  %v104 = vld [vmem:[%s1 + $0x290] sm:$0xff]
  %v105 = vld [vmem:[%s1 + $0x298] sm:$0xff]
  %v106 = vld [vmem:[%s1 + $0x2a0] sm:$0xff]
  %v107 = vld [vmem:[%s1 + $0x2a8] sm:$0xff]
  %v108 = vld [vmem:[%s1 + $0x2b0] sm:$0xff]
  %v109 = vld [vmem:[%s1 + $0x2b8] sm:$0xff]
  %v110 = vld [vmem:[%s1 + $0x2c0] sm:$0xff]
  %v111 = vld [vmem:[%s1 + $0x2c8] sm:$0xff]
  %v112 = vld [vmem:[%s1 + $0x2d0] sm:$0xff]
  %v113 = vld [vmem:[%s1 + $0x2d8] sm:$0xff]
  %v114 = vld [vmem:[%s1 + $0x2e0] sm:$0xff]
  %v115 = vld [vmem:[%s1 + $0x2e8] sm:$0xff]
  %v116 = vld [vmem:[%s1 + $0x2f0] sm:$0xff]
  %v117 = vld [vmem:[%s1 + $0x2f8] sm:$0xff]
  %v118 = vld [vmem:[%s1 + $0x300] sm:$0xff]
  %v119 = vld [vmem:[%s1 + $0x308] sm:$0xff]
  %v120 = vld [vmem:[%s1 + $0x310] sm:$0xff]
  %v121 = vld [vmem:[%s1 + $0x318] sm:$0xff]
  %v122 = vld [vmem:[%s1 + $0x320] sm:$0xff]
  %v123 = vld [vmem:[%s1 + $0x328] sm:$0xff]
  %v124 = vld [vmem:[%s1 + $0x330] sm:$0xff]
  %v125 = vld [vmem:[%s1 + $0x338] sm:$0xff]
  %v126 = vld [vmem:[%s1 + $0x340] sm:$0xff]
  %v127 = vld [vmem:[%s1 + $0x348] sm:$0xff]
  %v128 = vld [vmem:[%s1 + $0x350] sm:$0xff]
  %v129 = vld [vmem:[%s1 + $0x358] sm:$0xff]
  %v130 = vld [vmem:[%s1 + $0x360] sm:$0xff]
  %v131 = vld [vmem:[%s1 + $0x368] sm:$0xff]
  %v132 = vld [vmem:[%s1 + $0x370] sm:$0xff]
  %v133 = vld [vmem:[%s1 + $0x378] sm:$0xff]
  %v134 = vld [vmem:[%s1 + $0x380] sm:$0xff]
  %v135 = vld [vmem:[%s1 + $0x388] sm:$0xff]
  %v136 = vld [vmem:[%s1 + $0x390] sm:$0xff]
  %v137 = vld [vmem:[%s1 + $0x398] sm:$0xff]
  %v138 = vld [vmem:[%s1 + $0x3a0] sm:$0xff]
  %v139 = vld [vmem:[%s1 + $0x3a8] sm:$0xff]
  %v140 = vld [vmem:[%s1 + $0x3b0] sm:$0xff]
  %v141 = vld [vmem:[%s1 + $0x3b8] sm:$0xff]
  %v142 = vld [vmem:[%s1 + $0x3c0] sm:$0xff]
  %v143 = vld [vmem:[%s1 + $0x3c8] sm:$0xff]
  %v144 = vld [vmem:[%s1 + $0x3d0] sm:$0xff]
  %v145 = vld [vmem:[%s1 + $0x3d8] sm:$0xff]
  %v146 = vld [vmem:[%s1 + $0x3e0] sm:$0xff]
  %v147 = vld [vmem:[%s1 + $0x3e8] sm:$0xff]
  %v148 = vld [vmem:[%s1 + $0x3f0] sm:$0xff]
  %v149 = vld [vmem:[%s1 + $0x3f8] sm:$0xff]
  %v150 = vld [vmem:[%s2] sm:$0x1]
  %v152 = vlaneseq
  %v153 = vshrl.u32 %v152, 7
  %v154 = vsub.s32 0, %v153
  %v155 = vrot.slane %v150, %v154
  %157 = vmatprep.subr.mxu0 0.0
  %158 = vmatpush1.msra.mxu0 %v37
  %159 = vmatprep.subr.mxu0 0.0
  %160 = vmatpush1.msra.mxu0 %v36
  %161 = vmatprep.subr.mxu0 0.0
  %162 = vmatpush1.msra.mxu0 %v35
  %163 = vmatprep.subr.mxu0 0.0
  %164 = vmatpush1.msra.mxu0 %v34
  %165 = vmatprep.subr.mxu0 0.0
  %166 = vmatpush1.msra.mxu0 %v33
  %167 = vmatprep.subr.mxu0 0.0
  %168 = vmatpush1.msra.mxu0 %v32
  %169 = vmatprep.subr.mxu0 0.0
  %170 = vmatpush1.msra.mxu0 %v31
  %171 = vmatprep.subr.mxu0 0.0
  %172 = vmatpush1.msra.mxu0 %v30
  %173 = vmatprep.subr.mxu0 0.0
  %174 = vmatpush1.msra.mxu0 %v29
  %175 = vmatprep.subr.mxu0 0.0
  %176 = vmatpush1.msra.mxu0 %v28
  %177 = vmatprep.subr.mxu0 0.0
  %178 = vmatpush1.msra.mxu0 %v27
  %179 = vmatprep.subr.mxu0 0.0
  %180 = vmatpush1.msra.mxu0 %v26
  %181 = vmatprep.subr.mxu0 0.0
  %182 = vmatpush1.msra.mxu0 %v25
  %183 = vmatprep.subr.mxu0 0.0
  %184 = vmatpush1.msra.mxu0 %v24
  %185 = vmatprep.subr.mxu0 0.0
  %186 = vmatpush1.msra.mxu0 %v23
  %187 = vmatprep.subr.mxu0 0.0
  %188 = vmatpush1.msra.mxu0 %v22
  %189 = vmatprep.subr.mxu0 0.0
  %190 = vmatpush2.msra.mxu0 %v53
  %191 = vmatprep.subr.mxu0 0.0
  %192 = vmatpush2.msra.mxu0 %v52
  %193 = vmatprep.subr.mxu0 0.0
  %194 = vmatpush2.msra.mxu0 %v51
  %195 = vmatprep.subr.mxu0 0.0
  %196 = vmatpush2.msra.mxu0 %v50
  %197 = vmatprep.subr.mxu0 0.0
  %198 = vmatpush2.msra.mxu0 %v49
  %199 = vmatprep.subr.mxu0 0.0
  %200 = vmatpush2.msra.mxu0 %v48
  %201 = vmatprep.subr.mxu0 0.0
  %202 = vmatpush2.msra.mxu0 %v47
  %203 = vmatprep.subr.mxu0 0.0
  %204 = vmatpush2.msra.mxu0 %v46
  %205 = vmatprep.subr.mxu0 0.0
  %206 = vmatpush2.msra.mxu0 %v45
  %207 = vmatprep.subr.mxu0 0.0
  %208 = vmatpush2.msra.mxu0 %v44
  %209 = vmatprep.subr.mxu0 0.0
  %210 = vmatpush2.msra.mxu0 %v43
  %211 = vmatprep.subr.mxu0 0.0
  %212 = vmatpush2.msra.mxu0 %v42
  %213 = vmatprep.subr.mxu0 0.0
  %214 = vmatpush2.msra.mxu0 %v41
  %215 = vmatprep.subr.mxu0 0.0
  %216 = vmatpush2.msra.mxu0 %v40
  %217 = vmatprep.subr.mxu0 0.0
  %218 = vmatpush2.msra.mxu0 %v39
  %219 = vmatprep.subr.mxu0 0.0
  %220 = vmatpush2.msra.mxu0 %v38
  %221 = vmatprep.mubr.f32.mxu0 %v15
  %222 = vmatmul.mubr.f32.gmra.mxu0 %v14
  %v223 = vpop.f32.mrf.mxu0
  %v224 = vadd.f32 %v155, %v223
  %v225 = vpop.f32.mrf.mxu0
  %226 = vdwg.mxu0
  %227 = vmatprep.subr.mxu0 0.0
  %228 = vmatpush1.msra.mxu0 %v69
  %229 = vmatprep.subr.mxu0 0.0
  %230 = vmatpush1.msra.mxu0 %v68
  %231 = vmatprep.subr.mxu0 0.0
  %232 = vmatpush1.msra.mxu0 %v67
  %233 = vmatprep.subr.mxu0 0.0
  %234 = vmatpush1.msra.mxu0 %v66
  %235 = vmatprep.subr.mxu0 0.0
  %236 = vmatpush1.msra.mxu0 %v65
  %237 = vmatprep.subr.mxu0 0.0
  %238 = vmatpush1.msra.mxu0 %v64
  %239 = vmatprep.subr.mxu0 0.0
  %240 = vmatpush1.msra.mxu0 %v63
  %241 = vmatprep.subr.mxu0 0.0
  %242 = vmatpush1.msra.mxu0 %v62
  %243 = vmatprep.subr.mxu0 0.0
  %244 = vmatpush1.msra.mxu0 %v61
  %245 = vmatprep.subr.mxu0 0.0
  %246 = vmatpush1.msra.mxu0 %v60
  %247 = vmatprep.subr.mxu0 0.0
  %248 = vmatpush1.msra.mxu0 %v59
  %249 = vmatprep.subr.mxu0 0.0
  %250 = vmatpush1.msra.mxu0 %v58
  %251 = vmatprep.subr.mxu0 0.0
  %252 = vmatpush1.msra.mxu0 %v57
  %253 = vmatprep.subr.mxu0 0.0
  %254 = vmatpush1.msra.mxu0 %v56
  %255 = vmatprep.subr.mxu0 0.0
  %256 = vmatpush1.msra.mxu0 %v55
  %257 = vmatprep.subr.mxu0 0.0
  %258 = vmatpush1.msra.mxu0 %v54
  %259 = vmatprep.subr.mxu0 0.0
  %260 = vmatpush2.msra.mxu0 %v85
  %261 = vmatprep.subr.mxu0 0.0
  %262 = vmatpush2.msra.mxu0 %v84
  %263 = vmatprep.subr.mxu0 0.0
  %264 = vmatpush2.msra.mxu0 %v83
  %265 = vmatprep.subr.mxu0 0.0
  %266 = vmatpush2.msra.mxu0 %v82
  %267 = vmatprep.subr.mxu0 0.0
  %268 = vmatpush2.msra.mxu0 %v81
  %269 = vmatprep.subr.mxu0 0.0
  %270 = vmatpush2.msra.mxu0 %v80
  %271 = vmatprep.subr.mxu0 0.0
  %272 = vmatpush2.msra.mxu0 %v79
  %273 = vmatprep.subr.mxu0 0.0
  %274 = vmatpush2.msra.mxu0 %v78
  %275 = vmatprep.subr.mxu0 0.0
  %276 = vmatpush2.msra.mxu0 %v77
  %277 = vmatprep.subr.mxu0 0.0
  %278 = vmatpush2.msra.mxu0 %v76
  %279 = vmatprep.subr.mxu0 0.0
  %280 = vmatpush2.msra.mxu0 %v75
  %281 = vmatprep.subr.mxu0 0.0
  %282 = vmatpush2.msra.mxu0 %v74
  %283 = vmatprep.subr.mxu0 0.0
  %284 = vmatpush2.msra.mxu0 %v73
  %285 = vmatprep.subr.mxu0 0.0
  %286 = vmatpush2.msra.mxu0 %v72
  %287 = vmatprep.subr.mxu0 0.0
  %288 = vmatpush2.msra.mxu0 %v71
  %289 = vmatprep.subr.mxu0 0.0
  %290 = vmatpush2.msra.mxu0 %v70
  %291 = vmatprep.mubr.f32.mxu0 %v17
  %292 = vmatmul.mubr.f32.gmra.mxu0 %v16
  %v293 = vpop.f32.mrf.mxu0
  %v294 = vadd.f32 %v224, %v293
  %v295 = vpop.f32.mrf.mxu0
  %296 = vdwg.mxu0
  %297 = vmatprep.subr.mxu0 0.0
  %298 = vmatpush1.msra.mxu0 %v101
  %299 = vmatprep.subr.mxu0 0.0
  %300 = vmatpush1.msra.mxu0 %v100
  %301 = vmatprep.subr.mxu0 0.0
  %302 = vmatpush1.msra.mxu0 %v99
  %303 = vmatprep.subr.mxu0 0.0
  %304 = vmatpush1.msra.mxu0 %v98
  %305 = vmatprep.subr.mxu0 0.0
  %306 = vmatpush1.msra.mxu0 %v97
  %307 = vmatprep.subr.mxu0 0.0
  %308 = vmatpush1.msra.mxu0 %v96
  %309 = vmatprep.subr.mxu0 0.0
  %310 = vmatpush1.msra.mxu0 %v95
  %311 = vmatprep.subr.mxu0 0.0
  %312 = vmatpush1.msra.mxu0 %v94
  %313 = vmatprep.subr.mxu0 0.0
  %314 = vmatpush1.msra.mxu0 %v93
  %315 = vmatprep.subr.mxu0 0.0
  %316 = vmatpush1.msra.mxu0 %v92
  %317 = vmatprep.subr.mxu0 0.0
  %318 = vmatpush1.msra.mxu0 %v91
  %319 = vmatprep.subr.mxu0 0.0
  %320 = vmatpush1.msra.mxu0 %v90
  %321 = vmatprep.subr.mxu0 0.0
  %322 = vmatpush1.msra.mxu0 %v89
  %323 = vmatprep.subr.mxu0 0.0
  %324 = vmatpush1.msra.mxu0 %v88
  %325 = vmatprep.subr.mxu0 0.0
  %326 = vmatpush1.msra.mxu0 %v87
  %327 = vmatprep.subr.mxu0 0.0
  %328 = vmatpush1.msra.mxu0 %v86
  %329 = vmatprep.subr.mxu0 0.0
  %330 = vmatpush2.msra.mxu0 %v117
  %331 = vmatprep.subr.mxu0 0.0
  %332 = vmatpush2.msra.mxu0 %v116
  %333 = vmatprep.subr.mxu0 0.0
  %334 = vmatpush2.msra.mxu0 %v115
  %335 = vmatprep.subr.mxu0 0.0
  %336 = vmatpush2.msra.mxu0 %v114
  %337 = vmatprep.subr.mxu0 0.0
  %338 = vmatpush2.msra.mxu0 %v113
  %339 = vmatprep.subr.mxu0 0.0
  %340 = vmatpush2.msra.mxu0 %v112
  %341 = vmatprep.subr.mxu0 0.0
  %342 = vmatpush2.msra.mxu0 %v111
  %343 = vmatprep.subr.mxu0 0.0
  %344 = vmatpush2.msra.mxu0 %v110
  %345 = vmatprep.subr.mxu0 0.0
  %346 = vmatpush2.msra.mxu0 %v109
  %347 = vmatprep.subr.mxu0 0.0
  %348 = vmatpush2.msra.mxu0 %v108
  %349 = vmatprep.subr.mxu0 0.0
  %350 = vmatpush2.msra.mxu0 %v107
  %351 = vmatprep.subr.mxu0 0.0
  %352 = vmatpush2.msra.mxu0 %v106
  %353 = vmatprep.subr.mxu0 0.0
  %354 = vmatpush2.msra.mxu0 %v105
  %355 = vmatprep.subr.mxu0 0.0
  %356 = vmatpush2.msra.mxu0 %v104
  %357 = vmatprep.subr.mxu0 0.0
  %358 = vmatpush2.msra.mxu0 %v103
  %359 = vmatprep.subr.mxu0 0.0
  %360 = vmatpush2.msra.mxu0 %v102
  %361 = vmatprep.mubr.f32.mxu0 %v19
  %362 = vmatmul.mubr.f32.gmra.mxu0 %v18
  %v363 = vpop.f32.mrf.mxu0
  %v364 = vadd.f32 %v294, %v363
  %v365 = vpop.f32.mrf.mxu0
  %366 = vdwg.mxu0
  %367 = vmatprep.subr.mxu0 0.0
  %368 = vmatpush1.msra.mxu0 %v133
  %369 = vmatprep.subr.mxu0 0.0
  %370 = vmatpush1.msra.mxu0 %v132
  %371 = vmatprep.subr.mxu0 0.0
  %372 = vmatpush1.msra.mxu0 %v131
  %373 = vmatprep.subr.mxu0 0.0
  %374 = vmatpush1.msra.mxu0 %v130
  %375 = vmatprep.subr.mxu0 0.0
  %376 = vmatpush1.msra.mxu0 %v129
  %377 = vmatprep.subr.mxu0 0.0
  %378 = vmatpush1.msra.mxu0 %v128
  %379 = vmatprep.subr.mxu0 0.0
  %380 = vmatpush1.msra.mxu0 %v127
  %381 = vmatprep.subr.mxu0 0.0
  %382 = vmatpush1.msra.mxu0 %v126
  %383 = vmatprep.subr.mxu0 0.0
  %384 = vmatpush1.msra.mxu0 %v125
  %385 = vmatprep.subr.mxu0 0.0
  %386 = vmatpush1.msra.mxu0 %v124
  %387 = vmatprep.subr.mxu0 0.0
  %388 = vmatpush1.msra.mxu0 %v123
  %389 = vmatprep.subr.mxu0 0.0
  %390 = vmatpush1.msra.mxu0 %v122
  %391 = vmatprep.subr.mxu0 0.0
  %392 = vmatpush1.msra.mxu0 %v121
  %393 = vmatprep.subr.mxu0 0.0
  %394 = vmatpush1.msra.mxu0 %v120
  %395 = vmatprep.subr.mxu0 0.0
  %396 = vmatpush1.msra.mxu0 %v119
  %397 = vmatprep.subr.mxu0 0.0
  %398 = vmatpush1.msra.mxu0 %v118
  %399 = vmatprep.subr.mxu0 0.0
  %400 = vmatpush2.msra.mxu0 %v149
  %401 = vmatprep.subr.mxu0 0.0
  %402 = vmatpush2.msra.mxu0 %v148
  %403 = vmatprep.subr.mxu0 0.0
  %404 = vmatpush2.msra.mxu0 %v147
  %405 = vmatprep.subr.mxu0 0.0
  %406 = vmatpush2.msra.mxu0 %v146
  %407 = vmatprep.subr.mxu0 0.0
  %408 = vmatpush2.msra.mxu0 %v145
  %409 = vmatprep.subr.mxu0 0.0
  %410 = vmatpush2.msra.mxu0 %v144
  %411 = vmatprep.subr.mxu0 0.0
  %412 = vmatpush2.msra.mxu0 %v143
  %413 = vmatprep.subr.mxu0 0.0
  %414 = vmatpush2.msra.mxu0 %v142
  %415 = vmatprep.subr.mxu0 0.0
  %416 = vmatpush2.msra.mxu0 %v141
  %417 = vmatprep.subr.mxu0 0.0
  %418 = vmatpush2.msra.mxu0 %v140
  %419 = vmatprep.subr.mxu0 0.0
  %420 = vmatpush2.msra.mxu0 %v139
  %421 = vmatprep.subr.mxu0 0.0
  %422 = vmatpush2.msra.mxu0 %v138
  %423 = vmatprep.subr.mxu0 0.0
  %424 = vmatpush2.msra.mxu0 %v137
  %425 = vmatprep.subr.mxu0 0.0
  %426 = vmatpush2.msra.mxu0 %v136
  %427 = vmatprep.subr.mxu0 0.0
  %428 = vmatpush2.msra.mxu0 %v135
  %429 = vmatprep.subr.mxu0 0.0
  %430 = vmatpush2.msra.mxu0 %v134
  %431 = vmatprep.mubr.f32.mxu0 %v21
  %432 = vmatmul.mubr.f32.gmra.mxu0 %v20
  %v433 = vpop.f32.mrf.mxu0
  %v434 = vadd.f32 %v364, %v433
  %v435 = vpop.f32.mrf.mxu0
  %436 = vdwg.mxu0
  %437 = vst [vmem:[%s3] sm:$0xff] %v434
  // Predicated region
  $region14: #{forward.9} parent=0 // pred_check
    _
  $region15: #{forward.9} parent=0 // pred_check_branch
    %439 = sbr.rel (0) target = $region17
  $region16: #{forward.9} parent=0 // pred_region
    _
  $region17: #{forward.9} parent=0 // pred_fallthru
    _
  // Predicated region
  $region18: #{forward.9} parent=0 // pred_check
    _
  $region19: #{forward.9} parent=0 // pred_check_branch
    %441 = sbr.rel (0) target = $region21
  $region20: #{forward.9} parent=0 // pred_region
    _
  $region21: #{forward.9} parent=0 // pred_fallthru
    _

// kernel: forward.8
$region0: #{forward.8}
  #allocation0 [shape = 'u32[]', space=smem, size = 0x4, offset = 0x4, fixed_abs, tag = 'smem constant byte address 0x4 - core index']
  #allocation1 [shape = 'u32[144,128]{1,0:T(1,128)}', space=vmem, size = 0x12000, scoped, tag = 'internal scratch']
  #allocation2 [shape = 'f32[8,512]{1,0:T(8,128)}', space=vmem, size = 0x4000, scoped, tag = 'scratch operand']
  %s0 = inlined_call_operand.vmem [shape: f32[8,12544], index: 0, kind: input, shape index: {}]
  %s1 = inlined_call_operand.vmem [shape: f32[12544,1024], index: 1, kind: input, shape index: {}]
  %s2 = inlined_call_operand.vmem [shape: f32[1,1024], index: 2, kind: input, shape index: {}]
  %s3 = inlined_call_operand.vmem [shape: f32[8,1024], index: 3, kind: output, shape index: {}]
  %s4 = sld [smem:[#allocation0]]
  $region76: #{forward.8} parent=0
    _
  %s6 = ssub.s32 1, %s4
  %s7 = scalar_select 0, %s6, %s4
  $region1: #{forward.8} parent=0
    #allocation3 [shape = 'u8[7340032]{0}', space=vmem, size = 0x700000, scoped, tag = 'input window, operand 1']
    loop: start=0, step=1, limit=16
    $region2: #{forward.8} parent=1 // loop_pre_header
      _
    $region3: #{forward.8} parent=1 // loop_header
      %s9 = sphi 0, %s13
      %p10 = scmp.ge.s32.totalorder %s9, 16
      %s16 = sphi 0, %s35
      %s17 = sphi 0, %s31
      %s18 = sphi 0, %s27
      %s19 = sphi 0, %s16
      %s20 = sphi 0, %s17
      %s21 = sphi 0, %s18
      %s22 = sphi 0, %s19
      %s23 = sphi 0, %s20
      %s24 = sphi 0, %s21
      %s40 = sphi 0, %s42
      %s43 = sphi 0, %s40
      %s44 = sphi 0, %s43
      %s60 = sphi 0, %s44
      %s68 = sphi 0, %s70
      %s71 = sphi 0, %s68
      %s72 = sphi 0, %s71
      %s88 = sphi 0, %s72
      %s94 = sphi 0, %s96
      %s97 = sphi 0, %s94
      %s98 = sphi 0, %s97
      %s114 = sphi 0, %s98
      %s122 = sphi 0, %s124
      %s125 = sphi 0, %s122
      %s126 = sphi 0, %s125
      %s142 = sphi 0, %s126
    $region4: #{forward.8} parent=1 // loop_header_branch
      %12 = sbr.rel (%p10) target = $region8
    $region5: #{forward.8} parent=1 // loop_body
      %s14 = ssub.s32 %s9, 1
      %s15 = ssub.s32 %s9, 2
      %s25 = sadd.s32 1, %s18
      %p26 = scmp.ge.s32.totalorder %s25, 7
      %s27 = scalar_select %p26, 0, %s25
      %s28 = sadd.s32 1, %s17
      %s29 = scalar_select %p26, %s28, %s17
      %p30 = scmp.ge.s32.totalorder %s29, 2
      %s31 = scalar_select %p30, 0, %s29
      %s32 = sadd.s32 1, %s16
      %s33 = scalar_select %p30, %s32, %s16
      %p34 = scmp.ge.s32.totalorder %s33, 1
      %s35 = scalar_select %p34, 0, %s33
      %s36 = ssub.s32 %s16, %s35
      %s37 = ssub.s32 %s18, %s27
      %s38 = sor.u32 %s36, %s37
      %p39 = scmp.eq.s32.totalorder %s38, 0
      %s41 = sadd.s32 %s40, 1
      %s42 = scalar_select %p39, %s40, %s41
      %p45 = pneg %p39
      %p46 = scmp.eq.s32.totalorder %s9, 13
      %p47 = por %p45, %p46
      %p48 = scmp.ne.s32.totalorder %s40, %s43
      %p49 = scmp.eq.s32.totalorder %s9, 0
      %p50 = por %p48, %p49
      %p51 = scmp.ne.s32.totalorder %s40, %s43
      %p52 = scmp.eq.s32.totalorder %s14, 13
      %p53 = por %p51, %p52
      %p54 = scmp.ne.s32.totalorder %s43, %s44
      %p55 = scmp.eq.s32.totalorder %s14, 0
      %p56 = por %p54, %p55
      %p57 = scmp.ne.s32.totalorder %s43, %s44
      %p58 = scmp.eq.s32.totalorder %s15, 13
      %p59 = por %p57, %p58
      %p61 = scmp.ne.s32.totalorder %s44, %s60
      %p62 = scmp.eq.s32.totalorder %s15, 0
      %p63 = por %p61, %p62
      %s64 = ssub.s32 %s18, %s27
      %s65 = ssub.s32 %s17, %s31
      %s66 = sor.u32 %s64, %s65
      %p67 = scmp.eq.s32.totalorder %s66, 0
      %s69 = sadd.s32 %s68, 1
      %s70 = scalar_select %p67, %s68, %s69
      %p73 = pneg %p67
      %p74 = scmp.eq.s32.totalorder %s9, 13
      %p75 = por %p73, %p74
      %p76 = scmp.ne.s32.totalorder %s68, %s71
      %p77 = scmp.eq.s32.totalorder %s9, 0
      %p78 = por %p76, %p77
      %p79 = scmp.ne.s32.totalorder %s68, %s71
      %p80 = scmp.eq.s32.totalorder %s14, 13
      %p81 = por %p79, %p80
      %p82 = scmp.ne.s32.totalorder %s71, %s72
      %p83 = scmp.eq.s32.totalorder %s14, 0
      %p84 = por %p82, %p83
      %p85 = scmp.ne.s32.totalorder %s71, %s72
      %p86 = scmp.eq.s32.totalorder %s15, 13
      %p87 = por %p85, %p86
      %p89 = scmp.ne.s32.totalorder %s72, %s88
      %p90 = scmp.eq.s32.totalorder %s15, 0
      %p91 = por %p89, %p90
      %s92 = ssub.s32 %s17, %s31
      %p93 = scmp.eq.s32.totalorder %s92, 0
      %s95 = sadd.s32 %s94, 1
      %s96 = scalar_select %p93, %s94, %s95
      %p99 = pneg %p93
      %p100 = scmp.eq.s32.totalorder %s9, 13
      %p101 = por %p99, %p100
      %p102 = scmp.ne.s32.totalorder %s94, %s97
      %p103 = scmp.eq.s32.totalorder %s9, 0
      %p104 = por %p102, %p103
      %p105 = scmp.ne.s32.totalorder %s94, %s97
      %p106 = scmp.eq.s32.totalorder %s14, 13
      %p107 = por %p105, %p106
      %p108 = scmp.ne.s32.totalorder %s97, %s98
      %p109 = scmp.eq.s32.totalorder %s14, 0
      %p110 = por %p108, %p109
      %p111 = scmp.ne.s32.totalorder %s97, %s98
      %p112 = scmp.eq.s32.totalorder %s15, 13
      %p113 = por %p111, %p112
      %p115 = scmp.ne.s32.totalorder %s98, %s114
      %p116 = scmp.eq.s32.totalorder %s15, 0
      %p117 = por %p115, %p116
      %s118 = ssub.s32 %s16, %s35
      %s119 = ssub.s32 %s17, %s31
      %s120 = sor.u32 %s118, %s119
      %p121 = scmp.eq.s32.totalorder %s120, 0
      %s123 = sadd.s32 %s122, 1
      %s124 = scalar_select %p121, %s122, %s123
      %p127 = pneg %p121
      %p128 = scmp.eq.s32.totalorder %s9, 13
      %p129 = por %p127, %p128
      %p130 = scmp.ne.s32.totalorder %s122, %s125
      %p131 = scmp.eq.s32.totalorder %s9, 0
      %p132 = por %p130, %p131
      %p133 = scmp.ne.s32.totalorder %s122, %s125
      %p134 = scmp.eq.s32.totalorder %s14, 13
      %p135 = por %p133, %p134
      %p136 = scmp.ne.s32.totalorder %s125, %s126
      %p137 = scmp.eq.s32.totalorder %s14, 0
      %p138 = por %p136, %p137
      %p139 = scmp.ne.s32.totalorder %s125, %s126
      %p140 = scmp.eq.s32.totalorder %s15, 13
      %p141 = por %p139, %p140
      %p143 = scmp.ne.s32.totalorder %s126, %s142
      %p144 = scmp.eq.s32.totalorder %s15, 0
      %p145 = por %p143, %p144
      %p146 = scmp.le.s32.totalorder 1, %s9
      %p147 = scmp.lt.s32.totalorder %s9, 15
      %p148 = pnand %p146, %p147
      %p149 = pneg %p148
      // Predicated region
      $region9: #{forward.8} parent=5 // pred_check
        _
      $region10: #{forward.8} parent=5 // pred_check_branch
        %151 = sbr.rel (%p148) target = $region12
      $region11: #{forward.8} parent=5 // pred_region
        %s152 = ssub.s32 %s9, 1
      $region12: #{forward.8} parent=5 // pred_fallthru
        _
      %p153 = scmp.lt.s32.totalorder %s9, 14
      // Predicated region
      $region13: #{forward.8} parent=5 // pred_check
        %p154 = pneg %p153
      $region14: #{forward.8} parent=5 // pred_check_branch
        %156 = sbr.rel (%p154) target = $region16
      $region15: #{forward.8} parent=5 // pred_region
        // Predicated region
        $region17: #{forward.8} parent=15 // pred_check
          %p157 = pneg %p50
        $region18: #{forward.8} parent=15 // pred_check_branch
          %159 = sbr.rel (%p157) target = $region20
        $region19: #{forward.8} parent=15 // pred_region
          %s160 = smul.u32 14, %s18
          %p161 = scmp.lt.s32.totalorder %s16, 0
          %s162 = scalar_select %p161, %s16, 0
          %p163 = scmp.lt.s32.totalorder %s160, 97
          %s164 = scalar_select %p163, %s160, 97
          %s165 = smul.addr %s162, 98
          %s166 = sadd.s32 %s164, %s165
          %s167 = smul.addr %s166, 8
          %s168 = scalar_lea.vmem %s0, %s167
          %s169 = smul.u32 14, %s18
        $region20: #{forward.8} parent=15 // pred_fallthru
          _
        // Predicated region
        $region21: #{forward.8} parent=15 // pred_check
          %p170 = pneg %p78
        $region22: #{forward.8} parent=15 // pred_check_branch
          %172 = sbr.rel (%p170) target = $region24
        $region23: #{forward.8} parent=15 // pred_region
          %s173 = sand.u32 %s68, 1
          %s174 = sand.u32 %s68, 1
          %s175 = smul.addr %s174, 7168
          %s176 = scalar_lea.vmem [#allocation3], %s175
          %s177 = smul.u32 224, %s18
          %s178 = smul.u32 4, %s17
          %s179 = smul.addr %s177, 8
          %s180 = sadd.s32 %s178, %s179
          %s181 = smul.addr %s180, 8
          %s182 = scalar_lea.vmem %s1, %s181
          // Predicated region
          $region25: #{forward.8} parent=23 // pred_check
            _
          $region26: #{forward.8} parent=23 // pred_check_branch
            %184 = sbr.rel (0) target = $region28
          $region27: #{forward.8} parent=23 // pred_region
            // Predicated region
            $region29: #{forward.8} parent=27 // pred_check
              _
            $region30: #{forward.8} parent=27 // pred_check_branch
              %186 = sbr.rel (0) target = $region32
            $region31: #{forward.8} parent=27 // pred_region
              loop: start=0, step=1, limit=1
              $region33: #{forward.8} parent=31 // loop_pre_header
                _
              $region34: #{forward.8} parent=31 // loop_header
                %s188 = sphi 0, %s192
                %p189 = scmp.ge.s32.totalorder %s188, 1
                %s193 = sphi %s182, %s182
                %s194 = sphi %s176, %s176
              $region35: #{forward.8} parent=31 // loop_header_branch
                %191 = sbr.rel (%p189) target = $region39
              $region36: #{forward.8} parent=31 // loop_body
                %v195 = vld [vmem:[%s193] sm:$0xff]
                %196 = vst [vmem:[%s194] sm:$0xff] %v195
                %v197 = vld [vmem:[%s193 + $0x8] sm:$0xff]
                %198 = vst [vmem:[%s194 + $0x8] sm:$0xff] %v197
                %v199 = vld [vmem:[%s193 + $0x10] sm:$0xff]
                %200 = vst [vmem:[%s194 + $0x10] sm:$0xff] %v199
                %v201 = vld [vmem:[%s193 + $0x18] sm:$0xff]
                %202 = vst [vmem:[%s194 + $0x18] sm:$0xff] %v201
                %v203 = vld [vmem:[%s193 + $0x40] sm:$0xff]
                %204 = vst [vmem:[%s194 + $0x20] sm:$0xff] %v203
                %v205 = vld [vmem:[%s193 + $0x48] sm:$0xff]
                %206 = vst [vmem:[%s194 + $0x28] sm:$0xff] %v205
                %v207 = vld [vmem:[%s193 + $0x50] sm:$0xff]
                %208 = vst [vmem:[%s194 + $0x30] sm:$0xff] %v207
                %v209 = vld [vmem:[%s193 + $0x58] sm:$0xff]
                %210 = vst [vmem:[%s194 + $0x38] sm:$0xff] %v209
                %v211 = vld [vmem:[%s193 + $0x80] sm:$0xff]
                %212 = vst [vmem:[%s194 + $0x40] sm:$0xff] %v211
                %v213 = vld [vmem:[%s193 + $0x88] sm:$0xff]
                %214 = vst [vmem:[%s194 + $0x48] sm:$0xff] %v213
                %v215 = vld [vmem:[%s193 + $0x90] sm:$0xff]
                %216 = vst [vmem:[%s194 + $0x50] sm:$0xff] %v215
                %v217 = vld [vmem:[%s193 + $0x98] sm:$0xff]
                %218 = vst [vmem:[%s194 + $0x58] sm:$0xff] %v217
                %v219 = vld [vmem:[%s193 + $0xc0] sm:$0xff]
                %220 = vst [vmem:[%s194 + $0x60] sm:$0xff] %v219
                %v221 = vld [vmem:[%s193 + $0xc8] sm:$0xff]
                %222 = vst [vmem:[%s194 + $0x68] sm:$0xff] %v221
                %v223 = vld [vmem:[%s193 + $0xd0] sm:$0xff]
                %224 = vst [vmem:[%s194 + $0x70] sm:$0xff] %v223
                %v225 = vld [vmem:[%s193 + $0xd8] sm:$0xff]
                %226 = vst [vmem:[%s194 + $0x78] sm:$0xff] %v225
                %v227 = vld [vmem:[%s193 + $0x100] sm:$0xff]
                %228 = vst [vmem:[%s194 + $0x80] sm:$0xff] %v227
                %v229 = vld [vmem:[%s193 + $0x108] sm:$0xff]
                %230 = vst [vmem:[%s194 + $0x88] sm:$0xff] %v229
                %v231 = vld [vmem:[%s193 + $0x110] sm:$0xff]
                %232 = vst [vmem:[%s194 + $0x90] sm:$0xff] %v231
                %v233 = vld [vmem:[%s193 + $0x118] sm:$0xff]
                %234 = vst [vmem:[%s194 + $0x98] sm:$0xff] %v233
                %v235 = vld [vmem:[%s193 + $0x140] sm:$0xff]
                %236 = vst [vmem:[%s194 + $0xa0] sm:$0xff] %v235
                %v237 = vld [vmem:[%s193 + $0x148] sm:$0xff]
                %238 = vst [vmem:[%s194 + $0xa8] sm:$0xff] %v237
                %v239 = vld [vmem:[%s193 + $0x150] sm:$0xff]
                %240 = vst [vmem:[%s194 + $0xb0] sm:$0xff] %v239
                %v241 = vld [vmem:[%s193 + $0x158] sm:$0xff]
                %242 = vst [vmem:[%s194 + $0xb8] sm:$0xff] %v241
                %v243 = vld [vmem:[%s193 + $0x180] sm:$0xff]
                %244 = vst [vmem:[%s194 + $0xc0] sm:$0xff] %v243
                %v245 = vld [vmem:[%s193 + $0x188] sm:$0xff]
                %246 = vst [vmem:[%s194 + $0xc8] sm:$0xff] %v245
                %v247 = vld [vmem:[%s193 + $0x190] sm:$0xff]
                %248 = vst [vmem:[%s194 + $0xd0] sm:$0xff] %v247
                %v249 = vld [vmem:[%s193 + $0x198] sm:$0xff]
                %250 = vst [vmem:[%s194 + $0xd8] sm:$0xff] %v249
                %v251 = vld [vmem:[%s193 + $0x1c0] sm:$0xff]
                %252 = vst [vmem:[%s194 + $0xe0] sm:$0xff] %v251
                %v253 = vld [vmem:[%s193 + $0x1c8] sm:$0xff]
                %254 = vst [vmem:[%s194 + $0xe8] sm:$0xff] %v253
                %v255 = vld [vmem:[%s193 + $0x1d0] sm:$0xff]
                %256 = vst [vmem:[%s194 + $0xf0] sm:$0xff] %v255
                %v257 = vld [vmem:[%s193 + $0x1d8] sm:$0xff]
                %258 = vst [vmem:[%s194 + $0xf8] sm:$0xff] %v257
                %v259 = vld [vmem:[%s193 + $0x200] sm:$0xff]
                %260 = vst [vmem:[%s194 + $0x100] sm:$0xff] %v259
                %v261 = vld [vmem:[%s193 + $0x208] sm:$0xff]
                %262 = vst [vmem:[%s194 + $0x108] sm:$0xff] %v261
                %v263 = vld [vmem:[%s193 + $0x210] sm:$0xff]
                %264 = vst [vmem:[%s194 + $0x110] sm:$0xff] %v263
                %v265 = vld [vmem:[%s193 + $0x218] sm:$0xff]
                %266 = vst [vmem:[%s194 + $0x118] sm:$0xff] %v265
                %v267 = vld [vmem:[%s193 + $0x240] sm:$0xff]
                %268 = vst [vmem:[%s194 + $0x120] sm:$0xff] %v267
                %v269 = vld [vmem:[%s193 + $0x248] sm:$0xff]
                %270 = vst [vmem:[%s194 + $0x128] sm:$0xff] %v269
                %v271 = vld [vmem:[%s193 + $0x250] sm:$0xff]
                %272 = vst [vmem:[%s194 + $0x130] sm:$0xff] %v271
                %v273 = vld [vmem:[%s193 + $0x258] sm:$0xff]
                %274 = vst [vmem:[%s194 + $0x138] sm:$0xff] %v273
                %v275 = vld [vmem:[%s193 + $0x280] sm:$0xff]
                %276 = vst [vmem:[%s194 + $0x140] sm:$0xff] %v275
                %v277 = vld [vmem:[%s193 + $0x288] sm:$0xff]
                %278 = vst [vmem:[%s194 + $0x148] sm:$0xff] %v277
                %v279 = vld [vmem:[%s193 + $0x290] sm:$0xff]
                %280 = vst [vmem:[%s194 + $0x150] sm:$0xff] %v279
                %v281 = vld [vmem:[%s193 + $0x298] sm:$0xff]
                %282 = vst [vmem:[%s194 + $0x158] sm:$0xff] %v281
                %v283 = vld [vmem:[%s193 + $0x2c0] sm:$0xff]
                %284 = vst [vmem:[%s194 + $0x160] sm:$0xff] %v283
                %v285 = vld [vmem:[%s193 + $0x2c8] sm:$0xff]
                %286 = vst [vmem:[%s194 + $0x168] sm:$0xff] %v285
                %v287 = vld [vmem:[%s193 + $0x2d0] sm:$0xff]
                %288 = vst [vmem:[%s194 + $0x170] sm:$0xff] %v287
                %v289 = vld [vmem:[%s193 + $0x2d8] sm:$0xff]
                %290 = vst [vmem:[%s194 + $0x178] sm:$0xff] %v289
                %v291 = vld [vmem:[%s193 + $0x300] sm:$0xff]
                %292 = vst [vmem:[%s194 + $0x180] sm:$0xff] %v291
                %v293 = vld [vmem:[%s193 + $0x308] sm:$0xff]
                %294 = vst [vmem:[%s194 + $0x188] sm:$0xff] %v293
                %v295 = vld [vmem:[%s193 + $0x310] sm:$0xff]
                %296 = vst [vmem:[%s194 + $0x190] sm:$0xff] %v295
                %v297 = vld [vmem:[%s193 + $0x318] sm:$0xff]
                %298 = vst [vmem:[%s194 + $0x198] sm:$0xff] %v297
                %v299 = vld [vmem:[%s193 + $0x340] sm:$0xff]
                %300 = vst [vmem:[%s194 + $0x1a0] sm:$0xff] %v299
                %v301 = vld [vmem:[%s193 + $0x348] sm:$0xff]
                %302 = vst [vmem:[%s194 + $0x1a8] sm:$0xff] %v301
                %v303 = vld [vmem:[%s193 + $0x350] sm:$0xff]
                %304 = vst [vmem:[%s194 + $0x1b0] sm:$0xff] %v303
                %v305 = vld [vmem:[%s193 + $0x358] sm:$0xff]
                %306 = vst [vmem:[%s194 + $0x1b8] sm:$0xff] %v305
                %v307 = vld [vmem:[%s193 + $0x380] sm:$0xff]
                %308 = vst [vmem:[%s194 + $0x1c0] sm:$0xff] %v307
                %v309 = vld [vmem:[%s193 + $0x388] sm:$0xff]
                %310 = vst [vmem:[%s194 + $0x1c8] sm:$0xff] %v309
                %v311 = vld [vmem:[%s193 + $0x390] sm:$0xff]
                %312 = vst [vmem:[%s194 + $0x1d0] sm:$0xff] %v311
                %v313 = vld [vmem:[%s193 + $0x398] sm:$0xff]
                %314 = vst [vmem:[%s194 + $0x1d8] sm:$0xff] %v313
                %v315 = vld [vmem:[%s193 + $0x3c0] sm:$0xff]
                %316 = vst [vmem:[%s194 + $0x1e0] sm:$0xff] %v315
                %v317 = vld [vmem:[%s193 + $0x3c8] sm:$0xff]
                %318 = vst [vmem:[%s194 + $0x1e8] sm:$0xff] %v317
                %v319 = vld [vmem:[%s193 + $0x3d0] sm:$0xff]
                %320 = vst [vmem:[%s194 + $0x1f0] sm:$0xff] %v319
                %v321 = vld [vmem:[%s193 + $0x3d8] sm:$0xff]
                %322 = vst [vmem:[%s194 + $0x1f8] sm:$0xff] %v321
                %v323 = vld [vmem:[%s193 + $0x400] sm:$0xff]
                %324 = vst [vmem:[%s194 + $0x200] sm:$0xff] %v323
                %v325 = vld [vmem:[%s193 + $0x408] sm:$0xff]
                %326 = vst [vmem:[%s194 + $0x208] sm:$0xff] %v325
                %v327 = vld [vmem:[%s193 + $0x410] sm:$0xff]
                %328 = vst [vmem:[%s194 + $0x210] sm:$0xff] %v327
                %v329 = vld [vmem:[%s193 + $0x418] sm:$0xff]
                %330 = vst [vmem:[%s194 + $0x218] sm:$0xff] %v329
                %v331 = vld [vmem:[%s193 + $0x440] sm:$0xff]
                %332 = vst [vmem:[%s194 + $0x220] sm:$0xff] %v331
                %v333 = vld [vmem:[%s193 + $0x448] sm:$0xff]
                %334 = vst [vmem:[%s194 + $0x228] sm:$0xff] %v333
                %v335 = vld [vmem:[%s193 + $0x450] sm:$0xff]
                %336 = vst [vmem:[%s194 + $0x230] sm:$0xff] %v335
                %v337 = vld [vmem:[%s193 + $0x458] sm:$0xff]
                %338 = vst [vmem:[%s194 + $0x238] sm:$0xff] %v337
                %v339 = vld [vmem:[%s193 + $0x480] sm:$0xff]
                %340 = vst [vmem:[%s194 + $0x240] sm:$0xff] %v339
                %v341 = vld [vmem:[%s193 + $0x488] sm:$0xff]
                %342 = vst [vmem:[%s194 + $0x248] sm:$0xff] %v341
                %v343 = vld [vmem:[%s193 + $0x490] sm:$0xff]
                %344 = vst [vmem:[%s194 + $0x250] sm:$0xff] %v343
                %v345 = vld [vmem:[%s193 + $0x498] sm:$0xff]
                %346 = vst [vmem:[%s194 + $0x258] sm:$0xff] %v345
                %v347 = vld [vmem:[%s193 + $0x4c0] sm:$0xff]
                %348 = vst [vmem:[%s194 + $0x260] sm:$0xff] %v347
                %v349 = vld [vmem:[%s193 + $0x4c8] sm:$0xff]
                %350 = vst [vmem:[%s194 + $0x268] sm:$0xff] %v349
                %v351 = vld [vmem:[%s193 + $0x4d0] sm:$0xff]
                %352 = vst [vmem:[%s194 + $0x270] sm:$0xff] %v351
                %v353 = vld [vmem:[%s193 + $0x4d8] sm:$0xff]
                %354 = vst [vmem:[%s194 + $0x278] sm:$0xff] %v353
                %v355 = vld [vmem:[%s193 + $0x500] sm:$0xff]
                %356 = vst [vmem:[%s194 + $0x280] sm:$0xff] %v355
                %v357 = vld [vmem:[%s193 + $0x508] sm:$0xff]
                %358 = vst [vmem:[%s194 + $0x288] sm:$0xff] %v357
                %v359 = vld [vmem:[%s193 + $0x510] sm:$0xff]
                %360 = vst [vmem:[%s194 + $0x290] sm:$0xff] %v359
                %v361 = vld [vmem:[%s193 + $0x518] sm:$0xff]
                %362 = vst [vmem:[%s194 + $0x298] sm:$0xff] %v361
                %v363 = vld [vmem:[%s193 + $0x540] sm:$0xff]
                %364 = vst [vmem:[%s194 + $0x2a0] sm:$0xff] %v363
                %v365 = vld [vmem:[%s193 + $0x548] sm:$0xff]
                %366 = vst [vmem:[%s194 + $0x2a8] sm:$0xff] %v365
                %v367 = vld [vmem:[%s193 + $0x550] sm:$0xff]
                %368 = vst [vmem:[%s194 + $0x2b0] sm:$0xff] %v367
                %v369 = vld [vmem:[%s193 + $0x558] sm:$0xff]
                %370 = vst [vmem:[%s194 + $0x2b8] sm:$0xff] %v369
                %v371 = vld [vmem:[%s193 + $0x580] sm:$0xff]
                %372 = vst [vmem:[%s194 + $0x2c0] sm:$0xff] %v371
                %v373 = vld [vmem:[%s193 + $0x588] sm:$0xff]
                %374 = vst [vmem:[%s194 + $0x2c8] sm:$0xff] %v373
                %v375 = vld [vmem:[%s193 + $0x590] sm:$0xff]
                %376 = vst [vmem:[%s194 + $0x2d0] sm:$0xff] %v375
                %v377 = vld [vmem:[%s193 + $0x598] sm:$0xff]
                %378 = vst [vmem:[%s194 + $0x2d8] sm:$0xff] %v377
                %v379 = vld [vmem:[%s193 + $0x5c0] sm:$0xff]
                %380 = vst [vmem:[%s194 + $0x2e0] sm:$0xff] %v379
                %v381 = vld [vmem:[%s193 + $0x5c8] sm:$0xff]
                %382 = vst [vmem:[%s194 + $0x2e8] sm:$0xff] %v381
                %v383 = vld [vmem:[%s193 + $0x5d0] sm:$0xff]
                %384 = vst [vmem:[%s194 + $0x2f0] sm:$0xff] %v383
                %v385 = vld [vmem:[%s193 + $0x5d8] sm:$0xff]
                %386 = vst [vmem:[%s194 + $0x2f8] sm:$0xff] %v385
                %v387 = vld [vmem:[%s193 + $0x600] sm:$0xff]
                %388 = vst [vmem:[%s194 + $0x300] sm:$0xff] %v387
                %v389 = vld [vmem:[%s193 + $0x608] sm:$0xff]
                %390 = vst [vmem:[%s194 + $0x308] sm:$0xff] %v389
                %v391 = vld [vmem:[%s193 + $0x610] sm:$0xff]
                %392 = vst [vmem:[%s194 + $0x310] sm:$0xff] %v391
                %v393 = vld [vmem:[%s193 + $0x618] sm:$0xff]
                %394 = vst [vmem:[%s194 + $0x318] sm:$0xff] %v393
                %v395 = vld [vmem:[%s193 + $0x640] sm:$0xff]
                %396 = vst [vmem:[%s194 + $0x320] sm:$0xff] %v395
                %v397 = vld [vmem:[%s193 + $0x648] sm:$0xff]
                %398 = vst [vmem:[%s194 + $0x328] sm:$0xff] %v397
                %v399 = vld [vmem:[%s193 + $0x650] sm:$0xff]
                %400 = vst [vmem:[%s194 + $0x330] sm:$0xff] %v399
                %v401 = vld [vmem:[%s193 + $0x658] sm:$0xff]
                %402 = vst [vmem:[%s194 + $0x338] sm:$0xff] %v401
                %v403 = vld [vmem:[%s193 + $0x680] sm:$0xff]
                %404 = vst [vmem:[%s194 + $0x340] sm:$0xff] %v403
                %v405 = vld [vmem:[%s193 + $0x688] sm:$0xff]
                %406 = vst [vmem:[%s194 + $0x348] sm:$0xff] %v405
                %v407 = vld [vmem:[%s193 + $0x690] sm:$0xff]
                %408 = vst [vmem:[%s194 + $0x350] sm:$0xff] %v407
                %v409 = vld [vmem:[%s193 + $0x698] sm:$0xff]
                %410 = vst [vmem:[%s194 + $0x358] sm:$0xff] %v409
                %v411 = vld [vmem:[%s193 + $0x6c0] sm:$0xff]
                %412 = vst [vmem:[%s194 + $0x360] sm:$0xff] %v411
                %v413 = vld [vmem:[%s193 + $0x6c8] sm:$0xff]
                %414 = vst [vmem:[%s194 + $0x368] sm:$0xff] %v413
                %v415 = vld [vmem:[%s193 + $0x6d0] sm:$0xff]
                %416 = vst [vmem:[%s194 + $0x370] sm:$0xff] %v415
                %v417 = vld [vmem:[%s193 + $0x6d8] sm:$0xff]
                %418 = vst [vmem:[%s194 + $0x378] sm:$0xff] %v417
                %v419 = vld [vmem:[%s193 + $0x700] sm:$0xff]
                %420 = vst [vmem:[%s194 + $0x380] sm:$0xff] %v419
                %v421 = vld [vmem:[%s193 + $0x708] sm:$0xff]
                %422 = vst [vmem:[%s194 + $0x388] sm:$0xff] %v421
                %v423 = vld [vmem:[%s193 + $0x710] sm:$0xff]
                %424 = vst [vmem:[%s194 + $0x390] sm:$0xff] %v423
                %v425 = vld [vmem:[%s193 + $0x718] sm:$0xff]
                %426 = vst [vmem:[%s194 + $0x398] sm:$0xff] %v425
                %v427 = vld [vmem:[%s193 + $0x740] sm:$0xff]
                %428 = vst [vmem:[%s194 + $0x3a0] sm:$0xff] %v427
                %v429 = vld [vmem:[%s193 + $0x748] sm:$0xff]
                %430 = vst [vmem:[%s194 + $0x3a8] sm:$0xff] %v429
                %v431 = vld [vmem:[%s193 + $0x750] sm:$0xff]
                %432 = vst [vmem:[%s194 + $0x3b0] sm:$0xff] %v431
                %v433 = vld [vmem:[%s193 + $0x758] sm:$0xff]
                %434 = vst [vmem:[%s194 + $0x3b8] sm:$0xff] %v433
                %v435 = vld [vmem:[%s193 + $0x780] sm:$0xff]
                %436 = vst [vmem:[%s194 + $0x3c0] sm:$0xff] %v435
                %v437 = vld [vmem:[%s193 + $0x788] sm:$0xff]
                %438 = vst [vmem:[%s194 + $0x3c8] sm:$0xff] %v437
                %v439 = vld [vmem:[%s193 + $0x790] sm:$0xff]
                %440 = vst [vmem:[%s194 + $0x3d0] sm:$0xff] %v439
                %v441 = vld [vmem:[%s193 + $0x798] sm:$0xff]
                %442 = vst [vmem:[%s194 + $0x3d8] sm:$0xff] %v441
                %v443 = vld [vmem:[%s193 + $0x7c0] sm:$0xff]
                %444 = vst [vmem:[%s194 + $0x3e0] sm:$0xff] %v443
                %v445 = vld [vmem:[%s193 + $0x7c8] sm:$0xff]
                %446 = vst [vmem:[%s194 + $0x3e8] sm:$0xff] %v445
                %v447 = vld [vmem:[%s193 + $0x7d0] sm:$0xff]
                %448 = vst [vmem:[%s194 + $0x3f0] sm:$0xff] %v447
                %v449 = vld [vmem:[%s193 + $0x7d8] sm:$0xff]
                %450 = vst [vmem:[%s194 + $0x3f8] sm:$0xff] %v449
                %v451 = vld [vmem:[%s193 + $0x800] sm:$0xff]
                %452 = vst [vmem:[%s194 + $0x400] sm:$0xff] %v451
                %v453 = vld [vmem:[%s193 + $0x808] sm:$0xff]
                %454 = vst [vmem:[%s194 + $0x408] sm:$0xff] %v453
                %v455 = vld [vmem:[%s193 + $0x810] sm:$0xff]
                %456 = vst [vmem:[%s194 + $0x410] sm:$0xff] %v455
                %v457 = vld [vmem:[%s193 + $0x818] sm:$0xff]
                %458 = vst [vmem:[%s194 + $0x418] sm:$0xff] %v457
                %v459 = vld [vmem:[%s193 + $0x840] sm:$0xff]
                %460 = vst [vmem:[%s194 + $0x420] sm:$0xff] %v459
                %v461 = vld [vmem:[%s193 + $0x848] sm:$0xff]
                %462 = vst [vmem:[%s194 + $0x428] sm:$0xff] %v461
                %v463 = vld [vmem:[%s193 + $0x850] sm:$0xff]
                %464 = vst [vmem:[%s194 + $0x430] sm:$0xff] %v463
                %v465 = vld [vmem:[%s193 + $0x858] sm:$0xff]
                %466 = vst [vmem:[%s194 + $0x438] sm:$0xff] %v465
                %v467 = vld [vmem:[%s193 + $0x880] sm:$0xff]
                %468 = vst [vmem:[%s194 + $0x440] sm:$0xff] %v467
                %v469 = vld [vmem:[%s193 + $0x888] sm:$0xff]
                %470 = vst [vmem:[%s194 + $0x448] sm:$0xff] %v469
                %v471 = vld [vmem:[%s193 + $0x890] sm:$0xff]
                %472 = vst [vmem:[%s194 + $0x450] sm:$0xff] %v471
                %v473 = vld [vmem:[%s193 + $0x898] sm:$0xff]
                %474 = vst [vmem:[%s194 + $0x458] sm:$0xff] %v473
                %v475 = vld [vmem:[%s193 + $0x8c0] sm:$0xff]
                %476 = vst [vmem:[%s194 + $0x460] sm:$0xff] %v475
                %v477 = vld [vmem:[%s193 + $0x8c8] sm:$0xff]
                %478 = vst [vmem:[%s194 + $0x468] sm:$0xff] %v477
                %v479 = vld [vmem:[%s193 + $0x8d0] sm:$0xff]
                %480 = vst [vmem:[%s194 + $0x470] sm:$0xff] %v479
                %v481 = vld [vmem:[%s193 + $0x8d8] sm:$0xff]
                %482 = vst [vmem:[%s194 + $0x478] sm:$0xff] %v481
                %v483 = vld [vmem:[%s193 + $0x900] sm:$0xff]
                %484 = vst [vmem:[%s194 + $0x480] sm:$0xff] %v483
                %v485 = vld [vmem:[%s193 + $0x908] sm:$0xff]
                %486 = vst [vmem:[%s194 + $0x488] sm:$0xff] %v485
                %v487 = vld [vmem:[%s193 + $0x910] sm:$0xff]
                %488 = vst [vmem:[%s194 + $0x490] sm:$0xff] %v487
                %v489 = vld [vmem:[%s193 + $0x918] sm:$0xff]
                %490 = vst [vmem:[%s194 + $0x498] sm:$0xff] %v489
                %v491 = vld [vmem:[%s193 + $0x940] sm:$0xff]
                %492 = vst [vmem:[%s194 + $0x4a0] sm:$0xff] %v491
                %v493 = vld [vmem:[%s193 + $0x948] sm:$0xff]
                %494 = vst [vmem:[%s194 + $0x4a8] sm:$0xff] %v493
                %v495 = vld [vmem:[%s193 + $0x950] sm:$0xff]
                %496 = vst [vmem:[%s194 + $0x4b0] sm:$0xff] %v495
                %v497 = vld [vmem:[%s193 + $0x958] sm:$0xff]
                %498 = vst [vmem:[%s194 + $0x4b8] sm:$0xff] %v497
                %v499 = vld [vmem:[%s193 + $0x980] sm:$0xff]
                %500 = vst [vmem:[%s194 + $0x4c0] sm:$0xff] %v499
                %v501 = vld [vmem:[%s193 + $0x988] sm:$0xff]
                %502 = vst [vmem:[%s194 + $0x4c8] sm:$0xff] %v501
                %v503 = vld [vmem:[%s193 + $0x990] sm:$0xff]
                %504 = vst [vmem:[%s194 + $0x4d0] sm:$0xff] %v503
                %v505 = vld [vmem:[%s193 + $0x998] sm:$0xff]
                %506 = vst [vmem:[%s194 + $0x4d8] sm:$0xff] %v505
                %v507 = vld [vmem:[%s193 + $0x9c0] sm:$0xff]
                %508 = vst [vmem:[%s194 + $0x4e0] sm:$0xff] %v507
                %v509 = vld [vmem:[%s193 + $0x9c8] sm:$0xff]
                %510 = vst [vmem:[%s194 + $0x4e8] sm:$0xff] %v509
                %v511 = vld [vmem:[%s193 + $0x9d0] sm:$0xff]
                %512 = vst [vmem:[%s194 + $0x4f0] sm:$0xff] %v511
                %v513 = vld [vmem:[%s193 + $0x9d8] sm:$0xff]
                %514 = vst [vmem:[%s194 + $0x4f8] sm:$0xff] %v513
                %v515 = vld [vmem:[%s193 + $0xa00] sm:$0xff]
                %516 = vst [vmem:[%s194 + $0x500] sm:$0xff] %v515
                %v517 = vld [vmem:[%s193 + $0xa08] sm:$0xff]
                %518 = vst [vmem:[%s194 + $0x508] sm:$0xff] %v517
                %v519 = vld [vmem:[%s193 + $0xa10] sm:$0xff]
                %520 = vst [vmem:[%s194 + $0x510] sm:$0xff] %v519
                %v521 = vld [vmem:[%s193 + $0xa18] sm:$0xff]
                %522 = vst [vmem:[%s194 + $0x518] sm:$0xff] %v521
                %v523 = vld [vmem:[%s193 + $0xa40] sm:$0xff]
                %524 = vst [vmem:[%s194 + $0x520] sm:$0xff] %v523
                %v525 = vld [vmem:[%s193 + $0xa48] sm:$0xff]
                %526 = vst [vmem:[%s194 + $0x528] sm:$0xff] %v525
                %v527 = vld [vmem:[%s193 + $0xa50] sm:$0xff]
                %528 = vst [vmem:[%s194 + $0x530] sm:$0xff] %v527
                %v529 = vld [vmem:[%s193 + $0xa58] sm:$0xff]
                %530 = vst [vmem:[%s194 + $0x538] sm:$0xff] %v529
                %v531 = vld [vmem:[%s193 + $0xa80] sm:$0xff]
                %532 = vst [vmem:[%s194 + $0x540] sm:$0xff] %v531
                %v533 = vld [vmem:[%s193 + $0xa88] sm:$0xff]
                %534 = vst [vmem:[%s194 + $0x548] sm:$0xff] %v533
                %v535 = vld [vmem:[%s193 + $0xa90] sm:$0xff]
                %536 = vst [vmem:[%s194 + $0x550] sm:$0xff] %v535
                %v537 = vld [vmem:[%s193 + $0xa98] sm:$0xff]
                %538 = vst [vmem:[%s194 + $0x558] sm:$0xff] %v537
                %v539 = vld [vmem:[%s193 + $0xac0] sm:$0xff]
                %540 = vst [vmem:[%s194 + $0x560] sm:$0xff] %v539
                %v541 = vld [vmem:[%s193 + $0xac8] sm:$0xff]
                %542 = vst [vmem:[%s194 + $0x568] sm:$0xff] %v541
                %v543 = vld [vmem:[%s193 + $0xad0] sm:$0xff]
                %544 = vst [vmem:[%s194 + $0x570] sm:$0xff] %v543
                %v545 = vld [vmem:[%s193 + $0xad8] sm:$0xff]
                %546 = vst [vmem:[%s194 + $0x578] sm:$0xff] %v545
                %v547 = vld [vmem:[%s193 + $0xb00] sm:$0xff]
                %548 = vst [vmem:[%s194 + $0x580] sm:$0xff] %v547
                %v549 = vld [vmem:[%s193 + $0xb08] sm:$0xff]
                %550 = vst [vmem:[%s194 + $0x588] sm:$0xff] %v549
                %v551 = vld [vmem:[%s193 + $0xb10] sm:$0xff]
                %552 = vst [vmem:[%s194 + $0x590] sm:$0xff] %v551
                %v553 = vld [vmem:[%s193 + $0xb18] sm:$0xff]
                %554 = vst [vmem:[%s194 + $0x598] sm:$0xff] %v553
                %v555 = vld [vmem:[%s193 + $0xb40] sm:$0xff]
                %556 = vst [vmem:[%s194 + $0x5a0] sm:$0xff] %v555
                %v557 = vld [vmem:[%s193 + $0xb48] sm:$0xff]
                %558 = vst [vmem:[%s194 + $0x5a8] sm:$0xff] %v557
                %v559 = vld [vmem:[%s193 + $0xb50] sm:$0xff]
                %560 = vst [vmem:[%s194 + $0x5b0] sm:$0xff] %v559
                %v561 = vld [vmem:[%s193 + $0xb58] sm:$0xff]
                %562 = vst [vmem:[%s194 + $0x5b8] sm:$0xff] %v561
                %v563 = vld [vmem:[%s193 + $0xb80] sm:$0xff]
                %564 = vst [vmem:[%s194 + $0x5c0] sm:$0xff] %v563
                %v565 = vld [vmem:[%s193 + $0xb88] sm:$0xff]
                %566 = vst [vmem:[%s194 + $0x5c8] sm:$0xff] %v565
                %v567 = vld [vmem:[%s193 + $0xb90] sm:$0xff]
                %568 = vst [vmem:[%s194 + $0x5d0] sm:$0xff] %v567
                %v569 = vld [vmem:[%s193 + $0xb98] sm:$0xff]
                %570 = vst [vmem:[%s194 + $0x5d8] sm:$0xff] %v569
                %v571 = vld [vmem:[%s193 + $0xbc0] sm:$0xff]
                %572 = vst [vmem:[%s194 + $0x5e0] sm:$0xff] %v571
                %v573 = vld [vmem:[%s193 + $0xbc8] sm:$0xff]
                %574 = vst [vmem:[%s194 + $0x5e8] sm:$0xff] %v573
                %v575 = vld [vmem:[%s193 + $0xbd0] sm:$0xff]
                %576 = vst [vmem:[%s194 + $0x5f0] sm:$0xff] %v575
                %v577 = vld [vmem:[%s193 + $0xbd8] sm:$0xff]
                %578 = vst [vmem:[%s194 + $0x5f8] sm:$0xff] %v577
                %v579 = vld [vmem:[%s193 + $0xc00] sm:$0xff]
                %580 = vst [vmem:[%s194 + $0x600] sm:$0xff] %v579
                %v581 = vld [vmem:[%s193 + $0xc08] sm:$0xff]
                %582 = vst [vmem:[%s194 + $0x608] sm:$0xff] %v581
                %v583 = vld [vmem:[%s193 + $0xc10] sm:$0xff]
                %584 = vst [vmem:[%s194 + $0x610] sm:$0xff] %v583
                %v585 = vld [vmem:[%s193 + $0xc18] sm:$0xff]
                %586 = vst [vmem:[%s194 + $0x618] sm:$0xff] %v585
                %v587 = vld [vmem:[%s193 + $0xc40] sm:$0xff]
                %588 = vst [vmem:[%s194 + $0x620] sm:$0xff] %v587
                %v589 = vld [vmem:[%s193 + $0xc48] sm:$0xff]
                %590 = vst [vmem:[%s194 + $0x628] sm:$0xff] %v589
                %v591 = vld [vmem:[%s193 + $0xc50] sm:$0xff]
                %592 = vst [vmem:[%s194 + $0x630] sm:$0xff] %v591
                %v593 = vld [vmem:[%s193 + $0xc58] sm:$0xff]
                %594 = vst [vmem:[%s194 + $0x638] sm:$0xff] %v593
                %v595 = vld [vmem:[%s193 + $0xc80] sm:$0xff]
                %596 = vst [vmem:[%s194 + $0x640] sm:$0xff] %v595
                %v597 = vld [vmem:[%s193 + $0xc88] sm:$0xff]
                %598 = vst [vmem:[%s194 + $0x648] sm:$0xff] %v597
                %v599 = vld [vmem:[%s193 + $0xc90] sm:$0xff]
                %600 = vst [vmem:[%s194 + $0x650] sm:$0xff] %v599
                %v601 = vld [vmem:[%s193 + $0xc98] sm:$0xff]
                %602 = vst [vmem:[%s194 + $0x658] sm:$0xff] %v601
                %v603 = vld [vmem:[%s193 + $0xcc0] sm:$0xff]
                %604 = vst [vmem:[%s194 + $0x660] sm:$0xff] %v603
                %v605 = vld [vmem:[%s193 + $0xcc8] sm:$0xff]
                %606 = vst [vmem:[%s194 + $0x668] sm:$0xff] %v605
                %v607 = vld [vmem:[%s193 + $0xcd0] sm:$0xff]
                %608 = vst [vmem:[%s194 + $0x670] sm:$0xff] %v607
                %v609 = vld [vmem:[%s193 + $0xcd8] sm:$0xff]
                %610 = vst [vmem:[%s194 + $0x678] sm:$0xff] %v609
                %v611 = vld [vmem:[%s193 + $0xd00] sm:$0xff]
                %612 = vst [vmem:[%s194 + $0x680] sm:$0xff] %v611
                %v613 = vld [vmem:[%s193 + $0xd08] sm:$0xff]
                %614 = vst [vmem:[%s194 + $0x688] sm:$0xff] %v613
                %v615 = vld [vmem:[%s193 + $0xd10] sm:$0xff]
                %616 = vst [vmem:[%s194 + $0x690] sm:$0xff] %v615
                %v617 = vld [vmem:[%s193 + $0xd18] sm:$0xff]
                %618 = vst [vmem:[%s194 + $0x698] sm:$0xff] %v617
                %v619 = vld [vmem:[%s193 + $0xd40] sm:$0xff]
                %620 = vst [vmem:[%s194 + $0x6a0] sm:$0xff] %v619
                %v621 = vld [vmem:[%s193 + $0xd48] sm:$0xff]
                %622 = vst [vmem:[%s194 + $0x6a8] sm:$0xff] %v621
                %v623 = vld [vmem:[%s193 + $0xd50] sm:$0xff]
                %624 = vst [vmem:[%s194 + $0x6b0] sm:$0xff] %v623
                %v625 = vld [vmem:[%s193 + $0xd58] sm:$0xff]
                %626 = vst [vmem:[%s194 + $0x6b8] sm:$0xff] %v625
                %v627 = vld [vmem:[%s193 + $0xd80] sm:$0xff]
                %628 = vst [vmem:[%s194 + $0x6c0] sm:$0xff] %v627
                %v629 = vld [vmem:[%s193 + $0xd88] sm:$0xff]
                %630 = vst [vmem:[%s194 + $0x6c8] sm:$0xff] %v629
                %v631 = vld [vmem:[%s193 + $0xd90] sm:$0xff]
                %632 = vst [vmem:[%s194 + $0x6d0] sm:$0xff] %v631
                %v633 = vld [vmem:[%s193 + $0xd98] sm:$0xff]
                %634 = vst [vmem:[%s194 + $0x6d8] sm:$0xff] %v633
                %v635 = vld [vmem:[%s193 + $0xdc0] sm:$0xff]
                %636 = vst [vmem:[%s194 + $0x6e0] sm:$0xff] %v635
                %v637 = vld [vmem:[%s193 + $0xdc8] sm:$0xff]
                %638 = vst [vmem:[%s194 + $0x6e8] sm:$0xff] %v637
                %v639 = vld [vmem:[%s193 + $0xdd0] sm:$0xff]
                %640 = vst [vmem:[%s194 + $0x6f0] sm:$0xff] %v639
                %v641 = vld [vmem:[%s193 + $0xdd8] sm:$0xff]
                %642 = vst [vmem:[%s194 + $0x6f8] sm:$0xff] %v641
                %v643 = vld [vmem:[%s193 + $0xe00] sm:$0xff]
                %644 = vst [vmem:[%s194 + $0x700] sm:$0xff] %v643
                %v645 = vld [vmem:[%s193 + $0xe08] sm:$0xff]
                %646 = vst [vmem:[%s194 + $0x708] sm:$0xff] %v645
                %v647 = vld [vmem:[%s193 + $0xe10] sm:$0xff]
                %648 = vst [vmem:[%s194 + $0x710] sm:$0xff] %v647
                %v649 = vld [vmem:[%s193 + $0xe18] sm:$0xff]
                %650 = vst [vmem:[%s194 + $0x718] sm:$0xff] %v649
                %v651 = vld [vmem:[%s193 + $0xe40] sm:$0xff]
                %652 = vst [vmem:[%s194 + $0x720] sm:$0xff] %v651
                %v653 = vld [vmem:[%s193 + $0xe48] sm:$0xff]
                %654 = vst [vmem:[%s194 + $0x728] sm:$0xff] %v653
                %v655 = vld [vmem:[%s193 + $0xe50] sm:$0xff]
                %656 = vst [vmem:[%s194 + $0x730] sm:$0xff] %v655
                %v657 = vld [vmem:[%s193 + $0xe58] sm:$0xff]
                %658 = vst [vmem:[%s194 + $0x738] sm:$0xff] %v657
                %v659 = vld [vmem:[%s193 + $0xe80] sm:$0xff]
                %660 = vst [vmem:[%s194 + $0x740] sm:$0xff] %v659
                %v661 = vld [vmem:[%s193 + $0xe88] sm:$0xff]
                %662 = vst [vmem:[%s194 + $0x748] sm:$0xff] %v661
                %v663 = vld [vmem:[%s193 + $0xe90] sm:$0xff]
                %664 = vst [vmem:[%s194 + $0x750] sm:$0xff] %v663
                %v665 = vld [vmem:[%s193 + $0xe98] sm:$0xff]
                %666 = vst [vmem:[%s194 + $0x758] sm:$0xff] %v665
                %v667 = vld [vmem:[%s193 + $0xec0] sm:$0xff]
                %668 = vst [vmem:[%s194 + $0x760] sm:$0xff] %v667
                %v669 = vld [vmem:[%s193 + $0xec8] sm:$0xff]
                %670 = vst [vmem:[%s194 + $0x768] sm:$0xff] %v669
                %v671 = vld [vmem:[%s193 + $0xed0] sm:$0xff]
                %672 = vst [vmem:[%s194 + $0x770] sm:$0xff] %v671
                %v673 = vld [vmem:[%s193 + $0xed8] sm:$0xff]
                %674 = vst [vmem:[%s194 + $0x778] sm:$0xff] %v673
                %v675 = vld [vmem:[%s193 + $0xf00] sm:$0xff]
                %676 = vst [vmem:[%s194 + $0x780] sm:$0xff] %v675
                %v677 = vld [vmem:[%s193 + $0xf08] sm:$0xff]
                %678 = vst [vmem:[%s194 + $0x788] sm:$0xff] %v677
                %v679 = vld [vmem:[%s193 + $0xf10] sm:$0xff]
                %680 = vst [vmem:[%s194 + $0x790] sm:$0xff] %v679
                %v681 = vld [vmem:[%s193 + $0xf18] sm:$0xff]
                %682 = vst [vmem:[%s194 + $0x798] sm:$0xff] %v681
                %v683 = vld [vmem:[%s193 + $0xf40] sm:$0xff]
                %684 = vst [vmem:[%s194 + $0x7a0] sm:$0xff] %v683
                %v685 = vld [vmem:[%s193 + $0xf48] sm:$0xff]
                %686 = vst [vmem:[%s194 + $0x7a8] sm:$0xff] %v685
                %v687 = vld [vmem:[%s193 + $0xf50] sm:$0xff]
                %688 = vst [vmem:[%s194 + $0x7b0] sm:$0xff] %v687
                %v689 = vld [vmem:[%s193 + $0xf58] sm:$0xff]
                %690 = vst [vmem:[%s194 + $0x7b8] sm:$0xff] %v689
                %v691 = vld [vmem:[%s193 + $0xf80] sm:$0xff]
                %692 = vst [vmem:[%s194 + $0x7c0] sm:$0xff] %v691
                %v693 = vld [vmem:[%s193 + $0xf88] sm:$0xff]
                %694 = vst [vmem:[%s194 + $0x7c8] sm:$0xff] %v693
                %v695 = vld [vmem:[%s193 + $0xf90] sm:$0xff]
                %696 = vst [vmem:[%s194 + $0x7d0] sm:$0xff] %v695
                %v697 = vld [vmem:[%s193 + $0xf98] sm:$0xff]
                %698 = vst [vmem:[%s194 + $0x7d8] sm:$0xff] %v697
                %v699 = vld [vmem:[%s193 + $0xfc0] sm:$0xff]
                %700 = vst [vmem:[%s194 + $0x7e0] sm:$0xff] %v699
                %v701 = vld [vmem:[%s193 + $0xfc8] sm:$0xff]
                %702 = vst [vmem:[%s194 + $0x7e8] sm:$0xff] %v701
                %v703 = vld [vmem:[%s193 + $0xfd0] sm:$0xff]
                %704 = vst [vmem:[%s194 + $0x7f0] sm:$0xff] %v703
                %v705 = vld [vmem:[%s193 + $0xfd8] sm:$0xff]
                %706 = vst [vmem:[%s194 + $0x7f8] sm:$0xff] %v705
                %v707 = vld [vmem:[%s193 + $0x1000] sm:$0xff]
                %708 = vst [vmem:[%s194 + $0x800] sm:$0xff] %v707
                %v709 = vld [vmem:[%s193 + $0x1008] sm:$0xff]
                %710 = vst [vmem:[%s194 + $0x808] sm:$0xff] %v709
                %v711 = vld [vmem:[%s193 + $0x1010] sm:$0xff]
                %712 = vst [vmem:[%s194 + $0x810] sm:$0xff] %v711
                %v713 = vld [vmem:[%s193 + $0x1018] sm:$0xff]
                %714 = vst [vmem:[%s194 + $0x818] sm:$0xff] %v713
                %v715 = vld [vmem:[%s193 + $0x1040] sm:$0xff]
                %716 = vst [vmem:[%s194 + $0x820] sm:$0xff] %v715
                %v717 = vld [vmem:[%s193 + $0x1048] sm:$0xff]
                %718 = vst [vmem:[%s194 + $0x828] sm:$0xff] %v717
                %v719 = vld [vmem:[%s193 + $0x1050] sm:$0xff]
                %720 = vst [vmem:[%s194 + $0x830] sm:$0xff] %v719
                %v721 = vld [vmem:[%s193 + $0x1058] sm:$0xff]
                %722 = vst [vmem:[%s194 + $0x838] sm:$0xff] %v721
                %v723 = vld [vmem:[%s193 + $0x1080] sm:$0xff]
                %724 = vst [vmem:[%s194 + $0x840] sm:$0xff] %v723
                %v725 = vld [vmem:[%s193 + $0x1088] sm:$0xff]
                %726 = vst [vmem:[%s194 + $0x848] sm:$0xff] %v725
                %v727 = vld [vmem:[%s193 + $0x1090] sm:$0xff]
                %728 = vst [vmem:[%s194 + $0x850] sm:$0xff] %v727
                %v729 = vld [vmem:[%s193 + $0x1098] sm:$0xff]
                %730 = vst [vmem:[%s194 + $0x858] sm:$0xff] %v729
                %v731 = vld [vmem:[%s193 + $0x10c0] sm:$0xff]
                %732 = vst [vmem:[%s194 + $0x860] sm:$0xff] %v731
                %v733 = vld [vmem:[%s193 + $0x10c8] sm:$0xff]
                %734 = vst [vmem:[%s194 + $0x868] sm:$0xff] %v733
                %v735 = vld [vmem:[%s193 + $0x10d0] sm:$0xff]
                %736 = vst [vmem:[%s194 + $0x870] sm:$0xff] %v735
                %v737 = vld [vmem:[%s193 + $0x10d8] sm:$0xff]
                %738 = vst [vmem:[%s194 + $0x878] sm:$0xff] %v737
                %v739 = vld [vmem:[%s193 + $0x1100] sm:$0xff]
                %740 = vst [vmem:[%s194 + $0x880] sm:$0xff] %v739
                %v741 = vld [vmem:[%s193 + $0x1108] sm:$0xff]
                %742 = vst [vmem:[%s194 + $0x888] sm:$0xff] %v741
                %v743 = vld [vmem:[%s193 + $0x1110] sm:$0xff]
                %744 = vst [vmem:[%s194 + $0x890] sm:$0xff] %v743
                %v745 = vld [vmem:[%s193 + $0x1118] sm:$0xff]
                %746 = vst [vmem:[%s194 + $0x898] sm:$0xff] %v745
                %v747 = vld [vmem:[%s193 + $0x1140] sm:$0xff]
                %748 = vst [vmem:[%s194 + $0x8a0] sm:$0xff] %v747
                %v749 = vld [vmem:[%s193 + $0x1148] sm:$0xff]
                %750 = vst [vmem:[%s194 + $0x8a8] sm:$0xff] %v749
                %v751 = vld [vmem:[%s193 + $0x1150] sm:$0xff]
                %752 = vst [vmem:[%s194 + $0x8b0] sm:$0xff] %v751
                %v753 = vld [vmem:[%s193 + $0x1158] sm:$0xff]
                %754 = vst [vmem:[%s194 + $0x8b8] sm:$0xff] %v753
                %v755 = vld [vmem:[%s193 + $0x1180] sm:$0xff]
                %756 = vst [vmem:[%s194 + $0x8c0] sm:$0xff] %v755
                %v757 = vld [vmem:[%s193 + $0x1188] sm:$0xff]
                %758 = vst [vmem:[%s194 + $0x8c8] sm:$0xff] %v757
                %v759 = vld [vmem:[%s193 + $0x1190] sm:$0xff]
                %760 = vst [vmem:[%s194 + $0x8d0] sm:$0xff] %v759
                %v761 = vld [vmem:[%s193 + $0x1198] sm:$0xff]
                %762 = vst [vmem:[%s194 + $0x8d8] sm:$0xff] %v761
                %v763 = vld [vmem:[%s193 + $0x11c0] sm:$0xff]
                %764 = vst [vmem:[%s194 + $0x8e0] sm:$0xff] %v763
                %v765 = vld [vmem:[%s193 + $0x11c8] sm:$0xff]
                %766 = vst [vmem:[%s194 + $0x8e8] sm:$0xff] %v765
                %v767 = vld [vmem:[%s193 + $0x11d0] sm:$0xff]
                %768 = vst [vmem:[%s194 + $0x8f0] sm:$0xff] %v767
                %v769 = vld [vmem:[%s193 + $0x11d8] sm:$0xff]
                %770 = vst [vmem:[%s194 + $0x8f8] sm:$0xff] %v769
                %v771 = vld [vmem:[%s193 + $0x1200] sm:$0xff]
                %772 = vst [vmem:[%s194 + $0x900] sm:$0xff] %v771
                %v773 = vld [vmem:[%s193 + $0x1208] sm:$0xff]
                %774 = vst [vmem:[%s194 + $0x908] sm:$0xff] %v773
                %v775 = vld [vmem:[%s193 + $0x1210] sm:$0xff]
                %776 = vst [vmem:[%s194 + $0x910] sm:$0xff] %v775
                %v777 = vld [vmem:[%s193 + $0x1218] sm:$0xff]
                %778 = vst [vmem:[%s194 + $0x918] sm:$0xff] %v777
                %v779 = vld [vmem:[%s193 + $0x1240] sm:$0xff]
                %780 = vst [vmem:[%s194 + $0x920] sm:$0xff] %v779
                %v781 = vld [vmem:[%s193 + $0x1248] sm:$0xff]
                %782 = vst [vmem:[%s194 + $0x928] sm:$0xff] %v781
                %v783 = vld [vmem:[%s193 + $0x1250] sm:$0xff]
                %784 = vst [vmem:[%s194 + $0x930] sm:$0xff] %v783
                %v785 = vld [vmem:[%s193 + $0x1258] sm:$0xff]
                %786 = vst [vmem:[%s194 + $0x938] sm:$0xff] %v785
                %v787 = vld [vmem:[%s193 + $0x1280] sm:$0xff]
                %788 = vst [vmem:[%s194 + $0x940] sm:$0xff] %v787
                %v789 = vld [vmem:[%s193 + $0x1288] sm:$0xff]
                %790 = vst [vmem:[%s194 + $0x948] sm:$0xff] %v789
                %v791 = vld [vmem:[%s193 + $0x1290] sm:$0xff]
                %792 = vst [vmem:[%s194 + $0x950] sm:$0xff] %v791
                %v793 = vld [vmem:[%s193 + $0x1298] sm:$0xff]
                %794 = vst [vmem:[%s194 + $0x958] sm:$0xff] %v793
                %v795 = vld [vmem:[%s193 + $0x12c0] sm:$0xff]
                %796 = vst [vmem:[%s194 + $0x960] sm:$0xff] %v795
                %v797 = vld [vmem:[%s193 + $0x12c8] sm:$0xff]
                %798 = vst [vmem:[%s194 + $0x968] sm:$0xff] %v797
                %v799 = vld [vmem:[%s193 + $0x12d0] sm:$0xff]
                %800 = vst [vmem:[%s194 + $0x970] sm:$0xff] %v799
                %v801 = vld [vmem:[%s193 + $0x12d8] sm:$0xff]
                %802 = vst [vmem:[%s194 + $0x978] sm:$0xff] %v801
                %v803 = vld [vmem:[%s193 + $0x1300] sm:$0xff]
                %804 = vst [vmem:[%s194 + $0x980] sm:$0xff] %v803
                %v805 = vld [vmem:[%s193 + $0x1308] sm:$0xff]
                %806 = vst [vmem:[%s194 + $0x988] sm:$0xff] %v805
                %v807 = vld [vmem:[%s193 + $0x1310] sm:$0xff]
                %808 = vst [vmem:[%s194 + $0x990] sm:$0xff] %v807
                %v809 = vld [vmem:[%s193 + $0x1318] sm:$0xff]
                %810 = vst [vmem:[%s194 + $0x998] sm:$0xff] %v809
                %v811 = vld [vmem:[%s193 + $0x1340] sm:$0xff]
                %812 = vst [vmem:[%s194 + $0x9a0] sm:$0xff] %v811
                %v813 = vld [vmem:[%s193 + $0x1348] sm:$0xff]
                %814 = vst [vmem:[%s194 + $0x9a8] sm:$0xff] %v813
                %v815 = vld [vmem:[%s193 + $0x1350] sm:$0xff]
                %816 = vst [vmem:[%s194 + $0x9b0] sm:$0xff] %v815
                %v817 = vld [vmem:[%s193 + $0x1358] sm:$0xff]
                %818 = vst [vmem:[%s194 + $0x9b8] sm:$0xff] %v817
                %v819 = vld [vmem:[%s193 + $0x1380] sm:$0xff]
                %820 = vst [vmem:[%s194 + $0x9c0] sm:$0xff] %v819
                %v821 = vld [vmem:[%s193 + $0x1388] sm:$0xff]
                %822 = vst [vmem:[%s194 + $0x9c8] sm:$0xff] %v821
                %v823 = vld [vmem:[%s193 + $0x1390] sm:$0xff]
                %824 = vst [vmem:[%s194 + $0x9d0] sm:$0xff] %v823
                %v825 = vld [vmem:[%s193 + $0x1398] sm:$0xff]
                %826 = vst [vmem:[%s194 + $0x9d8] sm:$0xff] %v825
                %v827 = vld [vmem:[%s193 + $0x13c0] sm:$0xff]
                %828 = vst [vmem:[%s194 + $0x9e0] sm:$0xff] %v827
                %v829 = vld [vmem:[%s193 + $0x13c8] sm:$0xff]
                %830 = vst [vmem:[%s194 + $0x9e8] sm:$0xff] %v829
                %v831 = vld [vmem:[%s193 + $0x13d0] sm:$0xff]
                %832 = vst [vmem:[%s194 + $0x9f0] sm:$0xff] %v831
                %v833 = vld [vmem:[%s193 + $0x13d8] sm:$0xff]
                %834 = vst [vmem:[%s194 + $0x9f8] sm:$0xff] %v833
                %v835 = vld [vmem:[%s193 + $0x1400] sm:$0xff]
                %836 = vst [vmem:[%s194 + $0xa00] sm:$0xff] %v835
                %v837 = vld [vmem:[%s193 + $0x1408] sm:$0xff]
                %838 = vst [vmem:[%s194 + $0xa08] sm:$0xff] %v837
                %v839 = vld [vmem:[%s193 + $0x1410] sm:$0xff]
                %840 = vst [vmem:[%s194 + $0xa10] sm:$0xff] %v839
                %v841 = vld [vmem:[%s193 + $0x1418] sm:$0xff]
                %842 = vst [vmem:[%s194 + $0xa18] sm:$0xff] %v841
                %v843 = vld [vmem:[%s193 + $0x1440] sm:$0xff]
                %844 = vst [vmem:[%s194 + $0xa20] sm:$0xff] %v843
                %v845 = vld [vmem:[%s193 + $0x1448] sm:$0xff]
                %846 = vst [vmem:[%s194 + $0xa28] sm:$0xff] %v845
                %v847 = vld [vmem:[%s193 + $0x1450] sm:$0xff]
                %848 = vst [vmem:[%s194 + $0xa30] sm:$0xff] %v847
                %v849 = vld [vmem:[%s193 + $0x1458] sm:$0xff]
                %850 = vst [vmem:[%s194 + $0xa38] sm:$0xff] %v849
                %v851 = vld [vmem:[%s193 + $0x1480] sm:$0xff]
                %852 = vst [vmem:[%s194 + $0xa40] sm:$0xff] %v851
                %v853 = vld [vmem:[%s193 + $0x1488] sm:$0xff]
                %854 = vst [vmem:[%s194 + $0xa48] sm:$0xff] %v853
                %v855 = vld [vmem:[%s193 + $0x1490] sm:$0xff]
                %856 = vst [vmem:[%s194 + $0xa50] sm:$0xff] %v855
                %v857 = vld [vmem:[%s193 + $0x1498] sm:$0xff]
                %858 = vst [vmem:[%s194 + $0xa58] sm:$0xff] %v857
                %v859 = vld [vmem:[%s193 + $0x14c0] sm:$0xff]
                %860 = vst [vmem:[%s194 + $0xa60] sm:$0xff] %v859
                %v861 = vld [vmem:[%s193 + $0x14c8] sm:$0xff]
                %862 = vst [vmem:[%s194 + $0xa68] sm:$0xff] %v861
                %v863 = vld [vmem:[%s193 + $0x14d0] sm:$0xff]
                %864 = vst [vmem:[%s194 + $0xa70] sm:$0xff] %v863
                %v865 = vld [vmem:[%s193 + $0x14d8] sm:$0xff]
                %866 = vst [vmem:[%s194 + $0xa78] sm:$0xff] %v865
                %v867 = vld [vmem:[%s193 + $0x1500] sm:$0xff]
                %868 = vst [vmem:[%s194 + $0xa80] sm:$0xff] %v867
                %v869 = vld [vmem:[%s193 + $0x1508] sm:$0xff]
                %870 = vst [vmem:[%s194 + $0xa88] sm:$0xff] %v869
                %v871 = vld [vmem:[%s193 + $0x1510] sm:$0xff]
                %872 = vst [vmem:[%s194 + $0xa90] sm:$0xff] %v871
                %v873 = vld [vmem:[%s193 + $0x1518] sm:$0xff]
                %874 = vst [vmem:[%s194 + $0xa98] sm:$0xff] %v873
                %v875 = vld [vmem:[%s193 + $0x1540] sm:$0xff]
                %876 = vst [vmem:[%s194 + $0xaa0] sm:$0xff] %v875
                %v877 = vld [vmem:[%s193 + $0x1548] sm:$0xff]
                %878 = vst [vmem:[%s194 + $0xaa8] sm:$0xff] %v877
                %v879 = vld [vmem:[%s193 + $0x1550] sm:$0xff]
                %880 = vst [vmem:[%s194 + $0xab0] sm:$0xff] %v879
                %v881 = vld [vmem:[%s193 + $0x1558] sm:$0xff]
                %882 = vst [vmem:[%s194 + $0xab8] sm:$0xff] %v881
                %v883 = vld [vmem:[%s193 + $0x1580] sm:$0xff]
                %884 = vst [vmem:[%s194 + $0xac0] sm:$0xff] %v883
                %v885 = vld [vmem:[%s193 + $0x1588] sm:$0xff]
                %886 = vst [vmem:[%s194 + $0xac8] sm:$0xff] %v885
                %v887 = vld [vmem:[%s193 + $0x1590] sm:$0xff]
                %888 = vst [vmem:[%s194 + $0xad0] sm:$0xff] %v887
                %v889 = vld [vmem:[%s193 + $0x1598] sm:$0xff]
                %890 = vst [vmem:[%s194 + $0xad8] sm:$0xff] %v889
                %v891 = vld [vmem:[%s193 + $0x15c0] sm:$0xff]
                %892 = vst [vmem:[%s194 + $0xae0] sm:$0xff] %v891
                %v893 = vld [vmem:[%s193 + $0x15c8] sm:$0xff]
                %894 = vst [vmem:[%s194 + $0xae8] sm:$0xff] %v893
                %v895 = vld [vmem:[%s193 + $0x15d0] sm:$0xff]
                %896 = vst [vmem:[%s194 + $0xaf0] sm:$0xff] %v895
                %v897 = vld [vmem:[%s193 + $0x15d8] sm:$0xff]
                %898 = vst [vmem:[%s194 + $0xaf8] sm:$0xff] %v897
                %v899 = vld [vmem:[%s193 + $0x1600] sm:$0xff]
                %900 = vst [vmem:[%s194 + $0xb00] sm:$0xff] %v899
                %v901 = vld [vmem:[%s193 + $0x1608] sm:$0xff]
                %902 = vst [vmem:[%s194 + $0xb08] sm:$0xff] %v901
                %v903 = vld [vmem:[%s193 + $0x1610] sm:$0xff]
                %904 = vst [vmem:[%s194 + $0xb10] sm:$0xff] %v903
                %v905 = vld [vmem:[%s193 + $0x1618] sm:$0xff]
                %906 = vst [vmem:[%s194 + $0xb18] sm:$0xff] %v905
                %v907 = vld [vmem:[%s193 + $0x1640] sm:$0xff]
                %908 = vst [vmem:[%s194 + $0xb20] sm:$0xff] %v907
                %v909 = vld [vmem:[%s193 + $0x1648] sm:$0xff]
                %910 = vst [vmem:[%s194 + $0xb28] sm:$0xff] %v909
                %v911 = vld [vmem:[%s193 + $0x1650] sm:$0xff]
                %912 = vst [vmem:[%s194 + $0xb30] sm:$0xff] %v911
                %v913 = vld [vmem:[%s193 + $0x1658] sm:$0xff]
                %914 = vst [vmem:[%s194 + $0xb38] sm:$0xff] %v913
                %v915 = vld [vmem:[%s193 + $0x1680] sm:$0xff]
                %916 = vst [vmem:[%s194 + $0xb40] sm:$0xff] %v915
                %v917 = vld [vmem:[%s193 + $0x1688] sm:$0xff]
                %918 = vst [vmem:[%s194 + $0xb48] sm:$0xff] %v917
                %v919 = vld [vmem:[%s193 + $0x1690] sm:$0xff]
                %920 = vst [vmem:[%s194 + $0xb50] sm:$0xff] %v919
                %v921 = vld [vmem:[%s193 + $0x1698] sm:$0xff]
                %922 = vst [vmem:[%s194 + $0xb58] sm:$0xff] %v921
                %v923 = vld [vmem:[%s193 + $0x16c0] sm:$0xff]
                %924 = vst [vmem:[%s194 + $0xb60] sm:$0xff] %v923
                %v925 = vld [vmem:[%s193 + $0x16c8] sm:$0xff]
                %926 = vst [vmem:[%s194 + $0xb68] sm:$0xff] %v925
                %v927 = vld [vmem:[%s193 + $0x16d0] sm:$0xff]
                %928 = vst [vmem:[%s194 + $0xb70] sm:$0xff] %v927
                %v929 = vld [vmem:[%s193 + $0x16d8] sm:$0xff]
                %930 = vst [vmem:[%s194 + $0xb78] sm:$0xff] %v929
                %v931 = vld [vmem:[%s193 + $0x1700] sm:$0xff]
                %932 = vst [vmem:[%s194 + $0xb80] sm:$0xff] %v931
                %v933 = vld [vmem:[%s193 + $0x1708] sm:$0xff]
                %934 = vst [vmem:[%s194 + $0xb88] sm:$0xff] %v933
                %v935 = vld [vmem:[%s193 + $0x1710] sm:$0xff]
                %936 = vst [vmem:[%s194 + $0xb90] sm:$0xff] %v935
                %v937 = vld [vmem:[%s193 + $0x1718] sm:$0xff]
                %938 = vst [vmem:[%s194 + $0xb98] sm:$0xff] %v937
                %v939 = vld [vmem:[%s193 + $0x1740] sm:$0xff]
                %940 = vst [vmem:[%s194 + $0xba0] sm:$0xff] %v939
                %v941 = vld [vmem:[%s193 + $0x1748] sm:$0xff]
                %942 = vst [vmem:[%s194 + $0xba8] sm:$0xff] %v941
                %v943 = vld [vmem:[%s193 + $0x1750] sm:$0xff]
                %944 = vst [vmem:[%s194 + $0xbb0] sm:$0xff] %v943
                %v945 = vld [vmem:[%s193 + $0x1758] sm:$0xff]
                %946 = vst [vmem:[%s194 + $0xbb8] sm:$0xff] %v945
                %v947 = vld [vmem:[%s193 + $0x1780] sm:$0xff]
                %948 = vst [vmem:[%s194 + $0xbc0] sm:$0xff] %v947
                %v949 = vld [vmem:[%s193 + $0x1788] sm:$0xff]
                %950 = vst [vmem:[%s194 + $0xbc8] sm:$0xff] %v949
                %v951 = vld [vmem:[%s193 + $0x1790] sm:$0xff]
                %952 = vst [vmem:[%s194 + $0xbd0] sm:$0xff] %v951
                %v953 = vld [vmem:[%s193 + $0x1798] sm:$0xff]
                %954 = vst [vmem:[%s194 + $0xbd8] sm:$0xff] %v953
                %v955 = vld [vmem:[%s193 + $0x17c0] sm:$0xff]
                %956 = vst [vmem:[%s194 + $0xbe0] sm:$0xff] %v955
                %v957 = vld [vmem:[%s193 + $0x17c8] sm:$0xff]
                %958 = vst [vmem:[%s194 + $0xbe8] sm:$0xff] %v957
                %v959 = vld [vmem:[%s193 + $0x17d0] sm:$0xff]
                %960 = vst [vmem:[%s194 + $0xbf0] sm:$0xff] %v959
                %v961 = vld [vmem:[%s193 + $0x17d8] sm:$0xff]
                %962 = vst [vmem:[%s194 + $0xbf8] sm:$0xff] %v961
                %v963 = vld [vmem:[%s193 + $0x1800] sm:$0xff]
                %964 = vst [vmem:[%s194 + $0xc00] sm:$0xff] %v963
                %v965 = vld [vmem:[%s193 + $0x1808] sm:$0xff]
                %966 = vst [vmem:[%s194 + $0xc08] sm:$0xff] %v965
                %v967 = vld [vmem:[%s193 + $0x1810] sm:$0xff]
                %968 = vst [vmem:[%s194 + $0xc10] sm:$0xff] %v967
                %v969 = vld [vmem:[%s193 + $0x1818] sm:$0xff]
                %970 = vst [vmem:[%s194 + $0xc18] sm:$0xff] %v969
                %v971 = vld [vmem:[%s193 + $0x1840] sm:$0xff]
                %972 = vst [vmem:[%s194 + $0xc20] sm:$0xff] %v971
                %v973 = vld [vmem:[%s193 + $0x1848] sm:$0xff]
                %974 = vst [vmem:[%s194 + $0xc28] sm:$0xff] %v973
                %v975 = vld [vmem:[%s193 + $0x1850] sm:$0xff]
                %976 = vst [vmem:[%s194 + $0xc30] sm:$0xff] %v975
                %v977 = vld [vmem:[%s193 + $0x1858] sm:$0xff]
                %978 = vst [vmem:[%s194 + $0xc38] sm:$0xff] %v977
                %v979 = vld [vmem:[%s193 + $0x1880] sm:$0xff]
                %980 = vst [vmem:[%s194 + $0xc40] sm:$0xff] %v979
                %v981 = vld [vmem:[%s193 + $0x1888] sm:$0xff]
                %982 = vst [vmem:[%s194 + $0xc48] sm:$0xff] %v981
                %v983 = vld [vmem:[%s193 + $0x1890] sm:$0xff]
                %984 = vst [vmem:[%s194 + $0xc50] sm:$0xff] %v983
                %v985 = vld [vmem:[%s193 + $0x1898] sm:$0xff]
                %986 = vst [vmem:[%s194 + $0xc58] sm:$0xff] %v985
                %v987 = vld [vmem:[%s193 + $0x18c0] sm:$0xff]
                %988 = vst [vmem:[%s194 + $0xc60] sm:$0xff] %v987
                %v989 = vld [vmem:[%s193 + $0x18c8] sm:$0xff]
                %990 = vst [vmem:[%s194 + $0xc68] sm:$0xff] %v989
                %v991 = vld [vmem:[%s193 + $0x18d0] sm:$0xff]
                %992 = vst [vmem:[%s194 + $0xc70] sm:$0xff] %v991
                %v993 = vld [vmem:[%s193 + $0x18d8] sm:$0xff]
                %994 = vst [vmem:[%s194 + $0xc78] sm:$0xff] %v993
                %v995 = vld [vmem:[%s193 + $0x1900] sm:$0xff]
                %996 = vst [vmem:[%s194 + $0xc80] sm:$0xff] %v995
                %v997 = vld [vmem:[%s193 + $0x1908] sm:$0xff]
                %998 = vst [vmem:[%s194 + $0xc88] sm:$0xff] %v997
                %v999 = vld [vmem:[%s193 + $0x1910] sm:$0xff]
                %1000 = vst [vmem:[%s194 + $0xc90] sm:$0xff] %v999
                %v1001 = vld [vmem:[%s193 + $0x1918] sm:$0xff]
                %1002 = vst [vmem:[%s194 + $0xc98] sm:$0xff] %v1001
                %v1003 = vld [vmem:[%s193 + $0x1940] sm:$0xff]
                %1004 = vst [vmem:[%s194 + $0xca0] sm:$0xff] %v1003
                %v1005 = vld [vmem:[%s193 + $0x1948] sm:$0xff]
                %1006 = vst [vmem:[%s194 + $0xca8] sm:$0xff] %v1005
                %v1007 = vld [vmem:[%s193 + $0x1950] sm:$0xff]
                %1008 = vst [vmem:[%s194 + $0xcb0] sm:$0xff] %v1007
                %v1009 = vld [vmem:[%s193 + $0x1958] sm:$0xff]
                %1010 = vst [vmem:[%s194 + $0xcb8] sm:$0xff] %v1009
                %v1011 = vld [vmem:[%s193 + $0x1980] sm:$0xff]
                %1012 = vst [vmem:[%s194 + $0xcc0] sm:$0xff] %v1011
                %v1013 = vld [vmem:[%s193 + $0x1988] sm:$0xff]
                %1014 = vst [vmem:[%s194 + $0xcc8] sm:$0xff] %v1013
                %v1015 = vld [vmem:[%s193 + $0x1990] sm:$0xff]
                %1016 = vst [vmem:[%s194 + $0xcd0] sm:$0xff] %v1015
                %v1017 = vld [vmem:[%s193 + $0x1998] sm:$0xff]
                %1018 = vst [vmem:[%s194 + $0xcd8] sm:$0xff] %v1017
                %v1019 = vld [vmem:[%s193 + $0x19c0] sm:$0xff]
                %1020 = vst [vmem:[%s194 + $0xce0] sm:$0xff] %v1019
                %v1021 = vld [vmem:[%s193 + $0x19c8] sm:$0xff]
                %1022 = vst [vmem:[%s194 + $0xce8] sm:$0xff] %v1021
                %v1023 = vld [vmem:[%s193 + $0x19d0] sm:$0xff]
                %1024 = vst [vmem:[%s194 + $0xcf0] sm:$0xff] %v1023
                %v1025 = vld [vmem:[%s193 + $0x19d8] sm:$0xff]
                %1026 = vst [vmem:[%s194 + $0xcf8] sm:$0xff] %v1025
                %v1027 = vld [vmem:[%s193 + $0x1a00] sm:$0xff]
                %1028 = vst [vmem:[%s194 + $0xd00] sm:$0xff] %v1027
                %v1029 = vld [vmem:[%s193 + $0x1a08] sm:$0xff]
                %1030 = vst [vmem:[%s194 + $0xd08] sm:$0xff] %v1029
                %v1031 = vld [vmem:[%s193 + $0x1a10] sm:$0xff]
                %1032 = vst [vmem:[%s194 + $0xd10] sm:$0xff] %v1031
                %v1033 = vld [vmem:[%s193 + $0x1a18] sm:$0xff]
                %1034 = vst [vmem:[%s194 + $0xd18] sm:$0xff] %v1033
                %v1035 = vld [vmem:[%s193 + $0x1a40] sm:$0xff]
                %1036 = vst [vmem:[%s194 + $0xd20] sm:$0xff] %v1035
                %v1037 = vld [vmem:[%s193 + $0x1a48] sm:$0xff]
                %1038 = vst [vmem:[%s194 + $0xd28] sm:$0xff] %v1037
                %v1039 = vld [vmem:[%s193 + $0x1a50] sm:$0xff]
                %1040 = vst [vmem:[%s194 + $0xd30] sm:$0xff] %v1039
                %v1041 = vld [vmem:[%s193 + $0x1a58] sm:$0xff]
                %1042 = vst [vmem:[%s194 + $0xd38] sm:$0xff] %v1041
                %v1043 = vld [vmem:[%s193 + $0x1a80] sm:$0xff]
                %1044 = vst [vmem:[%s194 + $0xd40] sm:$0xff] %v1043
                %v1045 = vld [vmem:[%s193 + $0x1a88] sm:$0xff]
                %1046 = vst [vmem:[%s194 + $0xd48] sm:$0xff] %v1045
                %v1047 = vld [vmem:[%s193 + $0x1a90] sm:$0xff]
                %1048 = vst [vmem:[%s194 + $0xd50] sm:$0xff] %v1047
                %v1049 = vld [vmem:[%s193 + $0x1a98] sm:$0xff]
                %1050 = vst [vmem:[%s194 + $0xd58] sm:$0xff] %v1049
                %v1051 = vld [vmem:[%s193 + $0x1ac0] sm:$0xff]
                %1052 = vst [vmem:[%s194 + $0xd60] sm:$0xff] %v1051
                %v1053 = vld [vmem:[%s193 + $0x1ac8] sm:$0xff]
                %1054 = vst [vmem:[%s194 + $0xd68] sm:$0xff] %v1053
                %v1055 = vld [vmem:[%s193 + $0x1ad0] sm:$0xff]
                %1056 = vst [vmem:[%s194 + $0xd70] sm:$0xff] %v1055
                %v1057 = vld [vmem:[%s193 + $0x1ad8] sm:$0xff]
                %1058 = vst [vmem:[%s194 + $0xd78] sm:$0xff] %v1057
                %v1059 = vld [vmem:[%s193 + $0x1b00] sm:$0xff]
                %1060 = vst [vmem:[%s194 + $0xd80] sm:$0xff] %v1059
                %v1061 = vld [vmem:[%s193 + $0x1b08] sm:$0xff]
                %1062 = vst [vmem:[%s194 + $0xd88] sm:$0xff] %v1061
                %v1063 = vld [vmem:[%s193 + $0x1b10] sm:$0xff]
                %1064 = vst [vmem:[%s194 + $0xd90] sm:$0xff] %v1063
                %v1065 = vld [vmem:[%s193 + $0x1b18] sm:$0xff]
                %1066 = vst [vmem:[%s194 + $0xd98] sm:$0xff] %v1065
                %v1067 = vld [vmem:[%s193 + $0x1b40] sm:$0xff]
                %1068 = vst [vmem:[%s194 + $0xda0] sm:$0xff] %v1067
                %v1069 = vld [vmem:[%s193 + $0x1b48] sm:$0xff]
                %1070 = vst [vmem:[%s194 + $0xda8] sm:$0xff] %v1069
                %v1071 = vld [vmem:[%s193 + $0x1b50] sm:$0xff]
                %1072 = vst [vmem:[%s194 + $0xdb0] sm:$0xff] %v1071
                %v1073 = vld [vmem:[%s193 + $0x1b58] sm:$0xff]
                %1074 = vst [vmem:[%s194 + $0xdb8] sm:$0xff] %v1073
                %v1075 = vld [vmem:[%s193 + $0x1b80] sm:$0xff]
                %1076 = vst [vmem:[%s194 + $0xdc0] sm:$0xff] %v1075
                %v1077 = vld [vmem:[%s193 + $0x1b88] sm:$0xff]
                %1078 = vst [vmem:[%s194 + $0xdc8] sm:$0xff] %v1077
                %v1079 = vld [vmem:[%s193 + $0x1b90] sm:$0xff]
                %1080 = vst [vmem:[%s194 + $0xdd0] sm:$0xff] %v1079
                %v1081 = vld [vmem:[%s193 + $0x1b98] sm:$0xff]
                %1082 = vst [vmem:[%s194 + $0xdd8] sm:$0xff] %v1081
                %v1083 = vld [vmem:[%s193 + $0x1bc0] sm:$0xff]
                %1084 = vst [vmem:[%s194 + $0xde0] sm:$0xff] %v1083
                %v1085 = vld [vmem:[%s193 + $0x1bc8] sm:$0xff]
                %1086 = vst [vmem:[%s194 + $0xde8] sm:$0xff] %v1085
                %v1087 = vld [vmem:[%s193 + $0x1bd0] sm:$0xff]
                %1088 = vst [vmem:[%s194 + $0xdf0] sm:$0xff] %v1087
                %v1089 = vld [vmem:[%s193 + $0x1bd8] sm:$0xff]
                %1090 = vst [vmem:[%s194 + $0xdf8] sm:$0xff] %v1089
                %v1091 = vld [vmem:[%s193 + $0x1c00] sm:$0xff]
                %1092 = vst [vmem:[%s194 + $0xe00] sm:$0xff] %v1091
                %v1093 = vld [vmem:[%s193 + $0x1c08] sm:$0xff]
                %1094 = vst [vmem:[%s194 + $0xe08] sm:$0xff] %v1093
                %v1095 = vld [vmem:[%s193 + $0x1c10] sm:$0xff]
                %1096 = vst [vmem:[%s194 + $0xe10] sm:$0xff] %v1095
                %v1097 = vld [vmem:[%s193 + $0x1c18] sm:$0xff]
                %1098 = vst [vmem:[%s194 + $0xe18] sm:$0xff] %v1097
                %v1099 = vld [vmem:[%s193 + $0x1c40] sm:$0xff]
                %1100 = vst [vmem:[%s194 + $0xe20] sm:$0xff] %v1099
                %v1101 = vld [vmem:[%s193 + $0x1c48] sm:$0xff]
                %1102 = vst [vmem:[%s194 + $0xe28] sm:$0xff] %v1101
                %v1103 = vld [vmem:[%s193 + $0x1c50] sm:$0xff]
                %1104 = vst [vmem:[%s194 + $0xe30] sm:$0xff] %v1103
                %v1105 = vld [vmem:[%s193 + $0x1c58] sm:$0xff]
                %1106 = vst [vmem:[%s194 + $0xe38] sm:$0xff] %v1105
                %v1107 = vld [vmem:[%s193 + $0x1c80] sm:$0xff]
                %1108 = vst [vmem:[%s194 + $0xe40] sm:$0xff] %v1107
                %v1109 = vld [vmem:[%s193 + $0x1c88] sm:$0xff]
                %1110 = vst [vmem:[%s194 + $0xe48] sm:$0xff] %v1109
                %v1111 = vld [vmem:[%s193 + $0x1c90] sm:$0xff]
                %1112 = vst [vmem:[%s194 + $0xe50] sm:$0xff] %v1111
                %v1113 = vld [vmem:[%s193 + $0x1c98] sm:$0xff]
                %1114 = vst [vmem:[%s194 + $0xe58] sm:$0xff] %v1113
                %v1115 = vld [vmem:[%s193 + $0x1cc0] sm:$0xff]
                %1116 = vst [vmem:[%s194 + $0xe60] sm:$0xff] %v1115
                %v1117 = vld [vmem:[%s193 + $0x1cc8] sm:$0xff]
                %1118 = vst [vmem:[%s194 + $0xe68] sm:$0xff] %v1117
                %v1119 = vld [vmem:[%s193 + $0x1cd0] sm:$0xff]
                %1120 = vst [vmem:[%s194 + $0xe70] sm:$0xff] %v1119
                %v1121 = vld [vmem:[%s193 + $0x1cd8] sm:$0xff]
                %1122 = vst [vmem:[%s194 + $0xe78] sm:$0xff] %v1121
                %v1123 = vld [vmem:[%s193 + $0x1d00] sm:$0xff]
                %1124 = vst [vmem:[%s194 + $0xe80] sm:$0xff] %v1123
                %v1125 = vld [vmem:[%s193 + $0x1d08] sm:$0xff]
                %1126 = vst [vmem:[%s194 + $0xe88] sm:$0xff] %v1125
                %v1127 = vld [vmem:[%s193 + $0x1d10] sm:$0xff]
                %1128 = vst [vmem:[%s194 + $0xe90] sm:$0xff] %v1127
                %v1129 = vld [vmem:[%s193 + $0x1d18] sm:$0xff]
                %1130 = vst [vmem:[%s194 + $0xe98] sm:$0xff] %v1129
                %v1131 = vld [vmem:[%s193 + $0x1d40] sm:$0xff]
                %1132 = vst [vmem:[%s194 + $0xea0] sm:$0xff] %v1131
                %v1133 = vld [vmem:[%s193 + $0x1d48] sm:$0xff]
                %1134 = vst [vmem:[%s194 + $0xea8] sm:$0xff] %v1133
                %v1135 = vld [vmem:[%s193 + $0x1d50] sm:$0xff]
                %1136 = vst [vmem:[%s194 + $0xeb0] sm:$0xff] %v1135
                %v1137 = vld [vmem:[%s193 + $0x1d58] sm:$0xff]
                %1138 = vst [vmem:[%s194 + $0xeb8] sm:$0xff] %v1137
                %v1139 = vld [vmem:[%s193 + $0x1d80] sm:$0xff]
                %1140 = vst [vmem:[%s194 + $0xec0] sm:$0xff] %v1139
                %v1141 = vld [vmem:[%s193 + $0x1d88] sm:$0xff]
                %1142 = vst [vmem:[%s194 + $0xec8] sm:$0xff] %v1141
                %v1143 = vld [vmem:[%s193 + $0x1d90] sm:$0xff]
                %1144 = vst [vmem:[%s194 + $0xed0] sm:$0xff] %v1143
                %v1145 = vld [vmem:[%s193 + $0x1d98] sm:$0xff]
                %1146 = vst [vmem:[%s194 + $0xed8] sm:$0xff] %v1145
                %v1147 = vld [vmem:[%s193 + $0x1dc0] sm:$0xff]
                %1148 = vst [vmem:[%s194 + $0xee0] sm:$0xff] %v1147
                %v1149 = vld [vmem:[%s193 + $0x1dc8] sm:$0xff]
                %1150 = vst [vmem:[%s194 + $0xee8] sm:$0xff] %v1149
                %v1151 = vld [vmem:[%s193 + $0x1dd0] sm:$0xff]
                %1152 = vst [vmem:[%s194 + $0xef0] sm:$0xff] %v1151
                %v1153 = vld [vmem:[%s193 + $0x1dd8] sm:$0xff]
                %1154 = vst [vmem:[%s194 + $0xef8] sm:$0xff] %v1153
                %v1155 = vld [vmem:[%s193 + $0x1e00] sm:$0xff]
                %1156 = vst [vmem:[%s194 + $0xf00] sm:$0xff] %v1155
                %v1157 = vld [vmem:[%s193 + $0x1e08] sm:$0xff]
                %1158 = vst [vmem:[%s194 + $0xf08] sm:$0xff] %v1157
                %v1159 = vld [vmem:[%s193 + $0x1e10] sm:$0xff]
                %1160 = vst [vmem:[%s194 + $0xf10] sm:$0xff] %v1159
                %v1161 = vld [vmem:[%s193 + $0x1e18] sm:$0xff]
                %1162 = vst [vmem:[%s194 + $0xf18] sm:$0xff] %v1161
                %v1163 = vld [vmem:[%s193 + $0x1e40] sm:$0xff]
                %1164 = vst [vmem:[%s194 + $0xf20] sm:$0xff] %v1163
                %v1165 = vld [vmem:[%s193 + $0x1e48] sm:$0xff]
                %1166 = vst [vmem:[%s194 + $0xf28] sm:$0xff] %v1165
                %v1167 = vld [vmem:[%s193 + $0x1e50] sm:$0xff]
                %1168 = vst [vmem:[%s194 + $0xf30] sm:$0xff] %v1167
                %v1169 = vld [vmem:[%s193 + $0x1e58] sm:$0xff]
                %1170 = vst [vmem:[%s194 + $0xf38] sm:$0xff] %v1169
                %v1171 = vld [vmem:[%s193 + $0x1e80] sm:$0xff]
                %1172 = vst [vmem:[%s194 + $0xf40] sm:$0xff] %v1171
                %v1173 = vld [vmem:[%s193 + $0x1e88] sm:$0xff]
                %1174 = vst [vmem:[%s194 + $0xf48] sm:$0xff] %v1173
                %v1175 = vld [vmem:[%s193 + $0x1e90] sm:$0xff]
                %1176 = vst [vmem:[%s194 + $0xf50] sm:$0xff] %v1175
                %v1177 = vld [vmem:[%s193 + $0x1e98] sm:$0xff]
                %1178 = vst [vmem:[%s194 + $0xf58] sm:$0xff] %v1177
                %v1179 = vld [vmem:[%s193 + $0x1ec0] sm:$0xff]
                %1180 = vst [vmem:[%s194 + $0xf60] sm:$0xff] %v1179
                %v1181 = vld [vmem:[%s193 + $0x1ec8] sm:$0xff]
                %1182 = vst [vmem:[%s194 + $0xf68] sm:$0xff] %v1181
                %v1183 = vld [vmem:[%s193 + $0x1ed0] sm:$0xff]
                %1184 = vst [vmem:[%s194 + $0xf70] sm:$0xff] %v1183
                %v1185 = vld [vmem:[%s193 + $0x1ed8] sm:$0xff]
                %1186 = vst [vmem:[%s194 + $0xf78] sm:$0xff] %v1185
                %v1187 = vld [vmem:[%s193 + $0x1f00] sm:$0xff]
                %1188 = vst [vmem:[%s194 + $0xf80] sm:$0xff] %v1187
                %v1189 = vld [vmem:[%s193 + $0x1f08] sm:$0xff]
                %1190 = vst [vmem:[%s194 + $0xf88] sm:$0xff] %v1189
                %v1191 = vld [vmem:[%s193 + $0x1f10] sm:$0xff]
                %1192 = vst [vmem:[%s194 + $0xf90] sm:$0xff] %v1191
                %v1193 = vld [vmem:[%s193 + $0x1f18] sm:$0xff]
                %1194 = vst [vmem:[%s194 + $0xf98] sm:$0xff] %v1193
                %v1195 = vld [vmem:[%s193 + $0x1f40] sm:$0xff]
                %1196 = vst [vmem:[%s194 + $0xfa0] sm:$0xff] %v1195
                %v1197 = vld [vmem:[%s193 + $0x1f48] sm:$0xff]
                %1198 = vst [vmem:[%s194 + $0xfa8] sm:$0xff] %v1197
                %v1199 = vld [vmem:[%s193 + $0x1f50] sm:$0xff]
                %1200 = vst [vmem:[%s194 + $0xfb0] sm:$0xff] %v1199
                %v1201 = vld [vmem:[%s193 + $0x1f58] sm:$0xff]
                %1202 = vst [vmem:[%s194 + $0xfb8] sm:$0xff] %v1201
                %v1203 = vld [vmem:[%s193 + $0x1f80] sm:$0xff]
                %1204 = vst [vmem:[%s194 + $0xfc0] sm:$0xff] %v1203
                %v1205 = vld [vmem:[%s193 + $0x1f88] sm:$0xff]
                %1206 = vst [vmem:[%s194 + $0xfc8] sm:$0xff] %v1205
                %v1207 = vld [vmem:[%s193 + $0x1f90] sm:$0xff]
                %1208 = vst [vmem:[%s194 + $0xfd0] sm:$0xff] %v1207
                %v1209 = vld [vmem:[%s193 + $0x1f98] sm:$0xff]
                %1210 = vst [vmem:[%s194 + $0xfd8] sm:$0xff] %v1209
                %v1211 = vld [vmem:[%s193 + $0x1fc0] sm:$0xff]
                %1212 = vst [vmem:[%s194 + $0xfe0] sm:$0xff] %v1211
                %v1213 = vld [vmem:[%s193 + $0x1fc8] sm:$0xff]
                %1214 = vst [vmem:[%s194 + $0xfe8] sm:$0xff] %v1213
                %v1215 = vld [vmem:[%s193 + $0x1fd0] sm:$0xff]
                %1216 = vst [vmem:[%s194 + $0xff0] sm:$0xff] %v1215
                %v1217 = vld [vmem:[%s193 + $0x1fd8] sm:$0xff]
                %1218 = vst [vmem:[%s194 + $0xff8] sm:$0xff] %v1217
                %v1219 = vld [vmem:[%s193 + $0x2000] sm:$0xff]
                %1220 = vst [vmem:[%s194 + $0x1000] sm:$0xff] %v1219
                %v1221 = vld [vmem:[%s193 + $0x2008] sm:$0xff]
                %1222 = vst [vmem:[%s194 + $0x1008] sm:$0xff] %v1221
                %v1223 = vld [vmem:[%s193 + $0x2010] sm:$0xff]
                %1224 = vst [vmem:[%s194 + $0x1010] sm:$0xff] %v1223
                %v1225 = vld [vmem:[%s193 + $0x2018] sm:$0xff]
                %1226 = vst [vmem:[%s194 + $0x1018] sm:$0xff] %v1225
                %v1227 = vld [vmem:[%s193 + $0x2040] sm:$0xff]
                %1228 = vst [vmem:[%s194 + $0x1020] sm:$0xff] %v1227
                %v1229 = vld [vmem:[%s193 + $0x2048] sm:$0xff]
                %1230 = vst [vmem:[%s194 + $0x1028] sm:$0xff] %v1229
                %v1231 = vld [vmem:[%s193 + $0x2050] sm:$0xff]
                %1232 = vst [vmem:[%s194 + $0x1030] sm:$0xff] %v1231
                %v1233 = vld [vmem:[%s193 + $0x2058] sm:$0xff]
                %1234 = vst [vmem:[%s194 + $0x1038] sm:$0xff] %v1233
                %v1235 = vld [vmem:[%s193 + $0x2080] sm:$0xff]
                %1236 = vst [vmem:[%s194 + $0x1040] sm:$0xff] %v1235
                %v1237 = vld [vmem:[%s193 + $0x2088] sm:$0xff]
                %1238 = vst [vmem:[%s194 + $0x1048] sm:$0xff] %v1237
                %v1239 = vld [vmem:[%s193 + $0x2090] sm:$0xff]
                %1240 = vst [vmem:[%s194 + $0x1050] sm:$0xff] %v1239
                %v1241 = vld [vmem:[%s193 + $0x2098] sm:$0xff]
                %1242 = vst [vmem:[%s194 + $0x1058] sm:$0xff] %v1241
                %v1243 = vld [vmem:[%s193 + $0x20c0] sm:$0xff]
                %1244 = vst [vmem:[%s194 + $0x1060] sm:$0xff] %v1243
                %v1245 = vld [vmem:[%s193 + $0x20c8] sm:$0xff]
                %1246 = vst [vmem:[%s194 + $0x1068] sm:$0xff] %v1245
                %v1247 = vld [vmem:[%s193 + $0x20d0] sm:$0xff]
                %1248 = vst [vmem:[%s194 + $0x1070] sm:$0xff] %v1247
                %v1249 = vld [vmem:[%s193 + $0x20d8] sm:$0xff]
                %1250 = vst [vmem:[%s194 + $0x1078] sm:$0xff] %v1249
                %v1251 = vld [vmem:[%s193 + $0x2100] sm:$0xff]
                %1252 = vst [vmem:[%s194 + $0x1080] sm:$0xff] %v1251
                %v1253 = vld [vmem:[%s193 + $0x2108] sm:$0xff]
                %1254 = vst [vmem:[%s194 + $0x1088] sm:$0xff] %v1253
                %v1255 = vld [vmem:[%s193 + $0x2110] sm:$0xff]
                %1256 = vst [vmem:[%s194 + $0x1090] sm:$0xff] %v1255
                %v1257 = vld [vmem:[%s193 + $0x2118] sm:$0xff]
                %1258 = vst [vmem:[%s194 + $0x1098] sm:$0xff] %v1257
                %v1259 = vld [vmem:[%s193 + $0x2140] sm:$0xff]
                %1260 = vst [vmem:[%s194 + $0x10a0] sm:$0xff] %v1259
                %v1261 = vld [vmem:[%s193 + $0x2148] sm:$0xff]
                %1262 = vst [vmem:[%s194 + $0x10a8] sm:$0xff] %v1261
                %v1263 = vld [vmem:[%s193 + $0x2150] sm:$0xff]
                %1264 = vst [vmem:[%s194 + $0x10b0] sm:$0xff] %v1263
                %v1265 = vld [vmem:[%s193 + $0x2158] sm:$0xff]
                %1266 = vst [vmem:[%s194 + $0x10b8] sm:$0xff] %v1265
                %v1267 = vld [vmem:[%s193 + $0x2180] sm:$0xff]
                %1268 = vst [vmem:[%s194 + $0x10c0] sm:$0xff] %v1267
                %v1269 = vld [vmem:[%s193 + $0x2188] sm:$0xff]
                %1270 = vst [vmem:[%s194 + $0x10c8] sm:$0xff] %v1269
                %v1271 = vld [vmem:[%s193 + $0x2190] sm:$0xff]
                %1272 = vst [vmem:[%s194 + $0x10d0] sm:$0xff] %v1271
                %v1273 = vld [vmem:[%s193 + $0x2198] sm:$0xff]
                %1274 = vst [vmem:[%s194 + $0x10d8] sm:$0xff] %v1273
                %v1275 = vld [vmem:[%s193 + $0x21c0] sm:$0xff]
                %1276 = vst [vmem:[%s194 + $0x10e0] sm:$0xff] %v1275
                %v1277 = vld [vmem:[%s193 + $0x21c8] sm:$0xff]
                %1278 = vst [vmem:[%s194 + $0x10e8] sm:$0xff] %v1277
                %v1279 = vld [vmem:[%s193 + $0x21d0] sm:$0xff]
                %1280 = vst [vmem:[%s194 + $0x10f0] sm:$0xff] %v1279
                %v1281 = vld [vmem:[%s193 + $0x21d8] sm:$0xff]
                %1282 = vst [vmem:[%s194 + $0x10f8] sm:$0xff] %v1281
                %v1283 = vld [vmem:[%s193 + $0x2200] sm:$0xff]
                %1284 = vst [vmem:[%s194 + $0x1100] sm:$0xff] %v1283
                %v1285 = vld [vmem:[%s193 + $0x2208] sm:$0xff]
                %1286 = vst [vmem:[%s194 + $0x1108] sm:$0xff] %v1285
                %v1287 = vld [vmem:[%s193 + $0x2210] sm:$0xff]
                %1288 = vst [vmem:[%s194 + $0x1110] sm:$0xff] %v1287
                %v1289 = vld [vmem:[%s193 + $0x2218] sm:$0xff]
                %1290 = vst [vmem:[%s194 + $0x1118] sm:$0xff] %v1289
                %v1291 = vld [vmem:[%s193 + $0x2240] sm:$0xff]
                %1292 = vst [vmem:[%s194 + $0x1120] sm:$0xff] %v1291
                %v1293 = vld [vmem:[%s193 + $0x2248] sm:$0xff]
                %1294 = vst [vmem:[%s194 + $0x1128] sm:$0xff] %v1293
                %v1295 = vld [vmem:[%s193 + $0x2250] sm:$0xff]
                %1296 = vst [vmem:[%s194 + $0x1130] sm:$0xff] %v1295
                %v1297 = vld [vmem:[%s193 + $0x2258] sm:$0xff]
                %1298 = vst [vmem:[%s194 + $0x1138] sm:$0xff] %v1297
                %v1299 = vld [vmem:[%s193 + $0x2280] sm:$0xff]
                %1300 = vst [vmem:[%s194 + $0x1140] sm:$0xff] %v1299
                %v1301 = vld [vmem:[%s193 + $0x2288] sm:$0xff]
                %1302 = vst [vmem:[%s194 + $0x1148] sm:$0xff] %v1301
                %v1303 = vld [vmem:[%s193 + $0x2290] sm:$0xff]
                %1304 = vst [vmem:[%s194 + $0x1150] sm:$0xff] %v1303
                %v1305 = vld [vmem:[%s193 + $0x2298] sm:$0xff]
                %1306 = vst [vmem:[%s194 + $0x1158] sm:$0xff] %v1305
                %v1307 = vld [vmem:[%s193 + $0x22c0] sm:$0xff]
                %1308 = vst [vmem:[%s194 + $0x1160] sm:$0xff] %v1307
                %v1309 = vld [vmem:[%s193 + $0x22c8] sm:$0xff]
                %1310 = vst [vmem:[%s194 + $0x1168] sm:$0xff] %v1309
                %v1311 = vld [vmem:[%s193 + $0x22d0] sm:$0xff]
                %1312 = vst [vmem:[%s194 + $0x1170] sm:$0xff] %v1311
                %v1313 = vld [vmem:[%s193 + $0x22d8] sm:$0xff]
                %1314 = vst [vmem:[%s194 + $0x1178] sm:$0xff] %v1313
                %v1315 = vld [vmem:[%s193 + $0x2300] sm:$0xff]
                %1316 = vst [vmem:[%s194 + $0x1180] sm:$0xff] %v1315
                %v1317 = vld [vmem:[%s193 + $0x2308] sm:$0xff]
                %1318 = vst [vmem:[%s194 + $0x1188] sm:$0xff] %v1317
                %v1319 = vld [vmem:[%s193 + $0x2310] sm:$0xff]
                %1320 = vst [vmem:[%s194 + $0x1190] sm:$0xff] %v1319
                %v1321 = vld [vmem:[%s193 + $0x2318] sm:$0xff]
                %1322 = vst [vmem:[%s194 + $0x1198] sm:$0xff] %v1321
                %v1323 = vld [vmem:[%s193 + $0x2340] sm:$0xff]
                %1324 = vst [vmem:[%s194 + $0x11a0] sm:$0xff] %v1323
                %v1325 = vld [vmem:[%s193 + $0x2348] sm:$0xff]
                %1326 = vst [vmem:[%s194 + $0x11a8] sm:$0xff] %v1325
                %v1327 = vld [vmem:[%s193 + $0x2350] sm:$0xff]
                %1328 = vst [vmem:[%s194 + $0x11b0] sm:$0xff] %v1327
                %v1329 = vld [vmem:[%s193 + $0x2358] sm:$0xff]
                %1330 = vst [vmem:[%s194 + $0x11b8] sm:$0xff] %v1329
                %v1331 = vld [vmem:[%s193 + $0x2380] sm:$0xff]
                %1332 = vst [vmem:[%s194 + $0x11c0] sm:$0xff] %v1331
                %v1333 = vld [vmem:[%s193 + $0x2388] sm:$0xff]
                %1334 = vst [vmem:[%s194 + $0x11c8] sm:$0xff] %v1333
                %v1335 = vld [vmem:[%s193 + $0x2390] sm:$0xff]
                %1336 = vst [vmem:[%s194 + $0x11d0] sm:$0xff] %v1335
                %v1337 = vld [vmem:[%s193 + $0x2398] sm:$0xff]
                %1338 = vst [vmem:[%s194 + $0x11d8] sm:$0xff] %v1337
                %v1339 = vld [vmem:[%s193 + $0x23c0] sm:$0xff]
                %1340 = vst [vmem:[%s194 + $0x11e0] sm:$0xff] %v1339
                %v1341 = vld [vmem:[%s193 + $0x23c8] sm:$0xff]
                %1342 = vst [vmem:[%s194 + $0x11e8] sm:$0xff] %v1341
                %v1343 = vld [vmem:[%s193 + $0x23d0] sm:$0xff]
                %1344 = vst [vmem:[%s194 + $0x11f0] sm:$0xff] %v1343
                %v1345 = vld [vmem:[%s193 + $0x23d8] sm:$0xff]
                %1346 = vst [vmem:[%s194 + $0x11f8] sm:$0xff] %v1345
                %v1347 = vld [vmem:[%s193 + $0x2400] sm:$0xff]
                %1348 = vst [vmem:[%s194 + $0x1200] sm:$0xff] %v1347
                %v1349 = vld [vmem:[%s193 + $0x2408] sm:$0xff]
                %1350 = vst [vmem:[%s194 + $0x1208] sm:$0xff] %v1349
                %v1351 = vld [vmem:[%s193 + $0x2410] sm:$0xff]
                %1352 = vst [vmem:[%s194 + $0x1210] sm:$0xff] %v1351
                %v1353 = vld [vmem:[%s193 + $0x2418] sm:$0xff]
                %1354 = vst [vmem:[%s194 + $0x1218] sm:$0xff] %v1353
                %v1355 = vld [vmem:[%s193 + $0x2440] sm:$0xff]
                %1356 = vst [vmem:[%s194 + $0x1220] sm:$0xff] %v1355
                %v1357 = vld [vmem:[%s193 + $0x2448] sm:$0xff]
                %1358 = vst [vmem:[%s194 + $0x1228] sm:$0xff] %v1357
                %v1359 = vld [vmem:[%s193 + $0x2450] sm:$0xff]
                %1360 = vst [vmem:[%s194 + $0x1230] sm:$0xff] %v1359
                %v1361 = vld [vmem:[%s193 + $0x2458] sm:$0xff]
                %1362 = vst [vmem:[%s194 + $0x1238] sm:$0xff] %v1361
                %v1363 = vld [vmem:[%s193 + $0x2480] sm:$0xff]
                %1364 = vst [vmem:[%s194 + $0x1240] sm:$0xff] %v1363
                %v1365 = vld [vmem:[%s193 + $0x2488] sm:$0xff]
                %1366 = vst [vmem:[%s194 + $0x1248] sm:$0xff] %v1365
                %v1367 = vld [vmem:[%s193 + $0x2490] sm:$0xff]
                %1368 = vst [vmem:[%s194 + $0x1250] sm:$0xff] %v1367
                %v1369 = vld [vmem:[%s193 + $0x2498] sm:$0xff]
                %1370 = vst [vmem:[%s194 + $0x1258] sm:$0xff] %v1369
                %v1371 = vld [vmem:[%s193 + $0x24c0] sm:$0xff]
                %1372 = vst [vmem:[%s194 + $0x1260] sm:$0xff] %v1371
                %v1373 = vld [vmem:[%s193 + $0x24c8] sm:$0xff]
                %1374 = vst [vmem:[%s194 + $0x1268] sm:$0xff] %v1373
                %v1375 = vld [vmem:[%s193 + $0x24d0] sm:$0xff]
                %1376 = vst [vmem:[%s194 + $0x1270] sm:$0xff] %v1375
                %v1377 = vld [vmem:[%s193 + $0x24d8] sm:$0xff]
                %1378 = vst [vmem:[%s194 + $0x1278] sm:$0xff] %v1377
                %v1379 = vld [vmem:[%s193 + $0x2500] sm:$0xff]
                %1380 = vst [vmem:[%s194 + $0x1280] sm:$0xff] %v1379
                %v1381 = vld [vmem:[%s193 + $0x2508] sm:$0xff]
                %1382 = vst [vmem:[%s194 + $0x1288] sm:$0xff] %v1381
                %v1383 = vld [vmem:[%s193 + $0x2510] sm:$0xff]
                %1384 = vst [vmem:[%s194 + $0x1290] sm:$0xff] %v1383
                %v1385 = vld [vmem:[%s193 + $0x2518] sm:$0xff]
                %1386 = vst [vmem:[%s194 + $0x1298] sm:$0xff] %v1385
                %v1387 = vld [vmem:[%s193 + $0x2540] sm:$0xff]
                %1388 = vst [vmem:[%s194 + $0x12a0] sm:$0xff] %v1387
                %v1389 = vld [vmem:[%s193 + $0x2548] sm:$0xff]
                %1390 = vst [vmem:[%s194 + $0x12a8] sm:$0xff] %v1389
                %v1391 = vld [vmem:[%s193 + $0x2550] sm:$0xff]
                %1392 = vst [vmem:[%s194 + $0x12b0] sm:$0xff] %v1391
                %v1393 = vld [vmem:[%s193 + $0x2558] sm:$0xff]
                %1394 = vst [vmem:[%s194 + $0x12b8] sm:$0xff] %v1393
                %v1395 = vld [vmem:[%s193 + $0x2580] sm:$0xff]
                %1396 = vst [vmem:[%s194 + $0x12c0] sm:$0xff] %v1395
                %v1397 = vld [vmem:[%s193 + $0x2588] sm:$0xff]
                %1398 = vst [vmem:[%s194 + $0x12c8] sm:$0xff] %v1397
                %v1399 = vld [vmem:[%s193 + $0x2590] sm:$0xff]
                %1400 = vst [vmem:[%s194 + $0x12d0] sm:$0xff] %v1399
                %v1401 = vld [vmem:[%s193 + $0x2598] sm:$0xff]
                %1402 = vst [vmem:[%s194 + $0x12d8] sm:$0xff] %v1401
                %v1403 = vld [vmem:[%s193 + $0x25c0] sm:$0xff]
                %1404 = vst [vmem:[%s194 + $0x12e0] sm:$0xff] %v1403
                %v1405 = vld [vmem:[%s193 + $0x25c8] sm:$0xff]
                %1406 = vst [vmem:[%s194 + $0x12e8] sm:$0xff] %v1405
                %v1407 = vld [vmem:[%s193 + $0x25d0] sm:$0xff]
                %1408 = vst [vmem:[%s194 + $0x12f0] sm:$0xff] %v1407
                %v1409 = vld [vmem:[%s193 + $0x25d8] sm:$0xff]
                %1410 = vst [vmem:[%s194 + $0x12f8] sm:$0xff] %v1409
                %v1411 = vld [vmem:[%s193 + $0x2600] sm:$0xff]
                %1412 = vst [vmem:[%s194 + $0x1300] sm:$0xff] %v1411
                %v1413 = vld [vmem:[%s193 + $0x2608] sm:$0xff]
                %1414 = vst [vmem:[%s194 + $0x1308] sm:$0xff] %v1413
                %v1415 = vld [vmem:[%s193 + $0x2610] sm:$0xff]
                %1416 = vst [vmem:[%s194 + $0x1310] sm:$0xff] %v1415
                %v1417 = vld [vmem:[%s193 + $0x2618] sm:$0xff]
                %1418 = vst [vmem:[%s194 + $0x1318] sm:$0xff] %v1417
                %v1419 = vld [vmem:[%s193 + $0x2640] sm:$0xff]
                %1420 = vst [vmem:[%s194 + $0x1320] sm:$0xff] %v1419
                %v1421 = vld [vmem:[%s193 + $0x2648] sm:$0xff]
                %1422 = vst [vmem:[%s194 + $0x1328] sm:$0xff] %v1421
                %v1423 = vld [vmem:[%s193 + $0x2650] sm:$0xff]
                %1424 = vst [vmem:[%s194 + $0x1330] sm:$0xff] %v1423
                %v1425 = vld [vmem:[%s193 + $0x2658] sm:$0xff]
                %1426 = vst [vmem:[%s194 + $0x1338] sm:$0xff] %v1425
                %v1427 = vld [vmem:[%s193 + $0x2680] sm:$0xff]
                %1428 = vst [vmem:[%s194 + $0x1340] sm:$0xff] %v1427
                %v1429 = vld [vmem:[%s193 + $0x2688] sm:$0xff]
                %1430 = vst [vmem:[%s194 + $0x1348] sm:$0xff] %v1429
                %v1431 = vld [vmem:[%s193 + $0x2690] sm:$0xff]
                %1432 = vst [vmem:[%s194 + $0x1350] sm:$0xff] %v1431
                %v1433 = vld [vmem:[%s193 + $0x2698] sm:$0xff]
                %1434 = vst [vmem:[%s194 + $0x1358] sm:$0xff] %v1433
                %v1435 = vld [vmem:[%s193 + $0x26c0] sm:$0xff]
                %1436 = vst [vmem:[%s194 + $0x1360] sm:$0xff] %v1435
                %v1437 = vld [vmem:[%s193 + $0x26c8] sm:$0xff]
                %1438 = vst [vmem:[%s194 + $0x1368] sm:$0xff] %v1437
                %v1439 = vld [vmem:[%s193 + $0x26d0] sm:$0xff]
                %1440 = vst [vmem:[%s194 + $0x1370] sm:$0xff] %v1439
                %v1441 = vld [vmem:[%s193 + $0x26d8] sm:$0xff]
                %1442 = vst [vmem:[%s194 + $0x1378] sm:$0xff] %v1441
                %v1443 = vld [vmem:[%s193 + $0x2700] sm:$0xff]
                %1444 = vst [vmem:[%s194 + $0x1380] sm:$0xff] %v1443
                %v1445 = vld [vmem:[%s193 + $0x2708] sm:$0xff]
                %1446 = vst [vmem:[%s194 + $0x1388] sm:$0xff] %v1445
                %v1447 = vld [vmem:[%s193 + $0x2710] sm:$0xff]
                %1448 = vst [vmem:[%s194 + $0x1390] sm:$0xff] %v1447
                %v1449 = vld [vmem:[%s193 + $0x2718] sm:$0xff]
                %1450 = vst [vmem:[%s194 + $0x1398] sm:$0xff] %v1449
                %v1451 = vld [vmem:[%s193 + $0x2740] sm:$0xff]
                %1452 = vst [vmem:[%s194 + $0x13a0] sm:$0xff] %v1451
                %v1453 = vld [vmem:[%s193 + $0x2748] sm:$0xff]
                %1454 = vst [vmem:[%s194 + $0x13a8] sm:$0xff] %v1453
                %v1455 = vld [vmem:[%s193 + $0x2750] sm:$0xff]
                %1456 = vst [vmem:[%s194 + $0x13b0] sm:$0xff] %v1455
                %v1457 = vld [vmem:[%s193 + $0x2758] sm:$0xff]
                %1458 = vst [vmem:[%s194 + $0x13b8] sm:$0xff] %v1457
                %v1459 = vld [vmem:[%s193 + $0x2780] sm:$0xff]
                %1460 = vst [vmem:[%s194 + $0x13c0] sm:$0xff] %v1459
                %v1461 = vld [vmem:[%s193 + $0x2788] sm:$0xff]
                %1462 = vst [vmem:[%s194 + $0x13c8] sm:$0xff] %v1461
                %v1463 = vld [vmem:[%s193 + $0x2790] sm:$0xff]
                %1464 = vst [vmem:[%s194 + $0x13d0] sm:$0xff] %v1463
                %v1465 = vld [vmem:[%s193 + $0x2798] sm:$0xff]
                %1466 = vst [vmem:[%s194 + $0x13d8] sm:$0xff] %v1465
                %v1467 = vld [vmem:[%s193 + $0x27c0] sm:$0xff]
                %1468 = vst [vmem:[%s194 + $0x13e0] sm:$0xff] %v1467
                %v1469 = vld [vmem:[%s193 + $0x27c8] sm:$0xff]
                %1470 = vst [vmem:[%s194 + $0x13e8] sm:$0xff] %v1469
                %v1471 = vld [vmem:[%s193 + $0x27d0] sm:$0xff]
                %1472 = vst [vmem:[%s194 + $0x13f0] sm:$0xff] %v1471
                %v1473 = vld [vmem:[%s193 + $0x27d8] sm:$0xff]
                %1474 = vst [vmem:[%s194 + $0x13f8] sm:$0xff] %v1473
                %v1475 = vld [vmem:[%s193 + $0x2800] sm:$0xff]
                %1476 = vst [vmem:[%s194 + $0x1400] sm:$0xff] %v1475
                %v1477 = vld [vmem:[%s193 + $0x2808] sm:$0xff]
                %1478 = vst [vmem:[%s194 + $0x1408] sm:$0xff] %v1477
                %v1479 = vld [vmem:[%s193 + $0x2810] sm:$0xff]
                %1480 = vst [vmem:[%s194 + $0x1410] sm:$0xff] %v1479
                %v1481 = vld [vmem:[%s193 + $0x2818] sm:$0xff]
                %1482 = vst [vmem:[%s194 + $0x1418] sm:$0xff] %v1481
                %v1483 = vld [vmem:[%s193 + $0x2840] sm:$0xff]
                %1484 = vst [vmem:[%s194 + $0x1420] sm:$0xff] %v1483
                %v1485 = vld [vmem:[%s193 + $0x2848] sm:$0xff]
                %1486 = vst [vmem:[%s194 + $0x1428] sm:$0xff] %v1485
                %v1487 = vld [vmem:[%s193 + $0x2850] sm:$0xff]
                %1488 = vst [vmem:[%s194 + $0x1430] sm:$0xff] %v1487
                %v1489 = vld [vmem:[%s193 + $0x2858] sm:$0xff]
                %1490 = vst [vmem:[%s194 + $0x1438] sm:$0xff] %v1489
                %v1491 = vld [vmem:[%s193 + $0x2880] sm:$0xff]
                %1492 = vst [vmem:[%s194 + $0x1440] sm:$0xff] %v1491
                %v1493 = vld [vmem:[%s193 + $0x2888] sm:$0xff]
                %1494 = vst [vmem:[%s194 + $0x1448] sm:$0xff] %v1493
                %v1495 = vld [vmem:[%s193 + $0x2890] sm:$0xff]
                %1496 = vst [vmem:[%s194 + $0x1450] sm:$0xff] %v1495
                %v1497 = vld [vmem:[%s193 + $0x2898] sm:$0xff]
                %1498 = vst [vmem:[%s194 + $0x1458] sm:$0xff] %v1497
                %v1499 = vld [vmem:[%s193 + $0x28c0] sm:$0xff]
                %1500 = vst [vmem:[%s194 + $0x1460] sm:$0xff] %v1499
                %v1501 = vld [vmem:[%s193 + $0x28c8] sm:$0xff]
                %1502 = vst [vmem:[%s194 + $0x1468] sm:$0xff] %v1501
                %v1503 = vld [vmem:[%s193 + $0x28d0] sm:$0xff]
                %1504 = vst [vmem:[%s194 + $0x1470] sm:$0xff] %v1503
                %v1505 = vld [vmem:[%s193 + $0x28d8] sm:$0xff]
                %1506 = vst [vmem:[%s194 + $0x1478] sm:$0xff] %v1505
                %v1507 = vld [vmem:[%s193 + $0x2900] sm:$0xff]
                %1508 = vst [vmem:[%s194 + $0x1480] sm:$0xff] %v1507
                %v1509 = vld [vmem:[%s193 + $0x2908] sm:$0xff]
                %1510 = vst [vmem:[%s194 + $0x1488] sm:$0xff] %v1509
                %v1511 = vld [vmem:[%s193 + $0x2910] sm:$0xff]
                %1512 = vst [vmem:[%s194 + $0x1490] sm:$0xff] %v1511
                %v1513 = vld [vmem:[%s193 + $0x2918] sm:$0xff]
                %1514 = vst [vmem:[%s194 + $0x1498] sm:$0xff] %v1513
                %v1515 = vld [vmem:[%s193 + $0x2940] sm:$0xff]
                %1516 = vst [vmem:[%s194 + $0x14a0] sm:$0xff] %v1515
                %v1517 = vld [vmem:[%s193 + $0x2948] sm:$0xff]
                %1518 = vst [vmem:[%s194 + $0x14a8] sm:$0xff] %v1517
                %v1519 = vld [vmem:[%s193 + $0x2950] sm:$0xff]
                %1520 = vst [vmem:[%s194 + $0x14b0] sm:$0xff] %v1519
                %v1521 = vld [vmem:[%s193 + $0x2958] sm:$0xff]
                %1522 = vst [vmem:[%s194 + $0x14b8] sm:$0xff] %v1521
                %v1523 = vld [vmem:[%s193 + $0x2980] sm:$0xff]
                %1524 = vst [vmem:[%s194 + $0x14c0] sm:$0xff] %v1523
                %v1525 = vld [vmem:[%s193 + $0x2988] sm:$0xff]
                %1526 = vst [vmem:[%s194 + $0x14c8] sm:$0xff] %v1525
                %v1527 = vld [vmem:[%s193 + $0x2990] sm:$0xff]
                %1528 = vst [vmem:[%s194 + $0x14d0] sm:$0xff] %v1527
                %v1529 = vld [vmem:[%s193 + $0x2998] sm:$0xff]
                %1530 = vst [vmem:[%s194 + $0x14d8] sm:$0xff] %v1529
                %v1531 = vld [vmem:[%s193 + $0x29c0] sm:$0xff]
                %1532 = vst [vmem:[%s194 + $0x14e0] sm:$0xff] %v1531
                %v1533 = vld [vmem:[%s193 + $0x29c8] sm:$0xff]
                %1534 = vst [vmem:[%s194 + $0x14e8] sm:$0xff] %v1533
                %v1535 = vld [vmem:[%s193 + $0x29d0] sm:$0xff]
                %1536 = vst [vmem:[%s194 + $0x14f0] sm:$0xff] %v1535
                %v1537 = vld [vmem:[%s193 + $0x29d8] sm:$0xff]
                %1538 = vst [vmem:[%s194 + $0x14f8] sm:$0xff] %v1537
                %v1539 = vld [vmem:[%s193 + $0x2a00] sm:$0xff]
                %1540 = vst [vmem:[%s194 + $0x1500] sm:$0xff] %v1539
                %v1541 = vld [vmem:[%s193 + $0x2a08] sm:$0xff]
                %1542 = vst [vmem:[%s194 + $0x1508] sm:$0xff] %v1541
                %v1543 = vld [vmem:[%s193 + $0x2a10] sm:$0xff]
                %1544 = vst [vmem:[%s194 + $0x1510] sm:$0xff] %v1543
                %v1545 = vld [vmem:[%s193 + $0x2a18] sm:$0xff]
                %1546 = vst [vmem:[%s194 + $0x1518] sm:$0xff] %v1545
                %v1547 = vld [vmem:[%s193 + $0x2a40] sm:$0xff]
                %1548 = vst [vmem:[%s194 + $0x1520] sm:$0xff] %v1547
                %v1549 = vld [vmem:[%s193 + $0x2a48] sm:$0xff]
                %1550 = vst [vmem:[%s194 + $0x1528] sm:$0xff] %v1549
                %v1551 = vld [vmem:[%s193 + $0x2a50] sm:$0xff]
                %1552 = vst [vmem:[%s194 + $0x1530] sm:$0xff] %v1551
                %v1553 = vld [vmem:[%s193 + $0x2a58] sm:$0xff]
                %1554 = vst [vmem:[%s194 + $0x1538] sm:$0xff] %v1553
                %v1555 = vld [vmem:[%s193 + $0x2a80] sm:$0xff]
                %1556 = vst [vmem:[%s194 + $0x1540] sm:$0xff] %v1555
                %v1557 = vld [vmem:[%s193 + $0x2a88] sm:$0xff]
                %1558 = vst [vmem:[%s194 + $0x1548] sm:$0xff] %v1557
                %v1559 = vld [vmem:[%s193 + $0x2a90] sm:$0xff]
                %1560 = vst [vmem:[%s194 + $0x1550] sm:$0xff] %v1559
                %v1561 = vld [vmem:[%s193 + $0x2a98] sm:$0xff]
                %1562 = vst [vmem:[%s194 + $0x1558] sm:$0xff] %v1561
                %v1563 = vld [vmem:[%s193 + $0x2ac0] sm:$0xff]
                %1564 = vst [vmem:[%s194 + $0x1560] sm:$0xff] %v1563
                %v1565 = vld [vmem:[%s193 + $0x2ac8] sm:$0xff]
                %1566 = vst [vmem:[%s194 + $0x1568] sm:$0xff] %v1565
                %v1567 = vld [vmem:[%s193 + $0x2ad0] sm:$0xff]
                %1568 = vst [vmem:[%s194 + $0x1570] sm:$0xff] %v1567
                %v1569 = vld [vmem:[%s193 + $0x2ad8] sm:$0xff]
                %1570 = vst [vmem:[%s194 + $0x1578] sm:$0xff] %v1569
                %v1571 = vld [vmem:[%s193 + $0x2b00] sm:$0xff]
                %1572 = vst [vmem:[%s194 + $0x1580] sm:$0xff] %v1571
                %v1573 = vld [vmem:[%s193 + $0x2b08] sm:$0xff]
                %1574 = vst [vmem:[%s194 + $0x1588] sm:$0xff] %v1573
                %v1575 = vld [vmem:[%s193 + $0x2b10] sm:$0xff]
                %1576 = vst [vmem:[%s194 + $0x1590] sm:$0xff] %v1575
                %v1577 = vld [vmem:[%s193 + $0x2b18] sm:$0xff]
                %1578 = vst [vmem:[%s194 + $0x1598] sm:$0xff] %v1577
                %v1579 = vld [vmem:[%s193 + $0x2b40] sm:$0xff]
                %1580 = vst [vmem:[%s194 + $0x15a0] sm:$0xff] %v1579
                %v1581 = vld [vmem:[%s193 + $0x2b48] sm:$0xff]
                %1582 = vst [vmem:[%s194 + $0x15a8] sm:$0xff] %v1581
                %v1583 = vld [vmem:[%s193 + $0x2b50] sm:$0xff]
                %1584 = vst [vmem:[%s194 + $0x15b0] sm:$0xff] %v1583
                %v1585 = vld [vmem:[%s193 + $0x2b58] sm:$0xff]
                %1586 = vst [vmem:[%s194 + $0x15b8] sm:$0xff] %v1585
                %v1587 = vld [vmem:[%s193 + $0x2b80] sm:$0xff]
                %1588 = vst [vmem:[%s194 + $0x15c0] sm:$0xff] %v1587
                %v1589 = vld [vmem:[%s193 + $0x2b88] sm:$0xff]
                %1590 = vst [vmem:[%s194 + $0x15c8] sm:$0xff] %v1589
                %v1591 = vld [vmem:[%s193 + $0x2b90] sm:$0xff]
                %1592 = vst [vmem:[%s194 + $0x15d0] sm:$0xff] %v1591
                %v1593 = vld [vmem:[%s193 + $0x2b98] sm:$0xff]
                %1594 = vst [vmem:[%s194 + $0x15d8] sm:$0xff] %v1593
                %v1595 = vld [vmem:[%s193 + $0x2bc0] sm:$0xff]
                %1596 = vst [vmem:[%s194 + $0x15e0] sm:$0xff] %v1595
                %v1597 = vld [vmem:[%s193 + $0x2bc8] sm:$0xff]
                %1598 = vst [vmem:[%s194 + $0x15e8] sm:$0xff] %v1597
                %v1599 = vld [vmem:[%s193 + $0x2bd0] sm:$0xff]
                %1600 = vst [vmem:[%s194 + $0x15f0] sm:$0xff] %v1599
                %v1601 = vld [vmem:[%s193 + $0x2bd8] sm:$0xff]
                %1602 = vst [vmem:[%s194 + $0x15f8] sm:$0xff] %v1601
                %v1603 = vld [vmem:[%s193 + $0x2c00] sm:$0xff]
                %1604 = vst [vmem:[%s194 + $0x1600] sm:$0xff] %v1603
                %v1605 = vld [vmem:[%s193 + $0x2c08] sm:$0xff]
                %1606 = vst [vmem:[%s194 + $0x1608] sm:$0xff] %v1605
                %v1607 = vld [vmem:[%s193 + $0x2c10] sm:$0xff]
                %1608 = vst [vmem:[%s194 + $0x1610] sm:$0xff] %v1607
                %v1609 = vld [vmem:[%s193 + $0x2c18] sm:$0xff]
                %1610 = vst [vmem:[%s194 + $0x1618] sm:$0xff] %v1609
                %v1611 = vld [vmem:[%s193 + $0x2c40] sm:$0xff]
                %1612 = vst [vmem:[%s194 + $0x1620] sm:$0xff] %v1611
                %v1613 = vld [vmem:[%s193 + $0x2c48] sm:$0xff]
                %1614 = vst [vmem:[%s194 + $0x1628] sm:$0xff] %v1613
                %v1615 = vld [vmem:[%s193 + $0x2c50] sm:$0xff]
                %1616 = vst [vmem:[%s194 + $0x1630] sm:$0xff] %v1615
                %v1617 = vld [vmem:[%s193 + $0x2c58] sm:$0xff]
                %1618 = vst [vmem:[%s194 + $0x1638] sm:$0xff] %v1617
                %v1619 = vld [vmem:[%s193 + $0x2c80] sm:$0xff]
                %1620 = vst [vmem:[%s194 + $0x1640] sm:$0xff] %v1619
                %v1621 = vld [vmem:[%s193 + $0x2c88] sm:$0xff]
                %1622 = vst [vmem:[%s194 + $0x1648] sm:$0xff] %v1621
                %v1623 = vld [vmem:[%s193 + $0x2c90] sm:$0xff]
                %1624 = vst [vmem:[%s194 + $0x1650] sm:$0xff] %v1623
                %v1625 = vld [vmem:[%s193 + $0x2c98] sm:$0xff]
                %1626 = vst [vmem:[%s194 + $0x1658] sm:$0xff] %v1625
                %v1627 = vld [vmem:[%s193 + $0x2cc0] sm:$0xff]
                %1628 = vst [vmem:[%s194 + $0x1660] sm:$0xff] %v1627
                %v1629 = vld [vmem:[%s193 + $0x2cc8] sm:$0xff]
                %1630 = vst [vmem:[%s194 + $0x1668] sm:$0xff] %v1629
                %v1631 = vld [vmem:[%s193 + $0x2cd0] sm:$0xff]
                %1632 = vst [vmem:[%s194 + $0x1670] sm:$0xff] %v1631
                %v1633 = vld [vmem:[%s193 + $0x2cd8] sm:$0xff]
                %1634 = vst [vmem:[%s194 + $0x1678] sm:$0xff] %v1633
                %v1635 = vld [vmem:[%s193 + $0x2d00] sm:$0xff]
                %1636 = vst [vmem:[%s194 + $0x1680] sm:$0xff] %v1635
                %v1637 = vld [vmem:[%s193 + $0x2d08] sm:$0xff]
                %1638 = vst [vmem:[%s194 + $0x1688] sm:$0xff] %v1637
                %v1639 = vld [vmem:[%s193 + $0x2d10] sm:$0xff]
                %1640 = vst [vmem:[%s194 + $0x1690] sm:$0xff] %v1639
                %v1641 = vld [vmem:[%s193 + $0x2d18] sm:$0xff]
                %1642 = vst [vmem:[%s194 + $0x1698] sm:$0xff] %v1641
                %v1643 = vld [vmem:[%s193 + $0x2d40] sm:$0xff]
                %1644 = vst [vmem:[%s194 + $0x16a0] sm:$0xff] %v1643
                %v1645 = vld [vmem:[%s193 + $0x2d48] sm:$0xff]
                %1646 = vst [vmem:[%s194 + $0x16a8] sm:$0xff] %v1645
                %v1647 = vld [vmem:[%s193 + $0x2d50] sm:$0xff]
                %1648 = vst [vmem:[%s194 + $0x16b0] sm:$0xff] %v1647
                %v1649 = vld [vmem:[%s193 + $0x2d58] sm:$0xff]
                %1650 = vst [vmem:[%s194 + $0x16b8] sm:$0xff] %v1649
                %v1651 = vld [vmem:[%s193 + $0x2d80] sm:$0xff]
                %1652 = vst [vmem:[%s194 + $0x16c0] sm:$0xff] %v1651
                %v1653 = vld [vmem:[%s193 + $0x2d88] sm:$0xff]
                %1654 = vst [vmem:[%s194 + $0x16c8] sm:$0xff] %v1653
                %v1655 = vld [vmem:[%s193 + $0x2d90] sm:$0xff]
                %1656 = vst [vmem:[%s194 + $0x16d0] sm:$0xff] %v1655
                %v1657 = vld [vmem:[%s193 + $0x2d98] sm:$0xff]
                %1658 = vst [vmem:[%s194 + $0x16d8] sm:$0xff] %v1657
                %v1659 = vld [vmem:[%s193 + $0x2dc0] sm:$0xff]
                %1660 = vst [vmem:[%s194 + $0x16e0] sm:$0xff] %v1659
                %v1661 = vld [vmem:[%s193 + $0x2dc8] sm:$0xff]
                %1662 = vst [vmem:[%s194 + $0x16e8] sm:$0xff] %v1661
                %v1663 = vld [vmem:[%s193 + $0x2dd0] sm:$0xff]
                %1664 = vst [vmem:[%s194 + $0x16f0] sm:$0xff] %v1663
                %v1665 = vld [vmem:[%s193 + $0x2dd8] sm:$0xff]
                %1666 = vst [vmem:[%s194 + $0x16f8] sm:$0xff] %v1665
                %v1667 = vld [vmem:[%s193 + $0x2e00] sm:$0xff]
                %1668 = vst [vmem:[%s194 + $0x1700] sm:$0xff] %v1667
                %v1669 = vld [vmem:[%s193 + $0x2e08] sm:$0xff]
                %1670 = vst [vmem:[%s194 + $0x1708] sm:$0xff] %v1669
                %v1671 = vld [vmem:[%s193 + $0x2e10] sm:$0xff]
                %1672 = vst [vmem:[%s194 + $0x1710] sm:$0xff] %v1671
                %v1673 = vld [vmem:[%s193 + $0x2e18] sm:$0xff]
                %1674 = vst [vmem:[%s194 + $0x1718] sm:$0xff] %v1673
                %v1675 = vld [vmem:[%s193 + $0x2e40] sm:$0xff]
                %1676 = vst [vmem:[%s194 + $0x1720] sm:$0xff] %v1675
                %v1677 = vld [vmem:[%s193 + $0x2e48] sm:$0xff]
                %1678 = vst [vmem:[%s194 + $0x1728] sm:$0xff] %v1677
                %v1679 = vld [vmem:[%s193 + $0x2e50] sm:$0xff]
                %1680 = vst [vmem:[%s194 + $0x1730] sm:$0xff] %v1679
                %v1681 = vld [vmem:[%s193 + $0x2e58] sm:$0xff]
                %1682 = vst [vmem:[%s194 + $0x1738] sm:$0xff] %v1681
                %v1683 = vld [vmem:[%s193 + $0x2e80] sm:$0xff]
                %1684 = vst [vmem:[%s194 + $0x1740] sm:$0xff] %v1683
                %v1685 = vld [vmem:[%s193 + $0x2e88] sm:$0xff]
                %1686 = vst [vmem:[%s194 + $0x1748] sm:$0xff] %v1685
                %v1687 = vld [vmem:[%s193 + $0x2e90] sm:$0xff]
                %1688 = vst [vmem:[%s194 + $0x1750] sm:$0xff] %v1687
                %v1689 = vld [vmem:[%s193 + $0x2e98] sm:$0xff]
                %1690 = vst [vmem:[%s194 + $0x1758] sm:$0xff] %v1689
                %v1691 = vld [vmem:[%s193 + $0x2ec0] sm:$0xff]
                %1692 = vst [vmem:[%s194 + $0x1760] sm:$0xff] %v1691
                %v1693 = vld [vmem:[%s193 + $0x2ec8] sm:$0xff]
                %1694 = vst [vmem:[%s194 + $0x1768] sm:$0xff] %v1693
                %v1695 = vld [vmem:[%s193 + $0x2ed0] sm:$0xff]
                %1696 = vst [vmem:[%s194 + $0x1770] sm:$0xff] %v1695
                %v1697 = vld [vmem:[%s193 + $0x2ed8] sm:$0xff]
                %1698 = vst [vmem:[%s194 + $0x1778] sm:$0xff] %v1697
                %v1699 = vld [vmem:[%s193 + $0x2f00] sm:$0xff]
                %1700 = vst [vmem:[%s194 + $0x1780] sm:$0xff] %v1699
                %v1701 = vld [vmem:[%s193 + $0x2f08] sm:$0xff]
                %1702 = vst [vmem:[%s194 + $0x1788] sm:$0xff] %v1701
                %v1703 = vld [vmem:[%s193 + $0x2f10] sm:$0xff]
                %1704 = vst [vmem:[%s194 + $0x1790] sm:$0xff] %v1703
                %v1705 = vld [vmem:[%s193 + $0x2f18] sm:$0xff]
                %1706 = vst [vmem:[%s194 + $0x1798] sm:$0xff] %v1705
                %v1707 = vld [vmem:[%s193 + $0x2f40] sm:$0xff]
                %1708 = vst [vmem:[%s194 + $0x17a0] sm:$0xff] %v1707
                %v1709 = vld [vmem:[%s193 + $0x2f48] sm:$0xff]
                %1710 = vst [vmem:[%s194 + $0x17a8] sm:$0xff] %v1709
                %v1711 = vld [vmem:[%s193 + $0x2f50] sm:$0xff]
                %1712 = vst [vmem:[%s194 + $0x17b0] sm:$0xff] %v1711
                %v1713 = vld [vmem:[%s193 + $0x2f58] sm:$0xff]
                %1714 = vst [vmem:[%s194 + $0x17b8] sm:$0xff] %v1713
                %v1715 = vld [vmem:[%s193 + $0x2f80] sm:$0xff]
                %1716 = vst [vmem:[%s194 + $0x17c0] sm:$0xff] %v1715
                %v1717 = vld [vmem:[%s193 + $0x2f88] sm:$0xff]
                %1718 = vst [vmem:[%s194 + $0x17c8] sm:$0xff] %v1717
                %v1719 = vld [vmem:[%s193 + $0x2f90] sm:$0xff]
                %1720 = vst [vmem:[%s194 + $0x17d0] sm:$0xff] %v1719
                %v1721 = vld [vmem:[%s193 + $0x2f98] sm:$0xff]
                %1722 = vst [vmem:[%s194 + $0x17d8] sm:$0xff] %v1721
                %v1723 = vld [vmem:[%s193 + $0x2fc0] sm:$0xff]
                %1724 = vst [vmem:[%s194 + $0x17e0] sm:$0xff] %v1723
                %v1725 = vld [vmem:[%s193 + $0x2fc8] sm:$0xff]
                %1726 = vst [vmem:[%s194 + $0x17e8] sm:$0xff] %v1725
                %v1727 = vld [vmem:[%s193 + $0x2fd0] sm:$0xff]
                %1728 = vst [vmem:[%s194 + $0x17f0] sm:$0xff] %v1727
                %v1729 = vld [vmem:[%s193 + $0x2fd8] sm:$0xff]
                %1730 = vst [vmem:[%s194 + $0x17f8] sm:$0xff] %v1729
                %v1731 = vld [vmem:[%s193 + $0x3000] sm:$0xff]
                %1732 = vst [vmem:[%s194 + $0x1800] sm:$0xff] %v1731
                %v1733 = vld [vmem:[%s193 + $0x3008] sm:$0xff]
                %1734 = vst [vmem:[%s194 + $0x1808] sm:$0xff] %v1733
                %v1735 = vld [vmem:[%s193 + $0x3010] sm:$0xff]
                %1736 = vst [vmem:[%s194 + $0x1810] sm:$0xff] %v1735
                %v1737 = vld [vmem:[%s193 + $0x3018] sm:$0xff]
                %1738 = vst [vmem:[%s194 + $0x1818] sm:$0xff] %v1737
                %v1739 = vld [vmem:[%s193 + $0x3040] sm:$0xff]
                %1740 = vst [vmem:[%s194 + $0x1820] sm:$0xff] %v1739
                %v1741 = vld [vmem:[%s193 + $0x3048] sm:$0xff]
                %1742 = vst [vmem:[%s194 + $0x1828] sm:$0xff] %v1741
                %v1743 = vld [vmem:[%s193 + $0x3050] sm:$0xff]
                %1744 = vst [vmem:[%s194 + $0x1830] sm:$0xff] %v1743
                %v1745 = vld [vmem:[%s193 + $0x3058] sm:$0xff]
                %1746 = vst [vmem:[%s194 + $0x1838] sm:$0xff] %v1745
                %v1747 = vld [vmem:[%s193 + $0x3080] sm:$0xff]
                %1748 = vst [vmem:[%s194 + $0x1840] sm:$0xff] %v1747
                %v1749 = vld [vmem:[%s193 + $0x3088] sm:$0xff]
                %1750 = vst [vmem:[%s194 + $0x1848] sm:$0xff] %v1749
                %v1751 = vld [vmem:[%s193 + $0x3090] sm:$0xff]
                %1752 = vst [vmem:[%s194 + $0x1850] sm:$0xff] %v1751
                %v1753 = vld [vmem:[%s193 + $0x3098] sm:$0xff]
                %1754 = vst [vmem:[%s194 + $0x1858] sm:$0xff] %v1753
                %v1755 = vld [vmem:[%s193 + $0x30c0] sm:$0xff]
                %1756 = vst [vmem:[%s194 + $0x1860] sm:$0xff] %v1755
                %v1757 = vld [vmem:[%s193 + $0x30c8] sm:$0xff]
                %1758 = vst [vmem:[%s194 + $0x1868] sm:$0xff] %v1757
                %v1759 = vld [vmem:[%s193 + $0x30d0] sm:$0xff]
                %1760 = vst [vmem:[%s194 + $0x1870] sm:$0xff] %v1759
                %v1761 = vld [vmem:[%s193 + $0x30d8] sm:$0xff]
                %1762 = vst [vmem:[%s194 + $0x1878] sm:$0xff] %v1761
                %v1763 = vld [vmem:[%s193 + $0x3100] sm:$0xff]
                %1764 = vst [vmem:[%s194 + $0x1880] sm:$0xff] %v1763
                %v1765 = vld [vmem:[%s193 + $0x3108] sm:$0xff]
                %1766 = vst [vmem:[%s194 + $0x1888] sm:$0xff] %v1765
                %v1767 = vld [vmem:[%s193 + $0x3110] sm:$0xff]
                %1768 = vst [vmem:[%s194 + $0x1890] sm:$0xff] %v1767
                %v1769 = vld [vmem:[%s193 + $0x3118] sm:$0xff]
                %1770 = vst [vmem:[%s194 + $0x1898] sm:$0xff] %v1769
                %v1771 = vld [vmem:[%s193 + $0x3140] sm:$0xff]
                %1772 = vst [vmem:[%s194 + $0x18a0] sm:$0xff] %v1771
                %v1773 = vld [vmem:[%s193 + $0x3148] sm:$0xff]
                %1774 = vst [vmem:[%s194 + $0x18a8] sm:$0xff] %v1773
                %v1775 = vld [vmem:[%s193 + $0x3150] sm:$0xff]
                %1776 = vst [vmem:[%s194 + $0x18b0] sm:$0xff] %v1775
                %v1777 = vld [vmem:[%s193 + $0x3158] sm:$0xff]
                %1778 = vst [vmem:[%s194 + $0x18b8] sm:$0xff] %v1777
                %v1779 = vld [vmem:[%s193 + $0x3180] sm:$0xff]
                %1780 = vst [vmem:[%s194 + $0x18c0] sm:$0xff] %v1779
                %v1781 = vld [vmem:[%s193 + $0x3188] sm:$0xff]
                %1782 = vst [vmem:[%s194 + $0x18c8] sm:$0xff] %v1781
                %v1783 = vld [vmem:[%s193 + $0x3190] sm:$0xff]
                %1784 = vst [vmem:[%s194 + $0x18d0] sm:$0xff] %v1783
                %v1785 = vld [vmem:[%s193 + $0x3198] sm:$0xff]
                %1786 = vst [vmem:[%s194 + $0x18d8] sm:$0xff] %v1785
                %v1787 = vld [vmem:[%s193 + $0x31c0] sm:$0xff]
                %1788 = vst [vmem:[%s194 + $0x18e0] sm:$0xff] %v1787
                %v1789 = vld [vmem:[%s193 + $0x31c8] sm:$0xff]
                %1790 = vst [vmem:[%s194 + $0x18e8] sm:$0xff] %v1789
                %v1791 = vld [vmem:[%s193 + $0x31d0] sm:$0xff]
                %1792 = vst [vmem:[%s194 + $0x18f0] sm:$0xff] %v1791
                %v1793 = vld [vmem:[%s193 + $0x31d8] sm:$0xff]
                %1794 = vst [vmem:[%s194 + $0x18f8] sm:$0xff] %v1793
                %v1795 = vld [vmem:[%s193 + $0x3200] sm:$0xff]
                %1796 = vst [vmem:[%s194 + $0x1900] sm:$0xff] %v1795
                %v1797 = vld [vmem:[%s193 + $0x3208] sm:$0xff]
                %1798 = vst [vmem:[%s194 + $0x1908] sm:$0xff] %v1797
                %v1799 = vld [vmem:[%s193 + $0x3210] sm:$0xff]
                %1800 = vst [vmem:[%s194 + $0x1910] sm:$0xff] %v1799
                %v1801 = vld [vmem:[%s193 + $0x3218] sm:$0xff]
                %1802 = vst [vmem:[%s194 + $0x1918] sm:$0xff] %v1801
                %v1803 = vld [vmem:[%s193 + $0x3240] sm:$0xff]
                %1804 = vst [vmem:[%s194 + $0x1920] sm:$0xff] %v1803
                %v1805 = vld [vmem:[%s193 + $0x3248] sm:$0xff]
                %1806 = vst [vmem:[%s194 + $0x1928] sm:$0xff] %v1805
                %v1807 = vld [vmem:[%s193 + $0x3250] sm:$0xff]
                %1808 = vst [vmem:[%s194 + $0x1930] sm:$0xff] %v1807
                %v1809 = vld [vmem:[%s193 + $0x3258] sm:$0xff]
                %1810 = vst [vmem:[%s194 + $0x1938] sm:$0xff] %v1809
                %v1811 = vld [vmem:[%s193 + $0x3280] sm:$0xff]
                %1812 = vst [vmem:[%s194 + $0x1940] sm:$0xff] %v1811
                %v1813 = vld [vmem:[%s193 + $0x3288] sm:$0xff]
                %1814 = vst [vmem:[%s194 + $0x1948] sm:$0xff] %v1813
                %v1815 = vld [vmem:[%s193 + $0x3290] sm:$0xff]
                %1816 = vst [vmem:[%s194 + $0x1950] sm:$0xff] %v1815
                %v1817 = vld [vmem:[%s193 + $0x3298] sm:$0xff]
                %1818 = vst [vmem:[%s194 + $0x1958] sm:$0xff] %v1817
                %v1819 = vld [vmem:[%s193 + $0x32c0] sm:$0xff]
                %1820 = vst [vmem:[%s194 + $0x1960] sm:$0xff] %v1819
                %v1821 = vld [vmem:[%s193 + $0x32c8] sm:$0xff]
                %1822 = vst [vmem:[%s194 + $0x1968] sm:$0xff] %v1821
                %v1823 = vld [vmem:[%s193 + $0x32d0] sm:$0xff]
                %1824 = vst [vmem:[%s194 + $0x1970] sm:$0xff] %v1823
                %v1825 = vld [vmem:[%s193 + $0x32d8] sm:$0xff]
                %1826 = vst [vmem:[%s194 + $0x1978] sm:$0xff] %v1825
                %v1827 = vld [vmem:[%s193 + $0x3300] sm:$0xff]
                %1828 = vst [vmem:[%s194 + $0x1980] sm:$0xff] %v1827
                %v1829 = vld [vmem:[%s193 + $0x3308] sm:$0xff]
                %1830 = vst [vmem:[%s194 + $0x1988] sm:$0xff] %v1829
                %v1831 = vld [vmem:[%s193 + $0x3310] sm:$0xff]
                %1832 = vst [vmem:[%s194 + $0x1990] sm:$0xff] %v1831
                %v1833 = vld [vmem:[%s193 + $0x3318] sm:$0xff]
                %1834 = vst [vmem:[%s194 + $0x1998] sm:$0xff] %v1833
                %v1835 = vld [vmem:[%s193 + $0x3340] sm:$0xff]
                %1836 = vst [vmem:[%s194 + $0x19a0] sm:$0xff] %v1835
                %v1837 = vld [vmem:[%s193 + $0x3348] sm:$0xff]
                %1838 = vst [vmem:[%s194 + $0x19a8] sm:$0xff] %v1837
                %v1839 = vld [vmem:[%s193 + $0x3350] sm:$0xff]
                %1840 = vst [vmem:[%s194 + $0x19b0] sm:$0xff] %v1839
                %v1841 = vld [vmem:[%s193 + $0x3358] sm:$0xff]
                %1842 = vst [vmem:[%s194 + $0x19b8] sm:$0xff] %v1841
                %v1843 = vld [vmem:[%s193 + $0x3380] sm:$0xff]
                %1844 = vst [vmem:[%s194 + $0x19c0] sm:$0xff] %v1843
                %v1845 = vld [vmem:[%s193 + $0x3388] sm:$0xff]
                %1846 = vst [vmem:[%s194 + $0x19c8] sm:$0xff] %v1845
                %v1847 = vld [vmem:[%s193 + $0x3390] sm:$0xff]
                %1848 = vst [vmem:[%s194 + $0x19d0] sm:$0xff] %v1847
                %v1849 = vld [vmem:[%s193 + $0x3398] sm:$0xff]
                %1850 = vst [vmem:[%s194 + $0x19d8] sm:$0xff] %v1849
                %v1851 = vld [vmem:[%s193 + $0x33c0] sm:$0xff]
                %1852 = vst [vmem:[%s194 + $0x19e0] sm:$0xff] %v1851
                %v1853 = vld [vmem:[%s193 + $0x33c8] sm:$0xff]
                %1854 = vst [vmem:[%s194 + $0x19e8] sm:$0xff] %v1853
                %v1855 = vld [vmem:[%s193 + $0x33d0] sm:$0xff]
                %1856 = vst [vmem:[%s194 + $0x19f0] sm:$0xff] %v1855
                %v1857 = vld [vmem:[%s193 + $0x33d8] sm:$0xff]
                %1858 = vst [vmem:[%s194 + $0x19f8] sm:$0xff] %v1857
                %v1859 = vld [vmem:[%s193 + $0x3400] sm:$0xff]
                %1860 = vst [vmem:[%s194 + $0x1a00] sm:$0xff] %v1859
                %v1861 = vld [vmem:[%s193 + $0x3408] sm:$0xff]
                %1862 = vst [vmem:[%s194 + $0x1a08] sm:$0xff] %v1861
                %v1863 = vld [vmem:[%s193 + $0x3410] sm:$0xff]
                %1864 = vst [vmem:[%s194 + $0x1a10] sm:$0xff] %v1863
                %v1865 = vld [vmem:[%s193 + $0x3418] sm:$0xff]
                %1866 = vst [vmem:[%s194 + $0x1a18] sm:$0xff] %v1865
                %v1867 = vld [vmem:[%s193 + $0x3440] sm:$0xff]
                %1868 = vst [vmem:[%s194 + $0x1a20] sm:$0xff] %v1867
                %v1869 = vld [vmem:[%s193 + $0x3448] sm:$0xff]
                %1870 = vst [vmem:[%s194 + $0x1a28] sm:$0xff] %v1869
                %v1871 = vld [vmem:[%s193 + $0x3450] sm:$0xff]
                %1872 = vst [vmem:[%s194 + $0x1a30] sm:$0xff] %v1871
                %v1873 = vld [vmem:[%s193 + $0x3458] sm:$0xff]
                %1874 = vst [vmem:[%s194 + $0x1a38] sm:$0xff] %v1873
                %v1875 = vld [vmem:[%s193 + $0x3480] sm:$0xff]
                %1876 = vst [vmem:[%s194 + $0x1a40] sm:$0xff] %v1875
                %v1877 = vld [vmem:[%s193 + $0x3488] sm:$0xff]
                %1878 = vst [vmem:[%s194 + $0x1a48] sm:$0xff] %v1877
                %v1879 = vld [vmem:[%s193 + $0x3490] sm:$0xff]
                %1880 = vst [vmem:[%s194 + $0x1a50] sm:$0xff] %v1879
                %v1881 = vld [vmem:[%s193 + $0x3498] sm:$0xff]
                %1882 = vst [vmem:[%s194 + $0x1a58] sm:$0xff] %v1881
                %v1883 = vld [vmem:[%s193 + $0x34c0] sm:$0xff]
                %1884 = vst [vmem:[%s194 + $0x1a60] sm:$0xff] %v1883
                %v1885 = vld [vmem:[%s193 + $0x34c8] sm:$0xff]
                %1886 = vst [vmem:[%s194 + $0x1a68] sm:$0xff] %v1885
                %v1887 = vld [vmem:[%s193 + $0x34d0] sm:$0xff]
                %1888 = vst [vmem:[%s194 + $0x1a70] sm:$0xff] %v1887
                %v1889 = vld [vmem:[%s193 + $0x34d8] sm:$0xff]
                %1890 = vst [vmem:[%s194 + $0x1a78] sm:$0xff] %v1889
                %v1891 = vld [vmem:[%s193 + $0x3500] sm:$0xff]
                %1892 = vst [vmem:[%s194 + $0x1a80] sm:$0xff] %v1891
                %v1893 = vld [vmem:[%s193 + $0x3508] sm:$0xff]
                %1894 = vst [vmem:[%s194 + $0x1a88] sm:$0xff] %v1893
                %v1895 = vld [vmem:[%s193 + $0x3510] sm:$0xff]
                %1896 = vst [vmem:[%s194 + $0x1a90] sm:$0xff] %v1895
                %v1897 = vld [vmem:[%s193 + $0x3518] sm:$0xff]
                %1898 = vst [vmem:[%s194 + $0x1a98] sm:$0xff] %v1897
                %v1899 = vld [vmem:[%s193 + $0x3540] sm:$0xff]
                %1900 = vst [vmem:[%s194 + $0x1aa0] sm:$0xff] %v1899
                %v1901 = vld [vmem:[%s193 + $0x3548] sm:$0xff]
                %1902 = vst [vmem:[%s194 + $0x1aa8] sm:$0xff] %v1901
                %v1903 = vld [vmem:[%s193 + $0x3550] sm:$0xff]
                %1904 = vst [vmem:[%s194 + $0x1ab0] sm:$0xff] %v1903
                %v1905 = vld [vmem:[%s193 + $0x3558] sm:$0xff]
                %1906 = vst [vmem:[%s194 + $0x1ab8] sm:$0xff] %v1905
                %v1907 = vld [vmem:[%s193 + $0x3580] sm:$0xff]
                %1908 = vst [vmem:[%s194 + $0x1ac0] sm:$0xff] %v1907
                %v1909 = vld [vmem:[%s193 + $0x3588] sm:$0xff]
                %1910 = vst [vmem:[%s194 + $0x1ac8] sm:$0xff] %v1909
                %v1911 = vld [vmem:[%s193 + $0x3590] sm:$0xff]
                %1912 = vst [vmem:[%s194 + $0x1ad0] sm:$0xff] %v1911
                %v1913 = vld [vmem:[%s193 + $0x3598] sm:$0xff]
                %1914 = vst [vmem:[%s194 + $0x1ad8] sm:$0xff] %v1913
                %v1915 = vld [vmem:[%s193 + $0x35c0] sm:$0xff]
                %1916 = vst [vmem:[%s194 + $0x1ae0] sm:$0xff] %v1915
                %v1917 = vld [vmem:[%s193 + $0x35c8] sm:$0xff]
                %1918 = vst [vmem:[%s194 + $0x1ae8] sm:$0xff] %v1917
                %v1919 = vld [vmem:[%s193 + $0x35d0] sm:$0xff]
                %1920 = vst [vmem:[%s194 + $0x1af0] sm:$0xff] %v1919
                %v1921 = vld [vmem:[%s193 + $0x35d8] sm:$0xff]
                %1922 = vst [vmem:[%s194 + $0x1af8] sm:$0xff] %v1921
                %v1923 = vld [vmem:[%s193 + $0x3600] sm:$0xff]
                %1924 = vst [vmem:[%s194 + $0x1b00] sm:$0xff] %v1923
                %v1925 = vld [vmem:[%s193 + $0x3608] sm:$0xff]
                %1926 = vst [vmem:[%s194 + $0x1b08] sm:$0xff] %v1925
                %v1927 = vld [vmem:[%s193 + $0x3610] sm:$0xff]
                %1928 = vst [vmem:[%s194 + $0x1b10] sm:$0xff] %v1927
                %v1929 = vld [vmem:[%s193 + $0x3618] sm:$0xff]
                %1930 = vst [vmem:[%s194 + $0x1b18] sm:$0xff] %v1929
                %v1931 = vld [vmem:[%s193 + $0x3640] sm:$0xff]
                %1932 = vst [vmem:[%s194 + $0x1b20] sm:$0xff] %v1931
                %v1933 = vld [vmem:[%s193 + $0x3648] sm:$0xff]
                %1934 = vst [vmem:[%s194 + $0x1b28] sm:$0xff] %v1933
                %v1935 = vld [vmem:[%s193 + $0x3650] sm:$0xff]
                %1936 = vst [vmem:[%s194 + $0x1b30] sm:$0xff] %v1935
                %v1937 = vld [vmem:[%s193 + $0x3658] sm:$0xff]
                %1938 = vst [vmem:[%s194 + $0x1b38] sm:$0xff] %v1937
                %v1939 = vld [vmem:[%s193 + $0x3680] sm:$0xff]
                %1940 = vst [vmem:[%s194 + $0x1b40] sm:$0xff] %v1939
                %v1941 = vld [vmem:[%s193 + $0x3688] sm:$0xff]
                %1942 = vst [vmem:[%s194 + $0x1b48] sm:$0xff] %v1941
                %v1943 = vld [vmem:[%s193 + $0x3690] sm:$0xff]
                %1944 = vst [vmem:[%s194 + $0x1b50] sm:$0xff] %v1943
                %v1945 = vld [vmem:[%s193 + $0x3698] sm:$0xff]
                %1946 = vst [vmem:[%s194 + $0x1b58] sm:$0xff] %v1945
                %v1947 = vld [vmem:[%s193 + $0x36c0] sm:$0xff]
                %1948 = vst [vmem:[%s194 + $0x1b60] sm:$0xff] %v1947
                %v1949 = vld [vmem:[%s193 + $0x36c8] sm:$0xff]
                %1950 = vst [vmem:[%s194 + $0x1b68] sm:$0xff] %v1949
                %v1951 = vld [vmem:[%s193 + $0x36d0] sm:$0xff]
                %1952 = vst [vmem:[%s194 + $0x1b70] sm:$0xff] %v1951
                %v1953 = vld [vmem:[%s193 + $0x36d8] sm:$0xff]
                %1954 = vst [vmem:[%s194 + $0x1b78] sm:$0xff] %v1953
                %v1955 = vld [vmem:[%s193 + $0x3700] sm:$0xff]
                %1956 = vst [vmem:[%s194 + $0x1b80] sm:$0xff] %v1955
                %v1957 = vld [vmem:[%s193 + $0x3708] sm:$0xff]
                %1958 = vst [vmem:[%s194 + $0x1b88] sm:$0xff] %v1957
                %v1959 = vld [vmem:[%s193 + $0x3710] sm:$0xff]
                %1960 = vst [vmem:[%s194 + $0x1b90] sm:$0xff] %v1959
                %v1961 = vld [vmem:[%s193 + $0x3718] sm:$0xff]
                %1962 = vst [vmem:[%s194 + $0x1b98] sm:$0xff] %v1961
                %v1963 = vld [vmem:[%s193 + $0x3740] sm:$0xff]
                %1964 = vst [vmem:[%s194 + $0x1ba0] sm:$0xff] %v1963
                %v1965 = vld [vmem:[%s193 + $0x3748] sm:$0xff]
                %1966 = vst [vmem:[%s194 + $0x1ba8] sm:$0xff] %v1965
                %v1967 = vld [vmem:[%s193 + $0x3750] sm:$0xff]
                %1968 = vst [vmem:[%s194 + $0x1bb0] sm:$0xff] %v1967
                %v1969 = vld [vmem:[%s193 + $0x3758] sm:$0xff]
                %1970 = vst [vmem:[%s194 + $0x1bb8] sm:$0xff] %v1969
                %v1971 = vld [vmem:[%s193 + $0x3780] sm:$0xff]
                %1972 = vst [vmem:[%s194 + $0x1bc0] sm:$0xff] %v1971
                %v1973 = vld [vmem:[%s193 + $0x3788] sm:$0xff]
                %1974 = vst [vmem:[%s194 + $0x1bc8] sm:$0xff] %v1973
                %v1975 = vld [vmem:[%s193 + $0x3790] sm:$0xff]
                %1976 = vst [vmem:[%s194 + $0x1bd0] sm:$0xff] %v1975
                %v1977 = vld [vmem:[%s193 + $0x3798] sm:$0xff]
                %1978 = vst [vmem:[%s194 + $0x1bd8] sm:$0xff] %v1977
                %v1979 = vld [vmem:[%s193 + $0x37c0] sm:$0xff]
                %1980 = vst [vmem:[%s194 + $0x1be0] sm:$0xff] %v1979
                %v1981 = vld [vmem:[%s193 + $0x37c8] sm:$0xff]
                %1982 = vst [vmem:[%s194 + $0x1be8] sm:$0xff] %v1981
                %v1983 = vld [vmem:[%s193 + $0x37d0] sm:$0xff]
                %1984 = vst [vmem:[%s194 + $0x1bf0] sm:$0xff] %v1983
                %v1985 = vld [vmem:[%s193 + $0x37d8] sm:$0xff]
                %1986 = vst [vmem:[%s194 + $0x1bf8] sm:$0xff] %v1985
              $region37: #{forward.8} parent=31 // loop_footer
                %s192 = sadd.s32 1, %s188
              $region38: #{forward.8} parent=31 // loop_footer_branch
                %187 = sbr.rel target = $region34
              $region39: #{forward.8} parent=31 // loop_exit
                _
            $region32: #{forward.8} parent=27 // pred_fallthru
              _
            // Predicated region
            $region40: #{forward.8} parent=27 // pred_check
              _
            $region41: #{forward.8} parent=27 // pred_check_branch
              %1988 = sbr.rel target = $region43
            $region42: #{forward.8} parent=27 // pred_region
              _
            $region43: #{forward.8} parent=27 // pred_fallthru
              _
          $region28: #{forward.8} parent=23 // pred_fallthru
            _
          %1989 = vnop
        $region24: #{forward.8} parent=15 // pred_fallthru
          _
        // Predicated region
        $region44: #{forward.8} parent=15 // pred_check
          %p1990 = pneg %p104
        $region45: #{forward.8} parent=15 // pred_check_branch
          %1992 = sbr.rel (%p1990) target = $region47
        $region46: #{forward.8} parent=15 // pred_region
          %s1993 = smul.u32 4, %s17
          %p1994 = scmp.lt.s32.totalorder %s1993, 7
          %s1995 = scalar_select %p1994, %s1993, 7
          %s1996 = scalar_lea.vmem %s2, %s1995
          %s1997 = smul.u32 4, %s17
        $region47: #{forward.8} parent=15 // pred_fallthru
          _
      $region16: #{forward.8} parent=5 // pred_fallthru
        _
      %p1998 = scmp.le.s32.totalorder 1, %s9
      %p1999 = scmp.lt.s32.totalorder %s9, 15
      %p2000 = pnand %p1998, %p1999
      %p2001 = pneg %p2000
      // Predicated region
      $region48: #{forward.8} parent=5 // pred_check
        _
      $region49: #{forward.8} parent=5 // pred_check_branch
        %2003 = sbr.rel (%p2000) target = $region51
      $region50: #{forward.8} parent=5 // pred_region
        %s2004 = ssub.s32 %s9, 1
        %s2005 = sand.u32 %s71, 1
        %s2006 = sand.u32 %s71, 1
        %s2007 = smul.addr %s2006, 7168
        %s2008 = scalar_lea.vmem [#allocation3], %s2007
        // Predicated region
        $region52: #{forward.8} parent=50 // pred_check
          %p2009 = pneg %p84
        $region53: #{forward.8} parent=50 // pred_check_branch
          %2011 = sbr.rel (%p2009) target = $region55
        $region54: #{forward.8} parent=50 // pred_region
          _
        $region55: #{forward.8} parent=50 // pred_fallthru
          _
        %s2012 = smul.u32 14, %s21
        %p2013 = scmp.lt.s32.totalorder %s19, 0
        %s2014 = scalar_select %p2013, %s19, 0
        %p2015 = scmp.lt.s32.totalorder %s2012, 97
        %s2016 = scalar_select %p2015, %s2012, 97
        %s2017 = smul.addr %s2014, 98
        %s2018 = sadd.s32 %s2016, %s2017
        %s2019 = smul.addr %s2018, 8
        %s2020 = scalar_lea.vmem %s0, %s2019
        %p2021 = pneg %p56
        %p2022 = pneg %p53
        %s2023 = sand.u32 %s71, 1
        %s2024 = sand.u32 %s71, 1
        %s2025 = smul.addr %s2024, 7168
        %s2026 = scalar_lea.vmem [#allocation3], %s2025
        %p2027 = pneg %p84
        %p2028 = pneg %p81
        %s2029 = smul.u32 4, %s20
        %p2030 = scmp.lt.s32.totalorder %s2029, 7
        %s2031 = scalar_select %p2030, %s2029, 7
        %s2032 = scalar_lea.vmem %s2, %s2031
        %p2033 = pneg %p110
        %p2034 = pneg %p107
        %p2035 = pneg %p138
        %p2036 = pneg %p135
        %s2037 = smul.u32 4, %s20
        %p2038 = scmp.lt.s32.totalorder %s19, 0
        %s2039 = scalar_select %p2038, %s19, 0
        %p2040 = scmp.lt.s32.totalorder %s2037, 7
        %s2041 = scalar_select %p2040, %s2037, 7
        %s2042 = smul.addr %s2039, 8
        %s2043 = sadd.s32 %s2041, %s2042
        %s2044 = smul.addr %s2043, 8
        %s2045 = scalar_lea.vmem %s3, %s2044
        %s2046 = smul.u32 14, %s21
        %p2047 = scmp.lt.s32.totalorder %s19, 0
        %s2048 = scalar_select %p2047, %s19, 0
        %p2049 = scmp.lt.s32.totalorder %s2046, 97
        %s2050 = scalar_select %p2049, %s2046, 97
        %s2051 = smul.addr %s2048, 98
        %s2052 = sadd.s32 %s2050, %s2051
        %s2053 = smul.addr %s2052, 8
        %s2054 = scalar_lea.vmem %s0, %s2053
        %s2055 = smul.u32 14, %s21
        %s2056 = smul.u32 224, %s21
        %s2057 = smul.u32 4, %s20
        %s2058 = smul.u32 4, %s20
        %p2059 = scmp.lt.s32.totalorder %s2058, 7
        %s2060 = scalar_select %p2059, %s2058, 7
        %s2061 = scalar_lea.vmem %s2, %s2060
        %s2062 = smul.u32 4, %s20
        %s2063 = smul.u32 4, %s20
        %p2064 = scmp.lt.s32.totalorder %s19, 0
        %s2065 = scalar_select %p2064, %s19, 0
        %p2066 = scmp.lt.s32.totalorder %s2063, 7
        %s2067 = scalar_select %p2066, %s2063, 7
        %s2068 = smul.addr %s2065, 8
        %s2069 = sadd.s32 %s2067, %s2068
        %s2070 = smul.addr %s2069, 8
        %s2071 = scalar_lea.vmem %s3, %s2070
        %s2072 = smul.u32 4, %s20
        %p2073 = scmp.eq.s32.totalorder %s21, 0
        // Predicated region
        $region56: #{forward.8} parent=50 // pred_check
          %p2074 = pneg %p2073
        $region57: #{forward.8} parent=50 // pred_check_branch
          %2076 = sbr.rel (%p2074) target = $region59
        $region58: #{forward.8} parent=50 // pred_region
          %2077 = vst [vmem:[#allocation2] sm:$0xff] 0.0
          %2078 = vst [vmem:[#allocation2 + $0x8] sm:$0xff] 0.0
          %2079 = vst [vmem:[#allocation2 + $0x10] sm:$0xff] 0.0
          %2080 = vst [vmem:[#allocation2 + $0x18] sm:$0xff] 0.0
        $region59: #{forward.8} parent=50 // pred_fallthru
          _
        %v2081 = vld [vmem:[#allocation2] sm:$0xff]
        %v2082 = vld [vmem:[#allocation2 + $0x8] sm:$0xff]
        %v2083 = vld [vmem:[#allocation2 + $0x10] sm:$0xff]
        %v2084 = vld [vmem:[#allocation2 + $0x18] sm:$0xff]
        %v2085 = vld [vmem:[%s2054] sm:$0xff]
        %v2086 = vld [vmem:[%s2054 + $0x8] sm:$0xff]
        %v2087 = vld [vmem:[%s2054 + $0x10] sm:$0xff]
        %v2088 = vld [vmem:[%s2054 + $0x18] sm:$0xff]
        %v2089 = vld [vmem:[%s2054 + $0x20] sm:$0xff]
        %v2090 = vld [vmem:[%s2054 + $0x28] sm:$0xff]
        %v2091 = vld [vmem:[%s2054 + $0x30] sm:$0xff]
        %v2092 = vld [vmem:[%s2054 + $0x38] sm:$0xff]
        %v2093 = vld [vmem:[%s2054 + $0x40] sm:$0xff]
        %v2094 = vld [vmem:[%s2054 + $0x48] sm:$0xff]
        %v2095 = vld [vmem:[%s2054 + $0x50] sm:$0xff]
        %v2096 = vld [vmem:[%s2054 + $0x58] sm:$0xff]
        %v2097 = vld [vmem:[%s2054 + $0x60] sm:$0xff]
        %v2098 = vld [vmem:[%s2054 + $0x68] sm:$0xff]
        %v2099 = vld [vmem:[%s2008] sm:$0xff]
        %v2100 = vld [vmem:[%s2008 + $0x8] sm:$0xff]
        %v2101 = vld [vmem:[%s2008 + $0x10] sm:$0xff]
        %v2102 = vld [vmem:[%s2008 + $0x18] sm:$0xff]
        %v2103 = vld [vmem:[%s2008 + $0x20] sm:$0xff]
        %v2104 = vld [vmem:[%s2008 + $0x28] sm:$0xff]
        %v2105 = vld [vmem:[%s2008 + $0x30] sm:$0xff]
        %v2106 = vld [vmem:[%s2008 + $0x38] sm:$0xff]
        %v2107 = vld [vmem:[%s2008 + $0x40] sm:$0xff]
        %v2108 = vld [vmem:[%s2008 + $0x48] sm:$0xff]
        %v2109 = vld [vmem:[%s2008 + $0x50] sm:$0xff]
        %v2110 = vld [vmem:[%s2008 + $0x58] sm:$0xff]
        %v2111 = vld [vmem:[%s2008 + $0x60] sm:$0xff]
        %v2112 = vld [vmem:[%s2008 + $0x68] sm:$0xff]
        %v2113 = vld [vmem:[%s2008 + $0x70] sm:$0xff]
        %v2114 = vld [vmem:[%s2008 + $0x78] sm:$0xff]
        %v2115 = vld [vmem:[%s2008 + $0x80] sm:$0xff]
        %v2116 = vld [vmem:[%s2008 + $0x88] sm:$0xff]
        %v2117 = vld [vmem:[%s2008 + $0x90] sm:$0xff]
        %v2118 = vld [vmem:[%s2008 + $0x98] sm:$0xff]
        %v2119 = vld [vmem:[%s2008 + $0xa0] sm:$0xff]
        %v2120 = vld [vmem:[%s2008 + $0xa8] sm:$0xff]
        %v2121 = vld [vmem:[%s2008 + $0xb0] sm:$0xff]
        %v2122 = vld [vmem:[%s2008 + $0xb8] sm:$0xff]
        %v2123 = vld [vmem:[%s2008 + $0xc0] sm:$0xff]
        %v2124 = vld [vmem:[%s2008 + $0xc8] sm:$0xff]
        %v2125 = vld [vmem:[%s2008 + $0xd0] sm:$0xff]
        %v2126 = vld [vmem:[%s2008 + $0xd8] sm:$0xff]
        %v2127 = vld [vmem:[%s2008 + $0xe0] sm:$0xff]
        %v2128 = vld [vmem:[%s2008 + $0xe8] sm:$0xff]
        %v2129 = vld [vmem:[%s2008 + $0xf0] sm:$0xff]
        %v2130 = vld [vmem:[%s2008 + $0xf8] sm:$0xff]
        %v2131 = vld [vmem:[%s2008 + $0x100] sm:$0xff]
        %v2132 = vld [vmem:[%s2008 + $0x108] sm:$0xff]
        %v2133 = vld [vmem:[%s2008 + $0x110] sm:$0xff]
        %v2134 = vld [vmem:[%s2008 + $0x118] sm:$0xff]
        %v2135 = vld [vmem:[%s2008 + $0x120] sm:$0xff]
        %v2136 = vld [vmem:[%s2008 + $0x128] sm:$0xff]
        %v2137 = vld [vmem:[%s2008 + $0x130] sm:$0xff]
        %v2138 = vld [vmem:[%s2008 + $0x138] sm:$0xff]
        %v2139 = vld [vmem:[%s2008 + $0x140] sm:$0xff]
        %v2140 = vld [vmem:[%s2008 + $0x148] sm:$0xff]
        %v2141 = vld [vmem:[%s2008 + $0x150] sm:$0xff]
        %v2142 = vld [vmem:[%s2008 + $0x158] sm:$0xff]
        %v2143 = vld [vmem:[%s2008 + $0x160] sm:$0xff]
        %v2144 = vld [vmem:[%s2008 + $0x168] sm:$0xff]
        %v2145 = vld [vmem:[%s2008 + $0x170] sm:$0xff]
        %v2146 = vld [vmem:[%s2008 + $0x178] sm:$0xff]
        %v2147 = vld [vmem:[%s2008 + $0x180] sm:$0xff]
        %v2148 = vld [vmem:[%s2008 + $0x188] sm:$0xff]
        %v2149 = vld [vmem:[%s2008 + $0x190] sm:$0xff]
        %v2150 = vld [vmem:[%s2008 + $0x198] sm:$0xff]
        %v2151 = vld [vmem:[%s2008 + $0x1a0] sm:$0xff]
        %v2152 = vld [vmem:[%s2008 + $0x1a8] sm:$0xff]
        %v2153 = vld [vmem:[%s2008 + $0x1b0] sm:$0xff]
        %v2154 = vld [vmem:[%s2008 + $0x1b8] sm:$0xff]
        %v2155 = vld [vmem:[%s2008 + $0x1c0] sm:$0xff]
        %v2156 = vld [vmem:[%s2008 + $0x1c8] sm:$0xff]
        %v2157 = vld [vmem:[%s2008 + $0x1d0] sm:$0xff]
        %v2158 = vld [vmem:[%s2008 + $0x1d8] sm:$0xff]
        %v2159 = vld [vmem:[%s2008 + $0x1e0] sm:$0xff]
        %v2160 = vld [vmem:[%s2008 + $0x1e8] sm:$0xff]
        %v2161 = vld [vmem:[%s2008 + $0x1f0] sm:$0xff]
        %v2162 = vld [vmem:[%s2008 + $0x1f8] sm:$0xff]
        %v2163 = vld [vmem:[%s2008 + $0x200] sm:$0xff]
        %v2164 = vld [vmem:[%s2008 + $0x208] sm:$0xff]
        %v2165 = vld [vmem:[%s2008 + $0x210] sm:$0xff]
        %v2166 = vld [vmem:[%s2008 + $0x218] sm:$0xff]
        %v2167 = vld [vmem:[%s2008 + $0x220] sm:$0xff]
        %v2168 = vld [vmem:[%s2008 + $0x228] sm:$0xff]
        %v2169 = vld [vmem:[%s2008 + $0x230] sm:$0xff]
        %v2170 = vld [vmem:[%s2008 + $0x238] sm:$0xff]
        %v2171 = vld [vmem:[%s2008 + $0x240] sm:$0xff]
        %v2172 = vld [vmem:[%s2008 + $0x248] sm:$0xff]
        %v2173 = vld [vmem:[%s2008 + $0x250] sm:$0xff]
        %v2174 = vld [vmem:[%s2008 + $0x258] sm:$0xff]
        %v2175 = vld [vmem:[%s2008 + $0x260] sm:$0xff]
        %v2176 = vld [vmem:[%s2008 + $0x268] sm:$0xff]
        %v2177 = vld [vmem:[%s2008 + $0x270] sm:$0xff]
        %v2178 = vld [vmem:[%s2008 + $0x278] sm:$0xff]
        %v2179 = vld [vmem:[%s2008 + $0x280] sm:$0xff]
        %v2180 = vld [vmem:[%s2008 + $0x288] sm:$0xff]
        %v2181 = vld [vmem:[%s2008 + $0x290] sm:$0xff]
        %v2182 = vld [vmem:[%s2008 + $0x298] sm:$0xff]
        %v2183 = vld [vmem:[%s2008 + $0x2a0] sm:$0xff]
        %v2184 = vld [vmem:[%s2008 + $0x2a8] sm:$0xff]
        %v2185 = vld [vmem:[%s2008 + $0x2b0] sm:$0xff]
        %v2186 = vld [vmem:[%s2008 + $0x2b8] sm:$0xff]
        %v2187 = vld [vmem:[%s2008 + $0x2c0] sm:$0xff]
        %v2188 = vld [vmem:[%s2008 + $0x2c8] sm:$0xff]
        %v2189 = vld [vmem:[%s2008 + $0x2d0] sm:$0xff]
        %v2190 = vld [vmem:[%s2008 + $0x2d8] sm:$0xff]
        %v2191 = vld [vmem:[%s2008 + $0x2e0] sm:$0xff]
        %v2192 = vld [vmem:[%s2008 + $0x2e8] sm:$0xff]
        %v2193 = vld [vmem:[%s2008 + $0x2f0] sm:$0xff]
        %v2194 = vld [vmem:[%s2008 + $0x2f8] sm:$0xff]
        %v2195 = vld [vmem:[%s2008 + $0x300] sm:$0xff]
        %v2196 = vld [vmem:[%s2008 + $0x308] sm:$0xff]
        %v2197 = vld [vmem:[%s2008 + $0x310] sm:$0xff]
        %v2198 = vld [vmem:[%s2008 + $0x318] sm:$0xff]
        %v2199 = vld [vmem:[%s2008 + $0x320] sm:$0xff]
        %v2200 = vld [vmem:[%s2008 + $0x328] sm:$0xff]
        %v2201 = vld [vmem:[%s2008 + $0x330] sm:$0xff]
        %v2202 = vld [vmem:[%s2008 + $0x338] sm:$0xff]
        %v2203 = vld [vmem:[%s2008 + $0x340] sm:$0xff]
        %v2204 = vld [vmem:[%s2008 + $0x348] sm:$0xff]
        %v2205 = vld [vmem:[%s2008 + $0x350] sm:$0xff]
        %v2206 = vld [vmem:[%s2008 + $0x358] sm:$0xff]
        %v2207 = vld [vmem:[%s2008 + $0x360] sm:$0xff]
        %v2208 = vld [vmem:[%s2008 + $0x368] sm:$0xff]
        %v2209 = vld [vmem:[%s2008 + $0x370] sm:$0xff]
        %v2210 = vld [vmem:[%s2008 + $0x378] sm:$0xff]
        %v2211 = vld [vmem:[%s2008 + $0x380] sm:$0xff]
        %v2212 = vld [vmem:[%s2008 + $0x388] sm:$0xff]
        %v2213 = vld [vmem:[%s2008 + $0x390] sm:$0xff]
        %v2214 = vld [vmem:[%s2008 + $0x398] sm:$0xff]
        %v2215 = vld [vmem:[%s2008 + $0x3a0] sm:$0xff]
        %v2216 = vld [vmem:[%s2008 + $0x3a8] sm:$0xff]
        %v2217 = vld [vmem:[%s2008 + $0x3b0] sm:$0xff]
        %v2218 = vld [vmem:[%s2008 + $0x3b8] sm:$0xff]
        %v2219 = vld [vmem:[%s2008 + $0x3c0] sm:$0xff]
        %v2220 = vld [vmem:[%s2008 + $0x3c8] sm:$0xff]
        %v2221 = vld [vmem:[%s2008 + $0x3d0] sm:$0xff]
        %v2222 = vld [vmem:[%s2008 + $0x3d8] sm:$0xff]
        %v2223 = vld [vmem:[%s2008 + $0x3e0] sm:$0xff]
        %v2224 = vld [vmem:[%s2008 + $0x3e8] sm:$0xff]
        %v2225 = vld [vmem:[%s2008 + $0x3f0] sm:$0xff]
        %v2226 = vld [vmem:[%s2008 + $0x3f8] sm:$0xff]
        %v2227 = vld [vmem:[%s2008 + $0x400] sm:$0xff]
        %v2228 = vld [vmem:[%s2008 + $0x408] sm:$0xff]
        %v2229 = vld [vmem:[%s2008 + $0x410] sm:$0xff]
        %v2230 = vld [vmem:[%s2008 + $0x418] sm:$0xff]
        %v2231 = vld [vmem:[%s2008 + $0x420] sm:$0xff]
        %v2232 = vld [vmem:[%s2008 + $0x428] sm:$0xff]
        %v2233 = vld [vmem:[%s2008 + $0x430] sm:$0xff]
        %v2234 = vld [vmem:[%s2008 + $0x438] sm:$0xff]
        %v2235 = vld [vmem:[%s2008 + $0x440] sm:$0xff]
        %v2236 = vld [vmem:[%s2008 + $0x448] sm:$0xff]
        %v2237 = vld [vmem:[%s2008 + $0x450] sm:$0xff]
        %v2238 = vld [vmem:[%s2008 + $0x458] sm:$0xff]
        %v2239 = vld [vmem:[%s2008 + $0x460] sm:$0xff]
        %v2240 = vld [vmem:[%s2008 + $0x468] sm:$0xff]
        %v2241 = vld [vmem:[%s2008 + $0x470] sm:$0xff]
        %v2242 = vld [vmem:[%s2008 + $0x478] sm:$0xff]
        %v2243 = vld [vmem:[%s2008 + $0x480] sm:$0xff]
        %v2244 = vld [vmem:[%s2008 + $0x488] sm:$0xff]
        %v2245 = vld [vmem:[%s2008 + $0x490] sm:$0xff]
        %v2246 = vld [vmem:[%s2008 + $0x498] sm:$0xff]
        %v2247 = vld [vmem:[%s2008 + $0x4a0] sm:$0xff]
        %v2248 = vld [vmem:[%s2008 + $0x4a8] sm:$0xff]
        %v2249 = vld [vmem:[%s2008 + $0x4b0] sm:$0xff]
        %v2250 = vld [vmem:[%s2008 + $0x4b8] sm:$0xff]
        %v2251 = vld [vmem:[%s2008 + $0x4c0] sm:$0xff]
        %v2252 = vld [vmem:[%s2008 + $0x4c8] sm:$0xff]
        %v2253 = vld [vmem:[%s2008 + $0x4d0] sm:$0xff]
        %v2254 = vld [vmem:[%s2008 + $0x4d8] sm:$0xff]
        %v2255 = vld [vmem:[%s2008 + $0x4e0] sm:$0xff]
        %v2256 = vld [vmem:[%s2008 + $0x4e8] sm:$0xff]
        %v2257 = vld [vmem:[%s2008 + $0x4f0] sm:$0xff]
        %v2258 = vld [vmem:[%s2008 + $0x4f8] sm:$0xff]
        %v2259 = vld [vmem:[%s2008 + $0x500] sm:$0xff]
        %v2260 = vld [vmem:[%s2008 + $0x508] sm:$0xff]
        %v2261 = vld [vmem:[%s2008 + $0x510] sm:$0xff]
        %v2262 = vld [vmem:[%s2008 + $0x518] sm:$0xff]
        %v2263 = vld [vmem:[%s2008 + $0x520] sm:$0xff]
        %v2264 = vld [vmem:[%s2008 + $0x528] sm:$0xff]
        %v2265 = vld [vmem:[%s2008 + $0x530] sm:$0xff]
        %v2266 = vld [vmem:[%s2008 + $0x538] sm:$0xff]
        %v2267 = vld [vmem:[%s2008 + $0x540] sm:$0xff]
        %v2268 = vld [vmem:[%s2008 + $0x548] sm:$0xff]
        %v2269 = vld [vmem:[%s2008 + $0x550] sm:$0xff]
        %v2270 = vld [vmem:[%s2008 + $0x558] sm:$0xff]
        %v2271 = vld [vmem:[%s2008 + $0x560] sm:$0xff]
        %v2272 = vld [vmem:[%s2008 + $0x568] sm:$0xff]
        %v2273 = vld [vmem:[%s2008 + $0x570] sm:$0xff]
        %v2274 = vld [vmem:[%s2008 + $0x578] sm:$0xff]
        %v2275 = vld [vmem:[%s2008 + $0x580] sm:$0xff]
        %v2276 = vld [vmem:[%s2008 + $0x588] sm:$0xff]
        %v2277 = vld [vmem:[%s2008 + $0x590] sm:$0xff]
        %v2278 = vld [vmem:[%s2008 + $0x598] sm:$0xff]
        %v2279 = vld [vmem:[%s2008 + $0x5a0] sm:$0xff]
        %v2280 = vld [vmem:[%s2008 + $0x5a8] sm:$0xff]
        %v2281 = vld [vmem:[%s2008 + $0x5b0] sm:$0xff]
        %v2282 = vld [vmem:[%s2008 + $0x5b8] sm:$0xff]
        %v2283 = vld [vmem:[%s2008 + $0x5c0] sm:$0xff]
        %v2284 = vld [vmem:[%s2008 + $0x5c8] sm:$0xff]
        %v2285 = vld [vmem:[%s2008 + $0x5d0] sm:$0xff]
        %v2286 = vld [vmem:[%s2008 + $0x5d8] sm:$0xff]
        %v2287 = vld [vmem:[%s2008 + $0x5e0] sm:$0xff]
        %v2288 = vld [vmem:[%s2008 + $0x5e8] sm:$0xff]
        %v2289 = vld [vmem:[%s2008 + $0x5f0] sm:$0xff]
        %v2290 = vld [vmem:[%s2008 + $0x5f8] sm:$0xff]
        %v2291 = vld [vmem:[%s2008 + $0x600] sm:$0xff]
        %v2292 = vld [vmem:[%s2008 + $0x608] sm:$0xff]
        %v2293 = vld [vmem:[%s2008 + $0x610] sm:$0xff]
        %v2294 = vld [vmem:[%s2008 + $0x618] sm:$0xff]
        %v2295 = vld [vmem:[%s2008 + $0x620] sm:$0xff]
        %v2296 = vld [vmem:[%s2008 + $0x628] sm:$0xff]
        %v2297 = vld [vmem:[%s2008 + $0x630] sm:$0xff]
        %v2298 = vld [vmem:[%s2008 + $0x638] sm:$0xff]
        %v2299 = vld [vmem:[%s2008 + $0x640] sm:$0xff]
        %v2300 = vld [vmem:[%s2008 + $0x648] sm:$0xff]
        %v2301 = vld [vmem:[%s2008 + $0x650] sm:$0xff]
        %v2302 = vld [vmem:[%s2008 + $0x658] sm:$0xff]
        %v2303 = vld [vmem:[%s2008 + $0x660] sm:$0xff]
        %v2304 = vld [vmem:[%s2008 + $0x668] sm:$0xff]
        %v2305 = vld [vmem:[%s2008 + $0x670] sm:$0xff]
        %v2306 = vld [vmem:[%s2008 + $0x678] sm:$0xff]
        %v2307 = vld [vmem:[%s2008 + $0x680] sm:$0xff]
        %v2308 = vld [vmem:[%s2008 + $0x688] sm:$0xff]
        %v2309 = vld [vmem:[%s2008 + $0x690] sm:$0xff]
        %v2310 = vld [vmem:[%s2008 + $0x698] sm:$0xff]
        %v2311 = vld [vmem:[%s2008 + $0x6a0] sm:$0xff]
        %v2312 = vld [vmem:[%s2008 + $0x6a8] sm:$0xff]
        %v2313 = vld [vmem:[%s2008 + $0x6b0] sm:$0xff]
        %v2314 = vld [vmem:[%s2008 + $0x6b8] sm:$0xff]
        %v2315 = vld [vmem:[%s2008 + $0x6c0] sm:$0xff]
        %v2316 = vld [vmem:[%s2008 + $0x6c8] sm:$0xff]
        %v2317 = vld [vmem:[%s2008 + $0x6d0] sm:$0xff]
        %v2318 = vld [vmem:[%s2008 + $0x6d8] sm:$0xff]
        %v2319 = vld [vmem:[%s2008 + $0x6e0] sm:$0xff]
        %v2320 = vld [vmem:[%s2008 + $0x6e8] sm:$0xff]
        %v2321 = vld [vmem:[%s2008 + $0x6f0] sm:$0xff]
        %v2322 = vld [vmem:[%s2008 + $0x6f8] sm:$0xff]
        %v2323 = vld [vmem:[%s2008 + $0x700] sm:$0xff]
        %v2324 = vld [vmem:[%s2008 + $0x708] sm:$0xff]
        %v2325 = vld [vmem:[%s2008 + $0x710] sm:$0xff]
        %v2326 = vld [vmem:[%s2008 + $0x718] sm:$0xff]
        %v2327 = vld [vmem:[%s2008 + $0x720] sm:$0xff]
        %v2328 = vld [vmem:[%s2008 + $0x728] sm:$0xff]
        %v2329 = vld [vmem:[%s2008 + $0x730] sm:$0xff]
        %v2330 = vld [vmem:[%s2008 + $0x738] sm:$0xff]
        %v2331 = vld [vmem:[%s2008 + $0x740] sm:$0xff]
        %v2332 = vld [vmem:[%s2008 + $0x748] sm:$0xff]
        %v2333 = vld [vmem:[%s2008 + $0x750] sm:$0xff]
        %v2334 = vld [vmem:[%s2008 + $0x758] sm:$0xff]
        %v2335 = vld [vmem:[%s2008 + $0x760] sm:$0xff]
        %v2336 = vld [vmem:[%s2008 + $0x768] sm:$0xff]
        %v2337 = vld [vmem:[%s2008 + $0x770] sm:$0xff]
        %v2338 = vld [vmem:[%s2008 + $0x778] sm:$0xff]
        %v2339 = vld [vmem:[%s2008 + $0x780] sm:$0xff]
        %v2340 = vld [vmem:[%s2008 + $0x788] sm:$0xff]
        %v2341 = vld [vmem:[%s2008 + $0x790] sm:$0xff]
        %v2342 = vld [vmem:[%s2008 + $0x798] sm:$0xff]
        %v2343 = vld [vmem:[%s2008 + $0x7a0] sm:$0xff]
        %v2344 = vld [vmem:[%s2008 + $0x7a8] sm:$0xff]
        %v2345 = vld [vmem:[%s2008 + $0x7b0] sm:$0xff]
        %v2346 = vld [vmem:[%s2008 + $0x7b8] sm:$0xff]
        %v2347 = vld [vmem:[%s2008 + $0x7c0] sm:$0xff]
        %v2348 = vld [vmem:[%s2008 + $0x7c8] sm:$0xff]
        %v2349 = vld [vmem:[%s2008 + $0x7d0] sm:$0xff]
        %v2350 = vld [vmem:[%s2008 + $0x7d8] sm:$0xff]
        %v2351 = vld [vmem:[%s2008 + $0x7e0] sm:$0xff]
        %v2352 = vld [vmem:[%s2008 + $0x7e8] sm:$0xff]
        %v2353 = vld [vmem:[%s2008 + $0x7f0] sm:$0xff]
        %v2354 = vld [vmem:[%s2008 + $0x7f8] sm:$0xff]
        %v2355 = vld [vmem:[%s2008 + $0x800] sm:$0xff]
        %v2356 = vld [vmem:[%s2008 + $0x808] sm:$0xff]
        %v2357 = vld [vmem:[%s2008 + $0x810] sm:$0xff]
        %v2358 = vld [vmem:[%s2008 + $0x818] sm:$0xff]
        %v2359 = vld [vmem:[%s2008 + $0x820] sm:$0xff]
        %v2360 = vld [vmem:[%s2008 + $0x828] sm:$0xff]
        %v2361 = vld [vmem:[%s2008 + $0x830] sm:$0xff]
        %v2362 = vld [vmem:[%s2008 + $0x838] sm:$0xff]
        %v2363 = vld [vmem:[%s2008 + $0x840] sm:$0xff]
        %v2364 = vld [vmem:[%s2008 + $0x848] sm:$0xff]
        %v2365 = vld [vmem:[%s2008 + $0x850] sm:$0xff]
        %v2366 = vld [vmem:[%s2008 + $0x858] sm:$0xff]
        %v2367 = vld [vmem:[%s2008 + $0x860] sm:$0xff]
        %v2368 = vld [vmem:[%s2008 + $0x868] sm:$0xff]
        %v2369 = vld [vmem:[%s2008 + $0x870] sm:$0xff]
        %v2370 = vld [vmem:[%s2008 + $0x878] sm:$0xff]
        %v2371 = vld [vmem:[%s2008 + $0x880] sm:$0xff]
        %v2372 = vld [vmem:[%s2008 + $0x888] sm:$0xff]
        %v2373 = vld [vmem:[%s2008 + $0x890] sm:$0xff]
        %v2374 = vld [vmem:[%s2008 + $0x898] sm:$0xff]
        %v2375 = vld [vmem:[%s2008 + $0x8a0] sm:$0xff]
        %v2376 = vld [vmem:[%s2008 + $0x8a8] sm:$0xff]
        %v2377 = vld [vmem:[%s2008 + $0x8b0] sm:$0xff]
        %v2378 = vld [vmem:[%s2008 + $0x8b8] sm:$0xff]
        %v2379 = vld [vmem:[%s2008 + $0x8c0] sm:$0xff]
        %v2380 = vld [vmem:[%s2008 + $0x8c8] sm:$0xff]
        %v2381 = vld [vmem:[%s2008 + $0x8d0] sm:$0xff]
        %v2382 = vld [vmem:[%s2008 + $0x8d8] sm:$0xff]
        %v2383 = vld [vmem:[%s2008 + $0x8e0] sm:$0xff]
        %v2384 = vld [vmem:[%s2008 + $0x8e8] sm:$0xff]
        %v2385 = vld [vmem:[%s2008 + $0x8f0] sm:$0xff]
        %v2386 = vld [vmem:[%s2008 + $0x8f8] sm:$0xff]
        %v2387 = vld [vmem:[%s2008 + $0x900] sm:$0xff]
        %v2388 = vld [vmem:[%s2008 + $0x908] sm:$0xff]
        %v2389 = vld [vmem:[%s2008 + $0x910] sm:$0xff]
        %v2390 = vld [vmem:[%s2008 + $0x918] sm:$0xff]
        %v2391 = vld [vmem:[%s2008 + $0x920] sm:$0xff]
        %v2392 = vld [vmem:[%s2008 + $0x928] sm:$0xff]
        %v2393 = vld [vmem:[%s2008 + $0x930] sm:$0xff]
        %v2394 = vld [vmem:[%s2008 + $0x938] sm:$0xff]
        %v2395 = vld [vmem:[%s2008 + $0x940] sm:$0xff]
        %v2396 = vld [vmem:[%s2008 + $0x948] sm:$0xff]
        %v2397 = vld [vmem:[%s2008 + $0x950] sm:$0xff]
        %v2398 = vld [vmem:[%s2008 + $0x958] sm:$0xff]
        %v2399 = vld [vmem:[%s2008 + $0x960] sm:$0xff]
        %v2400 = vld [vmem:[%s2008 + $0x968] sm:$0xff]
        %v2401 = vld [vmem:[%s2008 + $0x970] sm:$0xff]
        %v2402 = vld [vmem:[%s2008 + $0x978] sm:$0xff]
        %v2403 = vld [vmem:[%s2008 + $0x980] sm:$0xff]
        %v2404 = vld [vmem:[%s2008 + $0x988] sm:$0xff]
        %v2405 = vld [vmem:[%s2008 + $0x990] sm:$0xff]
        %v2406 = vld [vmem:[%s2008 + $0x998] sm:$0xff]
        %v2407 = vld [vmem:[%s2008 + $0x9a0] sm:$0xff]
        %v2408 = vld [vmem:[%s2008 + $0x9a8] sm:$0xff]
        %v2409 = vld [vmem:[%s2008 + $0x9b0] sm:$0xff]
        %v2410 = vld [vmem:[%s2008 + $0x9b8] sm:$0xff]
        %v2411 = vld [vmem:[%s2008 + $0x9c0] sm:$0xff]
        %v2412 = vld [vmem:[%s2008 + $0x9c8] sm:$0xff]
        %v2413 = vld [vmem:[%s2008 + $0x9d0] sm:$0xff]
        %v2414 = vld [vmem:[%s2008 + $0x9d8] sm:$0xff]
        %v2415 = vld [vmem:[%s2008 + $0x9e0] sm:$0xff]
        %v2416 = vld [vmem:[%s2008 + $0x9e8] sm:$0xff]
        %v2417 = vld [vmem:[%s2008 + $0x9f0] sm:$0xff]
        %v2418 = vld [vmem:[%s2008 + $0x9f8] sm:$0xff]
        %v2419 = vld [vmem:[%s2008 + $0xa00] sm:$0xff]
        %v2420 = vld [vmem:[%s2008 + $0xa08] sm:$0xff]
        %v2421 = vld [vmem:[%s2008 + $0xa10] sm:$0xff]
        %v2422 = vld [vmem:[%s2008 + $0xa18] sm:$0xff]
        %v2423 = vld [vmem:[%s2008 + $0xa20] sm:$0xff]
        %v2424 = vld [vmem:[%s2008 + $0xa28] sm:$0xff]
        %v2425 = vld [vmem:[%s2008 + $0xa30] sm:$0xff]
        %v2426 = vld [vmem:[%s2008 + $0xa38] sm:$0xff]
        %v2427 = vld [vmem:[%s2008 + $0xa40] sm:$0xff]
        %v2428 = vld [vmem:[%s2008 + $0xa48] sm:$0xff]
        %v2429 = vld [vmem:[%s2008 + $0xa50] sm:$0xff]
        %v2430 = vld [vmem:[%s2008 + $0xa58] sm:$0xff]
        %v2431 = vld [vmem:[%s2008 + $0xa60] sm:$0xff]
        %v2432 = vld [vmem:[%s2008 + $0xa68] sm:$0xff]
        %v2433 = vld [vmem:[%s2008 + $0xa70] sm:$0xff]
        %v2434 = vld [vmem:[%s2008 + $0xa78] sm:$0xff]
        %v2435 = vld [vmem:[%s2008 + $0xa80] sm:$0xff]
        %v2436 = vld [vmem:[%s2008 + $0xa88] sm:$0xff]
        %v2437 = vld [vmem:[%s2008 + $0xa90] sm:$0xff]
        %v2438 = vld [vmem:[%s2008 + $0xa98] sm:$0xff]
        %v2439 = vld [vmem:[%s2008 + $0xaa0] sm:$0xff]
        %v2440 = vld [vmem:[%s2008 + $0xaa8] sm:$0xff]
        %v2441 = vld [vmem:[%s2008 + $0xab0] sm:$0xff]
        %v2442 = vld [vmem:[%s2008 + $0xab8] sm:$0xff]
        %v2443 = vld [vmem:[%s2008 + $0xac0] sm:$0xff]
        %v2444 = vld [vmem:[%s2008 + $0xac8] sm:$0xff]
        %v2445 = vld [vmem:[%s2008 + $0xad0] sm:$0xff]
        %v2446 = vld [vmem:[%s2008 + $0xad8] sm:$0xff]
        %v2447 = vld [vmem:[%s2008 + $0xae0] sm:$0xff]
        %v2448 = vld [vmem:[%s2008 + $0xae8] sm:$0xff]
        %v2449 = vld [vmem:[%s2008 + $0xaf0] sm:$0xff]
        %v2450 = vld [vmem:[%s2008 + $0xaf8] sm:$0xff]
        %v2451 = vld [vmem:[%s2008 + $0xb00] sm:$0xff]
        %v2452 = vld [vmem:[%s2008 + $0xb08] sm:$0xff]
        %v2453 = vld [vmem:[%s2008 + $0xb10] sm:$0xff]
        %v2454 = vld [vmem:[%s2008 + $0xb18] sm:$0xff]
        %v2455 = vld [vmem:[%s2008 + $0xb20] sm:$0xff]
        %v2456 = vld [vmem:[%s2008 + $0xb28] sm:$0xff]
        %v2457 = vld [vmem:[%s2008 + $0xb30] sm:$0xff]
        %v2458 = vld [vmem:[%s2008 + $0xb38] sm:$0xff]
        %v2459 = vld [vmem:[%s2008 + $0xb40] sm:$0xff]
        %v2460 = vld [vmem:[%s2008 + $0xb48] sm:$0xff]
        %v2461 = vld [vmem:[%s2008 + $0xb50] sm:$0xff]
        %v2462 = vld [vmem:[%s2008 + $0xb58] sm:$0xff]
        %v2463 = vld [vmem:[%s2008 + $0xb60] sm:$0xff]
        %v2464 = vld [vmem:[%s2008 + $0xb68] sm:$0xff]
        %v2465 = vld [vmem:[%s2008 + $0xb70] sm:$0xff]
        %v2466 = vld [vmem:[%s2008 + $0xb78] sm:$0xff]
        %v2467 = vld [vmem:[%s2008 + $0xb80] sm:$0xff]
        %v2468 = vld [vmem:[%s2008 + $0xb88] sm:$0xff]
        %v2469 = vld [vmem:[%s2008 + $0xb90] sm:$0xff]
        %v2470 = vld [vmem:[%s2008 + $0xb98] sm:$0xff]
        %v2471 = vld [vmem:[%s2008 + $0xba0] sm:$0xff]
        %v2472 = vld [vmem:[%s2008 + $0xba8] sm:$0xff]
        %v2473 = vld [vmem:[%s2008 + $0xbb0] sm:$0xff]
        %v2474 = vld [vmem:[%s2008 + $0xbb8] sm:$0xff]
        %v2475 = vld [vmem:[%s2008 + $0xbc0] sm:$0xff]
        %v2476 = vld [vmem:[%s2008 + $0xbc8] sm:$0xff]
        %v2477 = vld [vmem:[%s2008 + $0xbd0] sm:$0xff]
        %v2478 = vld [vmem:[%s2008 + $0xbd8] sm:$0xff]
        %v2479 = vld [vmem:[%s2008 + $0xbe0] sm:$0xff]
        %v2480 = vld [vmem:[%s2008 + $0xbe8] sm:$0xff]
        %v2481 = vld [vmem:[%s2008 + $0xbf0] sm:$0xff]
        %v2482 = vld [vmem:[%s2008 + $0xbf8] sm:$0xff]
        %v2483 = vld [vmem:[%s2008 + $0xc00] sm:$0xff]
        %v2484 = vld [vmem:[%s2008 + $0xc08] sm:$0xff]
        %v2485 = vld [vmem:[%s2008 + $0xc10] sm:$0xff]
        %v2486 = vld [vmem:[%s2008 + $0xc18] sm:$0xff]
        %v2487 = vld [vmem:[%s2008 + $0xc20] sm:$0xff]
        %v2488 = vld [vmem:[%s2008 + $0xc28] sm:$0xff]
        %v2489 = vld [vmem:[%s2008 + $0xc30] sm:$0xff]
        %v2490 = vld [vmem:[%s2008 + $0xc38] sm:$0xff]
        %v2491 = vld [vmem:[%s2008 + $0xc40] sm:$0xff]
        %v2492 = vld [vmem:[%s2008 + $0xc48] sm:$0xff]
        %v2493 = vld [vmem:[%s2008 + $0xc50] sm:$0xff]
        %v2494 = vld [vmem:[%s2008 + $0xc58] sm:$0xff]
        %v2495 = vld [vmem:[%s2008 + $0xc60] sm:$0xff]
        %v2496 = vld [vmem:[%s2008 + $0xc68] sm:$0xff]
        %v2497 = vld [vmem:[%s2008 + $0xc70] sm:$0xff]
        %v2498 = vld [vmem:[%s2008 + $0xc78] sm:$0xff]
        %v2499 = vld [vmem:[%s2008 + $0xc80] sm:$0xff]
        %v2500 = vld [vmem:[%s2008 + $0xc88] sm:$0xff]
        %v2501 = vld [vmem:[%s2008 + $0xc90] sm:$0xff]
        %v2502 = vld [vmem:[%s2008 + $0xc98] sm:$0xff]
        %v2503 = vld [vmem:[%s2008 + $0xca0] sm:$0xff]
        %v2504 = vld [vmem:[%s2008 + $0xca8] sm:$0xff]
        %v2505 = vld [vmem:[%s2008 + $0xcb0] sm:$0xff]
        %v2506 = vld [vmem:[%s2008 + $0xcb8] sm:$0xff]
        %v2507 = vld [vmem:[%s2008 + $0xcc0] sm:$0xff]
        %v2508 = vld [vmem:[%s2008 + $0xcc8] sm:$0xff]
        %v2509 = vld [vmem:[%s2008 + $0xcd0] sm:$0xff]
        %v2510 = vld [vmem:[%s2008 + $0xcd8] sm:$0xff]
        %v2511 = vld [vmem:[%s2008 + $0xce0] sm:$0xff]
        %v2512 = vld [vmem:[%s2008 + $0xce8] sm:$0xff]
        %v2513 = vld [vmem:[%s2008 + $0xcf0] sm:$0xff]
        %v2514 = vld [vmem:[%s2008 + $0xcf8] sm:$0xff]
        %v2515 = vld [vmem:[%s2008 + $0xd00] sm:$0xff]
        %v2516 = vld [vmem:[%s2008 + $0xd08] sm:$0xff]
        %v2517 = vld [vmem:[%s2008 + $0xd10] sm:$0xff]
        %v2518 = vld [vmem:[%s2008 + $0xd18] sm:$0xff]
        %v2519 = vld [vmem:[%s2008 + $0xd20] sm:$0xff]
        %v2520 = vld [vmem:[%s2008 + $0xd28] sm:$0xff]
        %v2521 = vld [vmem:[%s2008 + $0xd30] sm:$0xff]
        %v2522 = vld [vmem:[%s2008 + $0xd38] sm:$0xff]
        %v2523 = vld [vmem:[%s2008 + $0xd40] sm:$0xff]
        %v2524 = vld [vmem:[%s2008 + $0xd48] sm:$0xff]
        %v2525 = vld [vmem:[%s2008 + $0xd50] sm:$0xff]
        %v2526 = vld [vmem:[%s2008 + $0xd58] sm:$0xff]
        %v2527 = vld [vmem:[%s2008 + $0xd60] sm:$0xff]
        %v2528 = vld [vmem:[%s2008 + $0xd68] sm:$0xff]
        %v2529 = vld [vmem:[%s2008 + $0xd70] sm:$0xff]
        %v2530 = vld [vmem:[%s2008 + $0xd78] sm:$0xff]
        %v2531 = vld [vmem:[%s2008 + $0xd80] sm:$0xff]
        %v2532 = vld [vmem:[%s2008 + $0xd88] sm:$0xff]
        %v2533 = vld [vmem:[%s2008 + $0xd90] sm:$0xff]
        %v2534 = vld [vmem:[%s2008 + $0xd98] sm:$0xff]
        %v2535 = vld [vmem:[%s2008 + $0xda0] sm:$0xff]
        %v2536 = vld [vmem:[%s2008 + $0xda8] sm:$0xff]
        %v2537 = vld [vmem:[%s2008 + $0xdb0] sm:$0xff]
        %v2538 = vld [vmem:[%s2008 + $0xdb8] sm:$0xff]
        %v2539 = vld [vmem:[%s2008 + $0xdc0] sm:$0xff]
        %v2540 = vld [vmem:[%s2008 + $0xdc8] sm:$0xff]
        %v2541 = vld [vmem:[%s2008 + $0xdd0] sm:$0xff]
        %v2542 = vld [vmem:[%s2008 + $0xdd8] sm:$0xff]
        %v2543 = vld [vmem:[%s2008 + $0xde0] sm:$0xff]
        %v2544 = vld [vmem:[%s2008 + $0xde8] sm:$0xff]
        %v2545 = vld [vmem:[%s2008 + $0xdf0] sm:$0xff]
        %v2546 = vld [vmem:[%s2008 + $0xdf8] sm:$0xff]
        %v2547 = vld [vmem:[%s2008 + $0xe00] sm:$0xff]
        %v2548 = vld [vmem:[%s2008 + $0xe08] sm:$0xff]
        %v2549 = vld [vmem:[%s2008 + $0xe10] sm:$0xff]
        %v2550 = vld [vmem:[%s2008 + $0xe18] sm:$0xff]
        %v2551 = vld [vmem:[%s2008 + $0xe20] sm:$0xff]
        %v2552 = vld [vmem:[%s2008 + $0xe28] sm:$0xff]
        %v2553 = vld [vmem:[%s2008 + $0xe30] sm:$0xff]
        %v2554 = vld [vmem:[%s2008 + $0xe38] sm:$0xff]
        %v2555 = vld [vmem:[%s2008 + $0xe40] sm:$0xff]
        %v2556 = vld [vmem:[%s2008 + $0xe48] sm:$0xff]
        %v2557 = vld [vmem:[%s2008 + $0xe50] sm:$0xff]
        %v2558 = vld [vmem:[%s2008 + $0xe58] sm:$0xff]
        %v2559 = vld [vmem:[%s2008 + $0xe60] sm:$0xff]
        %v2560 = vld [vmem:[%s2008 + $0xe68] sm:$0xff]
        %v2561 = vld [vmem:[%s2008 + $0xe70] sm:$0xff]
        %v2562 = vld [vmem:[%s2008 + $0xe78] sm:$0xff]
        %v2563 = vld [vmem:[%s2008 + $0xe80] sm:$0xff]
        %v2564 = vld [vmem:[%s2008 + $0xe88] sm:$0xff]
        %v2565 = vld [vmem:[%s2008 + $0xe90] sm:$0xff]
        %v2566 = vld [vmem:[%s2008 + $0xe98] sm:$0xff]
        %v2567 = vld [vmem:[%s2008 + $0xea0] sm:$0xff]
        %v2568 = vld [vmem:[%s2008 + $0xea8] sm:$0xff]
        %v2569 = vld [vmem:[%s2008 + $0xeb0] sm:$0xff]
        %v2570 = vld [vmem:[%s2008 + $0xeb8] sm:$0xff]
        %v2571 = vld [vmem:[%s2008 + $0xec0] sm:$0xff]
        %v2572 = vld [vmem:[%s2008 + $0xec8] sm:$0xff]
        %v2573 = vld [vmem:[%s2008 + $0xed0] sm:$0xff]
        %v2574 = vld [vmem:[%s2008 + $0xed8] sm:$0xff]
        %v2575 = vld [vmem:[%s2008 + $0xee0] sm:$0xff]
        %v2576 = vld [vmem:[%s2008 + $0xee8] sm:$0xff]
        %v2577 = vld [vmem:[%s2008 + $0xef0] sm:$0xff]
        %v2578 = vld [vmem:[%s2008 + $0xef8] sm:$0xff]
        %v2579 = vld [vmem:[%s2008 + $0xf00] sm:$0xff]
        %v2580 = vld [vmem:[%s2008 + $0xf08] sm:$0xff]
        %v2581 = vld [vmem:[%s2008 + $0xf10] sm:$0xff]
        %v2582 = vld [vmem:[%s2008 + $0xf18] sm:$0xff]
        %v2583 = vld [vmem:[%s2008 + $0xf20] sm:$0xff]
        %v2584 = vld [vmem:[%s2008 + $0xf28] sm:$0xff]
        %v2585 = vld [vmem:[%s2008 + $0xf30] sm:$0xff]
        %v2586 = vld [vmem:[%s2008 + $0xf38] sm:$0xff]
        %v2587 = vld [vmem:[%s2008 + $0xf40] sm:$0xff]
        %v2588 = vld [vmem:[%s2008 + $0xf48] sm:$0xff]
        %v2589 = vld [vmem:[%s2008 + $0xf50] sm:$0xff]
        %v2590 = vld [vmem:[%s2008 + $0xf58] sm:$0xff]
        %v2591 = vld [vmem:[%s2008 + $0xf60] sm:$0xff]
        %v2592 = vld [vmem:[%s2008 + $0xf68] sm:$0xff]
        %v2593 = vld [vmem:[%s2008 + $0xf70] sm:$0xff]
        %v2594 = vld [vmem:[%s2008 + $0xf78] sm:$0xff]
        %v2595 = vld [vmem:[%s2008 + $0xf80] sm:$0xff]
        %v2596 = vld [vmem:[%s2008 + $0xf88] sm:$0xff]
        %v2597 = vld [vmem:[%s2008 + $0xf90] sm:$0xff]
        %v2598 = vld [vmem:[%s2008 + $0xf98] sm:$0xff]
        %v2599 = vld [vmem:[%s2008 + $0xfa0] sm:$0xff]
        %v2600 = vld [vmem:[%s2008 + $0xfa8] sm:$0xff]
        %v2601 = vld [vmem:[%s2008 + $0xfb0] sm:$0xff]
        %v2602 = vld [vmem:[%s2008 + $0xfb8] sm:$0xff]
        %v2603 = vld [vmem:[%s2008 + $0xfc0] sm:$0xff]
        %v2604 = vld [vmem:[%s2008 + $0xfc8] sm:$0xff]
        %v2605 = vld [vmem:[%s2008 + $0xfd0] sm:$0xff]
        %v2606 = vld [vmem:[%s2008 + $0xfd8] sm:$0xff]
        %v2607 = vld [vmem:[%s2008 + $0xfe0] sm:$0xff]
        %v2608 = vld [vmem:[%s2008 + $0xfe8] sm:$0xff]
        %v2609 = vld [vmem:[%s2008 + $0xff0] sm:$0xff]
        %v2610 = vld [vmem:[%s2008 + $0xff8] sm:$0xff]
        %v2611 = vld [vmem:[%s2008 + $0x1000] sm:$0xff]
        %v2612 = vld [vmem:[%s2008 + $0x1008] sm:$0xff]
        %v2613 = vld [vmem:[%s2008 + $0x1010] sm:$0xff]
        %v2614 = vld [vmem:[%s2008 + $0x1018] sm:$0xff]
        %v2615 = vld [vmem:[%s2008 + $0x1020] sm:$0xff]
        %v2616 = vld [vmem:[%s2008 + $0x1028] sm:$0xff]
        %v2617 = vld [vmem:[%s2008 + $0x1030] sm:$0xff]
        %v2618 = vld [vmem:[%s2008 + $0x1038] sm:$0xff]
        %v2619 = vld [vmem:[%s2008 + $0x1040] sm:$0xff]
        %v2620 = vld [vmem:[%s2008 + $0x1048] sm:$0xff]
        %v2621 = vld [vmem:[%s2008 + $0x1050] sm:$0xff]
        %v2622 = vld [vmem:[%s2008 + $0x1058] sm:$0xff]
        %v2623 = vld [vmem:[%s2008 + $0x1060] sm:$0xff]
        %v2624 = vld [vmem:[%s2008 + $0x1068] sm:$0xff]
        %v2625 = vld [vmem:[%s2008 + $0x1070] sm:$0xff]
        %v2626 = vld [vmem:[%s2008 + $0x1078] sm:$0xff]
        %v2627 = vld [vmem:[%s2008 + $0x1080] sm:$0xff]
        %v2628 = vld [vmem:[%s2008 + $0x1088] sm:$0xff]
        %v2629 = vld [vmem:[%s2008 + $0x1090] sm:$0xff]
        %v2630 = vld [vmem:[%s2008 + $0x1098] sm:$0xff]
        %v2631 = vld [vmem:[%s2008 + $0x10a0] sm:$0xff]
        %v2632 = vld [vmem:[%s2008 + $0x10a8] sm:$0xff]
        %v2633 = vld [vmem:[%s2008 + $0x10b0] sm:$0xff]
        %v2634 = vld [vmem:[%s2008 + $0x10b8] sm:$0xff]
        %v2635 = vld [vmem:[%s2008 + $0x10c0] sm:$0xff]
        %v2636 = vld [vmem:[%s2008 + $0x10c8] sm:$0xff]
        %v2637 = vld [vmem:[%s2008 + $0x10d0] sm:$0xff]
        %v2638 = vld [vmem:[%s2008 + $0x10d8] sm:$0xff]
        %v2639 = vld [vmem:[%s2008 + $0x10e0] sm:$0xff]
        %v2640 = vld [vmem:[%s2008 + $0x10e8] sm:$0xff]
        %v2641 = vld [vmem:[%s2008 + $0x10f0] sm:$0xff]
        %v2642 = vld [vmem:[%s2008 + $0x10f8] sm:$0xff]
        %v2643 = vld [vmem:[%s2008 + $0x1100] sm:$0xff]
        %v2644 = vld [vmem:[%s2008 + $0x1108] sm:$0xff]
        %v2645 = vld [vmem:[%s2008 + $0x1110] sm:$0xff]
        %v2646 = vld [vmem:[%s2008 + $0x1118] sm:$0xff]
        %v2647 = vld [vmem:[%s2008 + $0x1120] sm:$0xff]
        %v2648 = vld [vmem:[%s2008 + $0x1128] sm:$0xff]
        %v2649 = vld [vmem:[%s2008 + $0x1130] sm:$0xff]
        %v2650 = vld [vmem:[%s2008 + $0x1138] sm:$0xff]
        %v2651 = vld [vmem:[%s2008 + $0x1140] sm:$0xff]
        %v2652 = vld [vmem:[%s2008 + $0x1148] sm:$0xff]
        %v2653 = vld [vmem:[%s2008 + $0x1150] sm:$0xff]
        %v2654 = vld [vmem:[%s2008 + $0x1158] sm:$0xff]
        %v2655 = vld [vmem:[%s2008 + $0x1160] sm:$0xff]
        %v2656 = vld [vmem:[%s2008 + $0x1168] sm:$0xff]
        %v2657 = vld [vmem:[%s2008 + $0x1170] sm:$0xff]
        %v2658 = vld [vmem:[%s2008 + $0x1178] sm:$0xff]
        %v2659 = vld [vmem:[%s2008 + $0x1180] sm:$0xff]
        %v2660 = vld [vmem:[%s2008 + $0x1188] sm:$0xff]
        %v2661 = vld [vmem:[%s2008 + $0x1190] sm:$0xff]
        %v2662 = vld [vmem:[%s2008 + $0x1198] sm:$0xff]
        %v2663 = vld [vmem:[%s2008 + $0x11a0] sm:$0xff]
        %v2664 = vld [vmem:[%s2008 + $0x11a8] sm:$0xff]
        %v2665 = vld [vmem:[%s2008 + $0x11b0] sm:$0xff]
        %v2666 = vld [vmem:[%s2008 + $0x11b8] sm:$0xff]
        %v2667 = vld [vmem:[%s2008 + $0x11c0] sm:$0xff]
        %v2668 = vld [vmem:[%s2008 + $0x11c8] sm:$0xff]
        %v2669 = vld [vmem:[%s2008 + $0x11d0] sm:$0xff]
        %v2670 = vld [vmem:[%s2008 + $0x11d8] sm:$0xff]
        %v2671 = vld [vmem:[%s2008 + $0x11e0] sm:$0xff]
        %v2672 = vld [vmem:[%s2008 + $0x11e8] sm:$0xff]
        %v2673 = vld [vmem:[%s2008 + $0x11f0] sm:$0xff]
        %v2674 = vld [vmem:[%s2008 + $0x11f8] sm:$0xff]
        %v2675 = vld [vmem:[%s2008 + $0x1200] sm:$0xff]
        %v2676 = vld [vmem:[%s2008 + $0x1208] sm:$0xff]
        %v2677 = vld [vmem:[%s2008 + $0x1210] sm:$0xff]
        %v2678 = vld [vmem:[%s2008 + $0x1218] sm:$0xff]
        %v2679 = vld [vmem:[%s2008 + $0x1220] sm:$0xff]
        %v2680 = vld [vmem:[%s2008 + $0x1228] sm:$0xff]
        %v2681 = vld [vmem:[%s2008 + $0x1230] sm:$0xff]
        %v2682 = vld [vmem:[%s2008 + $0x1238] sm:$0xff]
        %v2683 = vld [vmem:[%s2008 + $0x1240] sm:$0xff]
        %v2684 = vld [vmem:[%s2008 + $0x1248] sm:$0xff]
        %v2685 = vld [vmem:[%s2008 + $0x1250] sm:$0xff]
        %v2686 = vld [vmem:[%s2008 + $0x1258] sm:$0xff]
        %v2687 = vld [vmem:[%s2008 + $0x1260] sm:$0xff]
        %v2688 = vld [vmem:[%s2008 + $0x1268] sm:$0xff]
        %v2689 = vld [vmem:[%s2008 + $0x1270] sm:$0xff]
        %v2690 = vld [vmem:[%s2008 + $0x1278] sm:$0xff]
        %v2691 = vld [vmem:[%s2008 + $0x1280] sm:$0xff]
        %v2692 = vld [vmem:[%s2008 + $0x1288] sm:$0xff]
        %v2693 = vld [vmem:[%s2008 + $0x1290] sm:$0xff]
        %v2694 = vld [vmem:[%s2008 + $0x1298] sm:$0xff]
        %v2695 = vld [vmem:[%s2008 + $0x12a0] sm:$0xff]
        %v2696 = vld [vmem:[%s2008 + $0x12a8] sm:$0xff]
        %v2697 = vld [vmem:[%s2008 + $0x12b0] sm:$0xff]
        %v2698 = vld [vmem:[%s2008 + $0x12b8] sm:$0xff]
        %v2699 = vld [vmem:[%s2008 + $0x12c0] sm:$0xff]
        %v2700 = vld [vmem:[%s2008 + $0x12c8] sm:$0xff]
        %v2701 = vld [vmem:[%s2008 + $0x12d0] sm:$0xff]
        %v2702 = vld [vmem:[%s2008 + $0x12d8] sm:$0xff]
        %v2703 = vld [vmem:[%s2008 + $0x12e0] sm:$0xff]
        %v2704 = vld [vmem:[%s2008 + $0x12e8] sm:$0xff]
        %v2705 = vld [vmem:[%s2008 + $0x12f0] sm:$0xff]
        %v2706 = vld [vmem:[%s2008 + $0x12f8] sm:$0xff]
        %v2707 = vld [vmem:[%s2008 + $0x1300] sm:$0xff]
        %v2708 = vld [vmem:[%s2008 + $0x1308] sm:$0xff]
        %v2709 = vld [vmem:[%s2008 + $0x1310] sm:$0xff]
        %v2710 = vld [vmem:[%s2008 + $0x1318] sm:$0xff]
        %v2711 = vld [vmem:[%s2008 + $0x1320] sm:$0xff]
        %v2712 = vld [vmem:[%s2008 + $0x1328] sm:$0xff]
        %v2713 = vld [vmem:[%s2008 + $0x1330] sm:$0xff]
        %v2714 = vld [vmem:[%s2008 + $0x1338] sm:$0xff]
        %v2715 = vld [vmem:[%s2008 + $0x1340] sm:$0xff]
        %v2716 = vld [vmem:[%s2008 + $0x1348] sm:$0xff]
        %v2717 = vld [vmem:[%s2008 + $0x1350] sm:$0xff]
        %v2718 = vld [vmem:[%s2008 + $0x1358] sm:$0xff]
        %v2719 = vld [vmem:[%s2008 + $0x1360] sm:$0xff]
        %v2720 = vld [vmem:[%s2008 + $0x1368] sm:$0xff]
        %v2721 = vld [vmem:[%s2008 + $0x1370] sm:$0xff]
        %v2722 = vld [vmem:[%s2008 + $0x1378] sm:$0xff]
        %v2723 = vld [vmem:[%s2008 + $0x1380] sm:$0xff]
        %v2724 = vld [vmem:[%s2008 + $0x1388] sm:$0xff]
        %v2725 = vld [vmem:[%s2008 + $0x1390] sm:$0xff]
        %v2726 = vld [vmem:[%s2008 + $0x1398] sm:$0xff]
        %v2727 = vld [vmem:[%s2008 + $0x13a0] sm:$0xff]
        %v2728 = vld [vmem:[%s2008 + $0x13a8] sm:$0xff]
        %v2729 = vld [vmem:[%s2008 + $0x13b0] sm:$0xff]
        %v2730 = vld [vmem:[%s2008 + $0x13b8] sm:$0xff]
        %v2731 = vld [vmem:[%s2008 + $0x13c0] sm:$0xff]
        %v2732 = vld [vmem:[%s2008 + $0x13c8] sm:$0xff]
        %v2733 = vld [vmem:[%s2008 + $0x13d0] sm:$0xff]
        %v2734 = vld [vmem:[%s2008 + $0x13d8] sm:$0xff]
        %v2735 = vld [vmem:[%s2008 + $0x13e0] sm:$0xff]
        %v2736 = vld [vmem:[%s2008 + $0x13e8] sm:$0xff]
        %v2737 = vld [vmem:[%s2008 + $0x13f0] sm:$0xff]
        %v2738 = vld [vmem:[%s2008 + $0x13f8] sm:$0xff]
        %v2739 = vld [vmem:[%s2008 + $0x1400] sm:$0xff]
        %v2740 = vld [vmem:[%s2008 + $0x1408] sm:$0xff]
        %v2741 = vld [vmem:[%s2008 + $0x1410] sm:$0xff]
        %v2742 = vld [vmem:[%s2008 + $0x1418] sm:$0xff]
        %v2743 = vld [vmem:[%s2008 + $0x1420] sm:$0xff]
        %v2744 = vld [vmem:[%s2008 + $0x1428] sm:$0xff]
        %v2745 = vld [vmem:[%s2008 + $0x1430] sm:$0xff]
        %v2746 = vld [vmem:[%s2008 + $0x1438] sm:$0xff]
        %v2747 = vld [vmem:[%s2008 + $0x1440] sm:$0xff]
        %v2748 = vld [vmem:[%s2008 + $0x1448] sm:$0xff]
        %v2749 = vld [vmem:[%s2008 + $0x1450] sm:$0xff]
        %v2750 = vld [vmem:[%s2008 + $0x1458] sm:$0xff]
        %v2751 = vld [vmem:[%s2008 + $0x1460] sm:$0xff]
        %v2752 = vld [vmem:[%s2008 + $0x1468] sm:$0xff]
        %v2753 = vld [vmem:[%s2008 + $0x1470] sm:$0xff]
        %v2754 = vld [vmem:[%s2008 + $0x1478] sm:$0xff]
        %v2755 = vld [vmem:[%s2008 + $0x1480] sm:$0xff]
        %v2756 = vld [vmem:[%s2008 + $0x1488] sm:$0xff]
        %v2757 = vld [vmem:[%s2008 + $0x1490] sm:$0xff]
        %v2758 = vld [vmem:[%s2008 + $0x1498] sm:$0xff]
        %v2759 = vld [vmem:[%s2008 + $0x14a0] sm:$0xff]
        %v2760 = vld [vmem:[%s2008 + $0x14a8] sm:$0xff]
        %v2761 = vld [vmem:[%s2008 + $0x14b0] sm:$0xff]
        %v2762 = vld [vmem:[%s2008 + $0x14b8] sm:$0xff]
        %v2763 = vld [vmem:[%s2008 + $0x14c0] sm:$0xff]
        %v2764 = vld [vmem:[%s2008 + $0x14c8] sm:$0xff]
        %v2765 = vld [vmem:[%s2008 + $0x14d0] sm:$0xff]
        %v2766 = vld [vmem:[%s2008 + $0x14d8] sm:$0xff]
        %v2767 = vld [vmem:[%s2008 + $0x14e0] sm:$0xff]
        %v2768 = vld [vmem:[%s2008 + $0x14e8] sm:$0xff]
        %v2769 = vld [vmem:[%s2008 + $0x14f0] sm:$0xff]
        %v2770 = vld [vmem:[%s2008 + $0x14f8] sm:$0xff]
        %v2771 = vld [vmem:[%s2008 + $0x1500] sm:$0xff]
        %v2772 = vld [vmem:[%s2008 + $0x1508] sm:$0xff]
        %v2773 = vld [vmem:[%s2008 + $0x1510] sm:$0xff]
        %v2774 = vld [vmem:[%s2008 + $0x1518] sm:$0xff]
        %v2775 = vld [vmem:[%s2008 + $0x1520] sm:$0xff]
        %v2776 = vld [vmem:[%s2008 + $0x1528] sm:$0xff]
        %v2777 = vld [vmem:[%s2008 + $0x1530] sm:$0xff]
        %v2778 = vld [vmem:[%s2008 + $0x1538] sm:$0xff]
        %v2779 = vld [vmem:[%s2008 + $0x1540] sm:$0xff]
        %v2780 = vld [vmem:[%s2008 + $0x1548] sm:$0xff]
        %v2781 = vld [vmem:[%s2008 + $0x1550] sm:$0xff]
        %v2782 = vld [vmem:[%s2008 + $0x1558] sm:$0xff]
        %v2783 = vld [vmem:[%s2008 + $0x1560] sm:$0xff]
        %v2784 = vld [vmem:[%s2008 + $0x1568] sm:$0xff]
        %v2785 = vld [vmem:[%s2008 + $0x1570] sm:$0xff]
        %v2786 = vld [vmem:[%s2008 + $0x1578] sm:$0xff]
        %v2787 = vld [vmem:[%s2008 + $0x1580] sm:$0xff]
        %v2788 = vld [vmem:[%s2008 + $0x1588] sm:$0xff]
        %v2789 = vld [vmem:[%s2008 + $0x1590] sm:$0xff]
        %v2790 = vld [vmem:[%s2008 + $0x1598] sm:$0xff]
        %v2791 = vld [vmem:[%s2008 + $0x15a0] sm:$0xff]
        %v2792 = vld [vmem:[%s2008 + $0x15a8] sm:$0xff]
        %v2793 = vld [vmem:[%s2008 + $0x15b0] sm:$0xff]
        %v2794 = vld [vmem:[%s2008 + $0x15b8] sm:$0xff]
        %v2795 = vld [vmem:[%s2008 + $0x15c0] sm:$0xff]
        %v2796 = vld [vmem:[%s2008 + $0x15c8] sm:$0xff]
        %v2797 = vld [vmem:[%s2008 + $0x15d0] sm:$0xff]
        %v2798 = vld [vmem:[%s2008 + $0x15d8] sm:$0xff]
        %v2799 = vld [vmem:[%s2008 + $0x15e0] sm:$0xff]
        %v2800 = vld [vmem:[%s2008 + $0x15e8] sm:$0xff]
        %v2801 = vld [vmem:[%s2008 + $0x15f0] sm:$0xff]
        %v2802 = vld [vmem:[%s2008 + $0x15f8] sm:$0xff]
        %v2803 = vld [vmem:[%s2008 + $0x1600] sm:$0xff]
        %v2804 = vld [vmem:[%s2008 + $0x1608] sm:$0xff]
        %v2805 = vld [vmem:[%s2008 + $0x1610] sm:$0xff]
        %v2806 = vld [vmem:[%s2008 + $0x1618] sm:$0xff]
        %v2807 = vld [vmem:[%s2008 + $0x1620] sm:$0xff]
        %v2808 = vld [vmem:[%s2008 + $0x1628] sm:$0xff]
        %v2809 = vld [vmem:[%s2008 + $0x1630] sm:$0xff]
        %v2810 = vld [vmem:[%s2008 + $0x1638] sm:$0xff]
        %v2811 = vld [vmem:[%s2008 + $0x1640] sm:$0xff]
        %v2812 = vld [vmem:[%s2008 + $0x1648] sm:$0xff]
        %v2813 = vld [vmem:[%s2008 + $0x1650] sm:$0xff]
        %v2814 = vld [vmem:[%s2008 + $0x1658] sm:$0xff]
        %v2815 = vld [vmem:[%s2008 + $0x1660] sm:$0xff]
        %v2816 = vld [vmem:[%s2008 + $0x1668] sm:$0xff]
        %v2817 = vld [vmem:[%s2008 + $0x1670] sm:$0xff]
        %v2818 = vld [vmem:[%s2008 + $0x1678] sm:$0xff]
        %v2819 = vld [vmem:[%s2008 + $0x1680] sm:$0xff]
        %v2820 = vld [vmem:[%s2008 + $0x1688] sm:$0xff]
        %v2821 = vld [vmem:[%s2008 + $0x1690] sm:$0xff]
        %v2822 = vld [vmem:[%s2008 + $0x1698] sm:$0xff]
        %v2823 = vld [vmem:[%s2008 + $0x16a0] sm:$0xff]
        %v2824 = vld [vmem:[%s2008 + $0x16a8] sm:$0xff]
        %v2825 = vld [vmem:[%s2008 + $0x16b0] sm:$0xff]
        %v2826 = vld [vmem:[%s2008 + $0x16b8] sm:$0xff]
        %v2827 = vld [vmem:[%s2008 + $0x16c0] sm:$0xff]
        %v2828 = vld [vmem:[%s2008 + $0x16c8] sm:$0xff]
        %v2829 = vld [vmem:[%s2008 + $0x16d0] sm:$0xff]
        %v2830 = vld [vmem:[%s2008 + $0x16d8] sm:$0xff]
        %v2831 = vld [vmem:[%s2008 + $0x16e0] sm:$0xff]
        %v2832 = vld [vmem:[%s2008 + $0x16e8] sm:$0xff]
        %v2833 = vld [vmem:[%s2008 + $0x16f0] sm:$0xff]
        %v2834 = vld [vmem:[%s2008 + $0x16f8] sm:$0xff]
        %v2835 = vld [vmem:[%s2008 + $0x1700] sm:$0xff]
        %v2836 = vld [vmem:[%s2008 + $0x1708] sm:$0xff]
        %v2837 = vld [vmem:[%s2008 + $0x1710] sm:$0xff]
        %v2838 = vld [vmem:[%s2008 + $0x1718] sm:$0xff]
        %v2839 = vld [vmem:[%s2008 + $0x1720] sm:$0xff]
        %v2840 = vld [vmem:[%s2008 + $0x1728] sm:$0xff]
        %v2841 = vld [vmem:[%s2008 + $0x1730] sm:$0xff]
        %v2842 = vld [vmem:[%s2008 + $0x1738] sm:$0xff]
        %v2843 = vld [vmem:[%s2008 + $0x1740] sm:$0xff]
        %v2844 = vld [vmem:[%s2008 + $0x1748] sm:$0xff]
        %v2845 = vld [vmem:[%s2008 + $0x1750] sm:$0xff]
        %v2846 = vld [vmem:[%s2008 + $0x1758] sm:$0xff]
        %v2847 = vld [vmem:[%s2008 + $0x1760] sm:$0xff]
        %v2848 = vld [vmem:[%s2008 + $0x1768] sm:$0xff]
        %v2849 = vld [vmem:[%s2008 + $0x1770] sm:$0xff]
        %v2850 = vld [vmem:[%s2008 + $0x1778] sm:$0xff]
        %v2851 = vld [vmem:[%s2008 + $0x1780] sm:$0xff]
        %v2852 = vld [vmem:[%s2008 + $0x1788] sm:$0xff]
        %v2853 = vld [vmem:[%s2008 + $0x1790] sm:$0xff]
        %v2854 = vld [vmem:[%s2008 + $0x1798] sm:$0xff]
        %v2855 = vld [vmem:[%s2008 + $0x17a0] sm:$0xff]
        %v2856 = vld [vmem:[%s2008 + $0x17a8] sm:$0xff]
        %v2857 = vld [vmem:[%s2008 + $0x17b0] sm:$0xff]
        %v2858 = vld [vmem:[%s2008 + $0x17b8] sm:$0xff]
        %v2859 = vld [vmem:[%s2008 + $0x17c0] sm:$0xff]
        %v2860 = vld [vmem:[%s2008 + $0x17c8] sm:$0xff]
        %v2861 = vld [vmem:[%s2008 + $0x17d0] sm:$0xff]
        %v2862 = vld [vmem:[%s2008 + $0x17d8] sm:$0xff]
        %v2863 = vld [vmem:[%s2008 + $0x17e0] sm:$0xff]
        %v2864 = vld [vmem:[%s2008 + $0x17e8] sm:$0xff]
        %v2865 = vld [vmem:[%s2008 + $0x17f0] sm:$0xff]
        %v2866 = vld [vmem:[%s2008 + $0x17f8] sm:$0xff]
        %v2867 = vld [vmem:[%s2008 + $0x1800] sm:$0xff]
        %v2868 = vld [vmem:[%s2008 + $0x1808] sm:$0xff]
        %v2869 = vld [vmem:[%s2008 + $0x1810] sm:$0xff]
        %v2870 = vld [vmem:[%s2008 + $0x1818] sm:$0xff]
        %v2871 = vld [vmem:[%s2008 + $0x1820] sm:$0xff]
        %v2872 = vld [vmem:[%s2008 + $0x1828] sm:$0xff]
        %v2873 = vld [vmem:[%s2008 + $0x1830] sm:$0xff]
        %v2874 = vld [vmem:[%s2008 + $0x1838] sm:$0xff]
        %v2875 = vld [vmem:[%s2008 + $0x1840] sm:$0xff]
        %v2876 = vld [vmem:[%s2008 + $0x1848] sm:$0xff]
        %v2877 = vld [vmem:[%s2008 + $0x1850] sm:$0xff]
        %v2878 = vld [vmem:[%s2008 + $0x1858] sm:$0xff]
        %v2879 = vld [vmem:[%s2008 + $0x1860] sm:$0xff]
        %v2880 = vld [vmem:[%s2008 + $0x1868] sm:$0xff]
        %v2881 = vld [vmem:[%s2008 + $0x1870] sm:$0xff]
        %v2882 = vld [vmem:[%s2008 + $0x1878] sm:$0xff]
        %v2883 = vld [vmem:[%s2008 + $0x1880] sm:$0xff]
        %v2884 = vld [vmem:[%s2008 + $0x1888] sm:$0xff]
        %v2885 = vld [vmem:[%s2008 + $0x1890] sm:$0xff]
        %v2886 = vld [vmem:[%s2008 + $0x1898] sm:$0xff]
        %v2887 = vld [vmem:[%s2008 + $0x18a0] sm:$0xff]
        %v2888 = vld [vmem:[%s2008 + $0x18a8] sm:$0xff]
        %v2889 = vld [vmem:[%s2008 + $0x18b0] sm:$0xff]
        %v2890 = vld [vmem:[%s2008 + $0x18b8] sm:$0xff]
        %v2891 = vld [vmem:[%s2008 + $0x18c0] sm:$0xff]
        %v2892 = vld [vmem:[%s2008 + $0x18c8] sm:$0xff]
        %v2893 = vld [vmem:[%s2008 + $0x18d0] sm:$0xff]
        %v2894 = vld [vmem:[%s2008 + $0x18d8] sm:$0xff]
        %v2895 = vld [vmem:[%s2008 + $0x18e0] sm:$0xff]
        %v2896 = vld [vmem:[%s2008 + $0x18e8] sm:$0xff]
        %v2897 = vld [vmem:[%s2008 + $0x18f0] sm:$0xff]
        %v2898 = vld [vmem:[%s2008 + $0x18f8] sm:$0xff]
        %v2899 = vld [vmem:[%s2008 + $0x1900] sm:$0xff]
        %v2900 = vld [vmem:[%s2008 + $0x1908] sm:$0xff]
        %v2901 = vld [vmem:[%s2008 + $0x1910] sm:$0xff]
        %v2902 = vld [vmem:[%s2008 + $0x1918] sm:$0xff]
        %v2903 = vld [vmem:[%s2008 + $0x1920] sm:$0xff]
        %v2904 = vld [vmem:[%s2008 + $0x1928] sm:$0xff]
        %v2905 = vld [vmem:[%s2008 + $0x1930] sm:$0xff]
        %v2906 = vld [vmem:[%s2008 + $0x1938] sm:$0xff]
        %v2907 = vld [vmem:[%s2008 + $0x1940] sm:$0xff]
        %v2908 = vld [vmem:[%s2008 + $0x1948] sm:$0xff]
        %v2909 = vld [vmem:[%s2008 + $0x1950] sm:$0xff]
        %v2910 = vld [vmem:[%s2008 + $0x1958] sm:$0xff]
        %v2911 = vld [vmem:[%s2008 + $0x1960] sm:$0xff]
        %v2912 = vld [vmem:[%s2008 + $0x1968] sm:$0xff]
        %v2913 = vld [vmem:[%s2008 + $0x1970] sm:$0xff]
        %v2914 = vld [vmem:[%s2008 + $0x1978] sm:$0xff]
        %v2915 = vld [vmem:[%s2008 + $0x1980] sm:$0xff]
        %v2916 = vld [vmem:[%s2008 + $0x1988] sm:$0xff]
        %v2917 = vld [vmem:[%s2008 + $0x1990] sm:$0xff]
        %v2918 = vld [vmem:[%s2008 + $0x1998] sm:$0xff]
        %v2919 = vld [vmem:[%s2008 + $0x19a0] sm:$0xff]
        %v2920 = vld [vmem:[%s2008 + $0x19a8] sm:$0xff]
        %v2921 = vld [vmem:[%s2008 + $0x19b0] sm:$0xff]
        %v2922 = vld [vmem:[%s2008 + $0x19b8] sm:$0xff]
        %v2923 = vld [vmem:[%s2008 + $0x19c0] sm:$0xff]
        %v2924 = vld [vmem:[%s2008 + $0x19c8] sm:$0xff]
        %v2925 = vld [vmem:[%s2008 + $0x19d0] sm:$0xff]
        %v2926 = vld [vmem:[%s2008 + $0x19d8] sm:$0xff]
        %v2927 = vld [vmem:[%s2008 + $0x19e0] sm:$0xff]
        %v2928 = vld [vmem:[%s2008 + $0x19e8] sm:$0xff]
        %v2929 = vld [vmem:[%s2008 + $0x19f0] sm:$0xff]
        %v2930 = vld [vmem:[%s2008 + $0x19f8] sm:$0xff]
        %v2931 = vld [vmem:[%s2008 + $0x1a00] sm:$0xff]
        %v2932 = vld [vmem:[%s2008 + $0x1a08] sm:$0xff]
        %v2933 = vld [vmem:[%s2008 + $0x1a10] sm:$0xff]
        %v2934 = vld [vmem:[%s2008 + $0x1a18] sm:$0xff]
        %v2935 = vld [vmem:[%s2008 + $0x1a20] sm:$0xff]
        %v2936 = vld [vmem:[%s2008 + $0x1a28] sm:$0xff]
        %v2937 = vld [vmem:[%s2008 + $0x1a30] sm:$0xff]
        %v2938 = vld [vmem:[%s2008 + $0x1a38] sm:$0xff]
        %v2939 = vld [vmem:[%s2008 + $0x1a40] sm:$0xff]
        %v2940 = vld [vmem:[%s2008 + $0x1a48] sm:$0xff]
        %v2941 = vld [vmem:[%s2008 + $0x1a50] sm:$0xff]
        %v2942 = vld [vmem:[%s2008 + $0x1a58] sm:$0xff]
        %v2943 = vld [vmem:[%s2008 + $0x1a60] sm:$0xff]
        %v2944 = vld [vmem:[%s2008 + $0x1a68] sm:$0xff]
        %v2945 = vld [vmem:[%s2008 + $0x1a70] sm:$0xff]
        %v2946 = vld [vmem:[%s2008 + $0x1a78] sm:$0xff]
        %v2947 = vld [vmem:[%s2008 + $0x1a80] sm:$0xff]
        %v2948 = vld [vmem:[%s2008 + $0x1a88] sm:$0xff]
        %v2949 = vld [vmem:[%s2008 + $0x1a90] sm:$0xff]
        %v2950 = vld [vmem:[%s2008 + $0x1a98] sm:$0xff]
        %v2951 = vld [vmem:[%s2008 + $0x1aa0] sm:$0xff]
        %v2952 = vld [vmem:[%s2008 + $0x1aa8] sm:$0xff]
        %v2953 = vld [vmem:[%s2008 + $0x1ab0] sm:$0xff]
        %v2954 = vld [vmem:[%s2008 + $0x1ab8] sm:$0xff]
        %v2955 = vld [vmem:[%s2008 + $0x1ac0] sm:$0xff]
        %v2956 = vld [vmem:[%s2008 + $0x1ac8] sm:$0xff]
        %v2957 = vld [vmem:[%s2008 + $0x1ad0] sm:$0xff]
        %v2958 = vld [vmem:[%s2008 + $0x1ad8] sm:$0xff]
        %v2959 = vld [vmem:[%s2008 + $0x1ae0] sm:$0xff]
        %v2960 = vld [vmem:[%s2008 + $0x1ae8] sm:$0xff]
        %v2961 = vld [vmem:[%s2008 + $0x1af0] sm:$0xff]
        %v2962 = vld [vmem:[%s2008 + $0x1af8] sm:$0xff]
        %v2963 = vld [vmem:[%s2008 + $0x1b00] sm:$0xff]
        %v2964 = vld [vmem:[%s2008 + $0x1b08] sm:$0xff]
        %v2965 = vld [vmem:[%s2008 + $0x1b10] sm:$0xff]
        %v2966 = vld [vmem:[%s2008 + $0x1b18] sm:$0xff]
        %v2967 = vld [vmem:[%s2008 + $0x1b20] sm:$0xff]
        %v2968 = vld [vmem:[%s2008 + $0x1b28] sm:$0xff]
        %v2969 = vld [vmem:[%s2008 + $0x1b30] sm:$0xff]
        %v2970 = vld [vmem:[%s2008 + $0x1b38] sm:$0xff]
        %v2971 = vld [vmem:[%s2008 + $0x1b40] sm:$0xff]
        %v2972 = vld [vmem:[%s2008 + $0x1b48] sm:$0xff]
        %v2973 = vld [vmem:[%s2008 + $0x1b50] sm:$0xff]
        %v2974 = vld [vmem:[%s2008 + $0x1b58] sm:$0xff]
        %v2975 = vld [vmem:[%s2008 + $0x1b60] sm:$0xff]
        %v2976 = vld [vmem:[%s2008 + $0x1b68] sm:$0xff]
        %v2977 = vld [vmem:[%s2008 + $0x1b70] sm:$0xff]
        %v2978 = vld [vmem:[%s2008 + $0x1b78] sm:$0xff]
        %v2979 = vld [vmem:[%s2008 + $0x1b80] sm:$0xff]
        %v2980 = vld [vmem:[%s2008 + $0x1b88] sm:$0xff]
        %v2981 = vld [vmem:[%s2008 + $0x1b90] sm:$0xff]
        %v2982 = vld [vmem:[%s2008 + $0x1b98] sm:$0xff]
        %v2983 = vld [vmem:[%s2008 + $0x1ba0] sm:$0xff]
        %v2984 = vld [vmem:[%s2008 + $0x1ba8] sm:$0xff]
        %v2985 = vld [vmem:[%s2008 + $0x1bb0] sm:$0xff]
        %v2986 = vld [vmem:[%s2008 + $0x1bb8] sm:$0xff]
        %v2987 = vld [vmem:[%s2008 + $0x1bc0] sm:$0xff]
        %v2988 = vld [vmem:[%s2008 + $0x1bc8] sm:$0xff]
        %v2989 = vld [vmem:[%s2008 + $0x1bd0] sm:$0xff]
        %v2990 = vld [vmem:[%s2008 + $0x1bd8] sm:$0xff]
        %v2991 = vld [vmem:[%s2008 + $0x1be0] sm:$0xff]
        %v2992 = vld [vmem:[%s2008 + $0x1be8] sm:$0xff]
        %v2993 = vld [vmem:[%s2008 + $0x1bf0] sm:$0xff]
        %v2994 = vld [vmem:[%s2008 + $0x1bf8] sm:$0xff]
        %2995 = vmatprep.subr.mxu0 %v2160
        %2996 = vmatpush1.msra.mxu0 %v2159
        %2997 = vmatprep.subr.mxu0 %v2156
        %2998 = vmatpush1.msra.mxu0 %v2155
        %2999 = vmatprep.subr.mxu0 %v2152
        %3000 = vmatpush1.msra.mxu0 %v2151
        %3001 = vmatprep.subr.mxu0 %v2148
        %3002 = vmatpush1.msra.mxu0 %v2147
        %3003 = vmatprep.subr.mxu0 %v2144
        %3004 = vmatpush1.msra.mxu0 %v2143
        %3005 = vmatprep.subr.mxu0 %v2140
        %3006 = vmatpush1.msra.mxu0 %v2139
        %3007 = vmatprep.subr.mxu0 %v2136
        %3008 = vmatpush1.msra.mxu0 %v2135
        %3009 = vmatprep.subr.mxu0 %v2132
        %3010 = vmatpush1.msra.mxu0 %v2131
        %3011 = vmatprep.subr.mxu0 %v2128
        %3012 = vmatpush1.msra.mxu0 %v2127
        %3013 = vmatprep.subr.mxu0 %v2124
        %3014 = vmatpush1.msra.mxu0 %v2123
        %3015 = vmatprep.subr.mxu0 %v2120
        %3016 = vmatpush1.msra.mxu0 %v2119
        %3017 = vmatprep.subr.mxu0 %v2116
        %3018 = vmatpush1.msra.mxu0 %v2115
        %3019 = vmatprep.subr.mxu0 %v2112
        %3020 = vmatpush1.msra.mxu0 %v2111
        %3021 = vmatprep.subr.mxu0 %v2108
        %3022 = vmatpush1.msra.mxu0 %v2107
        %3023 = vmatprep.subr.mxu0 %v2104
        %3024 = vmatpush1.msra.mxu0 %v2103
        %3025 = vmatprep.subr.mxu0 %v2100
        %3026 = vmatpush1.msra.mxu0 %v2099
        %3027 = vmatprep.subr.mxu0 %v2224
        %3028 = vmatpush2.msra.mxu0 %v2223
        %3029 = vmatprep.subr.mxu0 %v2220
        %3030 = vmatpush2.msra.mxu0 %v2219
        %3031 = vmatprep.subr.mxu0 %v2216
        %3032 = vmatpush2.msra.mxu0 %v2215
        %3033 = vmatprep.subr.mxu0 %v2212
        %3034 = vmatpush2.msra.mxu0 %v2211
        %3035 = vmatprep.subr.mxu0 %v2208
        %3036 = vmatpush2.msra.mxu0 %v2207
        %3037 = vmatprep.subr.mxu0 %v2204
        %3038 = vmatpush2.msra.mxu0 %v2203
        %3039 = vmatprep.subr.mxu0 %v2200
        %3040 = vmatpush2.msra.mxu0 %v2199
        %3041 = vmatprep.subr.mxu0 %v2196
        %3042 = vmatpush2.msra.mxu0 %v2195
        %3043 = vmatprep.subr.mxu0 %v2192
        %3044 = vmatpush2.msra.mxu0 %v2191
        %3045 = vmatprep.subr.mxu0 %v2188
        %3046 = vmatpush2.msra.mxu0 %v2187
        %3047 = vmatprep.subr.mxu0 %v2184
        %3048 = vmatpush2.msra.mxu0 %v2183
        %3049 = vmatprep.subr.mxu0 %v2180
        %3050 = vmatpush2.msra.mxu0 %v2179
        %3051 = vmatprep.subr.mxu0 %v2176
        %3052 = vmatpush2.msra.mxu0 %v2175
        %3053 = vmatprep.subr.mxu0 %v2172
        %3054 = vmatpush2.msra.mxu0 %v2171
        %3055 = vmatprep.subr.mxu0 %v2168
        %3056 = vmatpush2.msra.mxu0 %v2167
        %3057 = vmatprep.subr.mxu0 %v2164
        %3058 = vmatpush2.msra.mxu0 %v2163
        %3059 = vmatprep.mubr.f32.mxu0 %v2086
        %3060 = vmatmul.mubr.f32.gmra.mxu0 %v2085
        %v3061 = vpop.f32.mrf.mxu0
        %v3062 = vadd.f32 0.0, %v3061
        %v3063 = vpop.f32.mrf.mxu0
        %v3064 = vadd.f32 0.0, %v3063
        %3065 = vdwg.mxu0
        %3066 = vmatprep.subr.mxu0 %v2288
        %3067 = vmatpush1.msra.mxu0 %v2287
        %3068 = vmatprep.subr.mxu0 %v2284
        %3069 = vmatpush1.msra.mxu0 %v2283
        %3070 = vmatprep.subr.mxu0 %v2280
        %3071 = vmatpush1.msra.mxu0 %v2279
        %3072 = vmatprep.subr.mxu0 %v2276
        %3073 = vmatpush1.msra.mxu0 %v2275
        %3074 = vmatprep.subr.mxu0 %v2272
        %3075 = vmatpush1.msra.mxu0 %v2271
        %3076 = vmatprep.subr.mxu0 %v2268
        %3077 = vmatpush1.msra.mxu0 %v2267
        %3078 = vmatprep.subr.mxu0 %v2264
        %3079 = vmatpush1.msra.mxu0 %v2263
        %3080 = vmatprep.subr.mxu0 %v2260
        %3081 = vmatpush1.msra.mxu0 %v2259
        %3082 = vmatprep.subr.mxu0 %v2256
        %3083 = vmatpush1.msra.mxu0 %v2255
        %3084 = vmatprep.subr.mxu0 %v2252
        %3085 = vmatpush1.msra.mxu0 %v2251
        %3086 = vmatprep.subr.mxu0 %v2248
        %3087 = vmatpush1.msra.mxu0 %v2247
        %3088 = vmatprep.subr.mxu0 %v2244
        %3089 = vmatpush1.msra.mxu0 %v2243
        %3090 = vmatprep.subr.mxu0 %v2240
        %3091 = vmatpush1.msra.mxu0 %v2239
        %3092 = vmatprep.subr.mxu0 %v2236
        %3093 = vmatpush1.msra.mxu0 %v2235
        %3094 = vmatprep.subr.mxu0 %v2232
        %3095 = vmatpush1.msra.mxu0 %v2231
        %3096 = vmatprep.subr.mxu0 %v2228
        %3097 = vmatpush1.msra.mxu0 %v2227
        %3098 = vmatprep.subr.mxu0 %v2352
        %3099 = vmatpush2.msra.mxu0 %v2351
        %3100 = vmatprep.subr.mxu0 %v2348
        %3101 = vmatpush2.msra.mxu0 %v2347
        %3102 = vmatprep.subr.mxu0 %v2344
        %3103 = vmatpush2.msra.mxu0 %v2343
        %3104 = vmatprep.subr.mxu0 %v2340
        %3105 = vmatpush2.msra.mxu0 %v2339
        %3106 = vmatprep.subr.mxu0 %v2336
        %3107 = vmatpush2.msra.mxu0 %v2335
        %3108 = vmatprep.subr.mxu0 %v2332
        %3109 = vmatpush2.msra.mxu0 %v2331
        %3110 = vmatprep.subr.mxu0 %v2328
        %3111 = vmatpush2.msra.mxu0 %v2327
        %3112 = vmatprep.subr.mxu0 %v2324
        %3113 = vmatpush2.msra.mxu0 %v2323
        %3114 = vmatprep.subr.mxu0 %v2320
        %3115 = vmatpush2.msra.mxu0 %v2319
        %3116 = vmatprep.subr.mxu0 %v2316
        %3117 = vmatpush2.msra.mxu0 %v2315
        %3118 = vmatprep.subr.mxu0 %v2312
        %3119 = vmatpush2.msra.mxu0 %v2311
        %3120 = vmatprep.subr.mxu0 %v2308
        %3121 = vmatpush2.msra.mxu0 %v2307
        %3122 = vmatprep.subr.mxu0 %v2304
        %3123 = vmatpush2.msra.mxu0 %v2303
        %3124 = vmatprep.subr.mxu0 %v2300
        %3125 = vmatpush2.msra.mxu0 %v2299
        %3126 = vmatprep.subr.mxu0 %v2296
        %3127 = vmatpush2.msra.mxu0 %v2295
        %3128 = vmatprep.subr.mxu0 %v2292
        %3129 = vmatpush2.msra.mxu0 %v2291
        %3130 = vmatprep.mubr.f32.mxu0 %v2088
        %3131 = vmatmul.mubr.f32.gmra.mxu0 %v2087
        %v3132 = vpop.f32.mrf.mxu0
        %v3133 = vadd.f32 %v3062, %v3132
        %v3134 = vpop.f32.mrf.mxu0
        %v3135 = vadd.f32 %v3064, %v3134
        %3136 = vdwg.mxu0
        %3137 = vmatprep.subr.mxu0 %v2416
        %3138 = vmatpush1.msra.mxu0 %v2415
        %3139 = vmatprep.subr.mxu0 %v2412
        %3140 = vmatpush1.msra.mxu0 %v2411
        %3141 = vmatprep.subr.mxu0 %v2408
        %3142 = vmatpush1.msra.mxu0 %v2407
        %3143 = vmatprep.subr.mxu0 %v2404
        %3144 = vmatpush1.msra.mxu0 %v2403
        %3145 = vmatprep.subr.mxu0 %v2400
        %3146 = vmatpush1.msra.mxu0 %v2399
        %3147 = vmatprep.subr.mxu0 %v2396
        %3148 = vmatpush1.msra.mxu0 %v2395
        %3149 = vmatprep.subr.mxu0 %v2392
        %3150 = vmatpush1.msra.mxu0 %v2391
        %3151 = vmatprep.subr.mxu0 %v2388
        %3152 = vmatpush1.msra.mxu0 %v2387
        %3153 = vmatprep.subr.mxu0 %v2384
        %3154 = vmatpush1.msra.mxu0 %v2383
        %3155 = vmatprep.subr.mxu0 %v2380
        %3156 = vmatpush1.msra.mxu0 %v2379
        %3157 = vmatprep.subr.mxu0 %v2376
        %3158 = vmatpush1.msra.mxu0 %v2375
        %3159 = vmatprep.subr.mxu0 %v2372
        %3160 = vmatpush1.msra.mxu0 %v2371
        %3161 = vmatprep.subr.mxu0 %v2368
        %3162 = vmatpush1.msra.mxu0 %v2367
        %3163 = vmatprep.subr.mxu0 %v2364
        %3164 = vmatpush1.msra.mxu0 %v2363
        %3165 = vmatprep.subr.mxu0 %v2360
        %3166 = vmatpush1.msra.mxu0 %v2359
        %3167 = vmatprep.subr.mxu0 %v2356
        %3168 = vmatpush1.msra.mxu0 %v2355
        %3169 = vmatprep.subr.mxu0 %v2480
        %3170 = vmatpush2.msra.mxu0 %v2479
        %3171 = vmatprep.subr.mxu0 %v2476
        %3172 = vmatpush2.msra.mxu0 %v2475
        %3173 = vmatprep.subr.mxu0 %v2472
        %3174 = vmatpush2.msra.mxu0 %v2471
        %3175 = vmatprep.subr.mxu0 %v2468
        %3176 = vmatpush2.msra.mxu0 %v2467
        %3177 = vmatprep.subr.mxu0 %v2464
        %3178 = vmatpush2.msra.mxu0 %v2463
        %3179 = vmatprep.subr.mxu0 %v2460
        %3180 = vmatpush2.msra.mxu0 %v2459
        %3181 = vmatprep.subr.mxu0 %v2456
        %3182 = vmatpush2.msra.mxu0 %v2455
        %3183 = vmatprep.subr.mxu0 %v2452
        %3184 = vmatpush2.msra.mxu0 %v2451
        %3185 = vmatprep.subr.mxu0 %v2448
        %3186 = vmatpush2.msra.mxu0 %v2447
        %3187 = vmatprep.subr.mxu0 %v2444
        %3188 = vmatpush2.msra.mxu0 %v2443
        %3189 = vmatprep.subr.mxu0 %v2440
        %3190 = vmatpush2.msra.mxu0 %v2439
        %3191 = vmatprep.subr.mxu0 %v2436
        %3192 = vmatpush2.msra.mxu0 %v2435
        %3193 = vmatprep.subr.mxu0 %v2432
        %3194 = vmatpush2.msra.mxu0 %v2431
        %3195 = vmatprep.subr.mxu0 %v2428
        %3196 = vmatpush2.msra.mxu0 %v2427
        %3197 = vmatprep.subr.mxu0 %v2424
        %3198 = vmatpush2.msra.mxu0 %v2423
        %3199 = vmatprep.subr.mxu0 %v2420
        %3200 = vmatpush2.msra.mxu0 %v2419
        %3201 = vmatprep.mubr.f32.mxu0 %v2090
        %3202 = vmatmul.mubr.f32.gmra.mxu0 %v2089
        %v3203 = vpop.f32.mrf.mxu0
        %v3204 = vadd.f32 %v3133, %v3203
        %v3205 = vpop.f32.mrf.mxu0
        %v3206 = vadd.f32 %v3135, %v3205
        %3207 = vdwg.mxu0
        %3208 = vmatprep.subr.mxu0 %v2544
        %3209 = vmatpush1.msra.mxu0 %v2543
        %3210 = vmatprep.subr.mxu0 %v2540
        %3211 = vmatpush1.msra.mxu0 %v2539
        %3212 = vmatprep.subr.mxu0 %v2536
        %3213 = vmatpush1.msra.mxu0 %v2535
        %3214 = vmatprep.subr.mxu0 %v2532
        %3215 = vmatpush1.msra.mxu0 %v2531
        %3216 = vmatprep.subr.mxu0 %v2528
        %3217 = vmatpush1.msra.mxu0 %v2527
        %3218 = vmatprep.subr.mxu0 %v2524
        %3219 = vmatpush1.msra.mxu0 %v2523
        %3220 = vmatprep.subr.mxu0 %v2520
        %3221 = vmatpush1.msra.mxu0 %v2519
        %3222 = vmatprep.subr.mxu0 %v2516
        %3223 = vmatpush1.msra.mxu0 %v2515
        %3224 = vmatprep.subr.mxu0 %v2512
        %3225 = vmatpush1.msra.mxu0 %v2511
        %3226 = vmatprep.subr.mxu0 %v2508
        %3227 = vmatpush1.msra.mxu0 %v2507
        %3228 = vmatprep.subr.mxu0 %v2504
        %3229 = vmatpush1.msra.mxu0 %v2503
        %3230 = vmatprep.subr.mxu0 %v2500
        %3231 = vmatpush1.msra.mxu0 %v2499
        %3232 = vmatprep.subr.mxu0 %v2496
        %3233 = vmatpush1.msra.mxu0 %v2495
        %3234 = vmatprep.subr.mxu0 %v2492
        %3235 = vmatpush1.msra.mxu0 %v2491
        %3236 = vmatprep.subr.mxu0 %v2488
        %3237 = vmatpush1.msra.mxu0 %v2487
        %3238 = vmatprep.subr.mxu0 %v2484
        %3239 = vmatpush1.msra.mxu0 %v2483
        %3240 = vmatprep.subr.mxu0 %v2608
        %3241 = vmatpush2.msra.mxu0 %v2607
        %3242 = vmatprep.subr.mxu0 %v2604
        %3243 = vmatpush2.msra.mxu0 %v2603
        %3244 = vmatprep.subr.mxu0 %v2600
        %3245 = vmatpush2.msra.mxu0 %v2599
        %3246 = vmatprep.subr.mxu0 %v2596
        %3247 = vmatpush2.msra.mxu0 %v2595
        %3248 = vmatprep.subr.mxu0 %v2592
        %3249 = vmatpush2.msra.mxu0 %v2591
        %3250 = vmatprep.subr.mxu0 %v2588
        %3251 = vmatpush2.msra.mxu0 %v2587
        %3252 = vmatprep.subr.mxu0 %v2584
        %3253 = vmatpush2.msra.mxu0 %v2583
        %3254 = vmatprep.subr.mxu0 %v2580
        %3255 = vmatpush2.msra.mxu0 %v2579
        %3256 = vmatprep.subr.mxu0 %v2576
        %3257 = vmatpush2.msra.mxu0 %v2575
        %3258 = vmatprep.subr.mxu0 %v2572
        %3259 = vmatpush2.msra.mxu0 %v2571
        %3260 = vmatprep.subr.mxu0 %v2568
        %3261 = vmatpush2.msra.mxu0 %v2567
        %3262 = vmatprep.subr.mxu0 %v2564
        %3263 = vmatpush2.msra.mxu0 %v2563
        %3264 = vmatprep.subr.mxu0 %v2560
        %3265 = vmatpush2.msra.mxu0 %v2559
        %3266 = vmatprep.subr.mxu0 %v2556
        %3267 = vmatpush2.msra.mxu0 %v2555
        %3268 = vmatprep.subr.mxu0 %v2552
        %3269 = vmatpush2.msra.mxu0 %v2551
        %3270 = vmatprep.subr.mxu0 %v2548
        %3271 = vmatpush2.msra.mxu0 %v2547
        %3272 = vmatprep.mubr.f32.mxu0 %v2092
        %3273 = vmatmul.mubr.f32.gmra.mxu0 %v2091
        %v3274 = vpop.f32.mrf.mxu0
        %v3275 = vadd.f32 %v3204, %v3274
        %v3276 = vpop.f32.mrf.mxu0
        %v3277 = vadd.f32 %v3206, %v3276
        %3278 = vdwg.mxu0
        %3279 = vmatprep.subr.mxu0 %v2672
        %3280 = vmatpush1.msra.mxu0 %v2671
        %3281 = vmatprep.subr.mxu0 %v2668
        %3282 = vmatpush1.msra.mxu0 %v2667
        %3283 = vmatprep.subr.mxu0 %v2664
        %3284 = vmatpush1.msra.mxu0 %v2663
        %3285 = vmatprep.subr.mxu0 %v2660
        %3286 = vmatpush1.msra.mxu0 %v2659
        %3287 = vmatprep.subr.mxu0 %v2656
        %3288 = vmatpush1.msra.mxu0 %v2655
        %3289 = vmatprep.subr.mxu0 %v2652
        %3290 = vmatpush1.msra.mxu0 %v2651
        %3291 = vmatprep.subr.mxu0 %v2648
        %3292 = vmatpush1.msra.mxu0 %v2647
        %3293 = vmatprep.subr.mxu0 %v2644
        %3294 = vmatpush1.msra.mxu0 %v2643
        %3295 = vmatprep.subr.mxu0 %v2640
        %3296 = vmatpush1.msra.mxu0 %v2639
        %3297 = vmatprep.subr.mxu0 %v2636
        %3298 = vmatpush1.msra.mxu0 %v2635
        %3299 = vmatprep.subr.mxu0 %v2632
        %3300 = vmatpush1.msra.mxu0 %v2631
        %3301 = vmatprep.subr.mxu0 %v2628
        %3302 = vmatpush1.msra.mxu0 %v2627
        %3303 = vmatprep.subr.mxu0 %v2624
        %3304 = vmatpush1.msra.mxu0 %v2623
        %3305 = vmatprep.subr.mxu0 %v2620
        %3306 = vmatpush1.msra.mxu0 %v2619
        %3307 = vmatprep.subr.mxu0 %v2616
        %3308 = vmatpush1.msra.mxu0 %v2615
        %3309 = vmatprep.subr.mxu0 %v2612
        %3310 = vmatpush1.msra.mxu0 %v2611
        %3311 = vmatprep.subr.mxu0 %v2736
        %3312 = vmatpush2.msra.mxu0 %v2735
        %3313 = vmatprep.subr.mxu0 %v2732
        %3314 = vmatpush2.msra.mxu0 %v2731
        %3315 = vmatprep.subr.mxu0 %v2728
        %3316 = vmatpush2.msra.mxu0 %v2727
        %3317 = vmatprep.subr.mxu0 %v2724
        %3318 = vmatpush2.msra.mxu0 %v2723
        %3319 = vmatprep.subr.mxu0 %v2720
        %3320 = vmatpush2.msra.mxu0 %v2719
        %3321 = vmatprep.subr.mxu0 %v2716
        %3322 = vmatpush2.msra.mxu0 %v2715
        %3323 = vmatprep.subr.mxu0 %v2712
        %3324 = vmatpush2.msra.mxu0 %v2711
        %3325 = vmatprep.subr.mxu0 %v2708
        %3326 = vmatpush2.msra.mxu0 %v2707
        %3327 = vmatprep.subr.mxu0 %v2704
        %3328 = vmatpush2.msra.mxu0 %v2703
        %3329 = vmatprep.subr.mxu0 %v2700
        %3330 = vmatpush2.msra.mxu0 %v2699
        %3331 = vmatprep.subr.mxu0 %v2696
        %3332 = vmatpush2.msra.mxu0 %v2695
        %3333 = vmatprep.subr.mxu0 %v2692
        %3334 = vmatpush2.msra.mxu0 %v2691
        %3335 = vmatprep.subr.mxu0 %v2688
        %3336 = vmatpush2.msra.mxu0 %v2687
        %3337 = vmatprep.subr.mxu0 %v2684
        %3338 = vmatpush2.msra.mxu0 %v2683
        %3339 = vmatprep.subr.mxu0 %v2680
        %3340 = vmatpush2.msra.mxu0 %v2679
        %3341 = vmatprep.subr.mxu0 %v2676
        %3342 = vmatpush2.msra.mxu0 %v2675
        %3343 = vmatprep.mubr.f32.mxu0 %v2094
        %3344 = vmatmul.mubr.f32.gmra.mxu0 %v2093
        %v3345 = vpop.f32.mrf.mxu0
        %v3346 = vadd.f32 %v3275, %v3345
        %v3347 = vpop.f32.mrf.mxu0
        %v3348 = vadd.f32 %v3277, %v3347
        %3349 = vdwg.mxu0
        %3350 = vmatprep.subr.mxu0 %v2800
        %3351 = vmatpush1.msra.mxu0 %v2799
        %3352 = vmatprep.subr.mxu0 %v2796
        %3353 = vmatpush1.msra.mxu0 %v2795
        %3354 = vmatprep.subr.mxu0 %v2792
        %3355 = vmatpush1.msra.mxu0 %v2791
        %3356 = vmatprep.subr.mxu0 %v2788
        %3357 = vmatpush1.msra.mxu0 %v2787
        %3358 = vmatprep.subr.mxu0 %v2784
        %3359 = vmatpush1.msra.mxu0 %v2783
        %3360 = vmatprep.subr.mxu0 %v2780
        %3361 = vmatpush1.msra.mxu0 %v2779
        %3362 = vmatprep.subr.mxu0 %v2776
        %3363 = vmatpush1.msra.mxu0 %v2775
        %3364 = vmatprep.subr.mxu0 %v2772
        %3365 = vmatpush1.msra.mxu0 %v2771
        %3366 = vmatprep.subr.mxu0 %v2768
        %3367 = vmatpush1.msra.mxu0 %v2767
        %3368 = vmatprep.subr.mxu0 %v2764
        %3369 = vmatpush1.msra.mxu0 %v2763
        %3370 = vmatprep.subr.mxu0 %v2760
        %3371 = vmatpush1.msra.mxu0 %v2759
        %3372 = vmatprep.subr.mxu0 %v2756
        %3373 = vmatpush1.msra.mxu0 %v2755
        %3374 = vmatprep.subr.mxu0 %v2752
        %3375 = vmatpush1.msra.mxu0 %v2751
        %3376 = vmatprep.subr.mxu0 %v2748
        %3377 = vmatpush1.msra.mxu0 %v2747
        %3378 = vmatprep.subr.mxu0 %v2744
        %3379 = vmatpush1.msra.mxu0 %v2743
        %3380 = vmatprep.subr.mxu0 %v2740
        %3381 = vmatpush1.msra.mxu0 %v2739
        %3382 = vmatprep.subr.mxu0 %v2864
        %3383 = vmatpush2.msra.mxu0 %v2863
        %3384 = vmatprep.subr.mxu0 %v2860
        %3385 = vmatpush2.msra.mxu0 %v2859
        %3386 = vmatprep.subr.mxu0 %v2856
        %3387 = vmatpush2.msra.mxu0 %v2855
        %3388 = vmatprep.subr.mxu0 %v2852
        %3389 = vmatpush2.msra.mxu0 %v2851
        %3390 = vmatprep.subr.mxu0 %v2848
        %3391 = vmatpush2.msra.mxu0 %v2847
        %3392 = vmatprep.subr.mxu0 %v2844
        %3393 = vmatpush2.msra.mxu0 %v2843
        %3394 = vmatprep.subr.mxu0 %v2840
        %3395 = vmatpush2.msra.mxu0 %v2839
        %3396 = vmatprep.subr.mxu0 %v2836
        %3397 = vmatpush2.msra.mxu0 %v2835
        %3398 = vmatprep.subr.mxu0 %v2832
        %3399 = vmatpush2.msra.mxu0 %v2831
        %3400 = vmatprep.subr.mxu0 %v2828
        %3401 = vmatpush2.msra.mxu0 %v2827
        %3402 = vmatprep.subr.mxu0 %v2824
        %3403 = vmatpush2.msra.mxu0 %v2823
        %3404 = vmatprep.subr.mxu0 %v2820
        %3405 = vmatpush2.msra.mxu0 %v2819
        %3406 = vmatprep.subr.mxu0 %v2816
        %3407 = vmatpush2.msra.mxu0 %v2815
        %3408 = vmatprep.subr.mxu0 %v2812
        %3409 = vmatpush2.msra.mxu0 %v2811
        %3410 = vmatprep.subr.mxu0 %v2808
        %3411 = vmatpush2.msra.mxu0 %v2807
        %3412 = vmatprep.subr.mxu0 %v2804
        %3413 = vmatpush2.msra.mxu0 %v2803
        %3414 = vmatprep.mubr.f32.mxu0 %v2096
        %3415 = vmatmul.mubr.f32.gmra.mxu0 %v2095
        %v3416 = vpop.f32.mrf.mxu0
        %v3417 = vadd.f32 %v3346, %v3416
        %v3418 = vpop.f32.mrf.mxu0
        %v3419 = vadd.f32 %v3348, %v3418
        %3420 = vdwg.mxu0
        %3421 = vmatprep.subr.mxu0 %v2928
        %3422 = vmatpush1.msra.mxu0 %v2927
        %3423 = vmatprep.subr.mxu0 %v2924
        %3424 = vmatpush1.msra.mxu0 %v2923
        %3425 = vmatprep.subr.mxu0 %v2920
        %3426 = vmatpush1.msra.mxu0 %v2919
        %3427 = vmatprep.subr.mxu0 %v2916
        %3428 = vmatpush1.msra.mxu0 %v2915
        %3429 = vmatprep.subr.mxu0 %v2912
        %3430 = vmatpush1.msra.mxu0 %v2911
        %3431 = vmatprep.subr.mxu0 %v2908
        %3432 = vmatpush1.msra.mxu0 %v2907
        %3433 = vmatprep.subr.mxu0 %v2904
        %3434 = vmatpush1.msra.mxu0 %v2903
        %3435 = vmatprep.subr.mxu0 %v2900
        %3436 = vmatpush1.msra.mxu0 %v2899
        %3437 = vmatprep.subr.mxu0 %v2896
        %3438 = vmatpush1.msra.mxu0 %v2895
        %3439 = vmatprep.subr.mxu0 %v2892
        %3440 = vmatpush1.msra.mxu0 %v2891
        %3441 = vmatprep.subr.mxu0 %v2888
        %3442 = vmatpush1.msra.mxu0 %v2887
        %3443 = vmatprep.subr.mxu0 %v2884
        %3444 = vmatpush1.msra.mxu0 %v2883
        %3445 = vmatprep.subr.mxu0 %v2880
        %3446 = vmatpush1.msra.mxu0 %v2879
        %3447 = vmatprep.subr.mxu0 %v2876
        %3448 = vmatpush1.msra.mxu0 %v2875
        %3449 = vmatprep.subr.mxu0 %v2872
        %3450 = vmatpush1.msra.mxu0 %v2871
        %3451 = vmatprep.subr.mxu0 %v2868
        %3452 = vmatpush1.msra.mxu0 %v2867
        %3453 = vmatprep.subr.mxu0 %v2992
        %3454 = vmatpush2.msra.mxu0 %v2991
        %3455 = vmatprep.subr.mxu0 %v2988
        %3456 = vmatpush2.msra.mxu0 %v2987
        %3457 = vmatprep.subr.mxu0 %v2984
        %3458 = vmatpush2.msra.mxu0 %v2983
        %3459 = vmatprep.subr.mxu0 %v2980
        %3460 = vmatpush2.msra.mxu0 %v2979
        %3461 = vmatprep.subr.mxu0 %v2976
        %3462 = vmatpush2.msra.mxu0 %v2975
        %3463 = vmatprep.subr.mxu0 %v2972
        %3464 = vmatpush2.msra.mxu0 %v2971
        %3465 = vmatprep.subr.mxu0 %v2968
        %3466 = vmatpush2.msra.mxu0 %v2967
        %3467 = vmatprep.subr.mxu0 %v2964
        %3468 = vmatpush2.msra.mxu0 %v2963
        %3469 = vmatprep.subr.mxu0 %v2960
        %3470 = vmatpush2.msra.mxu0 %v2959
        %3471 = vmatprep.subr.mxu0 %v2956
        %3472 = vmatpush2.msra.mxu0 %v2955
        %3473 = vmatprep.subr.mxu0 %v2952
        %3474 = vmatpush2.msra.mxu0 %v2951
        %3475 = vmatprep.subr.mxu0 %v2948
        %3476 = vmatpush2.msra.mxu0 %v2947
        %3477 = vmatprep.subr.mxu0 %v2944
        %3478 = vmatpush2.msra.mxu0 %v2943
        %3479 = vmatprep.subr.mxu0 %v2940
        %3480 = vmatpush2.msra.mxu0 %v2939
        %3481 = vmatprep.subr.mxu0 %v2936
        %3482 = vmatpush2.msra.mxu0 %v2935
        %3483 = vmatprep.subr.mxu0 %v2932
        %3484 = vmatpush2.msra.mxu0 %v2931
        %3485 = vmatprep.mubr.f32.mxu0 %v2098
        %3486 = vmatmul.mubr.f32.gmra.mxu0 %v2097
        %v3487 = vpop.f32.mrf.mxu0
        %v3488 = vadd.f32 %v3417, %v3487
        %v3489 = vpop.f32.mrf.mxu0
        %v3490 = vadd.f32 %v3419, %v3489
        %3491 = vdwg.mxu0
        %3492 = vmatprep.subr.mxu0 %v2162
        %3493 = vmatpush1.msra.mxu0 %v2161
        %3494 = vmatprep.subr.mxu0 %v2158
        %3495 = vmatpush1.msra.mxu0 %v2157
        %3496 = vmatprep.subr.mxu0 %v2154
        %3497 = vmatpush1.msra.mxu0 %v2153
        %3498 = vmatprep.subr.mxu0 %v2150
        %3499 = vmatpush1.msra.mxu0 %v2149
        %3500 = vmatprep.subr.mxu0 %v2146
        %3501 = vmatpush1.msra.mxu0 %v2145
        %3502 = vmatprep.subr.mxu0 %v2142
        %3503 = vmatpush1.msra.mxu0 %v2141
        %3504 = vmatprep.subr.mxu0 %v2138
        %3505 = vmatpush1.msra.mxu0 %v2137
        %3506 = vmatprep.subr.mxu0 %v2134
        %3507 = vmatpush1.msra.mxu0 %v2133
        %3508 = vmatprep.subr.mxu0 %v2130
        %3509 = vmatpush1.msra.mxu0 %v2129
        %3510 = vmatprep.subr.mxu0 %v2126
        %3511 = vmatpush1.msra.mxu0 %v2125
        %3512 = vmatprep.subr.mxu0 %v2122
        %3513 = vmatpush1.msra.mxu0 %v2121
        %3514 = vmatprep.subr.mxu0 %v2118
        %3515 = vmatpush1.msra.mxu0 %v2117
        %3516 = vmatprep.subr.mxu0 %v2114
        %3517 = vmatpush1.msra.mxu0 %v2113
        %3518 = vmatprep.subr.mxu0 %v2110
        %3519 = vmatpush1.msra.mxu0 %v2109
        %3520 = vmatprep.subr.mxu0 %v2106
        %3521 = vmatpush1.msra.mxu0 %v2105
        %3522 = vmatprep.subr.mxu0 %v2102
        %3523 = vmatpush1.msra.mxu0 %v2101
        %3524 = vmatprep.subr.mxu0 %v2226
        %3525 = vmatpush2.msra.mxu0 %v2225
        %3526 = vmatprep.subr.mxu0 %v2222
        %3527 = vmatpush2.msra.mxu0 %v2221
        %3528 = vmatprep.subr.mxu0 %v2218
        %3529 = vmatpush2.msra.mxu0 %v2217
        %3530 = vmatprep.subr.mxu0 %v2214
        %3531 = vmatpush2.msra.mxu0 %v2213
        %3532 = vmatprep.subr.mxu0 %v2210
        %3533 = vmatpush2.msra.mxu0 %v2209
        %3534 = vmatprep.subr.mxu0 %v2206
        %3535 = vmatpush2.msra.mxu0 %v2205
        %3536 = vmatprep.subr.mxu0 %v2202
        %3537 = vmatpush2.msra.mxu0 %v2201
        %3538 = vmatprep.subr.mxu0 %v2198
        %3539 = vmatpush2.msra.mxu0 %v2197
        %3540 = vmatprep.subr.mxu0 %v2194
        %3541 = vmatpush2.msra.mxu0 %v2193
        %3542 = vmatprep.subr.mxu0 %v2190
        %3543 = vmatpush2.msra.mxu0 %v2189
        %3544 = vmatprep.subr.mxu0 %v2186
        %3545 = vmatpush2.msra.mxu0 %v2185
        %3546 = vmatprep.subr.mxu0 %v2182
        %3547 = vmatpush2.msra.mxu0 %v2181
        %3548 = vmatprep.subr.mxu0 %v2178
        %3549 = vmatpush2.msra.mxu0 %v2177
        %3550 = vmatprep.subr.mxu0 %v2174
        %3551 = vmatpush2.msra.mxu0 %v2173
        %3552 = vmatprep.subr.mxu0 %v2170
        %3553 = vmatpush2.msra.mxu0 %v2169
        %3554 = vmatprep.subr.mxu0 %v2166
        %3555 = vmatpush2.msra.mxu0 %v2165
        %3556 = vmatprep.mubr.f32.mxu0 %v2086
        %3557 = vmatmul.mubr.f32.gmra.mxu0 %v2085
        %v3558 = vpop.f32.mrf.mxu0
        %v3559 = vadd.f32 0.0, %v3558
        %v3560 = vpop.f32.mrf.mxu0
        %v3561 = vadd.f32 0.0, %v3560
        %3562 = vdwg.mxu0
        %3563 = vmatprep.subr.mxu0 %v2290
        %3564 = vmatpush1.msra.mxu0 %v2289
        %3565 = vmatprep.subr.mxu0 %v2286
        %3566 = vmatpush1.msra.mxu0 %v2285
        %3567 = vmatprep.subr.mxu0 %v2282
        %3568 = vmatpush1.msra.mxu0 %v2281
        %3569 = vmatprep.subr.mxu0 %v2278
        %3570 = vmatpush1.msra.mxu0 %v2277
        %3571 = vmatprep.subr.mxu0 %v2274
        %3572 = vmatpush1.msra.mxu0 %v2273
        %3573 = vmatprep.subr.mxu0 %v2270
        %3574 = vmatpush1.msra.mxu0 %v2269
        %3575 = vmatprep.subr.mxu0 %v2266
        %3576 = vmatpush1.msra.mxu0 %v2265
        %3577 = vmatprep.subr.mxu0 %v2262
        %3578 = vmatpush1.msra.mxu0 %v2261
        %3579 = vmatprep.subr.mxu0 %v2258
        %3580 = vmatpush1.msra.mxu0 %v2257
        %3581 = vmatprep.subr.mxu0 %v2254
        %3582 = vmatpush1.msra.mxu0 %v2253
        %3583 = vmatprep.subr.mxu0 %v2250
        %3584 = vmatpush1.msra.mxu0 %v2249
        %3585 = vmatprep.subr.mxu0 %v2246
        %3586 = vmatpush1.msra.mxu0 %v2245
        %3587 = vmatprep.subr.mxu0 %v2242
        %3588 = vmatpush1.msra.mxu0 %v2241
        %3589 = vmatprep.subr.mxu0 %v2238
        %3590 = vmatpush1.msra.mxu0 %v2237
        %3591 = vmatprep.subr.mxu0 %v2234
        %3592 = vmatpush1.msra.mxu0 %v2233
        %3593 = vmatprep.subr.mxu0 %v2230
        %3594 = vmatpush1.msra.mxu0 %v2229
        %3595 = vmatprep.subr.mxu0 %v2354
        %3596 = vmatpush2.msra.mxu0 %v2353
        %3597 = vmatprep.subr.mxu0 %v2350
        %3598 = vmatpush2.msra.mxu0 %v2349
        %3599 = vmatprep.subr.mxu0 %v2346
        %3600 = vmatpush2.msra.mxu0 %v2345
        %3601 = vmatprep.subr.mxu0 %v2342
        %3602 = vmatpush2.msra.mxu0 %v2341
        %3603 = vmatprep.subr.mxu0 %v2338
        %3604 = vmatpush2.msra.mxu0 %v2337
        %3605 = vmatprep.subr.mxu0 %v2334
        %3606 = vmatpush2.msra.mxu0 %v2333
        %3607 = vmatprep.subr.mxu0 %v2330
        %3608 = vmatpush2.msra.mxu0 %v2329
        %3609 = vmatprep.subr.mxu0 %v2326
        %3610 = vmatpush2.msra.mxu0 %v2325
        %3611 = vmatprep.subr.mxu0 %v2322
        %3612 = vmatpush2.msra.mxu0 %v2321
        %3613 = vmatprep.subr.mxu0 %v2318
        %3614 = vmatpush2.msra.mxu0 %v2317
        %3615 = vmatprep.subr.mxu0 %v2314
        %3616 = vmatpush2.msra.mxu0 %v2313
        %3617 = vmatprep.subr.mxu0 %v2310
        %3618 = vmatpush2.msra.mxu0 %v2309
        %3619 = vmatprep.subr.mxu0 %v2306
        %3620 = vmatpush2.msra.mxu0 %v2305
        %3621 = vmatprep.subr.mxu0 %v2302
        %3622 = vmatpush2.msra.mxu0 %v2301
        %3623 = vmatprep.subr.mxu0 %v2298
        %3624 = vmatpush2.msra.mxu0 %v2297
        %3625 = vmatprep.subr.mxu0 %v2294
        %3626 = vmatpush2.msra.mxu0 %v2293
        %3627 = vmatprep.mubr.f32.mxu0 %v2088
        %3628 = vmatmul.mubr.f32.gmra.mxu0 %v2087
        %v3629 = vpop.f32.mrf.mxu0
        %v3630 = vadd.f32 %v3559, %v3629
        %v3631 = vpop.f32.mrf.mxu0
        %v3632 = vadd.f32 %v3561, %v3631
        %3633 = vdwg.mxu0
        %3634 = vmatprep.subr.mxu0 %v2418
        %3635 = vmatpush1.msra.mxu0 %v2417
        %3636 = vmatprep.subr.mxu0 %v2414
        %3637 = vmatpush1.msra.mxu0 %v2413
        %3638 = vmatprep.subr.mxu0 %v2410
        %3639 = vmatpush1.msra.mxu0 %v2409
        %3640 = vmatprep.subr.mxu0 %v2406
        %3641 = vmatpush1.msra.mxu0 %v2405
        %3642 = vmatprep.subr.mxu0 %v2402
        %3643 = vmatpush1.msra.mxu0 %v2401
        %3644 = vmatprep.subr.mxu0 %v2398
        %3645 = vmatpush1.msra.mxu0 %v2397
        %3646 = vmatprep.subr.mxu0 %v2394
        %3647 = vmatpush1.msra.mxu0 %v2393
        %3648 = vmatprep.subr.mxu0 %v2390
        %3649 = vmatpush1.msra.mxu0 %v2389
        %3650 = vmatprep.subr.mxu0 %v2386
        %3651 = vmatpush1.msra.mxu0 %v2385
        %3652 = vmatprep.subr.mxu0 %v2382
        %3653 = vmatpush1.msra.mxu0 %v2381
        %3654 = vmatprep.subr.mxu0 %v2378
        %3655 = vmatpush1.msra.mxu0 %v2377
        %3656 = vmatprep.subr.mxu0 %v2374
        %3657 = vmatpush1.msra.mxu0 %v2373
        %3658 = vmatprep.subr.mxu0 %v2370
        %3659 = vmatpush1.msra.mxu0 %v2369
        %3660 = vmatprep.subr.mxu0 %v2366
        %3661 = vmatpush1.msra.mxu0 %v2365
        %3662 = vmatprep.subr.mxu0 %v2362
        %3663 = vmatpush1.msra.mxu0 %v2361
        %3664 = vmatprep.subr.mxu0 %v2358
        %3665 = vmatpush1.msra.mxu0 %v2357
        %3666 = vmatprep.subr.mxu0 %v2482
        %3667 = vmatpush2.msra.mxu0 %v2481
        %3668 = vmatprep.subr.mxu0 %v2478
        %3669 = vmatpush2.msra.mxu0 %v2477
        %3670 = vmatprep.subr.mxu0 %v2474
        %3671 = vmatpush2.msra.mxu0 %v2473
        %3672 = vmatprep.subr.mxu0 %v2470
        %3673 = vmatpush2.msra.mxu0 %v2469
        %3674 = vmatprep.subr.mxu0 %v2466
        %3675 = vmatpush2.msra.mxu0 %v2465
        %3676 = vmatprep.subr.mxu0 %v2462
        %3677 = vmatpush2.msra.mxu0 %v2461
        %3678 = vmatprep.subr.mxu0 %v2458
        %3679 = vmatpush2.msra.mxu0 %v2457
        %3680 = vmatprep.subr.mxu0 %v2454
        %3681 = vmatpush2.msra.mxu0 %v2453
        %3682 = vmatprep.subr.mxu0 %v2450
        %3683 = vmatpush2.msra.mxu0 %v2449
        %3684 = vmatprep.subr.mxu0 %v2446
        %3685 = vmatpush2.msra.mxu0 %v2445
        %3686 = vmatprep.subr.mxu0 %v2442
        %3687 = vmatpush2.msra.mxu0 %v2441
        %3688 = vmatprep.subr.mxu0 %v2438
        %3689 = vmatpush2.msra.mxu0 %v2437
        %3690 = vmatprep.subr.mxu0 %v2434
        %3691 = vmatpush2.msra.mxu0 %v2433
        %3692 = vmatprep.subr.mxu0 %v2430
        %3693 = vmatpush2.msra.mxu0 %v2429
        %3694 = vmatprep.subr.mxu0 %v2426
        %3695 = vmatpush2.msra.mxu0 %v2425
        %3696 = vmatprep.subr.mxu0 %v2422
        %3697 = vmatpush2.msra.mxu0 %v2421
        %3698 = vmatprep.mubr.f32.mxu0 %v2090
        %3699 = vmatmul.mubr.f32.gmra.mxu0 %v2089
        %v3700 = vpop.f32.mrf.mxu0
        %v3701 = vadd.f32 %v3630, %v3700
        %v3702 = vpop.f32.mrf.mxu0
        %v3703 = vadd.f32 %v3632, %v3702
        %3704 = vdwg.mxu0
        %3705 = vmatprep.subr.mxu0 %v2546
        %3706 = vmatpush1.msra.mxu0 %v2545
        %3707 = vmatprep.subr.mxu0 %v2542
        %3708 = vmatpush1.msra.mxu0 %v2541
        %3709 = vmatprep.subr.mxu0 %v2538
        %3710 = vmatpush1.msra.mxu0 %v2537
        %3711 = vmatprep.subr.mxu0 %v2534
        %3712 = vmatpush1.msra.mxu0 %v2533
        %3713 = vmatprep.subr.mxu0 %v2530
        %3714 = vmatpush1.msra.mxu0 %v2529
        %3715 = vmatprep.subr.mxu0 %v2526
        %3716 = vmatpush1.msra.mxu0 %v2525
        %3717 = vmatprep.subr.mxu0 %v2522
        %3718 = vmatpush1.msra.mxu0 %v2521
        %3719 = vmatprep.subr.mxu0 %v2518
        %3720 = vmatpush1.msra.mxu0 %v2517
        %3721 = vmatprep.subr.mxu0 %v2514
        %3722 = vmatpush1.msra.mxu0 %v2513
        %3723 = vmatprep.subr.mxu0 %v2510
        %3724 = vmatpush1.msra.mxu0 %v2509
        %3725 = vmatprep.subr.mxu0 %v2506
        %3726 = vmatpush1.msra.mxu0 %v2505
        %3727 = vmatprep.subr.mxu0 %v2502
        %3728 = vmatpush1.msra.mxu0 %v2501
        %3729 = vmatprep.subr.mxu0 %v2498
        %3730 = vmatpush1.msra.mxu0 %v2497
        %3731 = vmatprep.subr.mxu0 %v2494
        %3732 = vmatpush1.msra.mxu0 %v2493
        %3733 = vmatprep.subr.mxu0 %v2490
        %3734 = vmatpush1.msra.mxu0 %v2489
        %3735 = vmatprep.subr.mxu0 %v2486
        %3736 = vmatpush1.msra.mxu0 %v2485
        %3737 = vmatprep.subr.mxu0 %v2610
        %3738 = vmatpush2.msra.mxu0 %v2609
        %3739 = vmatprep.subr.mxu0 %v2606
        %3740 = vmatpush2.msra.mxu0 %v2605
        %3741 = vmatprep.subr.mxu0 %v2602
        %3742 = vmatpush2.msra.mxu0 %v2601
        %3743 = vmatprep.subr.mxu0 %v2598
        %3744 = vmatpush2.msra.mxu0 %v2597
        %3745 = vmatprep.subr.mxu0 %v2594
        %3746 = vmatpush2.msra.mxu0 %v2593
        %3747 = vmatprep.subr.mxu0 %v2590
        %3748 = vmatpush2.msra.mxu0 %v2589
        %3749 = vmatprep.subr.mxu0 %v2586
        %3750 = vmatpush2.msra.mxu0 %v2585
        %3751 = vmatprep.subr.mxu0 %v2582
        %3752 = vmatpush2.msra.mxu0 %v2581
        %3753 = vmatprep.subr.mxu0 %v2578
        %3754 = vmatpush2.msra.mxu0 %v2577
        %3755 = vmatprep.subr.mxu0 %v2574
        %3756 = vmatpush2.msra.mxu0 %v2573
        %3757 = vmatprep.subr.mxu0 %v2570
        %3758 = vmatpush2.msra.mxu0 %v2569
        %3759 = vmatprep.subr.mxu0 %v2566
        %3760 = vmatpush2.msra.mxu0 %v2565
        %3761 = vmatprep.subr.mxu0 %v2562
        %3762 = vmatpush2.msra.mxu0 %v2561
        %3763 = vmatprep.subr.mxu0 %v2558
        %3764 = vmatpush2.msra.mxu0 %v2557
        %3765 = vmatprep.subr.mxu0 %v2554
        %3766 = vmatpush2.msra.mxu0 %v2553
        %3767 = vmatprep.subr.mxu0 %v2550
        %3768 = vmatpush2.msra.mxu0 %v2549
        %3769 = vmatprep.mubr.f32.mxu0 %v2092
        %3770 = vmatmul.mubr.f32.gmra.mxu0 %v2091
        %v3771 = vpop.f32.mrf.mxu0
        %v3772 = vadd.f32 %v3701, %v3771
        %v3773 = vpop.f32.mrf.mxu0
        %v3774 = vadd.f32 %v3703, %v3773
        %3775 = vdwg.mxu0
        %3776 = vmatprep.subr.mxu0 %v2674
        %3777 = vmatpush1.msra.mxu0 %v2673
        %3778 = vmatprep.subr.mxu0 %v2670
        %3779 = vmatpush1.msra.mxu0 %v2669
        %3780 = vmatprep.subr.mxu0 %v2666
        %3781 = vmatpush1.msra.mxu0 %v2665
        %3782 = vmatprep.subr.mxu0 %v2662
        %3783 = vmatpush1.msra.mxu0 %v2661
        %3784 = vmatprep.subr.mxu0 %v2658
        %3785 = vmatpush1.msra.mxu0 %v2657
        %3786 = vmatprep.subr.mxu0 %v2654
        %3787 = vmatpush1.msra.mxu0 %v2653
        %3788 = vmatprep.subr.mxu0 %v2650
        %3789 = vmatpush1.msra.mxu0 %v2649
        %3790 = vmatprep.subr.mxu0 %v2646
        %3791 = vmatpush1.msra.mxu0 %v2645
        %3792 = vmatprep.subr.mxu0 %v2642
        %3793 = vmatpush1.msra.mxu0 %v2641
        %3794 = vmatprep.subr.mxu0 %v2638
        %3795 = vmatpush1.msra.mxu0 %v2637
        %3796 = vmatprep.subr.mxu0 %v2634
        %3797 = vmatpush1.msra.mxu0 %v2633
        %3798 = vmatprep.subr.mxu0 %v2630
        %3799 = vmatpush1.msra.mxu0 %v2629
        %3800 = vmatprep.subr.mxu0 %v2626
        %3801 = vmatpush1.msra.mxu0 %v2625
        %3802 = vmatprep.subr.mxu0 %v2622
        %3803 = vmatpush1.msra.mxu0 %v2621
        %3804 = vmatprep.subr.mxu0 %v2618
        %3805 = vmatpush1.msra.mxu0 %v2617
        %3806 = vmatprep.subr.mxu0 %v2614
        %3807 = vmatpush1.msra.mxu0 %v2613
        %3808 = vmatprep.subr.mxu0 %v2738
        %3809 = vmatpush2.msra.mxu0 %v2737
        %3810 = vmatprep.subr.mxu0 %v2734
        %3811 = vmatpush2.msra.mxu0 %v2733
        %3812 = vmatprep.subr.mxu0 %v2730
        %3813 = vmatpush2.msra.mxu0 %v2729
        %3814 = vmatprep.subr.mxu0 %v2726
        %3815 = vmatpush2.msra.mxu0 %v2725
        %3816 = vmatprep.subr.mxu0 %v2722
        %3817 = vmatpush2.msra.mxu0 %v2721
        %3818 = vmatprep.subr.mxu0 %v2718
        %3819 = vmatpush2.msra.mxu0 %v2717
        %3820 = vmatprep.subr.mxu0 %v2714
        %3821 = vmatpush2.msra.mxu0 %v2713
        %3822 = vmatprep.subr.mxu0 %v2710
        %3823 = vmatpush2.msra.mxu0 %v2709
        %3824 = vmatprep.subr.mxu0 %v2706
        %3825 = vmatpush2.msra.mxu0 %v2705
        %3826 = vmatprep.subr.mxu0 %v2702
        %3827 = vmatpush2.msra.mxu0 %v2701
        %3828 = vmatprep.subr.mxu0 %v2698
        %3829 = vmatpush2.msra.mxu0 %v2697
        %3830 = vmatprep.subr.mxu0 %v2694
        %3831 = vmatpush2.msra.mxu0 %v2693
        %3832 = vmatprep.subr.mxu0 %v2690
        %3833 = vmatpush2.msra.mxu0 %v2689
        %3834 = vmatprep.subr.mxu0 %v2686
        %3835 = vmatpush2.msra.mxu0 %v2685
        %3836 = vmatprep.subr.mxu0 %v2682
        %3837 = vmatpush2.msra.mxu0 %v2681
        %3838 = vmatprep.subr.mxu0 %v2678
        %3839 = vmatpush2.msra.mxu0 %v2677
        %3840 = vmatprep.mubr.f32.mxu0 %v2094
        %3841 = vmatmul.mubr.f32.gmra.mxu0 %v2093
        %v3842 = vpop.f32.mrf.mxu0
        %v3843 = vadd.f32 %v3772, %v3842
        %v3844 = vpop.f32.mrf.mxu0
        %v3845 = vadd.f32 %v3774, %v3844
        %3846 = vdwg.mxu0
        %3847 = vmatprep.subr.mxu0 %v2802
        %3848 = vmatpush1.msra.mxu0 %v2801
        %3849 = vmatprep.subr.mxu0 %v2798
        %3850 = vmatpush1.msra.mxu0 %v2797
        %3851 = vmatprep.subr.mxu0 %v2794
        %3852 = vmatpush1.msra.mxu0 %v2793
        %3853 = vmatprep.subr.mxu0 %v2790
        %3854 = vmatpush1.msra.mxu0 %v2789
        %3855 = vmatprep.subr.mxu0 %v2786
        %3856 = vmatpush1.msra.mxu0 %v2785
        %3857 = vmatprep.subr.mxu0 %v2782
        %3858 = vmatpush1.msra.mxu0 %v2781
        %3859 = vmatprep.subr.mxu0 %v2778
        %3860 = vmatpush1.msra.mxu0 %v2777
        %3861 = vmatprep.subr.mxu0 %v2774
        %3862 = vmatpush1.msra.mxu0 %v2773
        %3863 = vmatprep.subr.mxu0 %v2770
        %3864 = vmatpush1.msra.mxu0 %v2769
        %3865 = vmatprep.subr.mxu0 %v2766
        %3866 = vmatpush1.msra.mxu0 %v2765
        %3867 = vmatprep.subr.mxu0 %v2762
        %3868 = vmatpush1.msra.mxu0 %v2761
        %3869 = vmatprep.subr.mxu0 %v2758
        %3870 = vmatpush1.msra.mxu0 %v2757
        %3871 = vmatprep.subr.mxu0 %v2754
        %3872 = vmatpush1.msra.mxu0 %v2753
        %3873 = vmatprep.subr.mxu0 %v2750
        %3874 = vmatpush1.msra.mxu0 %v2749
        %3875 = vmatprep.subr.mxu0 %v2746
        %3876 = vmatpush1.msra.mxu0 %v2745
        %3877 = vmatprep.subr.mxu0 %v2742
        %3878 = vmatpush1.msra.mxu0 %v2741
        %3879 = vmatprep.subr.mxu0 %v2866
        %3880 = vmatpush2.msra.mxu0 %v2865
        %3881 = vmatprep.subr.mxu0 %v2862
        %3882 = vmatpush2.msra.mxu0 %v2861
        %3883 = vmatprep.subr.mxu0 %v2858
        %3884 = vmatpush2.msra.mxu0 %v2857
        %3885 = vmatprep.subr.mxu0 %v2854
        %3886 = vmatpush2.msra.mxu0 %v2853
        %3887 = vmatprep.subr.mxu0 %v2850
        %3888 = vmatpush2.msra.mxu0 %v2849
        %3889 = vmatprep.subr.mxu0 %v2846
        %3890 = vmatpush2.msra.mxu0 %v2845
        %3891 = vmatprep.subr.mxu0 %v2842
        %3892 = vmatpush2.msra.mxu0 %v2841
        %3893 = vmatprep.subr.mxu0 %v2838
        %3894 = vmatpush2.msra.mxu0 %v2837
        %3895 = vmatprep.subr.mxu0 %v2834
        %3896 = vmatpush2.msra.mxu0 %v2833
        %3897 = vmatprep.subr.mxu0 %v2830
        %3898 = vmatpush2.msra.mxu0 %v2829
        %3899 = vmatprep.subr.mxu0 %v2826
        %3900 = vmatpush2.msra.mxu0 %v2825
        %3901 = vmatprep.subr.mxu0 %v2822
        %3902 = vmatpush2.msra.mxu0 %v2821
        %3903 = vmatprep.subr.mxu0 %v2818
        %3904 = vmatpush2.msra.mxu0 %v2817
        %3905 = vmatprep.subr.mxu0 %v2814
        %3906 = vmatpush2.msra.mxu0 %v2813
        %3907 = vmatprep.subr.mxu0 %v2810
        %3908 = vmatpush2.msra.mxu0 %v2809
        %3909 = vmatprep.subr.mxu0 %v2806
        %3910 = vmatpush2.msra.mxu0 %v2805
        %3911 = vmatprep.mubr.f32.mxu0 %v2096
        %3912 = vmatmul.mubr.f32.gmra.mxu0 %v2095
        %v3913 = vpop.f32.mrf.mxu0
        %v3914 = vadd.f32 %v3843, %v3913
        %v3915 = vpop.f32.mrf.mxu0
        %v3916 = vadd.f32 %v3845, %v3915
        %3917 = vdwg.mxu0
        %3918 = vmatprep.subr.mxu0 %v2930
        %3919 = vmatpush1.msra.mxu0 %v2929
        %3920 = vmatprep.subr.mxu0 %v2926
        %3921 = vmatpush1.msra.mxu0 %v2925
        %3922 = vmatprep.subr.mxu0 %v2922
        %3923 = vmatpush1.msra.mxu0 %v2921
        %3924 = vmatprep.subr.mxu0 %v2918
        %3925 = vmatpush1.msra.mxu0 %v2917
        %3926 = vmatprep.subr.mxu0 %v2914
        %3927 = vmatpush1.msra.mxu0 %v2913
        %3928 = vmatprep.subr.mxu0 %v2910
        %3929 = vmatpush1.msra.mxu0 %v2909
        %3930 = vmatprep.subr.mxu0 %v2906
        %3931 = vmatpush1.msra.mxu0 %v2905
        %3932 = vmatprep.subr.mxu0 %v2902
        %3933 = vmatpush1.msra.mxu0 %v2901
        %3934 = vmatprep.subr.mxu0 %v2898
        %3935 = vmatpush1.msra.mxu0 %v2897
        %3936 = vmatprep.subr.mxu0 %v2894
        %3937 = vmatpush1.msra.mxu0 %v2893
        %3938 = vmatprep.subr.mxu0 %v2890
        %3939 = vmatpush1.msra.mxu0 %v2889
        %3940 = vmatprep.subr.mxu0 %v2886
        %3941 = vmatpush1.msra.mxu0 %v2885
        %3942 = vmatprep.subr.mxu0 %v2882
        %3943 = vmatpush1.msra.mxu0 %v2881
        %3944 = vmatprep.subr.mxu0 %v2878
        %3945 = vmatpush1.msra.mxu0 %v2877
        %3946 = vmatprep.subr.mxu0 %v2874
        %3947 = vmatpush1.msra.mxu0 %v2873
        %3948 = vmatprep.subr.mxu0 %v2870
        %3949 = vmatpush1.msra.mxu0 %v2869
        %3950 = vmatprep.subr.mxu0 %v2994
        %3951 = vmatpush2.msra.mxu0 %v2993
        %3952 = vmatprep.subr.mxu0 %v2990
        %3953 = vmatpush2.msra.mxu0 %v2989
        %3954 = vmatprep.subr.mxu0 %v2986
        %3955 = vmatpush2.msra.mxu0 %v2985
        %3956 = vmatprep.subr.mxu0 %v2982
        %3957 = vmatpush2.msra.mxu0 %v2981
        %3958 = vmatprep.subr.mxu0 %v2978
        %3959 = vmatpush2.msra.mxu0 %v2977
        %3960 = vmatprep.subr.mxu0 %v2974
        %3961 = vmatpush2.msra.mxu0 %v2973
        %3962 = vmatprep.subr.mxu0 %v2970
        %3963 = vmatpush2.msra.mxu0 %v2969
        %3964 = vmatprep.subr.mxu0 %v2966
        %3965 = vmatpush2.msra.mxu0 %v2965
        %3966 = vmatprep.subr.mxu0 %v2962
        %3967 = vmatpush2.msra.mxu0 %v2961
        %3968 = vmatprep.subr.mxu0 %v2958
        %3969 = vmatpush2.msra.mxu0 %v2957
        %3970 = vmatprep.subr.mxu0 %v2954
        %3971 = vmatpush2.msra.mxu0 %v2953
        %3972 = vmatprep.subr.mxu0 %v2950
        %3973 = vmatpush2.msra.mxu0 %v2949
        %3974 = vmatprep.subr.mxu0 %v2946
        %3975 = vmatpush2.msra.mxu0 %v2945
        %3976 = vmatprep.subr.mxu0 %v2942
        %3977 = vmatpush2.msra.mxu0 %v2941
        %3978 = vmatprep.subr.mxu0 %v2938
        %3979 = vmatpush2.msra.mxu0 %v2937
        %3980 = vmatprep.subr.mxu0 %v2934
        %3981 = vmatpush2.msra.mxu0 %v2933
        %3982 = vmatprep.mubr.f32.mxu0 %v2098
        %3983 = vmatmul.mubr.f32.gmra.mxu0 %v2097
        %v3984 = vpop.f32.mrf.mxu0
        %v3985 = vadd.f32 %v3914, %v3984
        %v3986 = vpop.f32.mrf.mxu0
        %v3987 = vadd.f32 %v3916, %v3986
        %3988 = vdwg.mxu0
        %v3989 = vadd.f32 %v2081, %v3488
        %v3990 = vadd.f32 %v2082, %v3490
        %v3991 = vadd.f32 %v2083, %v3985
        %v3992 = vadd.f32 %v2084, %v3987
        %3993 = vst [vmem:[#allocation2] sm:$0xff] %v3989
        %3994 = vst [vmem:[#allocation2 + $0x8] sm:$0xff] %v3990
        %3995 = vst [vmem:[#allocation2 + $0x10] sm:$0xff] %v3991
        %3996 = vst [vmem:[#allocation2 + $0x18] sm:$0xff] %v3992
        %p3997 = scmp.eq.s32.totalorder %s21, 6
        // Predicated region
        $region60: #{forward.8} parent=50 // pred_check
          %p3998 = pneg %p3997
        $region61: #{forward.8} parent=50 // pred_check_branch
          %4000 = sbr.rel (%p3998) target = $region63
        $region62: #{forward.8} parent=50 // pred_region
          %v4001 = vld [vmem:[#allocation2] sm:$0xff]
          %v4002 = vld [vmem:[#allocation2 + $0x8] sm:$0xff]
          %v4003 = vld [vmem:[#allocation2 + $0x10] sm:$0xff]
          %v4004 = vld [vmem:[#allocation2 + $0x18] sm:$0xff]
          %v4005 = vld [vmem:[%s2061] sm:$0xf]
          %v4007 = vlaneseq
          %v4008 = vshrl.u32 %v4007, 7
          %v4009 = vsub.s32 0, %v4008
          %v4010 = vrot.slane %v4005, %v4009
          %v4011 = vlaneseq
          %v4012 = vshrl.u32 %v4011, 7
          %v4013 = vsub.s32 1, %v4012
          %v4014 = vrot.slane %v4005, %v4013
          %v4015 = vlaneseq
          %v4016 = vshrl.u32 %v4015, 7
          %v4017 = vsub.s32 2, %v4016
          %v4018 = vrot.slane %v4005, %v4017
          %v4019 = vlaneseq
          %v4020 = vshrl.u32 %v4019, 7
          %v4021 = vsub.s32 3, %v4020
          %v4022 = vrot.slane %v4005, %v4021
          %v4027 = vadd.f32 %v4001, %v4010
          %v4028 = vadd.f32 %v4002, %v4014
          %v4029 = vadd.f32 %v4003, %v4018
          %v4030 = vadd.f32 %v4004, %v4022
          %vm4031 = vcmp.ge.f32.partialorder %v4027, 0.0
          %vm4032 = vcmp.ge.f32.partialorder %v4028, 0.0
          %vm4033 = vcmp.ge.f32.partialorder %v4029, 0.0
          %vm4034 = vcmp.ge.f32.partialorder %v4030, 0.0
          %v4035 = vmul.f32 %v4027, 0.01
          %v4036 = vmul.f32 %v4028, 0.01
          %v4037 = vmul.f32 %v4029, 0.01
          %v4038 = vmul.f32 %v4030, 0.01
          %v4039 = vsel %vm4031, %v4027, %v4035
          %v4040 = vsel %vm4032, %v4028, %v4036
          %v4041 = vsel %vm4033, %v4029, %v4037
          %v4042 = vsel %vm4034, %v4030, %v4038
          %4043 = vst [vmem:[%s2071] sm:$0xff] %v4039
          %4044 = vst [vmem:[%s2071 + $0x8] sm:$0xff] %v4040
          %4045 = vst [vmem:[%s2071 + $0x10] sm:$0xff] %v4041
          %4046 = vst [vmem:[%s2071 + $0x18] sm:$0xff] %v4042
        $region63: #{forward.8} parent=50 // pred_fallthru
          _
        %s4047 = smul.u32 4, %s20
        %p4048 = scmp.lt.s32.totalorder %s19, 0
        %s4049 = scalar_select %p4048, %s19, 0
        %p4050 = scmp.lt.s32.totalorder %s4047, 7
        %s4051 = scalar_select %p4050, %s4047, 7
        %s4052 = smul.addr %s4049, 8
        %s4053 = sadd.s32 %s4051, %s4052
        %s4054 = smul.addr %s4053, 8
        %s4055 = scalar_lea.vmem %s3, %s4054
        // Predicated region
        $region64: #{forward.8} parent=50 // pred_check
          %p4056 = pneg %p135
        $region65: #{forward.8} parent=50 // pred_check_branch
          %4058 = sbr.rel (%p4056) target = $region67
        $region66: #{forward.8} parent=50 // pred_region
          %s4059 = smul.u32 4, %s20
        $region67: #{forward.8} parent=50 // pred_fallthru
          _
      $region51: #{forward.8} parent=5 // pred_fallthru
        _
      %p4060 = scmp.le.s32.totalorder 2, %s9
      // Predicated region
      $region68: #{forward.8} parent=5 // pred_check
        %p4061 = pneg %p4060
      $region69: #{forward.8} parent=5 // pred_check_branch
        %4063 = sbr.rel (%p4061) target = $region71
      $region70: #{forward.8} parent=5 // pred_region
        %s4064 = ssub.s32 %s9, 2
        // Predicated region
        $region72: #{forward.8} parent=70 // pred_check
          %p4065 = pneg %p141
        $region73: #{forward.8} parent=70 // pred_check_branch
          %4067 = sbr.rel (%p4065) target = $region75
        $region74: #{forward.8} parent=70 // pred_region
          %s4068 = smul.u32 4, %s23
          %p4069 = scmp.lt.s32.totalorder %s22, 0
          %s4070 = scalar_select %p4069, %s22, 0
          %p4071 = scmp.lt.s32.totalorder %s4068, 7
          %s4072 = scalar_select %p4071, %s4068, 7
          %s4073 = smul.addr %s4070, 8
          %s4074 = sadd.s32 %s4072, %s4073
          %s4075 = smul.addr %s4074, 8
          %s4076 = scalar_lea.vmem %s3, %s4075
        $region75: #{forward.8} parent=70 // pred_fallthru
          _
      $region71: #{forward.8} parent=5 // pred_fallthru
        _
    $region6: #{forward.8} parent=1 // loop_footer
      %s13 = sadd.s32 1, %s9
    $region7: #{forward.8} parent=1 // loop_footer_branch
      %8 = sbr.rel target = $region3
    $region8: #{forward.8} parent=1 // loop_exit
      _

</llo_original>
